<compile_context>
chip_gen: v6e
topology: v6e:2x2x1
jax: 0.10.0
libtpu: 0.0.40
codegen_flags: <defaults>
</compile_context>

<pallas_src>
import functools

import numpy as np

import jax
import jax.numpy as jnp
from jax import lax
from jax.experimental import pallas as pl
from jax.experimental.pallas import tpu as pltpu


_VMEM = pl.BlockSpec(memory_space=pltpu.MemorySpace.VMEM)


# ----------------------------------------------------------------------------
# Kernel 1: fused conv stack (5 x [Conv1d k=3 replicate-pad + folded BN + ReLU])
# ----------------------------------------------------------------------------
def _conv_stack_kernel(*refs, L, n_layers):
    x_ref = refs[0]
    o_ref = refs[-1]
    layer_refs = refs[1:-1]

    x = x_ref[...]                                            # (C_in0, N*L) f32
    for li in range(n_layers):
        w_ref, sc_ref, sh_ref = layer_refs[3 * li: 3 * li + 3]
        NL = x.shape[1]
        # Shift-by-one neighbours along the (folded) length axis.
        x_lm = jnp.concatenate([x[:, :1], x[:, :NL - 1]], axis=1)   # x[pos-1]
        x_rm = jnp.concatenate([x[:, 1:], x[:, NL - 1:]], axis=1)   # x[pos+1]
        # Per-image replicate padding; also masks the image boundary so
        # image n and image n+1 never leak into each other.
        pos = lax.broadcasted_iota(jnp.int32, x.shape, 1) % L
        x_left = jnp.where(pos == 0, x, x_lm)
        x_right = jnp.where(pos == L - 1, x, x_rm)
        # 3-tap conv as 3 accumulating MXU matmuls over the lane-folded batch.
        acc = jnp.dot(w_ref[0], x_left, preferred_element_type=jnp.float32)
        acc = acc + jnp.dot(w_ref[1], x, preferred_element_type=jnp.float32)
        acc = acc + jnp.dot(w_ref[2], x_right, preferred_element_type=jnp.float32)
        y = acc * sc_ref[...] + sh_ref[...]                   # folded BN (or bias)
        x = jnp.maximum(y, 0.0)                               # ReLU
    o_ref[...] = x


def conv_stack(x_cl, conv_layers, L):
    NL = x_cl.shape[1]
    c_out_last = conv_layers[-1]["w"].shape[1]
    inputs = [x_cl]
    for layer in conv_layers:
        inputs += [layer["w"], layer["scale"], layer["shift"]]
    return pl.pallas_call(
        functools.partial(_conv_stack_kernel, L=L, n_layers=len(conv_layers)),
        out_shape=jax.ShapeDtypeStruct((c_out_last, NL), jnp.float32),
        in_specs=[_VMEM] * len(inputs),
        out_specs=_VMEM,
    )(*inputs)


# ----------------------------------------------------------------------------
# Kernel 2: fused stacked GRU (PyTorch nn.GRU equations, gates stacked [r|z|n])
# ----------------------------------------------------------------------------
def _gru_stack_kernel(*refs, T, B, H, n_layers, unroll):
    seq_ref = refs[0]                                   # (T*B, I0)
    layer_refs = refs[1:1 + 4 * n_layers]
    out_ref = refs[1 + 4 * n_layers]                    # (T*B, H)
    hT_ref = refs[2 + 4 * n_layers]                     # (n_layers*B, H)
    gi_ref = refs[3 + 4 * n_layers]                     # scratch (T*B, 3H)

    for li in range(n_layers):
        wih_ref, whh_ref, bih_ref, bhh_ref = layer_refs[4 * li: 4 * li + 4]
        src_ref = seq_ref if li == 0 else out_ref       # layer l>0 reads layer l-1 output

        # Hoisted input projection: ONE (T*B, I) @ (I, 3H) matmul per layer
        # instead of three tiny matmuls inside every recurrent step.
        gi_ref[...] = (jnp.dot(src_ref[...], wih_ref[...],
                               preferred_element_type=jnp.float32)
                       + bih_ref[...])

        whh = whh_ref[...]                              # (H, 3H)
        bhh = bhh_ref[...]                              # (1, 3H)

        def cell(t, h, whh=whh, bhh=bhh):
            gi = gi_ref[pl.ds(t * B, B), :]             # (B, 3H)
            gh = jnp.dot(h, whh, preferred_element_type=jnp.float32) + bhh
            r = jax.nn.sigmoid(gi[:, 0:H] + gh[:, 0:H])
            z = jax.nn.sigmoid(gi[:, H:2 * H] + gh[:, H:2 * H])
            n = jnp.tanh(gi[:, 2 * H:3 * H] + r * gh[:, 2 * H:3 * H])
            h_new = (1.0 - z) * n + z * h
            out_ref[pl.ds(t * B, B), :] = h_new
            return h_new

        def block(tb, h, cell=cell):
            # Manual unroll: exposes `unroll` steps to the scheduler so the
            # EUP/VPU gate math overlaps the next step's MXU push.
            for u in range(unroll):
                h = cell(tb * unroll + u, h)
            return h

        h_last = lax.fori_loop(0, T // unroll, block,
                               jnp.zeros((B, H), jnp.float32))
        hT_ref[pl.ds(li * B, B), :] = h_last


def gru_stack(seq2d, gru_layers, T, B, H):
    n_layers = len(gru_layers)
    unroll = 4 if T % 4 == 0 else 1
    inputs = [seq2d]
    for lw in gru_layers:
        inputs += [lw["wih"], lw["whh"], lw["bih"], lw["bhh"]]
    out2d, hT2d = pl.pallas_call(
        functools.partial(_gru_stack_kernel, T=T, B=B, H=H,
                          n_layers=n_layers, unroll=unroll),
        out_shape=(jax.ShapeDtypeStruct((T * B, H), jnp.float32),
                   jax.ShapeDtypeStruct((n_layers * B, H), jnp.float32)),
        in_specs=[_VMEM] * len(inputs),
        out_specs=(_VMEM, _VMEM),
        scratch_shapes=[pltpu.VMEM((T * B, 3 * H), jnp.float32)],
    )(*inputs)
    return out2d, hT2d.reshape(n_layers, B, H)


# ----------------------------------------------------------------------------
# Kernel 3: final Linear (bf16 operands, f32 accumulation)
# ----------------------------------------------------------------------------
def _linear_kernel(x_ref, w_ref, b_ref, o_ref):
    o_ref[...] = (jnp.dot(x_ref[...].astype(jnp.bfloat16), w_ref[...],
                          preferred_element_type=jnp.float32) + b_ref[...])


def linear(x, w_t_bf16, b):
    B = x.shape[0]
    F_out = w_t_bf16.shape[1]
    return pl.pallas_call(
        _linear_kernel,
        out_shape=jax.ShapeDtypeStruct((B, F_out), jnp.float32),
        in_specs=[_VMEM, _VMEM, _VMEM],
        out_specs=_VMEM,
    )(x, w_t_bf16, b)


# ----------------------------------------------------------------------------
# Parameter construction (deterministic, synthetic). No scalar leaves in the
# pytree (so nothing shape-relevant ever becomes a tracer under jit).
# ----------------------------------------------------------------------------
def init_params(key, num_channel, lstm_num):
    C = num_channel
    H = 2 * C  # lstm_hidden_size
    eps = 1e-5
    conv_channels = [(C, 16 * C), (16 * C, 8 * C), (8 * C, 4 * C),
                     (4 * C, 2 * C), (2 * C, C)]
    params = {"conv_layers": [], "gru_layers": []}

    for li, (cin, cout) in enumerate(conv_channels):
        key, kw, kb, kg, kbe, km, kv = jax.random.split(key, 7)
        w = 0.1 * jax.random.normal(kw, (3, cout, cin), jnp.float32)
        b = 0.05 * jax.random.normal(kb, (cout,), jnp.float32)
        if li < 4:  # conv1..conv4 have a BatchNorm1d after them
            gamma = 1.0 + 0.1 * jax.random.normal(kg, (cout,), jnp.float32)
            beta = 0.1 * jax.random.normal(kbe, (cout,), jnp.float32)
            rmean = 0.1 * jax.random.normal(km, (cout,), jnp.float32)
            rvar = 1.0 + 0.1 * jnp.abs(jax.random.normal(kv, (cout,), jnp.float32))
            scale = gamma / jnp.sqrt(rvar + eps)
            shift = beta + scale * (b - rmean)
        else:       # conv5: no BN, just bias
            scale = jnp.ones((cout,), jnp.float32)
            shift = b
        params["conv_layers"].append({
            "w": w,                               # (3, C_out, C_in)
            "scale": scale.reshape(cout, 1),
            "shift": shift.reshape(cout, 1),
        })

    for li in range(lstm_num):
        in_size = C if li == 0 else H
        key, k1, k2, k3, k4 = jax.random.split(key, 5)
        params["gru_layers"].append({
            # gates stacked along the last axis in PyTorch order [r | z | n]
            "wih": 0.1 * jax.random.normal(k1, (in_size, 3 * H), jnp.float32),
            "whh": 0.1 * jax.random.normal(k2, (H, 3 * H), jnp.float32),
            "bih": 0.05 * jax.random.normal(k3, (1, 3 * H), jnp.float32),
            "bhh": 0.05 * jax.random.normal(k4, (1, 3 * H), jnp.float32),
        })

    key, kw3, kb3 = jax.random.split(key, 3)
    # Final linear weight stored in bf16 (MXU-native, halves HBM traffic of the
    # only non-trivial weight); accumulation stays f32.
    params["w3_t"] = (0.02 * jax.random.normal(kw3, (H * 160, 512),
                                               jnp.float32)).astype(jnp.bfloat16)
    params["b3"] = 0.02 * jax.random.normal(kb3, (1, 512), jnp.float32)
    return params


# ----------------------------------------------------------------------------
# Full forward pass (mirrors N_VCNN_GRU.forward).
# ----------------------------------------------------------------------------
@jax.jit
def n_vcnn_gru_forward(params, x):
    # All shape arithmetic uses static Python ints from array shapes.
    N, C, L = x.shape
    H = params["gru_layers"][0]["whh"].shape[0]
    T = 160

    # N_VCNN_: 5 x (conv1d + BN + ReLU), fused; batch folded into the lane axis.
    x_cl = jnp.reshape(jnp.transpose(x, (1, 0, 2)), (C, N * L))      # (C, N*L)
    y_cl = conv_stack(x_cl, params["conv_layers"], L)                # (C, N*L)
    y_ncl = jnp.transpose(jnp.reshape(y_cl, (C, N, L)), (1, 0, 2))   # (N, C, L)

    # x.view(160, -1, num_channel)  (row-major, same as torch .view)
    assert (N * L) % T == 0, "N*L must be a multiple of 160"
    B = (N * L) // T
    seq2d = jnp.reshape(y_ncl, (T * B, C))                           # (T*B, C)

    # GRU (hidden=None -> zero initial state), stacked layers, fused.
    out2d, hidden = gru_stack(seq2d, params["gru_layers"], T, B, H)

    # x.view(-1, hidden*160); dropout -> identity (inference); linear3
    flat = jnp.reshape(out2d, (-1, H * T))
    out = linear(flat, params["w3_t"], params["b3"])
    return out, hidden


# ----------------------------------------------------------------------------
# Plain-NumPy reference of the PyTorch forward (for a loose numerical check).
# ----------------------------------------------------------------------------
def _sigmoid(v):
    return 1.0 / (1.0 + np.exp(-v))


def _reference_forward(params, x):
    xs = np.asarray(x, np.float32)                     # (N, C, L)
    N, C, L = xs.shape
    for layer in params["conv_layers"]:
        w = np.asarray(layer["w"], np.float32)         # (3, C_out, C_in)
        sc = np.asarray(layer["scale"], np.float32)
        sh = np.asarray(layer["shift"], np.float32)
        xp = np.pad(xs, ((0, 0), (0, 0), (1, 1)), mode="edge")
        y = np.zeros((N, w.shape[1], L), np.float32)
        for k in range(3):
            y += np.einsum("oi,nil->nol", w[k], xp[:, :, k:k + L])
        xs = np.maximum(y * sc[None] + sh[None], 0.0)

    T = 160
    seq = xs.reshape(T, -1, C)
    B = seq.shape[1]
    H = np.asarray(params["gru_layers"][0]["whh"]).shape[0]
    hiddens = []
    for lw in params["gru_layers"]:
        wih = np.asarray(lw["wih"], np.float32)
        whh = np.asarray(lw["whh"], np.float32)
        bih = np.asarray(lw["bih"], np.float32)
        bhh = np.asarray(lw["bhh"], np.float32)
        h = np.zeros((B, H), np.float32)
        outs = []
        for t in range(T):
            gi = seq[t] @ wih + bih
            gh = h @ whh + bhh
            r = _sigmoid(gi[:, :H] + gh[:, :H])
            z = _sigmoid(gi[:, H:2 * H] + gh[:, H:2 * H])
            n = np.tanh(gi[:, 2 * H:] + r * gh[:, 2 * H:])
            h = (1.0 - z) * n + z * h
            outs.append(h)
        seq = np.stack(outs, axis=0)
        hiddens.append(h)
    hidden = np.stack(hiddens, axis=0)

    flat = seq.reshape(-1, H * T)
    w3 = np.asarray(jnp.asarray(params["w3_t"], jnp.float32))
    b3 = np.asarray(params["b3"], np.float32)
    out = flat @ w3 + b3
    return out, hidden


if __name__ == "__main__":
    num_channel = 4
    dropout_p = 0.1        # identity in inference mode
    lstm_num = 2

    # x.view(160, -1, C) requires N * L == 160 * B'; pick N=2, L=80 -> B'=1.
    N, C, L = 2, num_channel, 80

    key = jax.random.PRNGKey(0)
    key, kx = jax.random.split(key)
    params = init_params(key, num_channel, lstm_num)
    x = jax.random.normal(kx, (N, C, L), jnp.float32)

    out, hidden = n_vcnn_gru_forward(params, x)
    jax.block_until_ready((out, hidden))

    assert out.shape == (1, 512), out.shape
    assert hidden.shape == (lstm_num, 1, 2 * num_channel), hidden.shape
    assert bool(jnp.all(jnp.isfinite(out))) and bool(jnp.all(jnp.isfinite(hidden)))

    # Loose cross-check vs. a plain NumPy reference of the PyTorch forward
    # (bf16 final matmul + f32 MXU accumulation => small numeric deviation).
    out_ref, hidden_ref = _reference_forward(params, x)
    assert float(np.max(np.abs(np.asarray(out) - out_ref))) < 8e-2
    assert float(np.max(np.abs(np.asarray(hidden) - hidden_ref))) < 8e-2

    print("KERNEL_OK")
</pallas_src>

<mosaic_0001>
module attributes {stable_mosaic.version = 11 : i64} {
  func.func @_linear_kernel(%arg0: memref<1x1280xf32, #tpu.memory_space<vmem>>, %arg1: memref<1280x512xbf16, #tpu.memory_space<vmem>>, %arg2: memref<1x512xf32, #tpu.memory_space<vmem>>, %arg3: memref<1x512xf32, #tpu.memory_space<vmem>>) attributes {dimension_semantics = [], scalar_prefetch = 0 : i64, scratch_operands = 0 : i64, tpu.core_type = #tpu.core_type<tc>} {
    %c0 = arith.constant 0 : index
    %c0_0 = arith.constant 0 : index
    %0 = vector.load %arg0[%c0, %c0_0] : memref<1x1280xf32, #tpu.memory_space<vmem>>, vector<1x1280xf32>
    %1 = arith.truncf %0 : vector<1x1280xf32> to vector<1x1280xbf16>
    %c0_1 = arith.constant 0 : index
    %c0_2 = arith.constant 0 : index
    %2 = vector.load %arg1[%c0_1, %c0_2] : memref<1280x512xbf16, #tpu.memory_space<vmem>>, vector<1280x512xbf16>
    %cst = arith.constant dense<0.000000e+00> : vector<1x512xf32>
    %3 = tpu.matmul %1, %2, %cst {dimension_numbers = #tpu.dot_dimension_numbers<[1], [0], [0], [1], [0, 0, 1, 1], [], []>} : vector<1x1280xbf16>, vector<1280x512xbf16>, vector<1x512xf32> -> vector<1x512xf32>
    %c0_3 = arith.constant 0 : index
    %c0_4 = arith.constant 0 : index
    %4 = vector.load %arg2[%c0_3, %c0_4] : memref<1x512xf32, #tpu.memory_space<vmem>>, vector<1x512xf32>
    %5 = arith.addf %3, %4 : vector<1x512xf32>
    %c0_5 = arith.constant 0 : index
    %c0_6 = arith.constant 0 : index
    %6 = vector.load %arg3[%c0_5, %c0_6] : memref<1x512xf32, #tpu.memory_space<vmem>>, vector<1x512xf32>
    tpu.vector_store %arg3[%c0_5, %c0_6], %5 {strides = array<i32>} : memref<1x512xf32, #tpu.memory_space<vmem>>, vector<1x512xf32>,
    return
  }
}

module attributes {stable_mosaic.version = 11 : i64} {
  func.func @_conv_stack_kernel(%arg0: memref<4x160xf32, #tpu.memory_space<vmem>>, %arg1: memref<3x64x4xf32, #tpu.memory_space<vmem>>, %arg2: memref<64x1xf32, #tpu.memory_space<vmem>>, %arg3: memref<64x1xf32, #tpu.memory_space<vmem>>, %arg4: memref<3x32x64xf32, #tpu.memory_space<vmem>>, %arg5: memref<32x1xf32, #tpu.memory_space<vmem>>, %arg6: memref<32x1xf32, #tpu.memory_space<vmem>>, %arg7: memref<3x16x32xf32, #tpu.memory_space<vmem>>, %arg8: memref<16x1xf32, #tpu.memory_space<vmem>>, %arg9: memref<16x1xf32, #tpu.memory_space<vmem>>, %arg10: memref<3x8x16xf32, #tpu.memory_space<vmem>>, %arg11: memref<8x1xf32, #tpu.memory_space<vmem>>, %arg12: memref<8x1xf32, #tpu.memory_space<vmem>>, %arg13: memref<3x4x8xf32, #tpu.memory_space<vmem>>, %arg14: memref<4x1xf32, #tpu.memory_space<vmem>>, %arg15: memref<4x1xf32, #tpu.memory_space<vmem>>, %arg16: memref<4x160xf32, #tpu.memory_space<vmem>>) attributes {dimension_semantics = [], scalar_prefetch = 0 : i64, scratch_operands = 0 : i64, tpu.core_type = #tpu.core_type<tc>} {
    %c0 = arith.constant 0 : index
    %c0_0 = arith.constant 0 : index
    %0 = vector.load %arg0[%c0, %c0_0] : memref<4x160xf32, #tpu.memory_space<vmem>>, vector<4x160xf32>
    %1 = vector.extract_strided_slice %0 {offsets = [0, 0], sizes = [4, 1], strides = [1, 1]} : vector<4x160xf32> to vector<4x1xf32>
    %2 = vector.extract_strided_slice %0 {offsets = [0, 0], sizes = [4, 159], strides = [1, 1]} : vector<4x160xf32> to vector<4x159xf32>
    %3 = tpu.concatenate %1, %2 in 1 : vector<4x1xf32>, vector<4x159xf32> -> vector<4x160xf32>
    %4 = vector.extract_strided_slice %0 {offsets = [0, 1], sizes = [4, 159], strides = [1, 1]} : vector<4x160xf32> to vector<4x159xf32>
    %5 = vector.extract_strided_slice %0 {offsets = [0, 159], sizes = [4, 1], strides = [1, 1]} : vector<4x160xf32> to vector<4x1xf32>
    %6 = tpu.concatenate %4, %5 in 1 : vector<4x159xf32>, vector<4x1xf32> -> vector<4x160xf32>
    %7 = tpu.iota {dimensions = array<i32: 1>} : vector<4x160xi32>
    %c80_i32 = arith.constant 80 : i32
    %c0_i32 = arith.constant 0 : i32
    %8 = arith.cmpi eq, %c80_i32, %c0_i32 : i32
    %c1_i32 = arith.constant 1 : i32
    %9 = arith.select %8, %c1_i32, %c80_i32 : i32
    %10 = vector.broadcast %9 : i32 to vector<4x160xi32>
    %11 = arith.remsi %7, %10 : vector<4x160xi32>
    %c0_i32_1 = arith.constant 0 : i32
    %12 = vector.broadcast %c0_i32_1 : i32 to vector<4x160xi32>
    %13 = arith.cmpi ne, %11, %12 : vector<4x160xi32>
    %c0_i32_2 = arith.constant 0 : i32
    %14 = vector.broadcast %c0_i32_2 : i32 to vector<4x160xi32>
    %15 = arith.cmpi slt, %11, %14 : vector<4x160xi32>
    %c0_i32_3 = arith.constant 0 : i32
    %16 = arith.cmpi slt, %9, %c0_i32_3 : i32
    %17 = vector.broadcast %16 : i1 to vector<4x160xi1>
    %18 = vector.broadcast %17 : vector<4x160xi1> to vector<4x160xi1>
    %19 = arith.xori %15, %18 : vector<4x160xi1>
    %20 = arith.andi %19, %13 : vector<4x160xi1>
    %21 = vector.broadcast %9 : i32 to vector<4x160xi32>
    %22 = arith.addi %11, %21 : vector<4x160xi32>
    %23 = arith.select %20, %22, %11 : vector<4x160xi1>, vector<4x160xi32>
    %c0_i32_4 = arith.constant 0 : i32
    %24 = vector.broadcast %c0_i32_4 : i32 to vector<4x160xi32>
    %25 = arith.cmpi eq, %23, %24 : vector<4x160xi32>
    %26 = arith.select %25, %0, %3 : vector<4x160xi1>, vector<4x160xf32>
    %c79_i32 = arith.constant 79 : i32
    %27 = vector.broadcast %c79_i32 : i32 to vector<4x160xi32>
    %28 = arith.cmpi eq, %23, %27 : vector<4x160xi32>
    %29 = arith.select %28, %0, %6 : vector<4x160xi1>, vector<4x160xf32>
    %c0_5 = arith.constant 0 : index
    %c0_6 = arith.constant 0 : index
    %c0_7 = arith.constant 0 : index
    %30 = vector.load %arg1[%c0_5, %c0_6, %c0_7] : memref<3x64x4xf32, #tpu.memory_space<vmem>>, vector<1x64x4xf32>
    %31 = vector.shape_cast %30 : vector<1x64x4xf32> to vector<64x4xf32>
    %cst = arith.constant dense<0.000000e+00> : vector<64x160xf32>
    %32 = tpu.matmul %31, %26, %cst {dimension_numbers = #tpu.dot_dimension_numbers<[1], [0], [0], [1], [0, 0, 1, 1], [], []>} : vector<64x4xf32>, vector<4x160xf32>, vector<64x160xf32> -> vector<64x160xf32>
    %c1 = arith.constant 1 : index
    %c0_8 = arith.constant 0 : index
    %c0_9 = arith.constant 0 : index
    %33 = vector.load %arg1[%c1, %c0_8, %c0_9] : memref<3x64x4xf32, #tpu.memory_space<vmem>>, vector<1x64x4xf32>
    %34 = vector.shape_cast %33 : vector<1x64x4xf32> to vector<64x4xf32>
    %cst_10 = arith.constant dense<0.000000e+00> : vector<64x160xf32>
    %35 = tpu.matmul %34, %0, %cst_10 {dimension_numbers = #tpu.dot_dimension_numbers<[1], [0], [0], [1], [0, 0, 1, 1], [], []>} : vector<64x4xf32>, vector<4x160xf32>, vector<64x160xf32> -> vector<64x160xf32>
    %36 = arith.addf %32, %35 : vector<64x160xf32>
    %c2 = arith.constant 2 : index
    %c0_11 = arith.constant 0 : index
    %c0_12 = arith.constant 0 : index
    %37 = vector.load %arg1[%c2, %c0_11, %c0_12] : memref<3x64x4xf32, #tpu.memory_space<vmem>>, vector<1x64x4xf32>
    %38 = vector.shape_cast %37 : vector<1x64x4xf32> to vector<64x4xf32>
    %cst_13 = arith.constant dense<0.000000e+00> : vector<64x160xf32>
    %39 = tpu.matmul %38, %29, %cst_13 {dimension_numbers = #tpu.dot_dimension_numbers<[1], [0], [0], [1], [0, 0, 1, 1], [], []>} : vector<64x4xf32>, vector<4x160xf32>, vector<64x160xf32> -> vector<64x160xf32>
    %40 = arith.addf %36, %39 : vector<64x160xf32>
    %c0_14 = arith.constant 0 : index
    %c0_15 = arith.constant 0 : index
    %41 = vector.load %arg2[%c0_14, %c0_15] : memref<64x1xf32, #tpu.memory_space<vmem>>, vector<64x1xf32>
    %42 = vector.broadcast %41 : vector<64x1xf32> to vector<64x160xf32>
    %43 = arith.mulf %40, %42 : vector<64x160xf32>
    %c0_16 = arith.constant 0 : index
    %c0_17 = arith.constant 0 : index
    %44 = vector.load %arg3[%c0_16, %c0_17] : memref<64x1xf32, #tpu.memory_space<vmem>>, vector<64x1xf32>
    %45 = vector.broadcast %44 : vector<64x1xf32> to vector<64x160xf32>
    %46 = arith.addf %43, %45 : vector<64x160xf32>
    %cst_18 = arith.constant 0.000000e+00 : f32
    %47 = vector.broadcast %cst_18 : f32 to vector<64x160xf32>
    %48 = arith.maximumf %46, %47 : vector<64x160xf32>
    %49 = vector.extract_strided_slice %48 {offsets = [0, 0], sizes = [64, 1], strides = [1, 1]} : vector<64x160xf32> to vector<64x1xf32>
    %50 = vector.extract_strided_slice %48 {offsets = [0, 0], sizes = [64, 159], strides = [1, 1]} : vector<64x160xf32> to vector<64x159xf32>
    %51 = tpu.concatenate %49, %50 in 1 : vector<64x1xf32>, vector<64x159xf32> -> vector<64x160xf32>
    %52 = vector.extract_strided_slice %48 {offsets = [0, 1], sizes = [64, 159], strides = [1, 1]} : vector<64x160xf32> to vector<64x159xf32>
    %53 = vector.extract_strided_slice %48 {offsets = [0, 159], sizes = [64, 1], strides = [1, 1]} : vector<64x160xf32> to vector<64x1xf32>
    %54 = tpu.concatenate %52, %53 in 1 : vector<64x159xf32>, vector<64x1xf32> -> vector<64x160xf32>
    %55 = tpu.iota {dimensions = array<i32: 1>} : vector<64x160xi32>
    %c80_i32_19 = arith.constant 80 : i32
    %c0_i32_20 = arith.constant 0 : i32
    %56 = arith.cmpi eq, %c80_i32_19, %c0_i32_20 : i32
    %c1_i32_21 = arith.constant 1 : i32
    %57 = arith.select %56, %c1_i32_21, %c80_i32_19 : i32
    %58 = vector.broadcast %57 : i32 to vector<64x160xi32>
    %59 = arith.remsi %55, %58 : vector<64x160xi32>
    %c0_i32_22 = arith.constant 0 : i32
    %60 = vector.broadcast %c0_i32_22 : i32 to vector<64x160xi32>
    %61 = arith.cmpi ne, %59, %60 : vector<64x160xi32>
    %c0_i32_23 = arith.constant 0 : i32
    %62 = vector.broadcast %c0_i32_23 : i32 to vector<64x160xi32>
    %63 = arith.cmpi slt, %59, %62 : vector<64x160xi32>
    %c0_i32_24 = arith.constant 0 : i32
    %64 = arith.cmpi slt, %57, %c0_i32_24 : i32
    %65 = vector.broadcast %64 : i1 to vector<64x160xi1>
    %66 = vector.broadcast %65 : vector<64x160xi1> to vector<64x160xi1>
    %67 = arith.xori %63, %66 : vector<64x160xi1>
    %68 = arith.andi %67, %61 : vector<64x160xi1>
    %69 = vector.broadcast %57 : i32 to vector<64x160xi32>
    %70 = arith.addi %59, %69 : vector<64x160xi32>
    %71 = arith.select %68, %70, %59 : vector<64x160xi1>, vector<64x160xi32>
    %c0_i32_25 = arith.constant 0 : i32
    %72 = vector.broadcast %c0_i32_25 : i32 to vector<64x160xi32>
    %73 = arith.cmpi eq, %71, %72 : vector<64x160xi32>
    %74 = arith.select %73, %48, %51 : vector<64x160xi1>, vector<64x160xf32>
    %c79_i32_26 = arith.constant 79 : i32
    %75 = vector.broadcast %c79_i32_26 : i32 to vector<64x160xi32>
    %76 = arith.cmpi eq, %71, %75 : vector<64x160xi32>
    %77 = arith.select %76, %48, %54 : vector<64x160xi1>, vector<64x160xf32>
    %c0_27 = arith.constant 0 : index
    %c0_28 = arith.constant 0 : index
    %c0_29 = arith.constant 0 : index
    %78 = vector.load %arg4[%c0_27, %c0_28, %c0_29] : memref<3x32x64xf32, #tpu.memory_space<vmem>>, vector<1x32x64xf32>
    %79 = vector.shape_cast %78 : vector<1x32x64xf32> to vector<32x64xf32>
    %cst_30 = arith.constant dense<0.000000e+00> : vector<32x160xf32>
    %80 = tpu.matmul %79, %74, %cst_30 {dimension_numbers = #tpu.dot_dimension_numbers<[1], [0], [0], [1], [0, 0, 1, 1], [], []>} : vector<32x64xf32>, vector<64x160xf32>, vector<32x160xf32> -> vector<32x160xf32>
    %c1_31 = arith.constant 1 : index
    %c0_32 = arith.constant 0 : index
    %c0_33 = arith.constant 0 : index
    %81 = vector.load %arg4[%c1_31, %c0_32, %c0_33] : memref<3x32x64xf32, #tpu.memory_space<vmem>>, vector<1x32x64xf32>
    %82 = vector.shape_cast %81 : vector<1x32x64xf32> to vector<32x64xf32>
    %cst_34 = arith.constant dense<0.000000e+00> : vector<32x160xf32>
    %83 = tpu.matmul %82, %48, %cst_34 {dimension_numbers = #tpu.dot_dimension_numbers<[1], [0], [0], [1], [0, 0, 1, 1], [], []>} : vector<32x64xf32>, vector<64x160xf32>, vector<32x160xf32> -> vector<32x160xf32>
    %84 = arith.addf %80, %83 : vector<32x160xf32>
    %c2_35 = arith.constant 2 : index
    %c0_36 = arith.constant 0 : index
    %c0_37 = arith.constant 0 : index
    %85 = vector.load %arg4[%c2_35, %c0_36, %c0_37] : memref<3x32x64xf32, #tpu.memory_space<vmem>>, vector<1x32x64xf32>
    %86 = vector.shape_cast %85 : vector<1x32x64xf32> to vector<32x64xf32>
    %cst_38 = arith.constant dense<0.000000e+00> : vector<32x160xf32>
    %87 = tpu.matmul %86, %77, %cst_38 {dimension_numbers = #tpu.dot_dimension_numbers<[1], [0], [0], [1], [0, 0, 1, 1], [], []>} : vector<32x64xf32>, vector<64x160xf32>, vector<32x160xf32> -> vector<32x160xf32>
    %88 = arith.addf %84, %87 : vector<32x160xf32>
    %c0_39 = arith.constant 0 : index
    %c0_40 = arith.constant 0 : index
    %89 = vector.load %arg5[%c0_39, %c0_40] : memref<32x1xf32, #tpu.memory_space<vmem>>, vector<32x1xf32>
    %90 = vector.broadcast %89 : vector<32x1xf32> to vector<32x160xf32>
    %91 = arith.mulf %88, %90 : vector<32x160xf32>
    %c0_41 = arith.constant 0 : index
    %c0_42 = arith.constant 0 : index
    %92 = vector.load %arg6[%c0_41, %c0_42] : memref<32x1xf32, #tpu.memory_space<vmem>>, vector<32x1xf32>
    %93 = vector.broadcast %92 : vector<32x1xf32> to vector<32x160xf32>
    %94 = arith.addf %91, %93 : vector<32x160xf32>
    %cst_43 = arith.constant 0.000000e+00 : f32
    %95 = vector.broadcast %cst_43 : f32 to vector<32x160xf32>
    %96 = arith.maximumf %94, %95 : vector<32x160xf32>
    %97 = vector.extract_strided_slice %96 {offsets = [0, 0], sizes = [32, 1], strides = [1, 1]} : vector<32x160xf32> to vector<32x1xf32>
    %98 = vector.extract_strided_slice %96 {offsets = [0, 0], sizes = [32, 159], strides = [1, 1]} : vector<32x160xf32> to vector<32x159xf32>
    %99 = tpu.concatenate %97, %98 in 1 : vector<32x1xf32>, vector<32x159xf32> -> vector<32x160xf32>
    %100 = vector.extract_strided_slice %96 {offsets = [0, 1], sizes = [32, 159], strides = [1, 1]} : vector<32x160xf32> to vector<32x159xf32>
    %101 = vector.extract_strided_slice %96 {offsets = [0, 159], sizes = [32, 1], strides = [1, 1]} : vector<32x160xf32> to vector<32x1xf32>
    %102 = tpu.concatenate %100, %101 in 1 : vector<32x159xf32>, vector<32x1xf32> -> vector<32x160xf32>
    %103 = tpu.iota {dimensions = array<i32: 1>} : vector<32x160xi32>
    %c80_i32_44 = arith.constant 80 : i32
    %c0_i32_45 = arith.constant 0 : i32
    %104 = arith.cmpi eq, %c80_i32_44, %c0_i32_45 : i32
    %c1_i32_46 = arith.constant 1 : i32
    %105 = arith.select %104, %c1_i32_46, %c80_i32_44 : i32
    %106 = vector.broadcast %105 : i32 to vector<32x160xi32>
    %107 = arith.remsi %103, %106 : vector<32x160xi32>
    %c0_i32_47 = arith.constant 0 : i32
    %108 = vector.broadcast %c0_i32_47 : i32 to vector<32x160xi32>
    %109 = arith.cmpi ne, %107, %108 : vector<32x160xi32>
    %c0_i32_48 = arith.constant 0 : i32
    %110 = vector.broadcast %c0_i32_48 : i32 to vector<32x160xi32>
    %111 = arith.cmpi slt, %107, %110 : vector<32x160xi32>
    %c0_i32_49 = arith.constant 0 : i32
    %112 = arith.cmpi slt, %105, %c0_i32_49 : i32
    %113 = vector.broadcast %112 : i1 to vector<32x160xi1>
    %114 = vector.broadcast %113 : vector<32x160xi1> to vector<32x160xi1>
    %115 = arith.xori %111, %114 : vector<32x160xi1>
    %116 = arith.andi %115, %109 : vector<32x160xi1>
    %117 = vector.broadcast %105 : i32 to vector<32x160xi32>
    %118 = arith.addi %107, %117 : vector<32x160xi32>
    %119 = arith.select %116, %118, %107 : vector<32x160xi1>, vector<32x160xi32>
    %c0_i32_50 = arith.constant 0 : i32
    %120 = vector.broadcast %c0_i32_50 : i32 to vector<32x160xi32>
    %121 = arith.cmpi eq, %119, %120 : vector<32x160xi32>
    %122 = arith.select %121, %96, %99 : vector<32x160xi1>, vector<32x160xf32>
    %c79_i32_51 = arith.constant 79 : i32
    %123 = vector.broadcast %c79_i32_51 : i32 to vector<32x160xi32>
    %124 = arith.cmpi eq, %119, %123 : vector<32x160xi32>
    %125 = arith.select %124, %96, %102 : vector<32x160xi1>, vector<32x160xf32>
    %c0_52 = arith.constant 0 : index
    %c0_53 = arith.constant 0 : index
    %c0_54 = arith.constant 0 : index
    %126 = vector.load %arg7[%c0_52, %c0_53, %c0_54] : memref<3x16x32xf32, #tpu.memory_space<vmem>>, vector<1x16x32xf32>
    %127 = vector.shape_cast %126 : vector<1x16x32xf32> to vector<16x32xf32>
    %cst_55 = arith.constant dense<0.000000e+00> : vector<16x160xf32>
    %128 = tpu.matmul %127, %122, %cst_55 {dimension_numbers = #tpu.dot_dimension_numbers<[1], [0], [0], [1], [0, 0, 1, 1], [], []>} : vector<16x32xf32>, vector<32x160xf32>, vector<16x160xf32> -> vector<16x160xf32>
    %c1_56 = arith.constant 1 : index
    %c0_57 = arith.constant 0 : index
    %c0_58 = arith.constant 0 : index
    %129 = vector.load %arg7[%c1_56, %c0_57, %c0_58] : memref<3x16x32xf32, #tpu.memory_space<vmem>>, vector<1x16x32xf32>
    %130 = vector.shape_cast %129 : vector<1x16x32xf32> to vector<16x32xf32>
    %cst_59 = arith.constant dense<0.000000e+00> : vector<16x160xf32>
    %131 = tpu.matmul %130, %96, %cst_59 {dimension_numbers = #tpu.dot_dimension_numbers<[1], [0], [0], [1], [0, 0, 1, 1], [], []>} : vector<16x32xf32>, vector<32x160xf32>, vector<16x160xf32> -> vector<16x160xf32>
    %132 = arith.addf %128, %131 : vector<16x160xf32>
    %c2_60 = arith.constant 2 : index
    %c0_61 = arith.constant 0 : index
    %c0_62 = arith.constant 0 : index
    %133 = vector.load %arg7[%c2_60, %c0_61, %c0_62] : memref<3x16x32xf32, #tpu.memory_space<vmem>>, vector<1x16x32xf32>
    %134 = vector.shape_cast %133 : vector<1x16x32xf32> to vector<16x32xf32>
    %cst_63 = arith.constant dense<0.000000e+00> : vector<16x160xf32>
    %135 = tpu.matmul %134, %125, %cst_63 {dimension_numbers = #tpu.dot_dimension_numbers<[1], [0], [0], [1], [0, 0, 1, 1], [], []>} : vector<16x32xf32>, vector<32x160xf32>, vector<16x160xf32> -> vector<16x160xf32>
    %136 = arith.addf %132, %135 : vector<16x160xf32>
    %c0_64 = arith.constant 0 : index
    %c0_65 = arith.constant 0 : index
    %137 = vector.load %arg8[%c0_64, %c0_65] : memref<16x1xf32, #tpu.memory_space<vmem>>, vector<16x1xf32>
    %138 = vector.broadcast %137 : vector<16x1xf32> to vector<16x160xf32>
    %139 = arith.mulf %136, %138 : vector<16x160xf32>
    %c0_66 = arith.constant 0 : index
    %c0_67 = arith.constant 0 : index
    %140 = vector.load %arg9[%c0_66, %c0_67] : memref<16x1xf32, #tpu.memory_space<vmem>>, vector<16x1xf32>
    %141 = vector.broadcast %140 : vector<16x1xf32> to vector<16x160xf32>
    %142 = arith.addf %139, %141 : vector<16x160xf32>
    %cst_68 = arith.constant 0.000000e+00 : f32
    %143 = vector.broadcast %cst_68 : f32 to vector<16x160xf32>
    %144 = arith.maximumf %142, %143 : vector<16x160xf32>
    %145 = vector.extract_strided_slice %144 {offsets = [0, 0], sizes = [16, 1], strides = [1, 1]} : vector<16x160xf32> to vector<16x1xf32>
    %146 = vector.extract_strided_slice %144 {offsets = [0, 0], sizes = [16, 159], strides = [1, 1]} : vector<16x160xf32> to vector<16x159xf32>
    %147 = tpu.concatenate %145, %146 in 1 : vector<16x1xf32>, vector<16x159xf32> -> vector<16x160xf32>
    %148 = vector.extract_strided_slice %144 {offsets = [0, 1], sizes = [16, 159], strides = [1, 1]} : vector<16x160xf32> to vector<16x159xf32>
    %149 = vector.extract_strided_slice %144 {offsets = [0, 159], sizes = [16, 1], strides = [1, 1]} : vector<16x160xf32> to vector<16x1xf32>
    %150 = tpu.concatenate %148, %149 in 1 : vector<16x159xf32>, vector<16x1xf32> -> vector<16x160xf32>
    %151 = tpu.iota {dimensions = array<i32: 1>} : vector<16x160xi32>
    %c80_i32_69 = arith.constant 80 : i32
    %c0_i32_70 = arith.constant 0 : i32
    %152 = arith.cmpi eq, %c80_i32_69, %c0_i32_70 : i32
    %c1_i32_71 = arith.constant 1 : i32
    %153 = arith.select %152, %c1_i32_71, %c80_i32_69 : i32
    %154 = vector.broadcast %153 : i32 to vector<16x160xi32>
    %155 = arith.remsi %151, %154 : vector<16x160xi32>
    %c0_i32_72 = arith.constant 0 : i32
    %156 = vector.broadcast %c0_i32_72 : i32 to vector<16x160xi32>
    %157 = arith.cmpi ne, %155, %156 : vector<16x160xi32>
    %c0_i32_73 = arith.constant 0 : i32
    %158 = vector.broadcast %c0_i32_73 : i32 to vector<16x160xi32>
    %159 = arith.cmpi slt, %155, %158 : vector<16x160xi32>
    %c0_i32_74 = arith.constant 0 : i32
    %160 = arith.cmpi slt, %153, %c0_i32_74 : i32
    %161 = vector.broadcast %160 : i1 to vector<16x160xi1>
    %162 = vector.broadcast %161 : vector<16x160xi1> to vector<16x160xi1>
    %163 = arith.xori %159, %162 : vector<16x160xi1>
    %164 = arith.andi %163, %157 : vector<16x160xi1>
    %165 = vector.broadcast %153 : i32 to vector<16x160xi32>
    %166 = arith.addi %155, %165 : vector<16x160xi32>
    %167 = arith.select %164, %166, %155 : vector<16x160xi1>, vector<16x160xi32>
    %c0_i32_75 = arith.constant 0 : i32
    %168 = vector.broadcast %c0_i32_75 : i32 to vector<16x160xi32>
    %169 = arith.cmpi eq, %167, %168 : vector<16x160xi32>
    %170 = arith.select %169, %144, %147 : vector<16x160xi1>, vector<16x160xf32>
    %c79_i32_76 = arith.constant 79 : i32
    %171 = vector.broadcast %c79_i32_76 : i32 to vector<16x160xi32>
    %172 = arith.cmpi eq, %167, %171 : vector<16x160xi32>
    %173 = arith.select %172, %144, %150 : vector<16x160xi1>, vector<16x160xf32>
    %c0_77 = arith.constant 0 : index
    %c0_78 = arith.constant 0 : index
    %c0_79 = arith.constant 0 : index
    %174 = vector.load %arg10[%c0_77, %c0_78, %c0_79] : memref<3x8x16xf32, #tpu.memory_space<vmem>>, vector<1x8x16xf32>
    %175 = vector.shape_cast %174 : vector<1x8x16xf32> to vector<8x16xf32>
    %cst_80 = arith.constant dense<0.000000e+00> : vector<8x160xf32>
    %176 = tpu.matmul %175, %170, %cst_80 {dimension_numbers = #tpu.dot_dimension_numbers<[1], [0], [0], [1], [0, 0, 1, 1], [], []>} : vector<8x16xf32>, vector<16x160xf32>, vector<8x160xf32> -> vector<8x160xf32>
    %c1_81 = arith.constant 1 : index
    %c0_82 = arith.constant 0 : index
    %c0_83 = arith.constant 0 : index
    %177 = vector.load %arg10[%c1_81, %c0_82, %c0_83] : memref<3x8x16xf32, #tpu.memory_space<vmem>>, vector<1x8x16xf32>
    %178 = vector.shape_cast %177 : vector<1x8x16xf32> to vector<8x16xf32>
    %cst_84 = arith.constant dense<0.000000e+00> : vector<8x160xf32>
    %179 = tpu.matmul %178, %144, %cst_84 {dimension_numbers = #tpu.dot_dimension_numbers<[1], [0], [0], [1], [0, 0, 1, 1], [], []>} : vector<8x16xf32>, vector<16x160xf32>, vector<8x160xf32> -> vector<8x160xf32>
    %180 = arith.addf %176, %179 : vector<8x160xf32>
    %c2_85 = arith.constant 2 : index
    %c0_86 = arith.constant 0 : index
    %c0_87 = arith.constant 0 : index
    %181 = vector.load %arg10[%c2_85, %c0_86, %c0_87] : memref<3x8x16xf32, #tpu.memory_space<vmem>>, vector<1x8x16xf32>
    %182 = vector.shape_cast %181 : vector<1x8x16xf32> to vector<8x16xf32>
    %cst_88 = arith.constant dense<0.000000e+00> : vector<8x160xf32>
    %183 = tpu.matmul %182, %173, %cst_88 {dimension_numbers = #tpu.dot_dimension_numbers<[1], [0], [0], [1], [0, 0, 1, 1], [], []>} : vector<8x16xf32>, vector<16x160xf32>, vector<8x160xf32> -> vector<8x160xf32>
    %184 = arith.addf %180, %183 : vector<8x160xf32>
    %c0_89 = arith.constant 0 : index
    %c0_90 = arith.constant 0 : index
    %185 = vector.load %arg11[%c0_89, %c0_90] : memref<8x1xf32, #tpu.memory_space<vmem>>, vector<8x1xf32>
    %186 = vector.broadcast %185 : vector<8x1xf32> to vector<8x160xf32>
    %187 = arith.mulf %184, %186 : vector<8x160xf32>
    %c0_91 = arith.constant 0 : index
    %c0_92 = arith.constant 0 : index
    %188 = vector.load %arg12[%c0_91, %c0_92] : memref<8x1xf32, #tpu.memory_space<vmem>>, vector<8x1xf32>
    %189 = vector.broadcast %188 : vector<8x1xf32> to vector<8x160xf32>
    %190 = arith.addf %187, %189 : vector<8x160xf32>
    %cst_93 = arith.constant 0.000000e+00 : f32
    %191 = vector.broadcast %cst_93 : f32 to vector<8x160xf32>
    %192 = arith.maximumf %190, %191 : vector<8x160xf32>
    %193 = vector.extract_strided_slice %192 {offsets = [0, 0], sizes = [8, 1], strides = [1, 1]} : vector<8x160xf32> to vector<8x1xf32>
    %194 = vector.extract_strided_slice %192 {offsets = [0, 0], sizes = [8, 159], strides = [1, 1]} : vector<8x160xf32> to vector<8x159xf32>
    %195 = tpu.concatenate %193, %194 in 1 : vector<8x1xf32>, vector<8x159xf32> -> vector<8x160xf32>
    %196 = vector.extract_strided_slice %192 {offsets = [0, 1], sizes = [8, 159], strides = [1, 1]} : vector<8x160xf32> to vector<8x159xf32>
    %197 = vector.extract_strided_slice %192 {offsets = [0, 159], sizes = [8, 1], strides = [1, 1]} : vector<8x160xf32> to vector<8x1xf32>
    %198 = tpu.concatenate %196, %197 in 1 : vector<8x159xf32>, vector<8x1xf32> -> vector<8x160xf32>
    %199 = tpu.iota {dimensions = array<i32: 1>} : vector<8x160xi32>
    %c80_i32_94 = arith.constant 80 : i32
    %c0_i32_95 = arith.constant 0 : i32
    %200 = arith.cmpi eq, %c80_i32_94, %c0_i32_95 : i32
    %c1_i32_96 = arith.constant 1 : i32
    %201 = arith.select %200, %c1_i32_96, %c80_i32_94 : i32
    %202 = vector.broadcast %201 : i32 to vector<8x160xi32>
    %203 = arith.remsi %199, %202 : vector<8x160xi32>
    %c0_i32_97 = arith.constant 0 : i32
    %204 = vector.broadcast %c0_i32_97 : i32 to vector<8x160xi32>
    %205 = arith.cmpi ne, %203, %204 : vector<8x160xi32>
    %c0_i32_98 = arith.constant 0 : i32
    %206 = vector.broadcast %c0_i32_98 : i32 to vector<8x160xi32>
    %207 = arith.cmpi slt, %203, %206 : vector<8x160xi32>
    %c0_i32_99 = arith.constant 0 : i32
    %208 = arith.cmpi slt, %201, %c0_i32_99 : i32
    %209 = vector.broadcast %208 : i1 to vector<8x160xi1>
    %210 = vector.broadcast %209 : vector<8x160xi1> to vector<8x160xi1>
    %211 = arith.xori %207, %210 : vector<8x160xi1>
    %212 = arith.andi %211, %205 : vector<8x160xi1>
    %213 = vector.broadcast %201 : i32 to vector<8x160xi32>
    %214 = arith.addi %203, %213 : vector<8x160xi32>
    %215 = arith.select %212, %214, %203 : vector<8x160xi1>, vector<8x160xi32>
    %c0_i32_100 = arith.constant 0 : i32
    %216 = vector.broadcast %c0_i32_100 : i32 to vector<8x160xi32>
    %217 = arith.cmpi eq, %215, %216 : vector<8x160xi32>
    %218 = arith.select %217, %192, %195 : vector<8x160xi1>, vector<8x160xf32>
    %c79_i32_101 = arith.constant 79 : i32
    %219 = vector.broadcast %c79_i32_101 : i32 to vector<8x160xi32>
    %220 = arith.cmpi eq, %215, %219 : vector<8x160xi32>
    %221 = arith.select %220, %192, %198 : vector<8x160xi1>, vector<8x160xf32>
    %c0_102 = arith.constant 0 : index
    %c0_103 = arith.constant 0 : index
    %c0_104 = arith.constant 0 : index
    %222 = vector.load %arg13[%c0_102, %c0_103, %c0_104] : memref<3x4x8xf32, #tpu.memory_space<vmem>>, vector<1x4x8xf32>
    %223 = vector.shape_cast %222 : vector<1x4x8xf32> to vector<4x8xf32>
    %cst_105 = arith.constant dense<0.000000e+00> : vector<4x160xf32>
    %224 = tpu.matmul %223, %218, %cst_105 {dimension_numbers = #tpu.dot_dimension_numbers<[1], [0], [0], [1], [0, 0, 1, 1], [], []>} : vector<4x8xf32>, vector<8x160xf32>, vector<4x160xf32> -> vector<4x160xf32>
    %c1_106 = arith.constant 1 : index
    %c0_107 = arith.constant 0 : index
    %c0_108 = arith.constant 0 : index
    %225 = vector.load %arg13[%c1_106, %c0_107, %c0_108] : memref<3x4x8xf32, #tpu.memory_space<vmem>>, vector<1x4x8xf32>
    %226 = vector.shape_cast %225 : vector<1x4x8xf32> to vector<4x8xf32>
    %cst_109 = arith.constant dense<0.000000e+00> : vector<4x160xf32>
    %227 = tpu.matmul %226, %192, %cst_109 {dimension_numbers = #tpu.dot_dimension_numbers<[1], [0], [0], [1], [0, 0, 1, 1], [], []>} : vector<4x8xf32>, vector<8x160xf32>, vector<4x160xf32> -> vector<4x160xf32>
    %228 = arith.addf %224, %227 : vector<4x160xf32>
    %c2_110 = arith.constant 2 : index
    %c0_111 = arith.constant 0 : index
    %c0_112 = arith.constant 0 : index
    %229 = vector.load %arg13[%c2_110, %c0_111, %c0_112] : memref<3x4x8xf32, #tpu.memory_space<vmem>>, vector<1x4x8xf32>
    %230 = vector.shape_cast %229 : vector<1x4x8xf32> to vector<4x8xf32>
    %cst_113 = arith.constant dense<0.000000e+00> : vector<4x160xf32>
    %231 = tpu.matmul %230, %221, %cst_113 {dimension_numbers = #tpu.dot_dimension_numbers<[1], [0], [0], [1], [0, 0, 1, 1], [], []>} : vector<4x8xf32>, vector<8x160xf32>, vector<4x160xf32> -> vector<4x160xf32>
    %232 = arith.addf %228, %231 : vector<4x160xf32>
    %c0_114 = arith.constant 0 : index
    %c0_115 = arith.constant 0 : index
    %233 = vector.load %arg14[%c0_114, %c0_115] : memref<4x1xf32, #tpu.memory_space<vmem>>, vector<4x1xf32>
    %234 = vector.broadcast %233 : vector<4x1xf32> to vector<4x160xf32>
    %235 = arith.mulf %232, %234 : vector<4x160xf32>
    %c0_116 = arith.constant 0 : index
    %c0_117 = arith.constant 0 : index
    %236 = vector.load %arg15[%c0_116, %c0_117] : memref<4x1xf32, #tpu.memory_space<vmem>>, vector<4x1xf32>
    %237 = vector.broadcast %236 : vector<4x1xf32> to vector<4x160xf32>
    %238 = arith.addf %235, %237 : vector<4x160xf32>
    %cst_118 = arith.constant 0.000000e+00 : f32
    %239 = vector.broadcast %cst_118 : f32 to vector<4x160xf32>
    %240 = arith.maximumf %238, %239 : vector<4x160xf32>
    %c0_119 = arith.constant 0 : index
    %c0_120 = arith.constant 0 : index
    %241 = vector.load %arg16[%c0_119, %c0_120] : memref<4x160xf32, #tpu.memory_space<vmem>>, vector<4x160xf32>
    tpu.vector_store %arg16[%c0_119, %c0_120], %240 {strides = array<i32>} : memref<4x160xf32, #tpu.memory_space<vmem>>, vector<4x160xf32>,
    return
  }
}

module attributes {stable_mosaic.version = 11 : i64} {
  func.func @_gru_stack_kernel(%arg0: memref<160x4xf32, #tpu.memory_space<vmem>>, %arg1: memref<4x24xf32, #tpu.memory_space<vmem>>, %arg2: memref<8x24xf32, #tpu.memory_space<vmem>>, %arg3: memref<1x24xf32, #tpu.memory_space<vmem>>, %arg4: memref<1x24xf32, #tpu.memory_space<vmem>>, %arg5: memref<8x24xf32, #tpu.memory_space<vmem>>, %arg6: memref<8x24xf32, #tpu.memory_space<vmem>>, %arg7: memref<1x24xf32, #tpu.memory_space<vmem>>, %arg8: memref<1x24xf32, #tpu.memory_space<vmem>>, %arg9: memref<160x8xf32, #tpu.memory_space<vmem>>, %arg10: memref<2x8xf32, #tpu.memory_space<vmem>>, %arg11: memref<160x24xf32, #tpu.memory_space<vmem>>) attributes {dimension_semantics = [], scalar_prefetch = 0 : i64, scratch_operands = 1 : i64, tpu.core_type = #tpu.core_type<tc>} {
    %c0 = arith.constant 0 : index
    %c0_0 = arith.constant 0 : index
    %0 = vector.load %arg0[%c0, %c0_0] : memref<160x4xf32, #tpu.memory_space<vmem>>, vector<160x4xf32>
    %c0_1 = arith.constant 0 : index
    %c0_2 = arith.constant 0 : index
    %1 = vector.load %arg1[%c0_1, %c0_2] : memref<4x24xf32, #tpu.memory_space<vmem>>, vector<4x24xf32>
    %cst = arith.constant dense<0.000000e+00> : vector<160x24xf32>
    %2 = tpu.matmul %0, %1, %cst {dimension_numbers = #tpu.dot_dimension_numbers<[1], [0], [0], [1], [0, 0, 1, 1], [], []>} : vector<160x4xf32>, vector<4x24xf32>, vector<160x24xf32> -> vector<160x24xf32>
    %c0_3 = arith.constant 0 : index
    %c0_4 = arith.constant 0 : index
    %3 = vector.load %arg3[%c0_3, %c0_4] : memref<1x24xf32, #tpu.memory_space<vmem>>, vector<1x24xf32>
    %4 = vector.broadcast %3 : vector<1x24xf32> to vector<160x24xf32>
    %5 = arith.addf %2, %4 : vector<160x24xf32>
    %c0_5 = arith.constant 0 : index
    %c0_6 = arith.constant 0 : index
    %6 = vector.load %arg11[%c0_5, %c0_6] : memref<160x24xf32, #tpu.memory_space<vmem>>, vector<160x24xf32>
    tpu.vector_store %arg11[%c0_5, %c0_6], %5 {strides = array<i32>} : memref<160x24xf32, #tpu.memory_space<vmem>>, vector<160x24xf32>,
    %c0_7 = arith.constant 0 : index
    %c0_8 = arith.constant 0 : index
    %7 = vector.load %arg2[%c0_7, %c0_8] : memref<8x24xf32, #tpu.memory_space<vmem>>, vector<8x24xf32>
    %c0_9 = arith.constant 0 : index
    %c0_10 = arith.constant 0 : index
    %8 = vector.load %arg4[%c0_9, %c0_10] : memref<1x24xf32, #tpu.memory_space<vmem>>, vector<1x24xf32>
    %cst_11 = arith.constant 0.000000e+00 : f32
    %9 = vector.broadcast %cst_11 : f32 to vector<1x8xf32>
    %c0_i32 = arith.constant 0 : i32
    %c40_i32 = arith.constant 40 : i32
    %10 = arith.addi %c0_i32, %c40_i32 : i32
    %c1_i32 = arith.constant 1 : i32
    %11 = scf.for %arg12 = %c0_i32 to %10 step %c1_i32 iter_args(%arg13 = %9) -> (vector<1x8xf32>)  : i32 {
      %c4_i32 = arith.constant 4 : i32
      %26 = arith.muli %arg12, %c4_i32 : i32
      %c0_i32_34 = arith.constant 0 : i32
      %27 = arith.addi %26, %c0_i32_34 : i32
      %c1_i32_35 = arith.constant 1 : i32
      %28 = arith.muli %27, %c1_i32_35 : i32
      %29 = arith.index_cast %28 : i32 to index
      %c0_36 = arith.constant 0 : index
      %30 = vector.load %arg11[%29, %c0_36] : memref<160x24xf32, #tpu.memory_space<vmem>>, vector<1x24xf32>
      %cst_37 = arith.constant dense<0.000000e+00> : vector<1x24xf32>
      %31 = tpu.matmul %arg13, %7, %cst_37 {dimension_numbers = #tpu.dot_dimension_numbers<[1], [0], [0], [1], [0, 0, 1, 1], [], []>} : vector<1x8xf32>, vector<8x24xf32>, vector<1x24xf32> -> vector<1x24xf32>
      %32 = arith.addf %31, %8 : vector<1x24xf32>
      %33 = vector.extract_strided_slice %30 {offsets = [0, 0], sizes = [1, 8], strides = [1, 1]} : vector<1x24xf32> to vector<1x8xf32>
      %34 = vector.extract_strided_slice %32 {offsets = [0, 0], sizes = [1, 8], strides = [1, 1]} : vector<1x24xf32> to vector<1x8xf32>
      %35 = arith.addf %33, %34 : vector<1x8xf32>
      %36 = arith.negf %35 : vector<1x8xf32>
      %37 = math.exp %36 : vector<1x8xf32>
      %cst_38 = arith.constant 1.000000e+00 : f32
      %38 = vector.broadcast %cst_38 : f32 to vector<1x8xf32>
      %39 = arith.addf %38, %37 : vector<1x8xf32>
      %40 = arith.divf %38, %39 : vector<1x8xf32>
      %41 = vector.extract_strided_slice %30 {offsets = [0, 8], sizes = [1, 8], strides = [1, 1]} : vector<1x24xf32> to vector<1x8xf32>
      %42 = vector.extract_strided_slice %32 {offsets = [0, 8], sizes = [1, 8], strides = [1, 1]} : vector<1x24xf32> to vector<1x8xf32>
      %43 = arith.addf %41, %42 : vector<1x8xf32>
      %44 = arith.negf %43 : vector<1x8xf32>
      %45 = math.exp %44 : vector<1x8xf32>
      %cst_39 = arith.constant 1.000000e+00 : f32
      %46 = vector.broadcast %cst_39 : f32 to vector<1x8xf32>
      %47 = arith.addf %46, %45 : vector<1x8xf32>
      %48 = arith.divf %46, %47 : vector<1x8xf32>
      %49 = vector.extract_strided_slice %30 {offsets = [0, 16], sizes = [1, 8], strides = [1, 1]} : vector<1x24xf32> to vector<1x8xf32>
      %50 = vector.extract_strided_slice %32 {offsets = [0, 16], sizes = [1, 8], strides = [1, 1]} : vector<1x24xf32> to vector<1x8xf32>
      %51 = arith.mulf %40, %50 : vector<1x8xf32>
      %52 = arith.addf %49, %51 : vector<1x8xf32>
      %53 = math.tanh %52 : vector<1x8xf32>
      %cst_40 = arith.constant 1.000000e+00 : f32
      %54 = vector.broadcast %cst_40 : f32 to vector<1x8xf32>
      %55 = arith.subf %54, %48 : vector<1x8xf32>
      %56 = arith.mulf %55, %53 : vector<1x8xf32>
      %57 = arith.mulf %48, %arg13 : vector<1x8xf32>
      %58 = arith.addf %56, %57 : vector<1x8xf32>
      %c1_i32_41 = arith.constant 1 : i32
      %59 = arith.muli %27, %c1_i32_41 : i32
      %60 = arith.index_cast %59 : i32 to index
      %c0_42 = arith.constant 0 : index
      %61 = vector.load %arg9[%60, %c0_42] : memref<160x8xf32, #tpu.memory_space<vmem>>, vector<1x8xf32>
      tpu.vector_store %arg9[%60, %c0_42], %58 {strides = array<i32>} : memref<160x8xf32, #tpu.memory_space<vmem>>, vector<1x8xf32>,
      %c4_i32_43 = arith.constant 4 : i32
      %62 = arith.muli %arg12, %c4_i32_43 : i32
      %c1_i32_44 = arith.constant 1 : i32
      %63 = arith.addi %62, %c1_i32_44 : i32
      %c1_i32_45 = arith.constant 1 : i32
      %64 = arith.muli %63, %c1_i32_45 : i32
      %65 = arith.index_cast %64 : i32 to index
      %c0_46 = arith.constant 0 : index
      %66 = vector.load %arg11[%65, %c0_46] : memref<160x24xf32, #tpu.memory_space<vmem>>, vector<1x24xf32>
      %cst_47 = arith.constant dense<0.000000e+00> : vector<1x24xf32>
      %67 = tpu.matmul %58, %7, %cst_47 {dimension_numbers = #tpu.dot_dimension_numbers<[1], [0], [0], [1], [0, 0, 1, 1], [], []>} : vector<1x8xf32>, vector<8x24xf32>, vector<1x24xf32> -> vector<1x24xf32>
      %68 = arith.addf %67, %8 : vector<1x24xf32>
      %69 = vector.extract_strided_slice %66 {offsets = [0, 0], sizes = [1, 8], strides = [1, 1]} : vector<1x24xf32> to vector<1x8xf32>
      %70 = vector.extract_strided_slice %68 {offsets = [0, 0], sizes = [1, 8], strides = [1, 1]} : vector<1x24xf32> to vector<1x8xf32>
      %71 = arith.addf %69, %70 : vector<1x8xf32>
      %72 = arith.negf %71 : vector<1x8xf32>
      %73 = math.exp %72 : vector<1x8xf32>
      %cst_48 = arith.constant 1.000000e+00 : f32
      %74 = vector.broadcast %cst_48 : f32 to vector<1x8xf32>
      %75 = arith.addf %74, %73 : vector<1x8xf32>
      %76 = arith.divf %74, %75 : vector<1x8xf32>
      %77 = vector.extract_strided_slice %66 {offsets = [0, 8], sizes = [1, 8], strides = [1, 1]} : vector<1x24xf32> to vector<1x8xf32>
      %78 = vector.extract_strided_slice %68 {offsets = [0, 8], sizes = [1, 8], strides = [1, 1]} : vector<1x24xf32> to vector<1x8xf32>
      %79 = arith.addf %77, %78 : vector<1x8xf32>
      %80 = arith.negf %79 : vector<1x8xf32>
      %81 = math.exp %80 : vector<1x8xf32>
      %cst_49 = arith.constant 1.000000e+00 : f32
      %82 = vector.broadcast %cst_49 : f32 to vector<1x8xf32>
      %83 = arith.addf %82, %81 : vector<1x8xf32>
      %84 = arith.divf %82, %83 : vector<1x8xf32>
      %85 = vector.extract_strided_slice %66 {offsets = [0, 16], sizes = [1, 8], strides = [1, 1]} : vector<1x24xf32> to vector<1x8xf32>
      %86 = vector.extract_strided_slice %68 {offsets = [0, 16], sizes = [1, 8], strides = [1, 1]} : vector<1x24xf32> to vector<1x8xf32>
      %87 = arith.mulf %76, %86 : vector<1x8xf32>
      %88 = arith.addf %85, %87 : vector<1x8xf32>
      %89 = math.tanh %88 : vector<1x8xf32>
      %cst_50 = arith.constant 1.000000e+00 : f32
      %90 = vector.broadcast %cst_50 : f32 to vector<1x8xf32>
      %91 = arith.subf %90, %84 : vector<1x8xf32>
      %92 = arith.mulf %91, %89 : vector<1x8xf32>
      %93 = arith.mulf %84, %58 : vector<1x8xf32>
      %94 = arith.addf %92, %93 : vector<1x8xf32>
      %c1_i32_51 = arith.constant 1 : i32
      %95 = arith.muli %63, %c1_i32_51 : i32
      %96 = arith.index_cast %95 : i32 to index
      %c0_52 = arith.constant 0 : index
      %97 = vector.load %arg9[%96, %c0_52] : memref<160x8xf32, #tpu.memory_space<vmem>>, vector<1x8xf32>
      tpu.vector_store %arg9[%96, %c0_52], %94 {strides = array<i32>} : memref<160x8xf32, #tpu.memory_space<vmem>>, vector<1x8xf32>,
      %c4_i32_53 = arith.constant 4 : i32
      %98 = arith.muli %arg12, %c4_i32_53 : i32
      %c2_i32 = arith.constant 2 : i32
      %99 = arith.addi %98, %c2_i32 : i32
      %c1_i32_54 = arith.constant 1 : i32
      %100 = arith.muli %99, %c1_i32_54 : i32
      %101 = arith.index_cast %100 : i32 to index
      %c0_55 = arith.constant 0 : index
      %102 = vector.load %arg11[%101, %c0_55] : memref<160x24xf32, #tpu.memory_space<vmem>>, vector<1x24xf32>
      %cst_56 = arith.constant dense<0.000000e+00> : vector<1x24xf32>
      %103 = tpu.matmul %94, %7, %cst_56 {dimension_numbers = #tpu.dot_dimension_numbers<[1], [0], [0], [1], [0, 0, 1, 1], [], []>} : vector<1x8xf32>, vector<8x24xf32>, vector<1x24xf32> -> vector<1x24xf32>
      %104 = arith.addf %103, %8 : vector<1x24xf32>
      %105 = vector.extract_strided_slice %102 {offsets = [0, 0], sizes = [1, 8], strides = [1, 1]} : vector<1x24xf32> to vector<1x8xf32>
      %106 = vector.extract_strided_slice %104 {offsets = [0, 0], sizes = [1, 8], strides = [1, 1]} : vector<1x24xf32> to vector<1x8xf32>
      %107 = arith.addf %105, %106 : vector<1x8xf32>
      %108 = arith.negf %107 : vector<1x8xf32>
      %109 = math.exp %108 : vector<1x8xf32>
      %cst_57 = arith.constant 1.000000e+00 : f32
      %110 = vector.broadcast %cst_57 : f32 to vector<1x8xf32>
      %111 = arith.addf %110, %109 : vector<1x8xf32>
      %112 = arith.divf %110, %111 : vector<1x8xf32>
      %113 = vector.extract_strided_slice %102 {offsets = [0, 8], sizes = [1, 8], strides = [1, 1]} : vector<1x24xf32> to vector<1x8xf32>
      %114 = vector.extract_strided_slice %104 {offsets = [0, 8], sizes = [1, 8], strides = [1, 1]} : vector<1x24xf32> to vector<1x8xf32>
      %115 = arith.addf %113, %114 : vector<1x8xf32>
      %116 = arith.negf %115 : vector<1x8xf32>
      %117 = math.exp %116 : vector<1x8xf32>
      %cst_58 = arith.constant 1.000000e+00 : f32
      %118 = vector.broadcast %cst_58 : f32 to vector<1x8xf32>
      %119 = arith.addf %118, %117 : vector<1x8xf32>
      %120 = arith.divf %118, %119 : vector<1x8xf32>
      %121 = vector.extract_strided_slice %102 {offsets = [0, 16], sizes = [1, 8], strides = [1, 1]} : vector<1x24xf32> to vector<1x8xf32>
      %122 = vector.extract_strided_slice %104 {offsets = [0, 16], sizes = [1, 8], strides = [1, 1]} : vector<1x24xf32> to vector<1x8xf32>
      %123 = arith.mulf %112, %122 : vector<1x8xf32>
      %124 = arith.addf %121, %123 : vector<1x8xf32>
      %125 = math.tanh %124 : vector<1x8xf32>
      %cst_59 = arith.constant 1.000000e+00 : f32
      %126 = vector.broadcast %cst_59 : f32 to vector<1x8xf32>
      %127 = arith.subf %126, %120 : vector<1x8xf32>
      %128 = arith.mulf %127, %125 : vector<1x8xf32>
      %129 = arith.mulf %120, %94 : vector<1x8xf32>
      %130 = arith.addf %128, %129 : vector<1x8xf32>
      %c1_i32_60 = arith.constant 1 : i32
      %131 = arith.muli %99, %c1_i32_60 : i32
      %132 = arith.index_cast %131 : i32 to index
      %c0_61 = arith.constant 0 : index
      %133 = vector.load %arg9[%132, %c0_61] : memref<160x8xf32, #tpu.memory_space<vmem>>, vector<1x8xf32>
      tpu.vector_store %arg9[%132, %c0_61], %130 {strides = array<i32>} : memref<160x8xf32, #tpu.memory_space<vmem>>, vector<1x8xf32>,
      %c4_i32_62 = arith.constant 4 : i32
      %134 = arith.muli %arg12, %c4_i32_62 : i32
      %c3_i32 = arith.constant 3 : i32
      %135 = arith.addi %134, %c3_i32 : i32
      %c1_i32_63 = arith.constant 1 : i32
      %136 = arith.muli %135, %c1_i32_63 : i32
      %137 = arith.index_cast %136 : i32 to index
      %c0_64 = arith.constant 0 : index
      %138 = vector.load %arg11[%137, %c0_64] : memref<160x24xf32, #tpu.memory_space<vmem>>, vector<1x24xf32>
      %cst_65 = arith.constant dense<0.000000e+00> : vector<1x24xf32>
      %139 = tpu.matmul %130, %7, %cst_65 {dimension_numbers = #tpu.dot_dimension_numbers<[1], [0], [0], [1], [0, 0, 1, 1], [], []>} : vector<1x8xf32>, vector<8x24xf32>, vector<1x24xf32> -> vector<1x24xf32>
      %140 = arith.addf %139, %8 : vector<1x24xf32>
      %141 = vector.extract_strided_slice %138 {offsets = [0, 0], sizes = [1, 8], strides = [1, 1]} : vector<1x24xf32> to vector<1x8xf32>
      %142 = vector.extract_strided_slice %140 {offsets = [0, 0], sizes = [1, 8], strides = [1, 1]} : vector<1x24xf32> to vector<1x8xf32>
      %143 = arith.addf %141, %142 : vector<1x8xf32>
      %144 = arith.negf %143 : vector<1x8xf32>
      %145 = math.exp %144 : vector<1x8xf32>
      %cst_66 = arith.constant 1.000000e+00 : f32
      %146 = vector.broadcast %cst_66 : f32 to vector<1x8xf32>
      %147 = arith.addf %146, %145 : vector<1x8xf32>
      %148 = arith.divf %146, %147 : vector<1x8xf32>
      %149 = vector.extract_strided_slice %138 {offsets = [0, 8], sizes = [1, 8], strides = [1, 1]} : vector<1x24xf32> to vector<1x8xf32>
      %150 = vector.extract_strided_slice %140 {offsets = [0, 8], sizes = [1, 8], strides = [1, 1]} : vector<1x24xf32> to vector<1x8xf32>
      %151 = arith.addf %149, %150 : vector<1x8xf32>
      %152 = arith.negf %151 : vector<1x8xf32>
      %153 = math.exp %152 : vector<1x8xf32>
      %cst_67 = arith.constant 1.000000e+00 : f32
      %154 = vector.broadcast %cst_67 : f32 to vector<1x8xf32>
      %155 = arith.addf %154, %153 : vector<1x8xf32>
      %156 = arith.divf %154, %155 : vector<1x8xf32>
      %157 = vector.extract_strided_slice %138 {offsets = [0, 16], sizes = [1, 8], strides = [1, 1]} : vector<1x24xf32> to vector<1x8xf32>
      %158 = vector.extract_strided_slice %140 {offsets = [0, 16], sizes = [1, 8], strides = [1, 1]} : vector<1x24xf32> to vector<1x8xf32>
      %159 = arith.mulf %148, %158 : vector<1x8xf32>
      %160 = arith.addf %157, %159 : vector<1x8xf32>
      %161 = math.tanh %160 : vector<1x8xf32>
      %cst_68 = arith.constant 1.000000e+00 : f32
      %162 = vector.broadcast %cst_68 : f32 to vector<1x8xf32>
      %163 = arith.subf %162, %156 : vector<1x8xf32>
      %164 = arith.mulf %163, %161 : vector<1x8xf32>
      %165 = arith.mulf %156, %130 : vector<1x8xf32>
      %166 = arith.addf %164, %165 : vector<1x8xf32>
      %c1_i32_69 = arith.constant 1 : i32
      %167 = arith.muli %135, %c1_i32_69 : i32
      %168 = arith.index_cast %167 : i32 to index
      %c0_70 = arith.constant 0 : index
      %169 = vector.load %arg9[%168, %c0_70] : memref<160x8xf32, #tpu.memory_space<vmem>>, vector<1x8xf32>
      tpu.vector_store %arg9[%168, %c0_70], %166 {strides = array<i32>} : memref<160x8xf32, #tpu.memory_space<vmem>>, vector<1x8xf32>,
      scf.yield %166 : vector<1x8xf32>
    }
    %c40_i32_12 = arith.constant 40 : i32
    %c0_13 = arith.constant 0 : index
    %c0_14 = arith.constant 0 : index
    %12 = vector.load %arg10[%c0_13, %c0_14] : memref<2x8xf32, #tpu.memory_space<vmem>>, vector<1x8xf32>
    tpu.vector_store %arg10[%c0_13, %c0_14], %11 {strides = array<i32>} : memref<2x8xf32, #tpu.memory_space<vmem>>, vector<1x8xf32>,
    %c0_15 = arith.constant 0 : index
    %c0_16 = arith.constant 0 : index
    %13 = vector.load %arg9[%c0_15, %c0_16] : memref<160x8xf32, #tpu.memory_space<vmem>>, vector<160x8xf32>
    %c0_17 = arith.constant 0 : index
    %c0_18 = arith.constant 0 : index
    %14 = vector.load %arg5[%c0_17, %c0_18] : memref<8x24xf32, #tpu.memory_space<vmem>>, vector<8x24xf32>
    %cst_19 = arith.constant dense<0.000000e+00> : vector<160x24xf32>
    %15 = tpu.matmul %13, %14, %cst_19 {dimension_numbers = #tpu.dot_dimension_numbers<[1], [0], [0], [1], [0, 0, 1, 1], [], []>} : vector<160x8xf32>, vector<8x24xf32>, vector<160x24xf32> -> vector<160x24xf32>
    %c0_20 = arith.constant 0 : index
    %c0_21 = arith.constant 0 : index
    %16 = vector.load %arg7[%c0_20, %c0_21] : memref<1x24xf32, #tpu.memory_space<vmem>>, vector<1x24xf32>
    %17 = vector.broadcast %16 : vector<1x24xf32> to vector<160x24xf32>
    %18 = arith.addf %15, %17 : vector<160x24xf32>
    %c0_22 = arith.constant 0 : index
    %c0_23 = arith.constant 0 : index
    %19 = vector.load %arg11[%c0_22, %c0_23] : memref<160x24xf32, #tpu.memory_space<vmem>>, vector<160x24xf32>
    tpu.vector_store %arg11[%c0_22, %c0_23], %18 {strides = array<i32>} : memref<160x24xf32, #tpu.memory_space<vmem>>, vector<160x24xf32>,
    %c0_24 = arith.constant 0 : index
    %c0_25 = arith.constant 0 : index
    %20 = vector.load %arg6[%c0_24, %c0_25] : memref<8x24xf32, #tpu.memory_space<vmem>>, vector<8x24xf32>
    %c0_26 = arith.constant 0 : index
    %c0_27 = arith.constant 0 : index
    %21 = vector.load %arg8[%c0_26, %c0_27] : memref<1x24xf32, #tpu.memory_space<vmem>>, vector<1x24xf32>
    %cst_28 = arith.constant 0.000000e+00 : f32
    %22 = vector.broadcast %cst_28 : f32 to vector<1x8xf32>
    %c0_i32_29 = arith.constant 0 : i32
    %c40_i32_30 = arith.constant 40 : i32
    %23 = arith.addi %c0_i32_29, %c40_i32_30 : i32
    %c1_i32_31 = arith.constant 1 : i32
    %24 = scf.for %arg12 = %c0_i32_29 to %23 step %c1_i32_31 iter_args(%arg13 = %22) -> (vector<1x8xf32>)  : i32 {
      %c4_i32 = arith.constant 4 : i32
      %26 = arith.muli %arg12, %c4_i32 : i32
      %c0_i32_34 = arith.constant 0 : i32
      %27 = arith.addi %26, %c0_i32_34 : i32
      %c1_i32_35 = arith.constant 1 : i32
      %28 = arith.muli %27, %c1_i32_35 : i32
      %29 = arith.index_cast %28 : i32 to index
      %c0_36 = arith.constant 0 : index
      %30 = vector.load %arg11[%29, %c0_36] : memref<160x24xf32, #tpu.memory_space<vmem>>, vector<1x24xf32>
      %cst_37 = arith.constant dense<0.000000e+00> : vector<1x24xf32>
      %31 = tpu.matmul %arg13, %20, %cst_37 {dimension_numbers = #tpu.dot_dimension_numbers<[1], [0], [0], [1], [0, 0, 1, 1], [], []>} : vector<1x8xf32>, vector<8x24xf32>, vector<1x24xf32> -> vector<1x24xf32>
      %32 = arith.addf %31, %21 : vector<1x24xf32>
      %33 = vector.extract_strided_slice %30 {offsets = [0, 0], sizes = [1, 8], strides = [1, 1]} : vector<1x24xf32> to vector<1x8xf32>
      %34 = vector.extract_strided_slice %32 {offsets = [0, 0], sizes = [1, 8], strides = [1, 1]} : vector<1x24xf32> to vector<1x8xf32>
      %35 = arith.addf %33, %34 : vector<1x8xf32>
      %36 = arith.negf %35 : vector<1x8xf32>
      %37 = math.exp %36 : vector<1x8xf32>
      %cst_38 = arith.constant 1.000000e+00 : f32
      %38 = vector.broadcast %cst_38 : f32 to vector<1x8xf32>
      %39 = arith.addf %38, %37 : vector<1x8xf32>
      %40 = arith.divf %38, %39 : vector<1x8xf32>
      %41 = vector.extract_strided_slice %30 {offsets = [0, 8], sizes = [1, 8], strides = [1, 1]} : vector<1x24xf32> to vector<1x8xf32>
      %42 = vector.extract_strided_slice %32 {offsets = [0, 8], sizes = [1, 8], strides = [1, 1]} : vector<1x24xf32> to vector<1x8xf32>
      %43 = arith.addf %41, %42 : vector<1x8xf32>
      %44 = arith.negf %43 : vector<1x8xf32>
      %45 = math.exp %44 : vector<1x8xf32>
      %cst_39 = arith.constant 1.000000e+00 : f32
      %46 = vector.broadcast %cst_39 : f32 to vector<1x8xf32>
      %47 = arith.addf %46, %45 : vector<1x8xf32>
      %48 = arith.divf %46, %47 : vector<1x8xf32>
      %49 = vector.extract_strided_slice %30 {offsets = [0, 16], sizes = [1, 8], strides = [1, 1]} : vector<1x24xf32> to vector<1x8xf32>
      %50 = vector.extract_strided_slice %32 {offsets = [0, 16], sizes = [1, 8], strides = [1, 1]} : vector<1x24xf32> to vector<1x8xf32>
      %51 = arith.mulf %40, %50 : vector<1x8xf32>
      %52 = arith.addf %49, %51 : vector<1x8xf32>
      %53 = math.tanh %52 : vector<1x8xf32>
      %cst_40 = arith.constant 1.000000e+00 : f32
      %54 = vector.broadcast %cst_40 : f32 to vector<1x8xf32>
      %55 = arith.subf %54, %48 : vector<1x8xf32>
      %56 = arith.mulf %55, %53 : vector<1x8xf32>
      %57 = arith.mulf %48, %arg13 : vector<1x8xf32>
      %58 = arith.addf %56, %57 : vector<1x8xf32>
      %c1_i32_41 = arith.constant 1 : i32
      %59 = arith.muli %27, %c1_i32_41 : i32
      %60 = arith.index_cast %59 : i32 to index
      %c0_42 = arith.constant 0 : index
      %61 = vector.load %arg9[%60, %c0_42] : memref<160x8xf32, #tpu.memory_space<vmem>>, vector<1x8xf32>
      tpu.vector_store %arg9[%60, %c0_42], %58 {strides = array<i32>} : memref<160x8xf32, #tpu.memory_space<vmem>>, vector<1x8xf32>,
      %c4_i32_43 = arith.constant 4 : i32
      %62 = arith.muli %arg12, %c4_i32_43 : i32
      %c1_i32_44 = arith.constant 1 : i32
      %63 = arith.addi %62, %c1_i32_44 : i32
      %c1_i32_45 = arith.constant 1 : i32
      %64 = arith.muli %63, %c1_i32_45 : i32
      %65 = arith.index_cast %64 : i32 to index
      %c0_46 = arith.constant 0 : index
      %66 = vector.load %arg11[%65, %c0_46] : memref<160x24xf32, #tpu.memory_space<vmem>>, vector<1x24xf32>
      %cst_47 = arith.constant dense<0.000000e+00> : vector<1x24xf32>
      %67 = tpu.matmul %58, %20, %cst_47 {dimension_numbers = #tpu.dot_dimension_numbers<[1], [0], [0], [1], [0, 0, 1, 1], [], []>} : vector<1x8xf32>, vector<8x24xf32>, vector<1x24xf32> -> vector<1x24xf32>
      %68 = arith.addf %67, %21 : vector<1x24xf32>
      %69 = vector.extract_strided_slice %66 {offsets = [0, 0], sizes = [1, 8], strides = [1, 1]} : vector<1x24xf32> to vector<1x8xf32>
      %70 = vector.extract_strided_slice %68 {offsets = [0, 0], sizes = [1, 8], strides = [1, 1]} : vector<1x24xf32> to vector<1x8xf32>
      %71 = arith.addf %69, %70 : vector<1x8xf32>
      %72 = arith.negf %71 : vector<1x8xf32>
      %73 = math.exp %72 : vector<1x8xf32>
      %cst_48 = arith.constant 1.000000e+00 : f32
      %74 = vector.broadcast %cst_48 : f32 to vector<1x8xf32>
      %75 = arith.addf %74, %73 : vector<1x8xf32>
      %76 = arith.divf %74, %75 : vector<1x8xf32>
      %77 = vector.extract_strided_slice %66 {offsets = [0, 8], sizes = [1, 8], strides = [1, 1]} : vector<1x24xf32> to vector<1x8xf32>
      %78 = vector.extract_strided_slice %68 {offsets = [0, 8], sizes = [1, 8], strides = [1, 1]} : vector<1x24xf32> to vector<1x8xf32>
      %79 = arith.addf %77, %78 : vector<1x8xf32>
      %80 = arith.negf %79 : vector<1x8xf32>
      %81 = math.exp %80 : vector<1x8xf32>
      %cst_49 = arith.constant 1.000000e+00 : f32
      %82 = vector.broadcast %cst_49 : f32 to vector<1x8xf32>
      %83 = arith.addf %82, %81 : vector<1x8xf32>
      %84 = arith.divf %82, %83 : vector<1x8xf32>
      %85 = vector.extract_strided_slice %66 {offsets = [0, 16], sizes = [1, 8], strides = [1, 1]} : vector<1x24xf32> to vector<1x8xf32>
      %86 = vector.extract_strided_slice %68 {offsets = [0, 16], sizes = [1, 8], strides = [1, 1]} : vector<1x24xf32> to vector<1x8xf32>
      %87 = arith.mulf %76, %86 : vector<1x8xf32>
      %88 = arith.addf %85, %87 : vector<1x8xf32>
      %89 = math.tanh %88 : vector<1x8xf32>
      %cst_50 = arith.constant 1.000000e+00 : f32
      %90 = vector.broadcast %cst_50 : f32 to vector<1x8xf32>
      %91 = arith.subf %90, %84 : vector<1x8xf32>
      %92 = arith.mulf %91, %89 : vector<1x8xf32>
      %93 = arith.mulf %84, %58 : vector<1x8xf32>
      %94 = arith.addf %92, %93 : vector<1x8xf32>
      %c1_i32_51 = arith.constant 1 : i32
      %95 = arith.muli %63, %c1_i32_51 : i32
      %96 = arith.index_cast %95 : i32 to index
      %c0_52 = arith.constant 0 : index
      %97 = vector.load %arg9[%96, %c0_52] : memref<160x8xf32, #tpu.memory_space<vmem>>, vector<1x8xf32>
      tpu.vector_store %arg9[%96, %c0_52], %94 {strides = array<i32>} : memref<160x8xf32, #tpu.memory_space<vmem>>, vector<1x8xf32>,
      %c4_i32_53 = arith.constant 4 : i32
      %98 = arith.muli %arg12, %c4_i32_53 : i32
      %c2_i32 = arith.constant 2 : i32
      %99 = arith.addi %98, %c2_i32 : i32
      %c1_i32_54 = arith.constant 1 : i32
      %100 = arith.muli %99, %c1_i32_54 : i32
      %101 = arith.index_cast %100 : i32 to index
      %c0_55 = arith.constant 0 : index
      %102 = vector.load %arg11[%101, %c0_55] : memref<160x24xf32, #tpu.memory_space<vmem>>, vector<1x24xf32>
      %cst_56 = arith.constant dense<0.000000e+00> : vector<1x24xf32>
      %103 = tpu.matmul %94, %20, %cst_56 {dimension_numbers = #tpu.dot_dimension_numbers<[1], [0], [0], [1], [0, 0, 1, 1], [], []>} : vector<1x8xf32>, vector<8x24xf32>, vector<1x24xf32> -> vector<1x24xf32>
      %104 = arith.addf %103, %21 : vector<1x24xf32>
      %105 = vector.extract_strided_slice %102 {offsets = [0, 0], sizes = [1, 8], strides = [1, 1]} : vector<1x24xf32> to vector<1x8xf32>
      %106 = vector.extract_strided_slice %104 {offsets = [0, 0], sizes = [1, 8], strides = [1, 1]} : vector<1x24xf32> to vector<1x8xf32>
      %107 = arith.addf %105, %106 : vector<1x8xf32>
      %108 = arith.negf %107 : vector<1x8xf32>
      %109 = math.exp %108 : vector<1x8xf32>
      %cst_57 = arith.constant 1.000000e+00 : f32
      %110 = vector.broadcast %cst_57 : f32 to vector<1x8xf32>
      %111 = arith.addf %110, %109 : vector<1x8xf32>
      %112 = arith.divf %110, %111 : vector<1x8xf32>
      %113 = vector.extract_strided_slice %102 {offsets = [0, 8], sizes = [1, 8], strides = [1, 1]} : vector<1x24xf32> to vector<1x8xf32>
      %114 = vector.extract_strided_slice %104 {offsets = [0, 8], sizes = [1, 8], strides = [1, 1]} : vector<1x24xf32> to vector<1x8xf32>
      %115 = arith.addf %113, %114 : vector<1x8xf32>
      %116 = arith.negf %115 : vector<1x8xf32>
      %117 = math.exp %116 : vector<1x8xf32>
      %cst_58 = arith.constant 1.000000e+00 : f32
      %118 = vector.broadcast %cst_58 : f32 to vector<1x8xf32>
      %119 = arith.addf %118, %117 : vector<1x8xf32>
      %120 = arith.divf %118, %119 : vector<1x8xf32>
      %121 = vector.extract_strided_slice %102 {offsets = [0, 16], sizes = [1, 8], strides = [1, 1]} : vector<1x24xf32> to vector<1x8xf32>
      %122 = vector.extract_strided_slice %104 {offsets = [0, 16], sizes = [1, 8], strides = [1, 1]} : vector<1x24xf32> to vector<1x8xf32>
      %123 = arith.mulf %112, %122 : vector<1x8xf32>
      %124 = arith.addf %121, %123 : vector<1x8xf32>
      %125 = math.tanh %124 : vector<1x8xf32>
      %cst_59 = arith.constant 1.000000e+00 : f32
      %126 = vector.broadcast %cst_59 : f32 to vector<1x8xf32>
      %127 = arith.subf %126, %120 : vector<1x8xf32>
      %128 = arith.mulf %127, %125 : vector<1x8xf32>
      %129 = arith.mulf %120, %94 : vector<1x8xf32>
      %130 = arith.addf %128, %129 : vector<1x8xf32>
      %c1_i32_60 = arith.constant 1 : i32
      %131 = arith.muli %99, %c1_i32_60 : i32
      %132 = arith.index_cast %131 : i32 to index
      %c0_61 = arith.constant 0 : index
      %133 = vector.load %arg9[%132, %c0_61] : memref<160x8xf32, #tpu.memory_space<vmem>>, vector<1x8xf32>
      tpu.vector_store %arg9[%132, %c0_61], %130 {strides = array<i32>} : memref<160x8xf32, #tpu.memory_space<vmem>>, vector<1x8xf32>,
      %c4_i32_62 = arith.constant 4 : i32
      %134 = arith.muli %arg12, %c4_i32_62 : i32
      %c3_i32 = arith.constant 3 : i32
      %135 = arith.addi %134, %c3_i32 : i32
      %c1_i32_63 = arith.constant 1 : i32
      %136 = arith.muli %135, %c1_i32_63 : i32
      %137 = arith.index_cast %136 : i32 to index
      %c0_64 = arith.constant 0 : index
      %138 = vector.load %arg11[%137, %c0_64] : memref<160x24xf32, #tpu.memory_space<vmem>>, vector<1x24xf32>
      %cst_65 = arith.constant dense<0.000000e+00> : vector<1x24xf32>
      %139 = tpu.matmul %130, %20, %cst_65 {dimension_numbers = #tpu.dot_dimension_numbers<[1], [0], [0], [1], [0, 0, 1, 1], [], []>} : vector<1x8xf32>, vector<8x24xf32>, vector<1x24xf32> -> vector<1x24xf32>
      %140 = arith.addf %139, %21 : vector<1x24xf32>
      %141 = vector.extract_strided_slice %138 {offsets = [0, 0], sizes = [1, 8], strides = [1, 1]} : vector<1x24xf32> to vector<1x8xf32>
      %142 = vector.extract_strided_slice %140 {offsets = [0, 0], sizes = [1, 8], strides = [1, 1]} : vector<1x24xf32> to vector<1x8xf32>
      %143 = arith.addf %141, %142 : vector<1x8xf32>
      %144 = arith.negf %143 : vector<1x8xf32>
      %145 = math.exp %144 : vector<1x8xf32>
      %cst_66 = arith.constant 1.000000e+00 : f32
      %146 = vector.broadcast %cst_66 : f32 to vector<1x8xf32>
      %147 = arith.addf %146, %145 : vector<1x8xf32>
      %148 = arith.divf %146, %147 : vector<1x8xf32>
      %149 = vector.extract_strided_slice %138 {offsets = [0, 8], sizes = [1, 8], strides = [1, 1]} : vector<1x24xf32> to vector<1x8xf32>
      %150 = vector.extract_strided_slice %140 {offsets = [0, 8], sizes = [1, 8], strides = [1, 1]} : vector<1x24xf32> to vector<1x8xf32>
      %151 = arith.addf %149, %150 : vector<1x8xf32>
      %152 = arith.negf %151 : vector<1x8xf32>
      %153 = math.exp %152 : vector<1x8xf32>
      %cst_67 = arith.constant 1.000000e+00 : f32
      %154 = vector.broadcast %cst_67 : f32 to vector<1x8xf32>
      %155 = arith.addf %154, %153 : vector<1x8xf32>
      %156 = arith.divf %154, %155 : vector<1x8xf32>
      %157 = vector.extract_strided_slice %138 {offsets = [0, 16], sizes = [1, 8], strides = [1, 1]} : vector<1x24xf32> to vector<1x8xf32>
      %158 = vector.extract_strided_slice %140 {offsets = [0, 16], sizes = [1, 8], strides = [1, 1]} : vector<1x24xf32> to vector<1x8xf32>
      %159 = arith.mulf %148, %158 : vector<1x8xf32>
      %160 = arith.addf %157, %159 : vector<1x8xf32>
      %161 = math.tanh %160 : vector<1x8xf32>
      %cst_68 = arith.constant 1.000000e+00 : f32
      %162 = vector.broadcast %cst_68 : f32 to vector<1x8xf32>
      %163 = arith.subf %162, %156 : vector<1x8xf32>
      %164 = arith.mulf %163, %161 : vector<1x8xf32>
      %165 = arith.mulf %156, %130 : vector<1x8xf32>
      %166 = arith.addf %164, %165 : vector<1x8xf32>
      %c1_i32_69 = arith.constant 1 : i32
      %167 = arith.muli %135, %c1_i32_69 : i32
      %168 = arith.index_cast %167 : i32 to index
      %c0_70 = arith.constant 0 : index
      %169 = vector.load %arg9[%168, %c0_70] : memref<160x8xf32, #tpu.memory_space<vmem>>, vector<1x8xf32>
      tpu.vector_store %arg9[%168, %c0_70], %166 {strides = array<i32>} : memref<160x8xf32, #tpu.memory_space<vmem>>, vector<1x8xf32>,
      scf.yield %166 : vector<1x8xf32>
    }
    %c40_i32_32 = arith.constant 40 : i32
    %c1 = arith.constant 1 : index
    %c0_33 = arith.constant 0 : index
    %25 = vector.load %arg10[%c1, %c0_33] : memref<2x8xf32, #tpu.memory_space<vmem>>, vector<1x8xf32>
    tpu.vector_store %arg10[%c1, %c0_33], %24 {strides = array<i32>} : memref<2x8xf32, #tpu.memory_space<vmem>>, vector<1x8xf32>,
    return
  }
}

</mosaic_0001>

<llo_original>
// kernel: n_vcnn_gru_forward.4
$region0: #{n_vcnn_gru_forward.4}
  #allocation0 [shape = 'u32[]', space=smem, size = 0x4, offset = 0x4, fixed_abs, tag = 'smem constant byte address 0x4 - core index']
  #allocation1 [shape = 'u32[144,128]{1,0:T(1,128)}', space=vmem, size = 0x12000, scoped, tag = 'internal scratch']
  #allocation2 [shape = 'f32[160,24]{1,0:T(8,128)}', space=vmem, size = 0x14000, scoped, tag = 'scratch operand']
  %s0 = inlined_call_operand.vmem [shape: f32[160,4], index: 0, kind: input, shape index: {}]
  %s1 = inlined_call_operand.hbm [shape: f32[4,24], index: 1, kind: input, shape index: {}]
  %s2 = inlined_call_operand.hbm [shape: f32[8,24], index: 2, kind: input, shape index: {}]
  %s3 = inlined_call_operand.hbm [shape: f32[1,24], index: 3, kind: input, shape index: {}]
  %s4 = inlined_call_operand.hbm [shape: f32[1,24], index: 4, kind: input, shape index: {}]
  %s5 = inlined_call_operand.hbm [shape: f32[8,24], index: 5, kind: input, shape index: {}]
  %s6 = inlined_call_operand.hbm [shape: f32[8,24], index: 6, kind: input, shape index: {}]
  %s7 = inlined_call_operand.hbm [shape: f32[1,24], index: 7, kind: input, shape index: {}]
  %s8 = inlined_call_operand.hbm [shape: f32[1,24], index: 8, kind: input, shape index: {}]
  %s9 = inlined_call_operand.vmem [shape: f32[160,8], index: 9, kind: output, shape index: {0}]
  %s10 = inlined_call_operand.hbm [shape: f32[2,8], index: 10, kind: output, shape index: {1}]
  %11 = xla_tuple %s9, %s10
  %s12 = sld [smem:[#allocation0]]
  $region100: #{n_vcnn_gru_forward.4} parent=0
    _
  %s14 = ssub.s32 1, %s12
  %s15 = scalar_select 0, %s14, %s12
  $region1: #{n_vcnn_gru_forward.4} parent=0
    #allocation3 [shape = 'u8[2048]{0}', space=vmem, size = 0x800, scoped, tag = 'input window, operand 1, single buffered']
    #allocation4 [shape = 's32[1]{0}', space=sflag, size = 0x4, scoped, tag = 'scoped memory for n_vcnn_gru_forward.4']
    #allocation5 [shape = 's32[1]{0}', space=sflag, size = 0x4, scoped, tag = 'scoped memory for n_vcnn_gru_forward.4']
    #allocation6 [shape = 'u8[4096]{0}', space=vmem, size = 0x1000, scoped, tag = 'input window, operand 2, single buffered']
    #allocation7 [shape = 's32[1]{0}', space=sflag, size = 0x4, scoped, tag = 'scoped memory for n_vcnn_gru_forward.4']
    #allocation8 [shape = 'u8[512]{0}', space=vmem, size = 0x400, scoped, tag = 'input window, operand 3, single buffered']
    #allocation9 [shape = 'u8[512]{0}', space=vmem, size = 0x400, scoped, tag = 'input window, operand 4, single buffered']
    #allocation10 [shape = 's32[1]{0}', space=sflag, size = 0x4, scoped, tag = 'scoped memory for n_vcnn_gru_forward.4']
    #allocation11 [shape = 'u8[4096]{0}', space=vmem, size = 0x1000, scoped, tag = 'input window, operand 5, single buffered']
    #allocation12 [shape = 'u8[4096]{0}', space=vmem, size = 0x1000, scoped, tag = 'input window, operand 6, single buffered']
    #allocation13 [shape = 's32[1]{0}', space=sflag, size = 0x4, scoped, tag = 'scoped memory for n_vcnn_gru_forward.4']
    #allocation14 [shape = 'u8[512]{0}', space=vmem, size = 0x400, scoped, tag = 'input window, operand 7, single buffered']
    #allocation15 [shape = 'u8[512]{0}', space=vmem, size = 0x400, scoped, tag = 'input window, operand 8, single buffered']
    #allocation16 [shape = 's32[1]{0}', space=sflag, size = 0x4, scoped, tag = 'scoped memory for n_vcnn_gru_forward.4']
    #allocation17 [shape = 'u8[1024]{0}', space=vmem, size = 0x400, scoped, tag = 'output window, operand 1, single buffered']
    %16 = vsyncpa [#allocation4], 0
    %17 = vsyncpa [#allocation7], 0
    %18 = vsyncpa [#allocation10], 0
    %19 = vsyncpa [#allocation13], 0
    %20 = vsyncpa [#allocation16], 0
    %21 = vsyncpa [#allocation5], 0
    // Predicated region
    $region2: #{n_vcnn_gru_forward.4} parent=1 // pred_check
      _
    $region3: #{n_vcnn_gru_forward.4} parent=1 // pred_check_branch
      %23 = sbr.rel (0) target = $region5
    $region4: #{n_vcnn_gru_forward.4} parent=1 // pred_region
      _
    $region5: #{n_vcnn_gru_forward.4} parent=1 // pred_fallthru
      _
    // Predicated region
    $region6: #{n_vcnn_gru_forward.4} parent=1 // pred_check
      _
    $region7: #{n_vcnn_gru_forward.4} parent=1 // pred_check_branch
      %25 = sbr.rel (0) target = $region9
    $region8: #{n_vcnn_gru_forward.4} parent=1 // pred_region
      %s27 = ssub.s32 64, 64
      %28 = vsyncadd [#allocation4], %s27
      %s30 = sshll.u32 [#allocation3], 4
      %s31 = int_to_ptr.vmem [resolvable:$true] %s30
      %33 = dma.hbm_to_vmem [thread:$0]  %s1, 64, %s31, [#allocation4]
    $region9: #{n_vcnn_gru_forward.4} parent=1 // pred_fallthru
      _
    // Predicated region
    $region10: #{n_vcnn_gru_forward.4} parent=1 // pred_check
      _
    $region11: #{n_vcnn_gru_forward.4} parent=1 // pred_check_branch
      %35 = sbr.rel (0) target = $region13
    $region12: #{n_vcnn_gru_forward.4} parent=1 // pred_region
      %s37 = ssub.s32 128, 128
      %38 = vsyncadd [#allocation7], %s37
      %s40 = sshll.u32 [#allocation6], 4
      %s41 = int_to_ptr.vmem [resolvable:$true] %s40
      %43 = dma.hbm_to_vmem [thread:$0]  %s2, 128, %s41, [#allocation7]
    $region13: #{n_vcnn_gru_forward.4} parent=1 // pred_fallthru
      _
    // Predicated region
    $region14: #{n_vcnn_gru_forward.4} parent=1 // pred_check
      _
    $region15: #{n_vcnn_gru_forward.4} parent=1 // pred_check_branch
      %45 = sbr.rel (0) target = $region17
    $region16: #{n_vcnn_gru_forward.4} parent=1 // pred_region
      %s47 = ssub.s32 16, 16
      %48 = vsyncadd [#allocation7], %s47
      %s50 = sshll.u32 [#allocation8], 4
      %s51 = int_to_ptr.vmem [resolvable:$true] %s50
      %53 = dma.hbm_to_vmem [thread:$0]  %s3, 16, %s51, [#allocation7]
    $region17: #{n_vcnn_gru_forward.4} parent=1 // pred_fallthru
      _
    // Predicated region
    $region18: #{n_vcnn_gru_forward.4} parent=1 // pred_check
      _
    $region19: #{n_vcnn_gru_forward.4} parent=1 // pred_check_branch
      %55 = sbr.rel (0) target = $region21
    $region20: #{n_vcnn_gru_forward.4} parent=1 // pred_region
      %s57 = ssub.s32 16, 16
      %58 = vsyncadd [#allocation10], %s57
      %s60 = sshll.u32 [#allocation9], 4
      %s61 = int_to_ptr.vmem [resolvable:$true] %s60
      %63 = dma.hbm_to_vmem [thread:$0]  %s4, 16, %s61, [#allocation10]
    $region21: #{n_vcnn_gru_forward.4} parent=1 // pred_fallthru
      _
    // Predicated region
    $region22: #{n_vcnn_gru_forward.4} parent=1 // pred_check
      _
    $region23: #{n_vcnn_gru_forward.4} parent=1 // pred_check_branch
      %65 = sbr.rel (0) target = $region25
    $region24: #{n_vcnn_gru_forward.4} parent=1 // pred_region
      %s67 = ssub.s32 128, 128
      %68 = vsyncadd [#allocation10], %s67
      %s70 = sshll.u32 [#allocation11], 4
      %s71 = int_to_ptr.vmem [resolvable:$true] %s70
      %73 = dma.hbm_to_vmem [thread:$0]  %s5, 128, %s71, [#allocation10]
    $region25: #{n_vcnn_gru_forward.4} parent=1 // pred_fallthru
      _
    // Predicated region
    $region26: #{n_vcnn_gru_forward.4} parent=1 // pred_check
      _
    $region27: #{n_vcnn_gru_forward.4} parent=1 // pred_check_branch
      %75 = sbr.rel (0) target = $region29
    $region28: #{n_vcnn_gru_forward.4} parent=1 // pred_region
      %s77 = ssub.s32 128, 128
      %78 = vsyncadd [#allocation13], %s77
      %s80 = sshll.u32 [#allocation12], 4
      %s81 = int_to_ptr.vmem [resolvable:$true] %s80
      %83 = dma.hbm_to_vmem [thread:$0]  %s6, 128, %s81, [#allocation13]
    $region29: #{n_vcnn_gru_forward.4} parent=1 // pred_fallthru
      _
    // Predicated region
    $region30: #{n_vcnn_gru_forward.4} parent=1 // pred_check
      _
    $region31: #{n_vcnn_gru_forward.4} parent=1 // pred_check_branch
      %85 = sbr.rel (0) target = $region33
    $region32: #{n_vcnn_gru_forward.4} parent=1 // pred_region
      %s87 = ssub.s32 16, 16
      %88 = vsyncadd [#allocation13], %s87
      %s90 = sshll.u32 [#allocation14], 4
      %s91 = int_to_ptr.vmem [resolvable:$true] %s90
      %93 = dma.hbm_to_vmem [thread:$0]  %s7, 16, %s91, [#allocation13]
    $region33: #{n_vcnn_gru_forward.4} parent=1 // pred_fallthru
      _
    // Predicated region
    $region34: #{n_vcnn_gru_forward.4} parent=1 // pred_check
      _
    $region35: #{n_vcnn_gru_forward.4} parent=1 // pred_check_branch
      %95 = sbr.rel (0) target = $region37
    $region36: #{n_vcnn_gru_forward.4} parent=1 // pred_region
      %s97 = ssub.s32 16, 16
      %98 = vsyncadd [#allocation16], %s97
      %s100 = sshll.u32 [#allocation15], 4
      %s101 = int_to_ptr.vmem [resolvable:$true] %s100
      %103 = dma.hbm_to_vmem [thread:$0]  %s8, 16, %s101, [#allocation16]
    $region37: #{n_vcnn_gru_forward.4} parent=1 // pred_fallthru
      _
    // Predicated region
    $region38: #{n_vcnn_gru_forward.4} parent=1 // pred_check
      _
    $region39: #{n_vcnn_gru_forward.4} parent=1 // pred_check_branch
      %105 = sbr.rel (0) target = $region41
    $region40: #{n_vcnn_gru_forward.4} parent=1 // pred_region
      %106 = dma.done [#allocation4], 64
    $region41: #{n_vcnn_gru_forward.4} parent=1 // pred_fallthru
      _
    // Predicated region
    $region42: #{n_vcnn_gru_forward.4} parent=1 // pred_check
      _
    $region43: #{n_vcnn_gru_forward.4} parent=1 // pred_check_branch
      %108 = sbr.rel (0) target = $region45
    $region44: #{n_vcnn_gru_forward.4} parent=1 // pred_region
      %109 = dma.done [#allocation7], 128
    $region45: #{n_vcnn_gru_forward.4} parent=1 // pred_fallthru
      _
    // Predicated region
    $region46: #{n_vcnn_gru_forward.4} parent=1 // pred_check
      _
    $region47: #{n_vcnn_gru_forward.4} parent=1 // pred_check_branch
      %111 = sbr.rel (0) target = $region49
    $region48: #{n_vcnn_gru_forward.4} parent=1 // pred_region
      %112 = dma.done [#allocation7], 16
    $region49: #{n_vcnn_gru_forward.4} parent=1 // pred_fallthru
      _
    // Predicated region
    $region50: #{n_vcnn_gru_forward.4} parent=1 // pred_check
      _
    $region51: #{n_vcnn_gru_forward.4} parent=1 // pred_check_branch
      %114 = sbr.rel (0) target = $region53
    $region52: #{n_vcnn_gru_forward.4} parent=1 // pred_region
      %115 = dma.done [#allocation10], 16
    $region53: #{n_vcnn_gru_forward.4} parent=1 // pred_fallthru
      _
    // Predicated region
    $region54: #{n_vcnn_gru_forward.4} parent=1 // pred_check
      _
    $region55: #{n_vcnn_gru_forward.4} parent=1 // pred_check_branch
      %117 = sbr.rel (0) target = $region57
    $region56: #{n_vcnn_gru_forward.4} parent=1 // pred_region
      %118 = dma.done [#allocation10], 128
    $region57: #{n_vcnn_gru_forward.4} parent=1 // pred_fallthru
      _
    // Predicated region
    $region58: #{n_vcnn_gru_forward.4} parent=1 // pred_check
      _
    $region59: #{n_vcnn_gru_forward.4} parent=1 // pred_check_branch
      %120 = sbr.rel (0) target = $region61
    $region60: #{n_vcnn_gru_forward.4} parent=1 // pred_region
      %121 = dma.done [#allocation13], 128
    $region61: #{n_vcnn_gru_forward.4} parent=1 // pred_fallthru
      _
    // Predicated region
    $region62: #{n_vcnn_gru_forward.4} parent=1 // pred_check
      _
    $region63: #{n_vcnn_gru_forward.4} parent=1 // pred_check_branch
      %123 = sbr.rel (0) target = $region65
    $region64: #{n_vcnn_gru_forward.4} parent=1 // pred_region
      %124 = dma.done [#allocation13], 16
    $region65: #{n_vcnn_gru_forward.4} parent=1 // pred_fallthru
      _
    // Predicated region
    $region66: #{n_vcnn_gru_forward.4} parent=1 // pred_check
      _
    $region67: #{n_vcnn_gru_forward.4} parent=1 // pred_check_branch
      %126 = sbr.rel (0) target = $region69
    $region68: #{n_vcnn_gru_forward.4} parent=1 // pred_region
      %127 = dma.done [#allocation16], 16
    $region69: #{n_vcnn_gru_forward.4} parent=1 // pred_fallthru
      _
    %v128 = vld [vmem:[%s0] sm:$0xff]
    %v129 = vld [vmem:[%s0 + $0x8] sm:$0xff]
    %v130 = vld [vmem:[%s0 + $0x10] sm:$0xff]
    %v131 = vld [vmem:[%s0 + $0x18] sm:$0xff]
    %v132 = vld [vmem:[%s0 + $0x20] sm:$0xff]
    %v133 = vld [vmem:[%s0 + $0x28] sm:$0xff]
    %v134 = vld [vmem:[%s0 + $0x30] sm:$0xff]
    %v135 = vld [vmem:[%s0 + $0x38] sm:$0xff]
    %v136 = vld [vmem:[%s0 + $0x40] sm:$0xff]
    %v137 = vld [vmem:[%s0 + $0x48] sm:$0xff]
    %v138 = vld [vmem:[%s0 + $0x50] sm:$0xff]
    %v139 = vld [vmem:[%s0 + $0x58] sm:$0xff]
    %v140 = vld [vmem:[%s0 + $0x60] sm:$0xff]
    %v141 = vld [vmem:[%s0 + $0x68] sm:$0xff]
    %v142 = vld [vmem:[%s0 + $0x70] sm:$0xff]
    %v143 = vld [vmem:[%s0 + $0x78] sm:$0xff]
    %v144 = vld [vmem:[%s0 + $0x80] sm:$0xff]
    %v145 = vld [vmem:[%s0 + $0x88] sm:$0xff]
    %v146 = vld [vmem:[%s0 + $0x90] sm:$0xff]
    %v147 = vld [vmem:[%s0 + $0x98] sm:$0xff]
    %v148 = vld [vmem:[#allocation3] sm:$0xf]
    %v149 = vld [vmem:[#allocation8] sm:$0x1]
    %v151 = vlaneseq
    %v152 = vshrl.u32 %v151, 7
    %v153 = vsub.s32 0, %v152
    %v154 = vrot.slane %v149, %v153
    %vm156 = vcmask 31744
    %v158 = vsel %vm156, %v128, 0
    %v161 = vsel %vm156, %v129, 0
    %v164 = vsel %vm156, %v130, 0
    %v167 = vsel %vm156, %v131, 0
    %v170 = vsel %vm156, %v132, 0
    %v173 = vsel %vm156, %v133, 0
    %v176 = vsel %vm156, %v134, 0
    %v179 = vsel %vm156, %v135, 0
    %v182 = vsel %vm156, %v136, 0
    %v185 = vsel %vm156, %v137, 0
    %v188 = vsel %vm156, %v138, 0
    %v191 = vsel %vm156, %v139, 0
    %v194 = vsel %vm156, %v140, 0
    %v197 = vsel %vm156, %v141, 0
    %v200 = vsel %vm156, %v142, 0
    %v203 = vsel %vm156, %v143, 0
    %v206 = vsel %vm156, %v144, 0
    %v209 = vsel %vm156, %v145, 0
    %v212 = vsel %vm156, %v146, 0
    %v215 = vsel %vm156, %v147, 0
    %vm217 = vcmask 1043456
    %v219 = vsel %vm217, %v148, 0
    %221 = vmatprep.subr.mxu0 0.0
    %222 = vmatpush1.msra.mxu0 0.0
    %223 = vmatprep.subr.mxu0 0.0
    %224 = vmatpush1.msra.mxu0 0.0
    %225 = vmatprep.subr.mxu0 0.0
    %226 = vmatpush1.msra.mxu0 0.0
    %227 = vmatprep.subr.mxu0 0.0
    %228 = vmatpush1.msra.mxu0 0.0
    %229 = vmatprep.subr.mxu0 0.0
    %230 = vmatpush1.msra.mxu0 0.0
    %231 = vmatprep.subr.mxu0 0.0
    %232 = vmatpush1.msra.mxu0 0.0
    %233 = vmatprep.subr.mxu0 0.0
    %234 = vmatpush1.msra.mxu0 0.0
    %235 = vmatprep.subr.mxu0 0.0
    %236 = vmatpush1.msra.mxu0 0.0
    %237 = vmatprep.subr.mxu0 0.0
    %238 = vmatpush1.msra.mxu0 0.0
    %239 = vmatprep.subr.mxu0 0.0
    %240 = vmatpush1.msra.mxu0 0.0
    %241 = vmatprep.subr.mxu0 0.0
    %242 = vmatpush1.msra.mxu0 0.0
    %243 = vmatprep.subr.mxu0 0.0
    %244 = vmatpush1.msra.mxu0 0.0
    %245 = vmatprep.subr.mxu0 0.0
    %246 = vmatpush1.msra.mxu0 0.0
    %247 = vmatprep.subr.mxu0 0.0
    %248 = vmatpush1.msra.mxu0 0.0
    %249 = vmatprep.subr.mxu0 0.0
    %250 = vmatpush1.msra.mxu0 0.0
    %251 = vmatprep.subr.mxu0 0.0
    %252 = vmatpush1.msra.mxu0 %v219
    %253 = vmatprep.subr.mxu0 0.0
    %254 = vmatpush2.msra.mxu0 0.0
    %255 = vmatprep.subr.mxu0 0.0
    %256 = vmatpush2.msra.mxu0 0.0
    %257 = vmatprep.subr.mxu0 0.0
    %258 = vmatpush2.msra.mxu0 0.0
    %259 = vmatprep.subr.mxu0 0.0
    %260 = vmatpush2.msra.mxu0 0.0
    %261 = vmatprep.subr.mxu0 0.0
    %262 = vmatpush2.msra.mxu0 0.0
    %263 = vmatprep.subr.mxu0 0.0
    %264 = vmatpush2.msra.mxu0 0.0
    %265 = vmatprep.subr.mxu0 0.0
    %266 = vmatpush2.msra.mxu0 0.0
    %267 = vmatprep.subr.mxu0 0.0
    %268 = vmatpush2.msra.mxu0 0.0
    %269 = vmatprep.subr.mxu0 0.0
    %270 = vmatpush2.msra.mxu0 0.0
    %271 = vmatprep.subr.mxu0 0.0
    %272 = vmatpush2.msra.mxu0 0.0
    %273 = vmatprep.subr.mxu0 0.0
    %274 = vmatpush2.msra.mxu0 0.0
    %275 = vmatprep.subr.mxu0 0.0
    %276 = vmatpush2.msra.mxu0 0.0
    %277 = vmatprep.subr.mxu0 0.0
    %278 = vmatpush2.msra.mxu0 0.0
    %279 = vmatprep.subr.mxu0 0.0
    %280 = vmatpush2.msra.mxu0 0.0
    %281 = vmatprep.subr.mxu0 0.0
    %282 = vmatpush2.msra.mxu0 0.0
    %283 = vmatprep.subr.mxu0 0.0
    %284 = vmatpush2.msra.mxu0 0.0
    %285 = vmatprep.mubr.f32.mxu0 0.0
    %286 = vmatmul.mubr.f32.gmra.mxu0 %v158
    %v287 = vpop.f32.mrf.mxu0
    %v288 = vadd.f32 %v154, %v287
    %v289 = vpop.f32.mrf.mxu0
    %290 = vmatprep.mubr.f32.mxu0 0.0
    %291 = vmatmul.mubr.f32.gmra.mxu0 %v161
    %v292 = vpop.f32.mrf.mxu0
    %v293 = vadd.f32 %v154, %v292
    %v294 = vpop.f32.mrf.mxu0
    %295 = vmatprep.mubr.f32.mxu0 0.0
    %296 = vmatmul.mubr.f32.gmra.mxu0 %v164
    %v297 = vpop.f32.mrf.mxu0
    %v298 = vadd.f32 %v154, %v297
    %v299 = vpop.f32.mrf.mxu0
    %300 = vmatprep.mubr.f32.mxu0 0.0
    %301 = vmatmul.mubr.f32.gmra.mxu0 %v167
    %v302 = vpop.f32.mrf.mxu0
    %v303 = vadd.f32 %v154, %v302
    %v304 = vpop.f32.mrf.mxu0
    %305 = vmatprep.mubr.f32.mxu0 0.0
    %306 = vmatmul.mubr.f32.gmra.mxu0 %v170
    %v307 = vpop.f32.mrf.mxu0
    %v308 = vadd.f32 %v154, %v307
    %v309 = vpop.f32.mrf.mxu0
    %310 = vmatprep.mubr.f32.mxu0 0.0
    %311 = vmatmul.mubr.f32.gmra.mxu0 %v173
    %v312 = vpop.f32.mrf.mxu0
    %v313 = vadd.f32 %v154, %v312
    %v314 = vpop.f32.mrf.mxu0
    %315 = vmatprep.mubr.f32.mxu0 0.0
    %316 = vmatmul.mubr.f32.gmra.mxu0 %v176
    %v317 = vpop.f32.mrf.mxu0
    %v318 = vadd.f32 %v154, %v317
    %v319 = vpop.f32.mrf.mxu0
    %320 = vmatprep.mubr.f32.mxu0 0.0
    %321 = vmatmul.mubr.f32.gmra.mxu0 %v179
    %v322 = vpop.f32.mrf.mxu0
    %v323 = vadd.f32 %v154, %v322
    %v324 = vpop.f32.mrf.mxu0
    %325 = vmatprep.mubr.f32.mxu0 0.0
    %326 = vmatmul.mubr.f32.gmra.mxu0 %v182
    %v327 = vpop.f32.mrf.mxu0
    %v328 = vadd.f32 %v154, %v327
    %v329 = vpop.f32.mrf.mxu0
    %330 = vmatprep.mubr.f32.mxu0 0.0
    %331 = vmatmul.mubr.f32.gmra.mxu0 %v185
    %v332 = vpop.f32.mrf.mxu0
    %v333 = vadd.f32 %v154, %v332
    %v334 = vpop.f32.mrf.mxu0
    %335 = vmatprep.mubr.f32.mxu0 0.0
    %336 = vmatmul.mubr.f32.gmra.mxu0 %v188
    %v337 = vpop.f32.mrf.mxu0
    %v338 = vadd.f32 %v154, %v337
    %v339 = vpop.f32.mrf.mxu0
    %340 = vmatprep.mubr.f32.mxu0 0.0
    %341 = vmatmul.mubr.f32.gmra.mxu0 %v191
    %v342 = vpop.f32.mrf.mxu0
    %v343 = vadd.f32 %v154, %v342
    %v344 = vpop.f32.mrf.mxu0
    %345 = vmatprep.mubr.f32.mxu0 0.0
    %346 = vmatmul.mubr.f32.gmra.mxu0 %v194
    %v347 = vpop.f32.mrf.mxu0
    %v348 = vadd.f32 %v154, %v347
    %v349 = vpop.f32.mrf.mxu0
    %350 = vmatprep.mubr.f32.mxu0 0.0
    %351 = vmatmul.mubr.f32.gmra.mxu0 %v197
    %v352 = vpop.f32.mrf.mxu0
    %v353 = vadd.f32 %v154, %v352
    %v354 = vpop.f32.mrf.mxu0
    %355 = vmatprep.mubr.f32.mxu0 0.0
    %356 = vmatmul.mubr.f32.gmra.mxu0 %v200
    %v357 = vpop.f32.mrf.mxu0
    %v358 = vadd.f32 %v154, %v357
    %v359 = vpop.f32.mrf.mxu0
    %360 = vmatprep.mubr.f32.mxu0 0.0
    %361 = vmatmul.mubr.f32.gmra.mxu0 %v203
    %v362 = vpop.f32.mrf.mxu0
    %v363 = vadd.f32 %v154, %v362
    %v364 = vpop.f32.mrf.mxu0
    %365 = vmatprep.mubr.f32.mxu0 0.0
    %366 = vmatmul.mubr.f32.gmra.mxu0 %v206
    %v367 = vpop.f32.mrf.mxu0
    %v368 = vadd.f32 %v154, %v367
    %v369 = vpop.f32.mrf.mxu0
    %370 = vmatprep.mubr.f32.mxu0 0.0
    %371 = vmatmul.mubr.f32.gmra.mxu0 %v209
    %v372 = vpop.f32.mrf.mxu0
    %v373 = vadd.f32 %v154, %v372
    %v374 = vpop.f32.mrf.mxu0
    %375 = vmatprep.mubr.f32.mxu0 0.0
    %376 = vmatmul.mubr.f32.gmra.mxu0 %v212
    %v377 = vpop.f32.mrf.mxu0
    %v378 = vadd.f32 %v154, %v377
    %v379 = vpop.f32.mrf.mxu0
    %380 = vmatprep.mubr.f32.mxu0 0.0
    %381 = vmatmul.mubr.f32.gmra.mxu0 %v215
    %v382 = vpop.f32.mrf.mxu0
    %v383 = vadd.f32 %v154, %v382
    %v384 = vpop.f32.mrf.mxu0
    %385 = vdwg.mxu0
    %vm386 = vcmask 195584
    %387 = vst.msk [vmem:[#allocation2] sm:$0xff] %vm386, %v288
    %388 = vst.msk [vmem:[#allocation2 + $0x8] sm:$0xff] %vm386, %v293
    %389 = vst.msk [vmem:[#allocation2 + $0x10] sm:$0xff] %vm386, %v298
    %390 = vst.msk [vmem:[#allocation2 + $0x18] sm:$0xff] %vm386, %v303
    %391 = vst.msk [vmem:[#allocation2 + $0x20] sm:$0xff] %vm386, %v308
    %392 = vst.msk [vmem:[#allocation2 + $0x28] sm:$0xff] %vm386, %v313
    %393 = vst.msk [vmem:[#allocation2 + $0x30] sm:$0xff] %vm386, %v318
    %394 = vst.msk [vmem:[#allocation2 + $0x38] sm:$0xff] %vm386, %v323
    %395 = vst.msk [vmem:[#allocation2 + $0x40] sm:$0xff] %vm386, %v328
    %396 = vst.msk [vmem:[#allocation2 + $0x48] sm:$0xff] %vm386, %v333
    %397 = vst.msk [vmem:[#allocation2 + $0x50] sm:$0xff] %vm386, %v338
    %398 = vst.msk [vmem:[#allocation2 + $0x58] sm:$0xff] %vm386, %v343
    %399 = vst.msk [vmem:[#allocation2 + $0x60] sm:$0xff] %vm386, %v348
    %400 = vst.msk [vmem:[#allocation2 + $0x68] sm:$0xff] %vm386, %v353
    %401 = vst.msk [vmem:[#allocation2 + $0x70] sm:$0xff] %vm386, %v358
    %402 = vst.msk [vmem:[#allocation2 + $0x78] sm:$0xff] %vm386, %v363
    %403 = vst.msk [vmem:[#allocation2 + $0x80] sm:$0xff] %vm386, %v368
    %404 = vst.msk [vmem:[#allocation2 + $0x88] sm:$0xff] %vm386, %v373
    %405 = vst.msk [vmem:[#allocation2 + $0x90] sm:$0xff] %vm386, %v378
    %406 = vst.msk [vmem:[#allocation2 + $0x98] sm:$0xff] %vm386, %v383
    %v407 = vld [vmem:[#allocation6] sm:$0xff]
    %v408 = vld [vmem:[#allocation9] sm:$0x1]
    loop: start=0, step=1, limit=40
    $region70: #{n_vcnn_gru_forward.4} parent=1 // loop_pre_header
      _
    $region71: #{n_vcnn_gru_forward.4} parent=1 // loop_header
      %s410 = sphi 0, %s414
      %p411 = scmp.ge.s32.totalorder %s410, 40
      %v415 = vphi 0.0, %v842
    $region72: #{n_vcnn_gru_forward.4} parent=1 // loop_header_branch
      %413 = sbr.rel (%p411) target = $region76
    $region73: #{n_vcnn_gru_forward.4} parent=1 // loop_body
      %s416 = smul.u32 %s410, 4
      %s417 = scalar_lea.vmem [#allocation2], %s416
      %v418 = vld [vmem:[%s417] sm:$0x1]
      %420 = vrot.lane.b32.xlu0 %v415, 120
      %v421 = vpop.permute.xlu0 %420
      %vm422 = vcmask 64512
      %v423 = vsel %vm422, %v421, 0
      %425 = vmatprep.subr.mxu0 0.0
      %426 = vmatpush1.msra.mxu0 0.0
      %427 = vmatprep.subr.mxu0 0.0
      %428 = vmatpush1.msra.mxu0 0.0
      %429 = vmatprep.subr.mxu0 0.0
      %430 = vmatpush1.msra.mxu0 0.0
      %431 = vmatprep.subr.mxu0 0.0
      %432 = vmatpush1.msra.mxu0 0.0
      %433 = vmatprep.subr.mxu0 0.0
      %434 = vmatpush1.msra.mxu0 0.0
      %435 = vmatprep.subr.mxu0 0.0
      %436 = vmatpush1.msra.mxu0 0.0
      %437 = vmatprep.subr.mxu0 0.0
      %438 = vmatpush1.msra.mxu0 0.0
      %439 = vmatprep.subr.mxu0 0.0
      %440 = vmatpush1.msra.mxu0 0.0
      %441 = vmatprep.subr.mxu0 0.0
      %442 = vmatpush1.msra.mxu0 0.0
      %443 = vmatprep.subr.mxu0 0.0
      %444 = vmatpush1.msra.mxu0 0.0
      %445 = vmatprep.subr.mxu0 0.0
      %446 = vmatpush1.msra.mxu0 0.0
      %447 = vmatprep.subr.mxu0 0.0
      %448 = vmatpush1.msra.mxu0 0.0
      %449 = vmatprep.subr.mxu0 0.0
      %450 = vmatpush1.msra.mxu0 0.0
      %451 = vmatprep.subr.mxu0 0.0
      %452 = vmatpush1.msra.mxu0 0.0
      %453 = vmatprep.subr.mxu0 0.0
      %454 = vmatpush1.msra.mxu0 0.0
      %455 = vmatprep.subr.mxu0 0.0
      %456 = vmatpush1.msra.mxu0 %v407
      %457 = vmatprep.subr.mxu0 0.0
      %458 = vmatpush2.msra.mxu0 0.0
      %459 = vmatprep.subr.mxu0 0.0
      %460 = vmatpush2.msra.mxu0 0.0
      %461 = vmatprep.subr.mxu0 0.0
      %462 = vmatpush2.msra.mxu0 0.0
      %463 = vmatprep.subr.mxu0 0.0
      %464 = vmatpush2.msra.mxu0 0.0
      %465 = vmatprep.subr.mxu0 0.0
      %466 = vmatpush2.msra.mxu0 0.0
      %467 = vmatprep.subr.mxu0 0.0
      %468 = vmatpush2.msra.mxu0 0.0
      %469 = vmatprep.subr.mxu0 0.0
      %470 = vmatpush2.msra.mxu0 0.0
      %471 = vmatprep.subr.mxu0 0.0
      %472 = vmatpush2.msra.mxu0 0.0
      %473 = vmatprep.subr.mxu0 0.0
      %474 = vmatpush2.msra.mxu0 0.0
      %475 = vmatprep.subr.mxu0 0.0
      %476 = vmatpush2.msra.mxu0 0.0
      %477 = vmatprep.subr.mxu0 0.0
      %478 = vmatpush2.msra.mxu0 0.0
      %479 = vmatprep.subr.mxu0 0.0
      %480 = vmatpush2.msra.mxu0 0.0
      %481 = vmatprep.subr.mxu0 0.0
      %482 = vmatpush2.msra.mxu0 0.0
      %483 = vmatprep.subr.mxu0 0.0
      %484 = vmatpush2.msra.mxu0 0.0
      %485 = vmatprep.subr.mxu0 0.0
      %486 = vmatpush2.msra.mxu0 0.0
      %487 = vmatprep.subr.mxu0 0.0
      %488 = vmatpush2.msra.mxu0 0.0
      %489 = vmatprep.mubr.f32.mxu0 0.0
      %490 = vmatmul.mubr.f32.gmra.mxu0 %v423
      %v491 = vpop.f32.mrf.mxu0
      %v492 = vadd.f32 %v408, %v491
      %v493 = vpop.f32.mrf.mxu0
      %494 = vdwg.mxu0
      %v495 = vadd.f32 %v418, %v492
      %v496 = vxor.u32 %v495, 2147483648
      %v497 = vmul.f32 %v496, 1.442695
      %v498 = vpow.pop %v497
      %v499 = vadd.f32 %v498, 1.0
      %v500 = vrcp.pop %v499
      %v501 = vmul.f32 1.0, %v500
      %503 = vrot.lane.b32.xlu0 %v492, 112
      %v504 = vpop.permute.xlu0 %503
      %v506 = vmul.f32 %v501, %v504
      %508 = vrot.lane.b32.xlu0 %v506, 16
      %v509 = vpop.permute.xlu0 %508
      %v511 = vadd.f32 %v418, %v509
      %v512 = vtanh.pop %v511
      %v513 = vsub.f32 1.0, %v501
      %515 = vrot.lane.b32.xlu0 %v512, 120
      %v516 = vpop.permute.xlu0 %515
      %v518 = vmul.f32 %v513, %v516
      %v519 = vmul.f32 %v501, %v415
      %v520 = vadd.f32 %v518, %v519
      %522 = vrot.lane.b32.xlu0 %v520, 120
      %v523 = vpop.permute.xlu0 %522
      %s525 = scalar_lea.vmem %s9, %s416
      %vm526 = vcmask 57344
      %527 = vst.msk [vmem:[%s525] sm:$0x1] %vm526, %v523
      %s528 = sadd.s32 %s416, 1
      %s529 = scalar_lea.vmem [#allocation2], %s528
      %v530 = vld [vmem:[%s529] sm:$0x1]
      %v531 = vsel %vm422, %v523, 0
      %533 = vmatprep.subr.mxu0 0.0
      %534 = vmatpush1.msra.mxu0 0.0
      %535 = vmatprep.subr.mxu0 0.0
      %536 = vmatpush1.msra.mxu0 0.0
      %537 = vmatprep.subr.mxu0 0.0
      %538 = vmatpush1.msra.mxu0 0.0
      %539 = vmatprep.subr.mxu0 0.0
      %540 = vmatpush1.msra.mxu0 0.0
      %541 = vmatprep.subr.mxu0 0.0
      %542 = vmatpush1.msra.mxu0 0.0
      %543 = vmatprep.subr.mxu0 0.0
      %544 = vmatpush1.msra.mxu0 0.0
      %545 = vmatprep.subr.mxu0 0.0
      %546 = vmatpush1.msra.mxu0 0.0
      %547 = vmatprep.subr.mxu0 0.0
      %548 = vmatpush1.msra.mxu0 0.0
      %549 = vmatprep.subr.mxu0 0.0
      %550 = vmatpush1.msra.mxu0 0.0
      %551 = vmatprep.subr.mxu0 0.0
      %552 = vmatpush1.msra.mxu0 0.0
      %553 = vmatprep.subr.mxu0 0.0
      %554 = vmatpush1.msra.mxu0 0.0
      %555 = vmatprep.subr.mxu0 0.0
      %556 = vmatpush1.msra.mxu0 0.0
      %557 = vmatprep.subr.mxu0 0.0
      %558 = vmatpush1.msra.mxu0 0.0
      %559 = vmatprep.subr.mxu0 0.0
      %560 = vmatpush1.msra.mxu0 0.0
      %561 = vmatprep.subr.mxu0 0.0
      %562 = vmatpush1.msra.mxu0 0.0
      %563 = vmatprep.subr.mxu0 0.0
      %564 = vmatpush1.msra.mxu0 %v407
      %565 = vmatprep.subr.mxu0 0.0
      %566 = vmatpush2.msra.mxu0 0.0
      %567 = vmatprep.subr.mxu0 0.0
      %568 = vmatpush2.msra.mxu0 0.0
      %569 = vmatprep.subr.mxu0 0.0
      %570 = vmatpush2.msra.mxu0 0.0
      %571 = vmatprep.subr.mxu0 0.0
      %572 = vmatpush2.msra.mxu0 0.0
      %573 = vmatprep.subr.mxu0 0.0
      %574 = vmatpush2.msra.mxu0 0.0
      %575 = vmatprep.subr.mxu0 0.0
      %576 = vmatpush2.msra.mxu0 0.0
      %577 = vmatprep.subr.mxu0 0.0
      %578 = vmatpush2.msra.mxu0 0.0
      %579 = vmatprep.subr.mxu0 0.0
      %580 = vmatpush2.msra.mxu0 0.0
      %581 = vmatprep.subr.mxu0 0.0
      %582 = vmatpush2.msra.mxu0 0.0
      %583 = vmatprep.subr.mxu0 0.0
      %584 = vmatpush2.msra.mxu0 0.0
      %585 = vmatprep.subr.mxu0 0.0
      %586 = vmatpush2.msra.mxu0 0.0
      %587 = vmatprep.subr.mxu0 0.0
      %588 = vmatpush2.msra.mxu0 0.0
      %589 = vmatprep.subr.mxu0 0.0
      %590 = vmatpush2.msra.mxu0 0.0
      %591 = vmatprep.subr.mxu0 0.0
      %592 = vmatpush2.msra.mxu0 0.0
      %593 = vmatprep.subr.mxu0 0.0
      %594 = vmatpush2.msra.mxu0 0.0
      %595 = vmatprep.subr.mxu0 0.0
      %596 = vmatpush2.msra.mxu0 0.0
      %597 = vmatprep.mubr.f32.mxu0 0.0
      %598 = vmatmul.mubr.f32.gmra.mxu0 %v531
      %v599 = vpop.f32.mrf.mxu0
      %v600 = vadd.f32 %v408, %v599
      %v601 = vpop.f32.mrf.mxu0
      %602 = vdwg.mxu0
      %v603 = vadd.f32 %v530, %v600
      %v604 = vxor.u32 %v603, 2147483648
      %v605 = vmul.f32 %v604, 1.442695
      %v606 = vpow.pop %v605
      %v607 = vadd.f32 %v606, 1.0
      %v608 = vrcp.pop %v607
      %v609 = vmul.f32 1.0, %v608
      %611 = vrot.lane.b32.xlu0 %v600, 112
      %v612 = vpop.permute.xlu0 %611
      %v614 = vmul.f32 %v609, %v612
      %616 = vrot.lane.b32.xlu0 %v614, 16
      %v617 = vpop.permute.xlu0 %616
      %v619 = vadd.f32 %v530, %v617
      %v620 = vtanh.pop %v619
      %v621 = vsub.f32 1.0, %v609
      %623 = vrot.lane.b32.xlu0 %v620, 120
      %v624 = vpop.permute.xlu0 %623
      %v626 = vmul.f32 %v621, %v624
      %v627 = vmul.f32 %v609, %v520
      %v628 = vadd.f32 %v626, %v627
      %630 = vrot.lane.b32.xlu0 %v628, 120
      %v631 = vpop.permute.xlu0 %630
      %s633 = scalar_lea.vmem %s9, %s528
      %634 = vst.msk [vmem:[%s633] sm:$0x1] %vm526, %v631
      %s635 = sadd.s32 %s416, 2
      %s636 = scalar_lea.vmem [#allocation2], %s635
      %v637 = vld [vmem:[%s636] sm:$0x1]
      %v638 = vsel %vm422, %v631, 0
      %640 = vmatprep.subr.mxu0 0.0
      %641 = vmatpush1.msra.mxu0 0.0
      %642 = vmatprep.subr.mxu0 0.0
      %643 = vmatpush1.msra.mxu0 0.0
      %644 = vmatprep.subr.mxu0 0.0
      %645 = vmatpush1.msra.mxu0 0.0
      %646 = vmatprep.subr.mxu0 0.0
      %647 = vmatpush1.msra.mxu0 0.0
      %648 = vmatprep.subr.mxu0 0.0
      %649 = vmatpush1.msra.mxu0 0.0
      %650 = vmatprep.subr.mxu0 0.0
      %651 = vmatpush1.msra.mxu0 0.0
      %652 = vmatprep.subr.mxu0 0.0
      %653 = vmatpush1.msra.mxu0 0.0
      %654 = vmatprep.subr.mxu0 0.0
      %655 = vmatpush1.msra.mxu0 0.0
      %656 = vmatprep.subr.mxu0 0.0
      %657 = vmatpush1.msra.mxu0 0.0
      %658 = vmatprep.subr.mxu0 0.0
      %659 = vmatpush1.msra.mxu0 0.0
      %660 = vmatprep.subr.mxu0 0.0
      %661 = vmatpush1.msra.mxu0 0.0
      %662 = vmatprep.subr.mxu0 0.0
      %663 = vmatpush1.msra.mxu0 0.0
      %664 = vmatprep.subr.mxu0 0.0
      %665 = vmatpush1.msra.mxu0 0.0
      %666 = vmatprep.subr.mxu0 0.0
      %667 = vmatpush1.msra.mxu0 0.0
      %668 = vmatprep.subr.mxu0 0.0
      %669 = vmatpush1.msra.mxu0 0.0
      %670 = vmatprep.subr.mxu0 0.0
      %671 = vmatpush1.msra.mxu0 %v407
      %672 = vmatprep.subr.mxu0 0.0
      %673 = vmatpush2.msra.mxu0 0.0
      %674 = vmatprep.subr.mxu0 0.0
      %675 = vmatpush2.msra.mxu0 0.0
      %676 = vmatprep.subr.mxu0 0.0
      %677 = vmatpush2.msra.mxu0 0.0
      %678 = vmatprep.subr.mxu0 0.0
      %679 = vmatpush2.msra.mxu0 0.0
      %680 = vmatprep.subr.mxu0 0.0
      %681 = vmatpush2.msra.mxu0 0.0
      %682 = vmatprep.subr.mxu0 0.0
      %683 = vmatpush2.msra.mxu0 0.0
      %684 = vmatprep.subr.mxu0 0.0
      %685 = vmatpush2.msra.mxu0 0.0
      %686 = vmatprep.subr.mxu0 0.0
      %687 = vmatpush2.msra.mxu0 0.0
      %688 = vmatprep.subr.mxu0 0.0
      %689 = vmatpush2.msra.mxu0 0.0
      %690 = vmatprep.subr.mxu0 0.0
      %691 = vmatpush2.msra.mxu0 0.0
      %692 = vmatprep.subr.mxu0 0.0
      %693 = vmatpush2.msra.mxu0 0.0
      %694 = vmatprep.subr.mxu0 0.0
      %695 = vmatpush2.msra.mxu0 0.0
      %696 = vmatprep.subr.mxu0 0.0
      %697 = vmatpush2.msra.mxu0 0.0
      %698 = vmatprep.subr.mxu0 0.0
      %699 = vmatpush2.msra.mxu0 0.0
      %700 = vmatprep.subr.mxu0 0.0
      %701 = vmatpush2.msra.mxu0 0.0
      %702 = vmatprep.subr.mxu0 0.0
      %703 = vmatpush2.msra.mxu0 0.0
      %704 = vmatprep.mubr.f32.mxu0 0.0
      %705 = vmatmul.mubr.f32.gmra.mxu0 %v638
      %v706 = vpop.f32.mrf.mxu0
      %v707 = vadd.f32 %v408, %v706
      %v708 = vpop.f32.mrf.mxu0
      %709 = vdwg.mxu0
      %v710 = vadd.f32 %v637, %v707
      %v711 = vxor.u32 %v710, 2147483648
      %v712 = vmul.f32 %v711, 1.442695
      %v713 = vpow.pop %v712
      %v714 = vadd.f32 %v713, 1.0
      %v715 = vrcp.pop %v714
      %v716 = vmul.f32 1.0, %v715
      %718 = vrot.lane.b32.xlu0 %v707, 112
      %v719 = vpop.permute.xlu0 %718
      %v721 = vmul.f32 %v716, %v719
      %723 = vrot.lane.b32.xlu0 %v721, 16
      %v724 = vpop.permute.xlu0 %723
      %v726 = vadd.f32 %v637, %v724
      %v727 = vtanh.pop %v726
      %v728 = vsub.f32 1.0, %v716
      %730 = vrot.lane.b32.xlu0 %v727, 120
      %v731 = vpop.permute.xlu0 %730
      %v733 = vmul.f32 %v728, %v731
      %v734 = vmul.f32 %v716, %v628
      %v735 = vadd.f32 %v733, %v734
      %737 = vrot.lane.b32.xlu0 %v735, 120
      %v738 = vpop.permute.xlu0 %737
      %s740 = scalar_lea.vmem %s9, %s635
      %741 = vst.msk [vmem:[%s740] sm:$0x1] %vm526, %v738
      %s742 = sadd.s32 %s416, 3
      %s743 = scalar_lea.vmem [#allocation2], %s742
      %v744 = vld [vmem:[%s743] sm:$0x1]
      %v745 = vsel %vm422, %v738, 0
      %747 = vmatprep.subr.mxu0 0.0
      %748 = vmatpush1.msra.mxu0 0.0
      %749 = vmatprep.subr.mxu0 0.0
      %750 = vmatpush1.msra.mxu0 0.0
      %751 = vmatprep.subr.mxu0 0.0
      %752 = vmatpush1.msra.mxu0 0.0
      %753 = vmatprep.subr.mxu0 0.0
      %754 = vmatpush1.msra.mxu0 0.0
      %755 = vmatprep.subr.mxu0 0.0
      %756 = vmatpush1.msra.mxu0 0.0
      %757 = vmatprep.subr.mxu0 0.0
      %758 = vmatpush1.msra.mxu0 0.0
      %759 = vmatprep.subr.mxu0 0.0
      %760 = vmatpush1.msra.mxu0 0.0
      %761 = vmatprep.subr.mxu0 0.0
      %762 = vmatpush1.msra.mxu0 0.0
      %763 = vmatprep.subr.mxu0 0.0
      %764 = vmatpush1.msra.mxu0 0.0
      %765 = vmatprep.subr.mxu0 0.0
      %766 = vmatpush1.msra.mxu0 0.0
      %767 = vmatprep.subr.mxu0 0.0
      %768 = vmatpush1.msra.mxu0 0.0
      %769 = vmatprep.subr.mxu0 0.0
      %770 = vmatpush1.msra.mxu0 0.0
      %771 = vmatprep.subr.mxu0 0.0
      %772 = vmatpush1.msra.mxu0 0.0
      %773 = vmatprep.subr.mxu0 0.0
      %774 = vmatpush1.msra.mxu0 0.0
      %775 = vmatprep.subr.mxu0 0.0
      %776 = vmatpush1.msra.mxu0 0.0
      %777 = vmatprep.subr.mxu0 0.0
      %778 = vmatpush1.msra.mxu0 %v407
      %779 = vmatprep.subr.mxu0 0.0
      %780 = vmatpush2.msra.mxu0 0.0
      %781 = vmatprep.subr.mxu0 0.0
      %782 = vmatpush2.msra.mxu0 0.0
      %783 = vmatprep.subr.mxu0 0.0
      %784 = vmatpush2.msra.mxu0 0.0
      %785 = vmatprep.subr.mxu0 0.0
      %786 = vmatpush2.msra.mxu0 0.0
      %787 = vmatprep.subr.mxu0 0.0
      %788 = vmatpush2.msra.mxu0 0.0
      %789 = vmatprep.subr.mxu0 0.0
      %790 = vmatpush2.msra.mxu0 0.0
      %791 = vmatprep.subr.mxu0 0.0
      %792 = vmatpush2.msra.mxu0 0.0
      %793 = vmatprep.subr.mxu0 0.0
      %794 = vmatpush2.msra.mxu0 0.0
      %795 = vmatprep.subr.mxu0 0.0
      %796 = vmatpush2.msra.mxu0 0.0
      %797 = vmatprep.subr.mxu0 0.0
      %798 = vmatpush2.msra.mxu0 0.0
      %799 = vmatprep.subr.mxu0 0.0
      %800 = vmatpush2.msra.mxu0 0.0
      %801 = vmatprep.subr.mxu0 0.0
      %802 = vmatpush2.msra.mxu0 0.0
      %803 = vmatprep.subr.mxu0 0.0
      %804 = vmatpush2.msra.mxu0 0.0
      %805 = vmatprep.subr.mxu0 0.0
      %806 = vmatpush2.msra.mxu0 0.0
      %807 = vmatprep.subr.mxu0 0.0
      %808 = vmatpush2.msra.mxu0 0.0
      %809 = vmatprep.subr.mxu0 0.0
      %810 = vmatpush2.msra.mxu0 0.0
      %811 = vmatprep.mubr.f32.mxu0 0.0
      %812 = vmatmul.mubr.f32.gmra.mxu0 %v745
      %v813 = vpop.f32.mrf.mxu0
      %v814 = vadd.f32 %v408, %v813
      %v815 = vpop.f32.mrf.mxu0
      %816 = vdwg.mxu0
      %v817 = vadd.f32 %v744, %v814
      %v818 = vxor.u32 %v817, 2147483648
      %v819 = vmul.f32 %v818, 1.442695
      %v820 = vpow.pop %v819
      %v821 = vadd.f32 %v820, 1.0
      %v822 = vrcp.pop %v821
      %v823 = vmul.f32 1.0, %v822
      %825 = vrot.lane.b32.xlu0 %v814, 112
      %v826 = vpop.permute.xlu0 %825
      %v828 = vmul.f32 %v823, %v826
      %830 = vrot.lane.b32.xlu0 %v828, 16
      %v831 = vpop.permute.xlu0 %830
      %v833 = vadd.f32 %v744, %v831
      %v834 = vtanh.pop %v833
      %v835 = vsub.f32 1.0, %v823
      %837 = vrot.lane.b32.xlu0 %v834, 120
      %v838 = vpop.permute.xlu0 %837
      %v840 = vmul.f32 %v835, %v838
      %v841 = vmul.f32 %v823, %v735
      %v842 = vadd.f32 %v840, %v841
      %844 = vrot.lane.b32.xlu0 %v842, 120
      %v845 = vpop.permute.xlu0 %844
      %s847 = scalar_lea.vmem %s9, %s742
      %848 = vst.msk [vmem:[%s847] sm:$0x1] %vm526, %v845
    $region74: #{n_vcnn_gru_forward.4} parent=1 // loop_footer
      %s414 = sadd.s32 1, %s410
    $region75: #{n_vcnn_gru_forward.4} parent=1 // loop_footer_branch
      %409 = sbr.rel target = $region71
    $region76: #{n_vcnn_gru_forward.4} parent=1 // loop_exit
      _
    %850 = vrot.lane.b32.xlu0 %v415, 120
    %v851 = vpop.permute.xlu0 %850
    %vm853 = vcmask 57344
    %854 = vst.msk [vmem:[#allocation17] sm:$0x1] %vm853, %v851
    %v855 = vld [vmem:[%s9] sm:$0xff]
    %v856 = vld [vmem:[%s9 + $0x8] sm:$0xff]
    %v857 = vld [vmem:[%s9 + $0x10] sm:$0xff]
    %v858 = vld [vmem:[%s9 + $0x18] sm:$0xff]
    %v859 = vld [vmem:[%s9 + $0x20] sm:$0xff]
    %v860 = vld [vmem:[%s9 + $0x28] sm:$0xff]
    %v861 = vld [vmem:[%s9 + $0x30] sm:$0xff]
    %v862 = vld [vmem:[%s9 + $0x38] sm:$0xff]
    %v863 = vld [vmem:[%s9 + $0x40] sm:$0xff]
    %v864 = vld [vmem:[%s9 + $0x48] sm:$0xff]
    %v865 = vld [vmem:[%s9 + $0x50] sm:$0xff]
    %v866 = vld [vmem:[%s9 + $0x58] sm:$0xff]
    %v867 = vld [vmem:[%s9 + $0x60] sm:$0xff]
    %v868 = vld [vmem:[%s9 + $0x68] sm:$0xff]
    %v869 = vld [vmem:[%s9 + $0x70] sm:$0xff]
    %v870 = vld [vmem:[%s9 + $0x78] sm:$0xff]
    %v871 = vld [vmem:[%s9 + $0x80] sm:$0xff]
    %v872 = vld [vmem:[%s9 + $0x88] sm:$0xff]
    %v873 = vld [vmem:[%s9 + $0x90] sm:$0xff]
    %v874 = vld [vmem:[%s9 + $0x98] sm:$0xff]
    %v875 = vld [vmem:[#allocation11] sm:$0xff]
    %v876 = vld [vmem:[#allocation14] sm:$0x1]
    %v878 = vlaneseq
    %v879 = vshrl.u32 %v878, 7
    %v880 = vsub.s32 0, %v879
    %v881 = vrot.slane %v876, %v880
    %vm883 = vcmask 64512
    %v885 = vsel %vm883, %v855, 0
    %v888 = vsel %vm883, %v856, 0
    %v891 = vsel %vm883, %v857, 0
    %v894 = vsel %vm883, %v858, 0
    %v897 = vsel %vm883, %v859, 0
    %v900 = vsel %vm883, %v860, 0
    %v903 = vsel %vm883, %v861, 0
    %v906 = vsel %vm883, %v862, 0
    %v909 = vsel %vm883, %v863, 0
    %v912 = vsel %vm883, %v864, 0
    %v915 = vsel %vm883, %v865, 0
    %v918 = vsel %vm883, %v866, 0
    %v921 = vsel %vm883, %v867, 0
    %v924 = vsel %vm883, %v868, 0
    %v927 = vsel %vm883, %v869, 0
    %v930 = vsel %vm883, %v870, 0
    %v933 = vsel %vm883, %v871, 0
    %v936 = vsel %vm883, %v872, 0
    %v939 = vsel %vm883, %v873, 0
    %v942 = vsel %vm883, %v874, 0
    %944 = vmatprep.subr.mxu0 0.0
    %945 = vmatpush1.msra.mxu0 0.0
    %946 = vmatprep.subr.mxu0 0.0
    %947 = vmatpush1.msra.mxu0 0.0
    %948 = vmatprep.subr.mxu0 0.0
    %949 = vmatpush1.msra.mxu0 0.0
    %950 = vmatprep.subr.mxu0 0.0
    %951 = vmatpush1.msra.mxu0 0.0
    %952 = vmatprep.subr.mxu0 0.0
    %953 = vmatpush1.msra.mxu0 0.0
    %954 = vmatprep.subr.mxu0 0.0
    %955 = vmatpush1.msra.mxu0 0.0
    %956 = vmatprep.subr.mxu0 0.0
    %957 = vmatpush1.msra.mxu0 0.0
    %958 = vmatprep.subr.mxu0 0.0
    %959 = vmatpush1.msra.mxu0 0.0
    %960 = vmatprep.subr.mxu0 0.0
    %961 = vmatpush1.msra.mxu0 0.0
    %962 = vmatprep.subr.mxu0 0.0
    %963 = vmatpush1.msra.mxu0 0.0
    %964 = vmatprep.subr.mxu0 0.0
    %965 = vmatpush1.msra.mxu0 0.0
    %966 = vmatprep.subr.mxu0 0.0
    %967 = vmatpush1.msra.mxu0 0.0
    %968 = vmatprep.subr.mxu0 0.0
    %969 = vmatpush1.msra.mxu0 0.0
    %970 = vmatprep.subr.mxu0 0.0
    %971 = vmatpush1.msra.mxu0 0.0
    %972 = vmatprep.subr.mxu0 0.0
    %973 = vmatpush1.msra.mxu0 0.0
    %974 = vmatprep.subr.mxu0 0.0
    %975 = vmatpush1.msra.mxu0 %v875
    %976 = vmatprep.subr.mxu0 0.0
    %977 = vmatpush2.msra.mxu0 0.0
    %978 = vmatprep.subr.mxu0 0.0
    %979 = vmatpush2.msra.mxu0 0.0
    %980 = vmatprep.subr.mxu0 0.0
    %981 = vmatpush2.msra.mxu0 0.0
    %982 = vmatprep.subr.mxu0 0.0
    %983 = vmatpush2.msra.mxu0 0.0
    %984 = vmatprep.subr.mxu0 0.0
    %985 = vmatpush2.msra.mxu0 0.0
    %986 = vmatprep.subr.mxu0 0.0
    %987 = vmatpush2.msra.mxu0 0.0
    %988 = vmatprep.subr.mxu0 0.0
    %989 = vmatpush2.msra.mxu0 0.0
    %990 = vmatprep.subr.mxu0 0.0
    %991 = vmatpush2.msra.mxu0 0.0
    %992 = vmatprep.subr.mxu0 0.0
    %993 = vmatpush2.msra.mxu0 0.0
    %994 = vmatprep.subr.mxu0 0.0
    %995 = vmatpush2.msra.mxu0 0.0
    %996 = vmatprep.subr.mxu0 0.0
    %997 = vmatpush2.msra.mxu0 0.0
    %998 = vmatprep.subr.mxu0 0.0
    %999 = vmatpush2.msra.mxu0 0.0
    %1000 = vmatprep.subr.mxu0 0.0
    %1001 = vmatpush2.msra.mxu0 0.0
    %1002 = vmatprep.subr.mxu0 0.0
    %1003 = vmatpush2.msra.mxu0 0.0
    %1004 = vmatprep.subr.mxu0 0.0
    %1005 = vmatpush2.msra.mxu0 0.0
    %1006 = vmatprep.subr.mxu0 0.0
    %1007 = vmatpush2.msra.mxu0 0.0
    %1008 = vmatprep.mubr.f32.mxu0 0.0
    %1009 = vmatmul.mubr.f32.gmra.mxu0 %v885
    %v1010 = vpop.f32.mrf.mxu0
    %v1011 = vadd.f32 %v881, %v1010
    %v1012 = vpop.f32.mrf.mxu0
    %1013 = vmatprep.mubr.f32.mxu0 0.0
    %1014 = vmatmul.mubr.f32.gmra.mxu0 %v888
    %v1015 = vpop.f32.mrf.mxu0
    %v1016 = vadd.f32 %v881, %v1015
    %v1017 = vpop.f32.mrf.mxu0
    %1018 = vmatprep.mubr.f32.mxu0 0.0
    %1019 = vmatmul.mubr.f32.gmra.mxu0 %v891
    %v1020 = vpop.f32.mrf.mxu0
    %v1021 = vadd.f32 %v881, %v1020
    %v1022 = vpop.f32.mrf.mxu0
    %1023 = vmatprep.mubr.f32.mxu0 0.0
    %1024 = vmatmul.mubr.f32.gmra.mxu0 %v894
    %v1025 = vpop.f32.mrf.mxu0
    %v1026 = vadd.f32 %v881, %v1025
    %v1027 = vpop.f32.mrf.mxu0
    %1028 = vmatprep.mubr.f32.mxu0 0.0
    %1029 = vmatmul.mubr.f32.gmra.mxu0 %v897
    %v1030 = vpop.f32.mrf.mxu0
    %v1031 = vadd.f32 %v881, %v1030
    %v1032 = vpop.f32.mrf.mxu0
    %1033 = vmatprep.mubr.f32.mxu0 0.0
    %1034 = vmatmul.mubr.f32.gmra.mxu0 %v900
    %v1035 = vpop.f32.mrf.mxu0
    %v1036 = vadd.f32 %v881, %v1035
    %v1037 = vpop.f32.mrf.mxu0
    %1038 = vmatprep.mubr.f32.mxu0 0.0
    %1039 = vmatmul.mubr.f32.gmra.mxu0 %v903
    %v1040 = vpop.f32.mrf.mxu0
    %v1041 = vadd.f32 %v881, %v1040
    %v1042 = vpop.f32.mrf.mxu0
    %1043 = vmatprep.mubr.f32.mxu0 0.0
    %1044 = vmatmul.mubr.f32.gmra.mxu0 %v906
    %v1045 = vpop.f32.mrf.mxu0
    %v1046 = vadd.f32 %v881, %v1045
    %v1047 = vpop.f32.mrf.mxu0
    %1048 = vmatprep.mubr.f32.mxu0 0.0
    %1049 = vmatmul.mubr.f32.gmra.mxu0 %v909
    %v1050 = vpop.f32.mrf.mxu0
    %v1051 = vadd.f32 %v881, %v1050
    %v1052 = vpop.f32.mrf.mxu0
    %1053 = vmatprep.mubr.f32.mxu0 0.0
    %1054 = vmatmul.mubr.f32.gmra.mxu0 %v912
    %v1055 = vpop.f32.mrf.mxu0
    %v1056 = vadd.f32 %v881, %v1055
    %v1057 = vpop.f32.mrf.mxu0
    %1058 = vmatprep.mubr.f32.mxu0 0.0
    %1059 = vmatmul.mubr.f32.gmra.mxu0 %v915
    %v1060 = vpop.f32.mrf.mxu0
    %v1061 = vadd.f32 %v881, %v1060
    %v1062 = vpop.f32.mrf.mxu0
    %1063 = vmatprep.mubr.f32.mxu0 0.0
    %1064 = vmatmul.mubr.f32.gmra.mxu0 %v918
    %v1065 = vpop.f32.mrf.mxu0
    %v1066 = vadd.f32 %v881, %v1065
    %v1067 = vpop.f32.mrf.mxu0
    %1068 = vmatprep.mubr.f32.mxu0 0.0
    %1069 = vmatmul.mubr.f32.gmra.mxu0 %v921
    %v1070 = vpop.f32.mrf.mxu0
    %v1071 = vadd.f32 %v881, %v1070
    %v1072 = vpop.f32.mrf.mxu0
    %1073 = vmatprep.mubr.f32.mxu0 0.0
    %1074 = vmatmul.mubr.f32.gmra.mxu0 %v924
    %v1075 = vpop.f32.mrf.mxu0
    %v1076 = vadd.f32 %v881, %v1075
    %v1077 = vpop.f32.mrf.mxu0
    %1078 = vmatprep.mubr.f32.mxu0 0.0
    %1079 = vmatmul.mubr.f32.gmra.mxu0 %v927
    %v1080 = vpop.f32.mrf.mxu0
    %v1081 = vadd.f32 %v881, %v1080
    %v1082 = vpop.f32.mrf.mxu0
    %1083 = vmatprep.mubr.f32.mxu0 0.0
    %1084 = vmatmul.mubr.f32.gmra.mxu0 %v930
    %v1085 = vpop.f32.mrf.mxu0
    %v1086 = vadd.f32 %v881, %v1085
    %v1087 = vpop.f32.mrf.mxu0
    %1088 = vmatprep.mubr.f32.mxu0 0.0
    %1089 = vmatmul.mubr.f32.gmra.mxu0 %v933
    %v1090 = vpop.f32.mrf.mxu0
    %v1091 = vadd.f32 %v881, %v1090
    %v1092 = vpop.f32.mrf.mxu0
    %1093 = vmatprep.mubr.f32.mxu0 0.0
    %1094 = vmatmul.mubr.f32.gmra.mxu0 %v936
    %v1095 = vpop.f32.mrf.mxu0
    %v1096 = vadd.f32 %v881, %v1095
    %v1097 = vpop.f32.mrf.mxu0
    %1098 = vmatprep.mubr.f32.mxu0 0.0
    %1099 = vmatmul.mubr.f32.gmra.mxu0 %v939
    %v1100 = vpop.f32.mrf.mxu0
    %v1101 = vadd.f32 %v881, %v1100
    %v1102 = vpop.f32.mrf.mxu0
    %1103 = vmatprep.mubr.f32.mxu0 0.0
    %1104 = vmatmul.mubr.f32.gmra.mxu0 %v942
    %v1105 = vpop.f32.mrf.mxu0
    %v1106 = vadd.f32 %v881, %v1105
    %v1107 = vpop.f32.mrf.mxu0
    %1108 = vdwg.mxu0
    %1109 = vst.msk [vmem:[#allocation2] sm:$0xff] %vm386, %v1011
    %1110 = vst.msk [vmem:[#allocation2 + $0x8] sm:$0xff] %vm386, %v1016
    %1111 = vst.msk [vmem:[#allocation2 + $0x10] sm:$0xff] %vm386, %v1021
    %1112 = vst.msk [vmem:[#allocation2 + $0x18] sm:$0xff] %vm386, %v1026
    %1113 = vst.msk [vmem:[#allocation2 + $0x20] sm:$0xff] %vm386, %v1031
    %1114 = vst.msk [vmem:[#allocation2 + $0x28] sm:$0xff] %vm386, %v1036
    %1115 = vst.msk [vmem:[#allocation2 + $0x30] sm:$0xff] %vm386, %v1041
    %1116 = vst.msk [vmem:[#allocation2 + $0x38] sm:$0xff] %vm386, %v1046
    %1117 = vst.msk [vmem:[#allocation2 + $0x40] sm:$0xff] %vm386, %v1051
    %1118 = vst.msk [vmem:[#allocation2 + $0x48] sm:$0xff] %vm386, %v1056
    %1119 = vst.msk [vmem:[#allocation2 + $0x50] sm:$0xff] %vm386, %v1061
    %1120 = vst.msk [vmem:[#allocation2 + $0x58] sm:$0xff] %vm386, %v1066
    %1121 = vst.msk [vmem:[#allocation2 + $0x60] sm:$0xff] %vm386, %v1071
    %1122 = vst.msk [vmem:[#allocation2 + $0x68] sm:$0xff] %vm386, %v1076
    %1123 = vst.msk [vmem:[#allocation2 + $0x70] sm:$0xff] %vm386, %v1081
    %1124 = vst.msk [vmem:[#allocation2 + $0x78] sm:$0xff] %vm386, %v1086
    %1125 = vst.msk [vmem:[#allocation2 + $0x80] sm:$0xff] %vm386, %v1091
    %1126 = vst.msk [vmem:[#allocation2 + $0x88] sm:$0xff] %vm386, %v1096
    %1127 = vst.msk [vmem:[#allocation2 + $0x90] sm:$0xff] %vm386, %v1101
    %1128 = vst.msk [vmem:[#allocation2 + $0x98] sm:$0xff] %vm386, %v1106
    %v1129 = vld [vmem:[#allocation12] sm:$0xff]
    %v1130 = vld [vmem:[#allocation15] sm:$0x1]
    loop: start=0, step=1, limit=40
    $region77: #{n_vcnn_gru_forward.4} parent=1 // loop_pre_header
      _
    $region78: #{n_vcnn_gru_forward.4} parent=1 // loop_header
      %s1132 = sphi 0, %s1136
      %p1133 = scmp.ge.s32.totalorder %s1132, 40
      %v1137 = vphi 0.0, %v1562
    $region79: #{n_vcnn_gru_forward.4} parent=1 // loop_header_branch
      %1135 = sbr.rel (%p1133) target = $region83
    $region80: #{n_vcnn_gru_forward.4} parent=1 // loop_body
      %s1138 = smul.u32 %s1132, 4
      %s1139 = scalar_lea.vmem [#allocation2], %s1138
      %v1140 = vld [vmem:[%s1139] sm:$0x1]
      %1142 = vrot.lane.b32.xlu0 %v1137, 120
      %v1143 = vpop.permute.xlu0 %1142
      %v1144 = vsel %vm883, %v1143, 0
      %1146 = vmatprep.subr.mxu0 0.0
      %1147 = vmatpush1.msra.mxu0 0.0
      %1148 = vmatprep.subr.mxu0 0.0
      %1149 = vmatpush1.msra.mxu0 0.0
      %1150 = vmatprep.subr.mxu0 0.0
      %1151 = vmatpush1.msra.mxu0 0.0
      %1152 = vmatprep.subr.mxu0 0.0
      %1153 = vmatpush1.msra.mxu0 0.0
      %1154 = vmatprep.subr.mxu0 0.0
      %1155 = vmatpush1.msra.mxu0 0.0
      %1156 = vmatprep.subr.mxu0 0.0
      %1157 = vmatpush1.msra.mxu0 0.0
      %1158 = vmatprep.subr.mxu0 0.0
      %1159 = vmatpush1.msra.mxu0 0.0
      %1160 = vmatprep.subr.mxu0 0.0
      %1161 = vmatpush1.msra.mxu0 0.0
      %1162 = vmatprep.subr.mxu0 0.0
      %1163 = vmatpush1.msra.mxu0 0.0
      %1164 = vmatprep.subr.mxu0 0.0
      %1165 = vmatpush1.msra.mxu0 0.0
      %1166 = vmatprep.subr.mxu0 0.0
      %1167 = vmatpush1.msra.mxu0 0.0
      %1168 = vmatprep.subr.mxu0 0.0
      %1169 = vmatpush1.msra.mxu0 0.0
      %1170 = vmatprep.subr.mxu0 0.0
      %1171 = vmatpush1.msra.mxu0 0.0
      %1172 = vmatprep.subr.mxu0 0.0
      %1173 = vmatpush1.msra.mxu0 0.0
      %1174 = vmatprep.subr.mxu0 0.0
      %1175 = vmatpush1.msra.mxu0 0.0
      %1176 = vmatprep.subr.mxu0 0.0
      %1177 = vmatpush1.msra.mxu0 %v1129
      %1178 = vmatprep.subr.mxu0 0.0
      %1179 = vmatpush2.msra.mxu0 0.0
      %1180 = vmatprep.subr.mxu0 0.0
      %1181 = vmatpush2.msra.mxu0 0.0
      %1182 = vmatprep.subr.mxu0 0.0
      %1183 = vmatpush2.msra.mxu0 0.0
      %1184 = vmatprep.subr.mxu0 0.0
      %1185 = vmatpush2.msra.mxu0 0.0
      %1186 = vmatprep.subr.mxu0 0.0
      %1187 = vmatpush2.msra.mxu0 0.0
      %1188 = vmatprep.subr.mxu0 0.0
      %1189 = vmatpush2.msra.mxu0 0.0
      %1190 = vmatprep.subr.mxu0 0.0
      %1191 = vmatpush2.msra.mxu0 0.0
      %1192 = vmatprep.subr.mxu0 0.0
      %1193 = vmatpush2.msra.mxu0 0.0
      %1194 = vmatprep.subr.mxu0 0.0
      %1195 = vmatpush2.msra.mxu0 0.0
      %1196 = vmatprep.subr.mxu0 0.0
      %1197 = vmatpush2.msra.mxu0 0.0
      %1198 = vmatprep.subr.mxu0 0.0
      %1199 = vmatpush2.msra.mxu0 0.0
      %1200 = vmatprep.subr.mxu0 0.0
      %1201 = vmatpush2.msra.mxu0 0.0
      %1202 = vmatprep.subr.mxu0 0.0
      %1203 = vmatpush2.msra.mxu0 0.0
      %1204 = vmatprep.subr.mxu0 0.0
      %1205 = vmatpush2.msra.mxu0 0.0
      %1206 = vmatprep.subr.mxu0 0.0
      %1207 = vmatpush2.msra.mxu0 0.0
      %1208 = vmatprep.subr.mxu0 0.0
      %1209 = vmatpush2.msra.mxu0 0.0
      %1210 = vmatprep.mubr.f32.mxu0 0.0
      %1211 = vmatmul.mubr.f32.gmra.mxu0 %v1144
      %v1212 = vpop.f32.mrf.mxu0
      %v1213 = vadd.f32 %v1130, %v1212
      %v1214 = vpop.f32.mrf.mxu0
      %1215 = vdwg.mxu0
      %v1216 = vadd.f32 %v1140, %v1213
      %v1217 = vxor.u32 %v1216, 2147483648
      %v1218 = vmul.f32 %v1217, 1.442695
      %v1219 = vpow.pop %v1218
      %v1220 = vadd.f32 %v1219, 1.0
      %v1221 = vrcp.pop %v1220
      %v1222 = vmul.f32 1.0, %v1221
      %1224 = vrot.lane.b32.xlu0 %v1213, 112
      %v1225 = vpop.permute.xlu0 %1224
      %v1227 = vmul.f32 %v1222, %v1225
      %1229 = vrot.lane.b32.xlu0 %v1227, 16
      %v1230 = vpop.permute.xlu0 %1229
      %v1232 = vadd.f32 %v1140, %v1230
      %v1233 = vtanh.pop %v1232
      %v1234 = vsub.f32 1.0, %v1222
      %1236 = vrot.lane.b32.xlu0 %v1233, 120
      %v1237 = vpop.permute.xlu0 %1236
      %v1239 = vmul.f32 %v1234, %v1237
      %v1240 = vmul.f32 %v1222, %v1137
      %v1241 = vadd.f32 %v1239, %v1240
      %1243 = vrot.lane.b32.xlu0 %v1241, 120
      %v1244 = vpop.permute.xlu0 %1243
      %s1246 = scalar_lea.vmem %s9, %s1138
      %1247 = vst.msk [vmem:[%s1246] sm:$0x1] %vm853, %v1244
      %s1248 = sadd.s32 %s1138, 1
      %s1249 = scalar_lea.vmem [#allocation2], %s1248
      %v1250 = vld [vmem:[%s1249] sm:$0x1]
      %v1251 = vsel %vm883, %v1244, 0
      %1253 = vmatprep.subr.mxu0 0.0
      %1254 = vmatpush1.msra.mxu0 0.0
      %1255 = vmatprep.subr.mxu0 0.0
      %1256 = vmatpush1.msra.mxu0 0.0
      %1257 = vmatprep.subr.mxu0 0.0
      %1258 = vmatpush1.msra.mxu0 0.0
      %1259 = vmatprep.subr.mxu0 0.0
      %1260 = vmatpush1.msra.mxu0 0.0
      %1261 = vmatprep.subr.mxu0 0.0
      %1262 = vmatpush1.msra.mxu0 0.0
      %1263 = vmatprep.subr.mxu0 0.0
      %1264 = vmatpush1.msra.mxu0 0.0
      %1265 = vmatprep.subr.mxu0 0.0
      %1266 = vmatpush1.msra.mxu0 0.0
      %1267 = vmatprep.subr.mxu0 0.0
      %1268 = vmatpush1.msra.mxu0 0.0
      %1269 = vmatprep.subr.mxu0 0.0
      %1270 = vmatpush1.msra.mxu0 0.0
      %1271 = vmatprep.subr.mxu0 0.0
      %1272 = vmatpush1.msra.mxu0 0.0
      %1273 = vmatprep.subr.mxu0 0.0
      %1274 = vmatpush1.msra.mxu0 0.0
      %1275 = vmatprep.subr.mxu0 0.0
      %1276 = vmatpush1.msra.mxu0 0.0
      %1277 = vmatprep.subr.mxu0 0.0
      %1278 = vmatpush1.msra.mxu0 0.0
      %1279 = vmatprep.subr.mxu0 0.0
      %1280 = vmatpush1.msra.mxu0 0.0
      %1281 = vmatprep.subr.mxu0 0.0
      %1282 = vmatpush1.msra.mxu0 0.0
      %1283 = vmatprep.subr.mxu0 0.0
      %1284 = vmatpush1.msra.mxu0 %v1129
      %1285 = vmatprep.subr.mxu0 0.0
      %1286 = vmatpush2.msra.mxu0 0.0
      %1287 = vmatprep.subr.mxu0 0.0
      %1288 = vmatpush2.msra.mxu0 0.0
      %1289 = vmatprep.subr.mxu0 0.0
      %1290 = vmatpush2.msra.mxu0 0.0
      %1291 = vmatprep.subr.mxu0 0.0
      %1292 = vmatpush2.msra.mxu0 0.0
      %1293 = vmatprep.subr.mxu0 0.0
      %1294 = vmatpush2.msra.mxu0 0.0
      %1295 = vmatprep.subr.mxu0 0.0
      %1296 = vmatpush2.msra.mxu0 0.0
      %1297 = vmatprep.subr.mxu0 0.0
      %1298 = vmatpush2.msra.mxu0 0.0
      %1299 = vmatprep.subr.mxu0 0.0
      %1300 = vmatpush2.msra.mxu0 0.0
      %1301 = vmatprep.subr.mxu0 0.0
      %1302 = vmatpush2.msra.mxu0 0.0
      %1303 = vmatprep.subr.mxu0 0.0
      %1304 = vmatpush2.msra.mxu0 0.0
      %1305 = vmatprep.subr.mxu0 0.0
      %1306 = vmatpush2.msra.mxu0 0.0
      %1307 = vmatprep.subr.mxu0 0.0
      %1308 = vmatpush2.msra.mxu0 0.0
      %1309 = vmatprep.subr.mxu0 0.0
      %1310 = vmatpush2.msra.mxu0 0.0
      %1311 = vmatprep.subr.mxu0 0.0
      %1312 = vmatpush2.msra.mxu0 0.0
      %1313 = vmatprep.subr.mxu0 0.0
      %1314 = vmatpush2.msra.mxu0 0.0
      %1315 = vmatprep.subr.mxu0 0.0
      %1316 = vmatpush2.msra.mxu0 0.0
      %1317 = vmatprep.mubr.f32.mxu0 0.0
      %1318 = vmatmul.mubr.f32.gmra.mxu0 %v1251
      %v1319 = vpop.f32.mrf.mxu0
      %v1320 = vadd.f32 %v1130, %v1319
      %v1321 = vpop.f32.mrf.mxu0
      %1322 = vdwg.mxu0
      %v1323 = vadd.f32 %v1250, %v1320
      %v1324 = vxor.u32 %v1323, 2147483648
      %v1325 = vmul.f32 %v1324, 1.442695
      %v1326 = vpow.pop %v1325
      %v1327 = vadd.f32 %v1326, 1.0
      %v1328 = vrcp.pop %v1327
      %v1329 = vmul.f32 1.0, %v1328
      %1331 = vrot.lane.b32.xlu0 %v1320, 112
      %v1332 = vpop.permute.xlu0 %1331
      %v1334 = vmul.f32 %v1329, %v1332
      %1336 = vrot.lane.b32.xlu0 %v1334, 16
      %v1337 = vpop.permute.xlu0 %1336
      %v1339 = vadd.f32 %v1250, %v1337
      %v1340 = vtanh.pop %v1339
      %v1341 = vsub.f32 1.0, %v1329
      %1343 = vrot.lane.b32.xlu0 %v1340, 120
      %v1344 = vpop.permute.xlu0 %1343
      %v1346 = vmul.f32 %v1341, %v1344
      %v1347 = vmul.f32 %v1329, %v1241
      %v1348 = vadd.f32 %v1346, %v1347
      %1350 = vrot.lane.b32.xlu0 %v1348, 120
      %v1351 = vpop.permute.xlu0 %1350
      %s1353 = scalar_lea.vmem %s9, %s1248
      %1354 = vst.msk [vmem:[%s1353] sm:$0x1] %vm853, %v1351
      %s1355 = sadd.s32 %s1138, 2
      %s1356 = scalar_lea.vmem [#allocation2], %s1355
      %v1357 = vld [vmem:[%s1356] sm:$0x1]
      %v1358 = vsel %vm883, %v1351, 0
      %1360 = vmatprep.subr.mxu0 0.0
      %1361 = vmatpush1.msra.mxu0 0.0
      %1362 = vmatprep.subr.mxu0 0.0
      %1363 = vmatpush1.msra.mxu0 0.0
      %1364 = vmatprep.subr.mxu0 0.0
      %1365 = vmatpush1.msra.mxu0 0.0
      %1366 = vmatprep.subr.mxu0 0.0
      %1367 = vmatpush1.msra.mxu0 0.0
      %1368 = vmatprep.subr.mxu0 0.0
      %1369 = vmatpush1.msra.mxu0 0.0
      %1370 = vmatprep.subr.mxu0 0.0
      %1371 = vmatpush1.msra.mxu0 0.0
      %1372 = vmatprep.subr.mxu0 0.0
      %1373 = vmatpush1.msra.mxu0 0.0
      %1374 = vmatprep.subr.mxu0 0.0
      %1375 = vmatpush1.msra.mxu0 0.0
      %1376 = vmatprep.subr.mxu0 0.0
      %1377 = vmatpush1.msra.mxu0 0.0
      %1378 = vmatprep.subr.mxu0 0.0
      %1379 = vmatpush1.msra.mxu0 0.0
      %1380 = vmatprep.subr.mxu0 0.0
      %1381 = vmatpush1.msra.mxu0 0.0
      %1382 = vmatprep.subr.mxu0 0.0
      %1383 = vmatpush1.msra.mxu0 0.0
      %1384 = vmatprep.subr.mxu0 0.0
      %1385 = vmatpush1.msra.mxu0 0.0
      %1386 = vmatprep.subr.mxu0 0.0
      %1387 = vmatpush1.msra.mxu0 0.0
      %1388 = vmatprep.subr.mxu0 0.0
      %1389 = vmatpush1.msra.mxu0 0.0
      %1390 = vmatprep.subr.mxu0 0.0
      %1391 = vmatpush1.msra.mxu0 %v1129
      %1392 = vmatprep.subr.mxu0 0.0
      %1393 = vmatpush2.msra.mxu0 0.0
      %1394 = vmatprep.subr.mxu0 0.0
      %1395 = vmatpush2.msra.mxu0 0.0
      %1396 = vmatprep.subr.mxu0 0.0
      %1397 = vmatpush2.msra.mxu0 0.0
      %1398 = vmatprep.subr.mxu0 0.0
      %1399 = vmatpush2.msra.mxu0 0.0
      %1400 = vmatprep.subr.mxu0 0.0
      %1401 = vmatpush2.msra.mxu0 0.0
      %1402 = vmatprep.subr.mxu0 0.0
      %1403 = vmatpush2.msra.mxu0 0.0
      %1404 = vmatprep.subr.mxu0 0.0
      %1405 = vmatpush2.msra.mxu0 0.0
      %1406 = vmatprep.subr.mxu0 0.0
      %1407 = vmatpush2.msra.mxu0 0.0
      %1408 = vmatprep.subr.mxu0 0.0
      %1409 = vmatpush2.msra.mxu0 0.0
      %1410 = vmatprep.subr.mxu0 0.0
      %1411 = vmatpush2.msra.mxu0 0.0
      %1412 = vmatprep.subr.mxu0 0.0
      %1413 = vmatpush2.msra.mxu0 0.0
      %1414 = vmatprep.subr.mxu0 0.0
      %1415 = vmatpush2.msra.mxu0 0.0
      %1416 = vmatprep.subr.mxu0 0.0
      %1417 = vmatpush2.msra.mxu0 0.0
      %1418 = vmatprep.subr.mxu0 0.0
      %1419 = vmatpush2.msra.mxu0 0.0
      %1420 = vmatprep.subr.mxu0 0.0
      %1421 = vmatpush2.msra.mxu0 0.0
      %1422 = vmatprep.subr.mxu0 0.0
      %1423 = vmatpush2.msra.mxu0 0.0
      %1424 = vmatprep.mubr.f32.mxu0 0.0
      %1425 = vmatmul.mubr.f32.gmra.mxu0 %v1358
      %v1426 = vpop.f32.mrf.mxu0
      %v1427 = vadd.f32 %v1130, %v1426
      %v1428 = vpop.f32.mrf.mxu0
      %1429 = vdwg.mxu0
      %v1430 = vadd.f32 %v1357, %v1427
      %v1431 = vxor.u32 %v1430, 2147483648
      %v1432 = vmul.f32 %v1431, 1.442695
      %v1433 = vpow.pop %v1432
      %v1434 = vadd.f32 %v1433, 1.0
      %v1435 = vrcp.pop %v1434
      %v1436 = vmul.f32 1.0, %v1435
      %1438 = vrot.lane.b32.xlu0 %v1427, 112
      %v1439 = vpop.permute.xlu0 %1438
      %v1441 = vmul.f32 %v1436, %v1439
      %1443 = vrot.lane.b32.xlu0 %v1441, 16
      %v1444 = vpop.permute.xlu0 %1443
      %v1446 = vadd.f32 %v1357, %v1444
      %v1447 = vtanh.pop %v1446
      %v1448 = vsub.f32 1.0, %v1436
      %1450 = vrot.lane.b32.xlu0 %v1447, 120
      %v1451 = vpop.permute.xlu0 %1450
      %v1453 = vmul.f32 %v1448, %v1451
      %v1454 = vmul.f32 %v1436, %v1348
      %v1455 = vadd.f32 %v1453, %v1454
      %1457 = vrot.lane.b32.xlu0 %v1455, 120
      %v1458 = vpop.permute.xlu0 %1457
      %s1460 = scalar_lea.vmem %s9, %s1355
      %1461 = vst.msk [vmem:[%s1460] sm:$0x1] %vm853, %v1458
      %s1462 = sadd.s32 %s1138, 3
      %s1463 = scalar_lea.vmem [#allocation2], %s1462
      %v1464 = vld [vmem:[%s1463] sm:$0x1]
      %v1465 = vsel %vm883, %v1458, 0
      %1467 = vmatprep.subr.mxu0 0.0
      %1468 = vmatpush1.msra.mxu0 0.0
      %1469 = vmatprep.subr.mxu0 0.0
      %1470 = vmatpush1.msra.mxu0 0.0
      %1471 = vmatprep.subr.mxu0 0.0
      %1472 = vmatpush1.msra.mxu0 0.0
      %1473 = vmatprep.subr.mxu0 0.0
      %1474 = vmatpush1.msra.mxu0 0.0
      %1475 = vmatprep.subr.mxu0 0.0
      %1476 = vmatpush1.msra.mxu0 0.0
      %1477 = vmatprep.subr.mxu0 0.0
      %1478 = vmatpush1.msra.mxu0 0.0
      %1479 = vmatprep.subr.mxu0 0.0
      %1480 = vmatpush1.msra.mxu0 0.0
      %1481 = vmatprep.subr.mxu0 0.0
      %1482 = vmatpush1.msra.mxu0 0.0
      %1483 = vmatprep.subr.mxu0 0.0
      %1484 = vmatpush1.msra.mxu0 0.0
      %1485 = vmatprep.subr.mxu0 0.0
      %1486 = vmatpush1.msra.mxu0 0.0
      %1487 = vmatprep.subr.mxu0 0.0
      %1488 = vmatpush1.msra.mxu0 0.0
      %1489 = vmatprep.subr.mxu0 0.0
      %1490 = vmatpush1.msra.mxu0 0.0
      %1491 = vmatprep.subr.mxu0 0.0
      %1492 = vmatpush1.msra.mxu0 0.0
      %1493 = vmatprep.subr.mxu0 0.0
      %1494 = vmatpush1.msra.mxu0 0.0
      %1495 = vmatprep.subr.mxu0 0.0
      %1496 = vmatpush1.msra.mxu0 0.0
      %1497 = vmatprep.subr.mxu0 0.0
      %1498 = vmatpush1.msra.mxu0 %v1129
      %1499 = vmatprep.subr.mxu0 0.0
      %1500 = vmatpush2.msra.mxu0 0.0
      %1501 = vmatprep.subr.mxu0 0.0
      %1502 = vmatpush2.msra.mxu0 0.0
      %1503 = vmatprep.subr.mxu0 0.0
      %1504 = vmatpush2.msra.mxu0 0.0
      %1505 = vmatprep.subr.mxu0 0.0
      %1506 = vmatpush2.msra.mxu0 0.0
      %1507 = vmatprep.subr.mxu0 0.0
      %1508 = vmatpush2.msra.mxu0 0.0
      %1509 = vmatprep.subr.mxu0 0.0
      %1510 = vmatpush2.msra.mxu0 0.0
      %1511 = vmatprep.subr.mxu0 0.0
      %1512 = vmatpush2.msra.mxu0 0.0
      %1513 = vmatprep.subr.mxu0 0.0
      %1514 = vmatpush2.msra.mxu0 0.0
      %1515 = vmatprep.subr.mxu0 0.0
      %1516 = vmatpush2.msra.mxu0 0.0
      %1517 = vmatprep.subr.mxu0 0.0
      %1518 = vmatpush2.msra.mxu0 0.0
      %1519 = vmatprep.subr.mxu0 0.0
      %1520 = vmatpush2.msra.mxu0 0.0
      %1521 = vmatprep.subr.mxu0 0.0
      %1522 = vmatpush2.msra.mxu0 0.0
      %1523 = vmatprep.subr.mxu0 0.0
      %1524 = vmatpush2.msra.mxu0 0.0
      %1525 = vmatprep.subr.mxu0 0.0
      %1526 = vmatpush2.msra.mxu0 0.0
      %1527 = vmatprep.subr.mxu0 0.0
      %1528 = vmatpush2.msra.mxu0 0.0
      %1529 = vmatprep.subr.mxu0 0.0
      %1530 = vmatpush2.msra.mxu0 0.0
      %1531 = vmatprep.mubr.f32.mxu0 0.0
      %1532 = vmatmul.mubr.f32.gmra.mxu0 %v1465
      %v1533 = vpop.f32.mrf.mxu0
      %v1534 = vadd.f32 %v1130, %v1533
      %v1535 = vpop.f32.mrf.mxu0
      %1536 = vdwg.mxu0
      %v1537 = vadd.f32 %v1464, %v1534
      %v1538 = vxor.u32 %v1537, 2147483648
      %v1539 = vmul.f32 %v1538, 1.442695
      %v1540 = vpow.pop %v1539
      %v1541 = vadd.f32 %v1540, 1.0
      %v1542 = vrcp.pop %v1541
      %v1543 = vmul.f32 1.0, %v1542
      %1545 = vrot.lane.b32.xlu0 %v1534, 112
      %v1546 = vpop.permute.xlu0 %1545
      %v1548 = vmul.f32 %v1543, %v1546
      %1550 = vrot.lane.b32.xlu0 %v1548, 16
      %v1551 = vpop.permute.xlu0 %1550
      %v1553 = vadd.f32 %v1464, %v1551
      %v1554 = vtanh.pop %v1553
      %v1555 = vsub.f32 1.0, %v1543
      %1557 = vrot.lane.b32.xlu0 %v1554, 120
      %v1558 = vpop.permute.xlu0 %1557
      %v1560 = vmul.f32 %v1555, %v1558
      %v1561 = vmul.f32 %v1543, %v1455
      %v1562 = vadd.f32 %v1560, %v1561
      %1564 = vrot.lane.b32.xlu0 %v1562, 120
      %v1565 = vpop.permute.xlu0 %1564
      %s1567 = scalar_lea.vmem %s9, %s1462
      %1568 = vst.msk [vmem:[%s1567] sm:$0x1] %vm853, %v1565
    $region81: #{n_vcnn_gru_forward.4} parent=1 // loop_footer
      %s1136 = sadd.s32 1, %s1132
    $region82: #{n_vcnn_gru_forward.4} parent=1 // loop_footer_branch
      %1131 = sbr.rel target = $region78
    $region83: #{n_vcnn_gru_forward.4} parent=1 // loop_exit
      _
    %1570 = vrot.lane.b32.xlu0 %v1137, 120
    %v1571 = vpop.permute.xlu0 %1570
    %1573 = vst.msk [vmem:[#allocation17 + $0x1] sm:$0x1] %vm853, %v1571
    // Predicated region
    $region84: #{n_vcnn_gru_forward.4} parent=1 // pred_check
      _
    $region85: #{n_vcnn_gru_forward.4} parent=1 // pred_check_branch
      %1575 = sbr.rel (0) target = $region87
    $region86: #{n_vcnn_gru_forward.4} parent=1 // pred_region
      _
    $region87: #{n_vcnn_gru_forward.4} parent=1 // pred_fallthru
      _
    // Predicated region
    $region88: #{n_vcnn_gru_forward.4} parent=1 // pred_check
      _
    $region89: #{n_vcnn_gru_forward.4} parent=1 // pred_check_branch
      %1577 = sbr.rel (0) target = $region91
    $region90: #{n_vcnn_gru_forward.4} parent=1 // pred_region
      %s1579 = ssub.s32 32, 32
      %1580 = vsyncadd [#allocation5], %s1579
      %s1582 = sshll.u32 [#allocation17], 4
      %s1583 = int_to_ptr.vmem [resolvable:$true] %s1582
      %1585 = dma.vmem_to_hbm [thread:$0]  %s1583, 32, %s10, [#allocation5]
    $region91: #{n_vcnn_gru_forward.4} parent=1 // pred_fallthru
      _
    // Predicated region
    $region92: #{n_vcnn_gru_forward.4} parent=1 // pred_check
      _
    $region93: #{n_vcnn_gru_forward.4} parent=1 // pred_check_branch
      %1587 = sbr.rel (0) target = $region95
    $region94: #{n_vcnn_gru_forward.4} parent=1 // pred_region
      _
    $region95: #{n_vcnn_gru_forward.4} parent=1 // pred_fallthru
      _
    // Predicated region
    $region96: #{n_vcnn_gru_forward.4} parent=1 // pred_check
      _
    $region97: #{n_vcnn_gru_forward.4} parent=1 // pred_check_branch
      %1589 = sbr.rel (0) target = $region99
    $region98: #{n_vcnn_gru_forward.4} parent=1 // pred_region
      %1590 = dma.done [#allocation5], 32
    $region99: #{n_vcnn_gru_forward.4} parent=1 // pred_fallthru
      _
    %1591 = vsyncpa [#allocation4], 1
    %1592 = vsyncpa [#allocation7], 1
    %1593 = vsyncpa [#allocation10], 1
    %1594 = vsyncpa [#allocation13], 1
    %1595 = vsyncpa [#allocation16], 1
    %1596 = vsyncpa [#allocation5], 1

// kernel: n_vcnn_gru_forward.3
$region0: #{n_vcnn_gru_forward.3}
  #allocation0 [shape = 'u32[]', space=smem, size = 0x4, offset = 0x4, fixed_abs, tag = 'smem constant byte address 0x4 - core index']
  #allocation1 [shape = 'u32[144,128]{1,0:T(1,128)}', space=vmem, size = 0x12000, scoped, tag = 'internal scratch']
  %s0 = inlined_call_operand.vmem [shape: f32[4,160], index: 0, kind: input, shape index: {}]
  %s1 = inlined_call_operand.vmem [shape: f32[3,64,4], index: 1, kind: input, shape index: {}]
  %s2 = inlined_call_operand.vmem [shape: f32[64,1], index: 2, kind: input, shape index: {}]
  %s3 = inlined_call_operand.vmem [shape: f32[64,1], index: 3, kind: input, shape index: {}]
  %s4 = inlined_call_operand.hbm [shape: f32[3,32,64], index: 4, kind: input, shape index: {}]
  %s5 = inlined_call_operand.vmem [shape: f32[32,1], index: 5, kind: input, shape index: {}]
  %s6 = inlined_call_operand.vmem [shape: f32[32,1], index: 6, kind: input, shape index: {}]
  %s7 = inlined_call_operand.hbm [shape: f32[3,16,32], index: 7, kind: input, shape index: {}]
  %s8 = inlined_call_operand.vmem [shape: f32[16,1], index: 8, kind: input, shape index: {}]
  %s9 = inlined_call_operand.vmem [shape: f32[16,1], index: 9, kind: input, shape index: {}]
  %s10 = inlined_call_operand.hbm [shape: f32[3,8,16], index: 10, kind: input, shape index: {}]
  %s11 = inlined_call_operand.vmem [shape: f32[8,1], index: 11, kind: input, shape index: {}]
  %s12 = inlined_call_operand.vmem [shape: f32[8,1], index: 12, kind: input, shape index: {}]
  %s13 = inlined_call_operand.hbm [shape: f32[3,4,8], index: 13, kind: input, shape index: {}]
  %s14 = inlined_call_operand.vmem [shape: f32[4,1], index: 14, kind: input, shape index: {}]
  %s15 = inlined_call_operand.vmem [shape: f32[4,1], index: 15, kind: input, shape index: {}]
  %s16 = inlined_call_operand.vmem [shape: f32[4,160], index: 16, kind: output, shape index: {}]
  %s17 = sld [smem:[#allocation0]]
  $region90: #{n_vcnn_gru_forward.3} parent=0
    _
  %s19 = ssub.s32 1, %s17
  %s20 = scalar_select 0, %s19, %s17
  $region1: #{n_vcnn_gru_forward.3} parent=0
    #allocation2 [shape = 'u8[49152]{0}', space=vmem, size = 0xc000, scoped, tag = 'input window, operand 4, single buffered']
    #allocation3 [shape = 's32[1]{0}', space=sflag, size = 0x4, scoped, tag = 'scoped memory for n_vcnn_gru_forward.3']
    #allocation4 [shape = 'u8[24576]{0}', space=vmem, size = 0x6000, scoped, tag = 'input window, operand 7, single buffered']
    #allocation5 [shape = 's32[1]{0}', space=sflag, size = 0x4, scoped, tag = 'scoped memory for n_vcnn_gru_forward.3']
    #allocation6 [shape = 'u8[12288]{0}', space=vmem, size = 0x3000, scoped, tag = 'input window, operand 10, single buffered']
    #allocation7 [shape = 'u8[6144]{0}', space=vmem, size = 0x1800, scoped, tag = 'input window, operand 13, single buffered']
    #allocation8 [shape = 's32[1]{0}', space=sflag, size = 0x4, scoped, tag = 'scoped memory for n_vcnn_gru_forward.3']
    %21 = vsyncpa [#allocation3], 0
    %22 = vsyncpa [#allocation5], 0
    %23 = vsyncpa [#allocation8], 0
    // Predicated region
    $region2: #{n_vcnn_gru_forward.3} parent=1 // pred_check
      _
    $region3: #{n_vcnn_gru_forward.3} parent=1 // pred_check_branch
      %25 = sbr.rel (0) target = $region5
    $region4: #{n_vcnn_gru_forward.3} parent=1 // pred_region
      _
    $region5: #{n_vcnn_gru_forward.3} parent=1 // pred_fallthru
      _
    // Predicated region
    $region6: #{n_vcnn_gru_forward.3} parent=1 // pred_check
      _
    $region7: #{n_vcnn_gru_forward.3} parent=1 // pred_check_branch
      %27 = sbr.rel (0) target = $region9
    $region8: #{n_vcnn_gru_forward.3} parent=1 // pred_region
      _
    $region9: #{n_vcnn_gru_forward.3} parent=1 // pred_fallthru
      _
    // Predicated region
    $region10: #{n_vcnn_gru_forward.3} parent=1 // pred_check
      _
    $region11: #{n_vcnn_gru_forward.3} parent=1 // pred_check_branch
      %29 = sbr.rel (0) target = $region13
    $region12: #{n_vcnn_gru_forward.3} parent=1 // pred_region
      _
    $region13: #{n_vcnn_gru_forward.3} parent=1 // pred_fallthru
      _
    // Predicated region
    $region14: #{n_vcnn_gru_forward.3} parent=1 // pred_check
      _
    $region15: #{n_vcnn_gru_forward.3} parent=1 // pred_check_branch
      %31 = sbr.rel (0) target = $region17
    $region16: #{n_vcnn_gru_forward.3} parent=1 // pred_region
      _
    $region17: #{n_vcnn_gru_forward.3} parent=1 // pred_fallthru
      _
    // Predicated region
    $region18: #{n_vcnn_gru_forward.3} parent=1 // pred_check
      _
    $region19: #{n_vcnn_gru_forward.3} parent=1 // pred_check_branch
      %33 = sbr.rel (0) target = $region21
    $region20: #{n_vcnn_gru_forward.3} parent=1 // pred_region
      %s35 = ssub.s32 1536, 1536
      %36 = vsyncadd [#allocation3], %s35
      %s37 = sshll.u32 [#allocation2], 4
      %s38 = int_to_ptr.vmem [resolvable:$true] %s37
      %43 = dma.hbm_to_vmem [thread:$0]  %s4, 1536, %s38, [#allocation3], 128, 128, 8
    $region21: #{n_vcnn_gru_forward.3} parent=1 // pred_fallthru
      _
    // Predicated region
    $region22: #{n_vcnn_gru_forward.3} parent=1 // pred_check
      _
    $region23: #{n_vcnn_gru_forward.3} parent=1 // pred_check_branch
      %45 = sbr.rel (0) target = $region25
    $region24: #{n_vcnn_gru_forward.3} parent=1 // pred_region
      _
    $region25: #{n_vcnn_gru_forward.3} parent=1 // pred_fallthru
      _
    // Predicated region
    $region26: #{n_vcnn_gru_forward.3} parent=1 // pred_check
      _
    $region27: #{n_vcnn_gru_forward.3} parent=1 // pred_check_branch
      %47 = sbr.rel (0) target = $region29
    $region28: #{n_vcnn_gru_forward.3} parent=1 // pred_region
      _
    $region29: #{n_vcnn_gru_forward.3} parent=1 // pred_fallthru
      _
    // Predicated region
    $region30: #{n_vcnn_gru_forward.3} parent=1 // pred_check
      _
    $region31: #{n_vcnn_gru_forward.3} parent=1 // pred_check_branch
      %49 = sbr.rel (0) target = $region33
    $region32: #{n_vcnn_gru_forward.3} parent=1 // pred_region
      %s51 = ssub.s32 768, 768
      %52 = vsyncadd [#allocation5], %s51
      %s53 = sshll.u32 [#allocation4], 4
      %s54 = int_to_ptr.vmem [resolvable:$true] %s53
      %59 = dma.hbm_to_vmem [thread:$0]  %s7, 768, %s54, [#allocation5], 128, 128, 8
    $region33: #{n_vcnn_gru_forward.3} parent=1 // pred_fallthru
      _
    // Predicated region
    $region34: #{n_vcnn_gru_forward.3} parent=1 // pred_check
      _
    $region35: #{n_vcnn_gru_forward.3} parent=1 // pred_check_branch
      %61 = sbr.rel (0) target = $region37
    $region36: #{n_vcnn_gru_forward.3} parent=1 // pred_region
      _
    $region37: #{n_vcnn_gru_forward.3} parent=1 // pred_fallthru
      _
    // Predicated region
    $region38: #{n_vcnn_gru_forward.3} parent=1 // pred_check
      _
    $region39: #{n_vcnn_gru_forward.3} parent=1 // pred_check_branch
      %63 = sbr.rel (0) target = $region41
    $region40: #{n_vcnn_gru_forward.3} parent=1 // pred_region
      _
    $region41: #{n_vcnn_gru_forward.3} parent=1 // pred_fallthru
      _
    // Predicated region
    $region42: #{n_vcnn_gru_forward.3} parent=1 // pred_check
      _
    $region43: #{n_vcnn_gru_forward.3} parent=1 // pred_check_branch
      %65 = sbr.rel (0) target = $region45
    $region44: #{n_vcnn_gru_forward.3} parent=1 // pred_region
      %s67 = ssub.s32 384, 384
      %68 = vsyncadd [#allocation5], %s67
      %s69 = sshll.u32 [#allocation6], 4
      %s70 = int_to_ptr.vmem [resolvable:$true] %s69
      %75 = dma.hbm_to_vmem [thread:$0]  %s10, 384, %s70, [#allocation5], 128, 128, 8
    $region45: #{n_vcnn_gru_forward.3} parent=1 // pred_fallthru
      _
    // Predicated region
    $region46: #{n_vcnn_gru_forward.3} parent=1 // pred_check
      _
    $region47: #{n_vcnn_gru_forward.3} parent=1 // pred_check_branch
      %77 = sbr.rel (0) target = $region49
    $region48: #{n_vcnn_gru_forward.3} parent=1 // pred_region
      _
    $region49: #{n_vcnn_gru_forward.3} parent=1 // pred_fallthru
      _
    // Predicated region
    $region50: #{n_vcnn_gru_forward.3} parent=1 // pred_check
      _
    $region51: #{n_vcnn_gru_forward.3} parent=1 // pred_check_branch
      %79 = sbr.rel (0) target = $region53
    $region52: #{n_vcnn_gru_forward.3} parent=1 // pred_region
      _
    $region53: #{n_vcnn_gru_forward.3} parent=1 // pred_fallthru
      _
    // Predicated region
    $region54: #{n_vcnn_gru_forward.3} parent=1 // pred_check
      _
    $region55: #{n_vcnn_gru_forward.3} parent=1 // pred_check_branch
      %81 = sbr.rel (0) target = $region57
    $region56: #{n_vcnn_gru_forward.3} parent=1 // pred_region
      %s83 = ssub.s32 192, 192
      %84 = vsyncadd [#allocation8], %s83
      %s85 = sshll.u32 [#allocation7], 4
      %s86 = int_to_ptr.vmem [resolvable:$true] %s85
      %91 = dma.hbm_to_vmem [thread:$0]  %s13, 192, %s86, [#allocation8], 64, 64, 4
    $region57: #{n_vcnn_gru_forward.3} parent=1 // pred_fallthru
      _
    // Predicated region
    $region58: #{n_vcnn_gru_forward.3} parent=1 // pred_check
      _
    $region59: #{n_vcnn_gru_forward.3} parent=1 // pred_check_branch
      %93 = sbr.rel (0) target = $region61
    $region60: #{n_vcnn_gru_forward.3} parent=1 // pred_region
      _
    $region61: #{n_vcnn_gru_forward.3} parent=1 // pred_fallthru
      _
    // Predicated region
    $region62: #{n_vcnn_gru_forward.3} parent=1 // pred_check
      _
    $region63: #{n_vcnn_gru_forward.3} parent=1 // pred_check_branch
      %95 = sbr.rel (0) target = $region65
    $region64: #{n_vcnn_gru_forward.3} parent=1 // pred_region
      _
    $region65: #{n_vcnn_gru_forward.3} parent=1 // pred_fallthru
      _
    // Predicated region
    $region66: #{n_vcnn_gru_forward.3} parent=1 // pred_check
      _
    $region67: #{n_vcnn_gru_forward.3} parent=1 // pred_check_branch
      %97 = sbr.rel (0) target = $region69
    $region68: #{n_vcnn_gru_forward.3} parent=1 // pred_region
      %98 = dma.done [#allocation3], 1536
    $region69: #{n_vcnn_gru_forward.3} parent=1 // pred_fallthru
      _
    // Predicated region
    $region70: #{n_vcnn_gru_forward.3} parent=1 // pred_check
      _
    $region71: #{n_vcnn_gru_forward.3} parent=1 // pred_check_branch
      %100 = sbr.rel (0) target = $region73
    $region72: #{n_vcnn_gru_forward.3} parent=1 // pred_region
      %101 = dma.done [#allocation5], 768
    $region73: #{n_vcnn_gru_forward.3} parent=1 // pred_fallthru
      _
    // Predicated region
    $region74: #{n_vcnn_gru_forward.3} parent=1 // pred_check
      _
    $region75: #{n_vcnn_gru_forward.3} parent=1 // pred_check_branch
      %103 = sbr.rel (0) target = $region77
    $region76: #{n_vcnn_gru_forward.3} parent=1 // pred_region
      %104 = dma.done [#allocation5], 384
    $region77: #{n_vcnn_gru_forward.3} parent=1 // pred_fallthru
      _
    // Predicated region
    $region78: #{n_vcnn_gru_forward.3} parent=1 // pred_check
      _
    $region79: #{n_vcnn_gru_forward.3} parent=1 // pred_check_branch
      %106 = sbr.rel (0) target = $region81
    $region80: #{n_vcnn_gru_forward.3} parent=1 // pred_region
      %107 = dma.done [#allocation8], 192
    $region81: #{n_vcnn_gru_forward.3} parent=1 // pred_fallthru
      _
    %v108 = vld [vmem:[%s0] sm:$0xff]
    %v110 = vcombine.high %v108, %v108
    %111 = vrot.lane.b32.xlu0 %v108, 1
    %v112 = vpop.permute.xlu0 %111
    %113 = vrot.lane.b32.xlu0 %v110, 1
    %v114 = vpop.permute.xlu0 %113
    %vm115 = vcmask 7168
    %v116 = vsel %vm115, %v112, %v114
    %v119 = vsel %vm115, %v108, %v112
    %120 = vrot.lane.b32.xlu0 %v108, 127
    %v121 = vpop.permute.xlu0 %120
    %122 = vrot.lane.b32.xlu0 %v110, 127
    %v123 = vpop.permute.xlu0 %122
    %vm124 = vcmask 1039360
    %v125 = vsel %vm124, %v121, %v123
    %vm129 = vcmask 252928
    %v130 = vsel %vm129, %v123, %v110
    %v131 = vlaneseq
    %v132 = vand.u32 %v131, 127
    %v133 = vadd.s32 %v132, 128
    %vm134 = vcmp.lt.s32.totalorder %v132, 0
    %v135 = vsub.s32 0, %v132
    %v136 = vsel %vm134, %v135, %v132
    %v137 = vmul.u32.u64.compose %v136, 3435973837
    %v138 = vextract.low.u32 %v137
    %v139 = vextract.high.u32 %v137
    %v140 = vshrl.u32 %v139, 6
    %v141 = vmul.u32 %v140, 80
    %v142 = vsub.s32 %v136, %v141
    %v143 = vsub.s32 0, %v142
    %v144 = vsel %vm134, %v143, %v142
    %vm145 = vcmp.lt.s32.totalorder %v133, 0
    %v146 = vsub.s32 0, %v133
    %v147 = vsel %vm145, %v146, %v133
    %v148 = vmul.u32.u64.compose %v147, 3435973837
    %v149 = vextract.low.u32 %v148
    %v150 = vextract.high.u32 %v148
    %v151 = vshrl.u32 %v150, 6
    %v152 = vmul.u32 %v151, 80
    %v153 = vsub.s32 %v147, %v152
    %v154 = vsub.s32 0, %v153
    %v155 = vsel %vm145, %v154, %v153
    %vm156 = vcmp.ne.s32.totalorder %v144, 0
    %vm157 = vcmp.ne.s32.totalorder %v155, 0
    %vm158 = vcmp.lt.s32.totalorder %v144, 0
    %vm159 = vcmp.lt.s32.totalorder %v155, 0
    %vm160 = vmand %vm158, %vm156
    %vm161 = vmand %vm159, %vm157
    %v162 = vadd.s32 %v144, 80
    %v163 = vadd.s32 %v155, 80
    %v164 = vsel %vm160, %v162, %v144
    %v165 = vsel %vm161, %v163, %v155
    %vm166 = vcmp.eq.s32.totalorder %v164, 0
    %vm167 = vcmp.eq.s32.totalorder %v165, 0
    %v168 = vsel %vm166, %v108, %v119
    %v169 = vsel %vm167, %v110, %v116
    %vm170 = vcmp.eq.s32.totalorder %v164, 79
    %vm171 = vcmp.eq.s32.totalorder %v165, 79
    %v172 = vsel %vm170, %v108, %v125
    %v173 = vsel %vm171, %v110, %v130
    %v174 = vld [vmem:[%s1] sm:$0xff]
    %v175 = vld [vmem:[%s1 + $0x8] sm:$0xff]
    %v176 = vld [vmem:[%s1 + $0x10] sm:$0xff]
    %v177 = vld [vmem:[%s1 + $0x18] sm:$0xff]
    %v178 = vld [vmem:[%s1 + $0x20] sm:$0xff]
    %v179 = vld [vmem:[%s1 + $0x28] sm:$0xff]
    %v180 = vld [vmem:[%s1 + $0x30] sm:$0xff]
    %v181 = vld [vmem:[%s1 + $0x38] sm:$0xff]
    %s182 = scalar_lea.vmem %s1, 64
    %v183 = vld [vmem:[%s182] sm:$0xff]
    %v184 = vld [vmem:[%s182 + $0x8] sm:$0xff]
    %v185 = vld [vmem:[%s182 + $0x10] sm:$0xff]
    %v186 = vld [vmem:[%s182 + $0x18] sm:$0xff]
    %v187 = vld [vmem:[%s182 + $0x20] sm:$0xff]
    %v188 = vld [vmem:[%s182 + $0x28] sm:$0xff]
    %v189 = vld [vmem:[%s182 + $0x30] sm:$0xff]
    %v190 = vld [vmem:[%s182 + $0x38] sm:$0xff]
    %vm191 = vcmask 31744
    %v193 = vsel %vm191, %v183, 0
    %v196 = vsel %vm191, %v184, 0
    %v199 = vsel %vm191, %v185, 0
    %v202 = vsel %vm191, %v186, 0
    %v205 = vsel %vm191, %v187, 0
    %v208 = vsel %vm191, %v188, 0
    %v211 = vsel %vm191, %v189, 0
    %v214 = vsel %vm191, %v190, 0
    %vm216 = vcmask 1043456
    %v217 = vsel %vm216, %v108, 0
    %v219 = vsel %vm216, %v110, 0
    %221 = vmatprep.subr.mxu0 0.0
    %222 = vmatpush1.msra.mxu0 0.0
    %223 = vmatprep.subr.mxu0 0.0
    %224 = vmatpush1.msra.mxu0 0.0
    %225 = vmatprep.subr.mxu0 0.0
    %226 = vmatpush1.msra.mxu0 0.0
    %227 = vmatprep.subr.mxu0 0.0
    %228 = vmatpush1.msra.mxu0 0.0
    %229 = vmatprep.subr.mxu0 0.0
    %230 = vmatpush1.msra.mxu0 0.0
    %231 = vmatprep.subr.mxu0 0.0
    %232 = vmatpush1.msra.mxu0 0.0
    %233 = vmatprep.subr.mxu0 0.0
    %234 = vmatpush1.msra.mxu0 0.0
    %235 = vmatprep.subr.mxu0 0.0
    %236 = vmatpush1.msra.mxu0 0.0
    %237 = vmatprep.subr.mxu0 0.0
    %238 = vmatpush1.msra.mxu0 0.0
    %239 = vmatprep.subr.mxu0 0.0
    %240 = vmatpush1.msra.mxu0 0.0
    %241 = vmatprep.subr.mxu0 0.0
    %242 = vmatpush1.msra.mxu0 0.0
    %243 = vmatprep.subr.mxu0 0.0
    %244 = vmatpush1.msra.mxu0 0.0
    %245 = vmatprep.subr.mxu0 0.0
    %246 = vmatpush1.msra.mxu0 0.0
    %247 = vmatprep.subr.mxu0 0.0
    %248 = vmatpush1.msra.mxu0 0.0
    %249 = vmatprep.subr.mxu0 0.0
    %250 = vmatpush1.msra.mxu0 0.0
    %251 = vmatprep.subr.mxu0 %v219
    %252 = vmatpush1.msra.mxu0 %v217
    %253 = vmatprep.subr.mxu0 0.0
    %254 = vmatpush2.msra.mxu0 0.0
    %255 = vmatprep.subr.mxu0 0.0
    %256 = vmatpush2.msra.mxu0 0.0
    %257 = vmatprep.subr.mxu0 0.0
    %258 = vmatpush2.msra.mxu0 0.0
    %259 = vmatprep.subr.mxu0 0.0
    %260 = vmatpush2.msra.mxu0 0.0
    %261 = vmatprep.subr.mxu0 0.0
    %262 = vmatpush2.msra.mxu0 0.0
    %263 = vmatprep.subr.mxu0 0.0
    %264 = vmatpush2.msra.mxu0 0.0
    %265 = vmatprep.subr.mxu0 0.0
    %266 = vmatpush2.msra.mxu0 0.0
    %267 = vmatprep.subr.mxu0 0.0
    %268 = vmatpush2.msra.mxu0 0.0
    %269 = vmatprep.subr.mxu0 0.0
    %270 = vmatpush2.msra.mxu0 0.0
    %271 = vmatprep.subr.mxu0 0.0
    %272 = vmatpush2.msra.mxu0 0.0
    %273 = vmatprep.subr.mxu0 0.0
    %274 = vmatpush2.msra.mxu0 0.0
    %275 = vmatprep.subr.mxu0 0.0
    %276 = vmatpush2.msra.mxu0 0.0
    %277 = vmatprep.subr.mxu0 0.0
    %278 = vmatpush2.msra.mxu0 0.0
    %279 = vmatprep.subr.mxu0 0.0
    %280 = vmatpush2.msra.mxu0 0.0
    %281 = vmatprep.subr.mxu0 0.0
    %282 = vmatpush2.msra.mxu0 0.0
    %283 = vmatprep.subr.mxu0 0.0
    %284 = vmatpush2.msra.mxu0 0.0
    %285 = vmatprep.mubr.f32.mxu0 0.0
    %286 = vmatmul.mubr.f32.gmra.mxu0 %v193
    %v287 = vpop.f32.mrf.mxu0
    %v288 = vadd.f32 0.0, %v287
    %v289 = vpop.f32.mrf.mxu0
    %v290 = vadd.f32 0.0, %v289
    %291 = vmatprep.mubr.f32.mxu0 0.0
    %292 = vmatmul.mubr.f32.gmra.mxu0 %v196
    %v293 = vpop.f32.mrf.mxu0
    %v294 = vadd.f32 0.0, %v293
    %v295 = vpop.f32.mrf.mxu0
    %v296 = vadd.f32 0.0, %v295
    %297 = vmatprep.mubr.f32.mxu0 0.0
    %298 = vmatmul.mubr.f32.gmra.mxu0 %v199
    %v299 = vpop.f32.mrf.mxu0
    %v300 = vadd.f32 0.0, %v299
    %v301 = vpop.f32.mrf.mxu0
    %v302 = vadd.f32 0.0, %v301
    %303 = vmatprep.mubr.f32.mxu0 0.0
    %304 = vmatmul.mubr.f32.gmra.mxu0 %v202
    %v305 = vpop.f32.mrf.mxu0
    %v306 = vadd.f32 0.0, %v305
    %v307 = vpop.f32.mrf.mxu0
    %v308 = vadd.f32 0.0, %v307
    %309 = vmatprep.mubr.f32.mxu0 0.0
    %310 = vmatmul.mubr.f32.gmra.mxu0 %v205
    %v311 = vpop.f32.mrf.mxu0
    %v312 = vadd.f32 0.0, %v311
    %v313 = vpop.f32.mrf.mxu0
    %v314 = vadd.f32 0.0, %v313
    %315 = vmatprep.mubr.f32.mxu0 0.0
    %316 = vmatmul.mubr.f32.gmra.mxu0 %v208
    %v317 = vpop.f32.mrf.mxu0
    %v318 = vadd.f32 0.0, %v317
    %v319 = vpop.f32.mrf.mxu0
    %v320 = vadd.f32 0.0, %v319
    %321 = vmatprep.mubr.f32.mxu0 0.0
    %322 = vmatmul.mubr.f32.gmra.mxu0 %v211
    %v323 = vpop.f32.mrf.mxu0
    %v324 = vadd.f32 0.0, %v323
    %v325 = vpop.f32.mrf.mxu0
    %v326 = vadd.f32 0.0, %v325
    %327 = vmatprep.mubr.f32.mxu0 0.0
    %328 = vmatmul.mubr.f32.gmra.mxu0 %v214
    %v329 = vpop.f32.mrf.mxu0
    %v330 = vadd.f32 0.0, %v329
    %v331 = vpop.f32.mrf.mxu0
    %v332 = vadd.f32 0.0, %v331
    %333 = vdwg.mxu0
    %v335 = vsel %vm191, %v174, 0
    %v338 = vsel %vm191, %v175, 0
    %v341 = vsel %vm191, %v176, 0
    %v344 = vsel %vm191, %v177, 0
    %v347 = vsel %vm191, %v178, 0
    %v350 = vsel %vm191, %v179, 0
    %v353 = vsel %vm191, %v180, 0
    %v356 = vsel %vm191, %v181, 0
    %v359 = vsel %vm216, %v168, 0
    %v362 = vsel %vm216, %v169, 0
    %364 = vmatprep.subr.mxu0 0.0
    %365 = vmatpush1.msra.mxu0 0.0
    %366 = vmatprep.subr.mxu0 0.0
    %367 = vmatpush1.msra.mxu0 0.0
    %368 = vmatprep.subr.mxu0 0.0
    %369 = vmatpush1.msra.mxu0 0.0
    %370 = vmatprep.subr.mxu0 0.0
    %371 = vmatpush1.msra.mxu0 0.0
    %372 = vmatprep.subr.mxu0 0.0
    %373 = vmatpush1.msra.mxu0 0.0
    %374 = vmatprep.subr.mxu0 0.0
    %375 = vmatpush1.msra.mxu0 0.0
    %376 = vmatprep.subr.mxu0 0.0
    %377 = vmatpush1.msra.mxu0 0.0
    %378 = vmatprep.subr.mxu0 0.0
    %379 = vmatpush1.msra.mxu0 0.0
    %380 = vmatprep.subr.mxu0 0.0
    %381 = vmatpush1.msra.mxu0 0.0
    %382 = vmatprep.subr.mxu0 0.0
    %383 = vmatpush1.msra.mxu0 0.0
    %384 = vmatprep.subr.mxu0 0.0
    %385 = vmatpush1.msra.mxu0 0.0
    %386 = vmatprep.subr.mxu0 0.0
    %387 = vmatpush1.msra.mxu0 0.0
    %388 = vmatprep.subr.mxu0 0.0
    %389 = vmatpush1.msra.mxu0 0.0
    %390 = vmatprep.subr.mxu0 0.0
    %391 = vmatpush1.msra.mxu0 0.0
    %392 = vmatprep.subr.mxu0 0.0
    %393 = vmatpush1.msra.mxu0 0.0
    %394 = vmatprep.subr.mxu0 %v362
    %395 = vmatpush1.msra.mxu0 %v359
    %396 = vmatprep.subr.mxu0 0.0
    %397 = vmatpush2.msra.mxu0 0.0
    %398 = vmatprep.subr.mxu0 0.0
    %399 = vmatpush2.msra.mxu0 0.0
    %400 = vmatprep.subr.mxu0 0.0
    %401 = vmatpush2.msra.mxu0 0.0
    %402 = vmatprep.subr.mxu0 0.0
    %403 = vmatpush2.msra.mxu0 0.0
    %404 = vmatprep.subr.mxu0 0.0
    %405 = vmatpush2.msra.mxu0 0.0
    %406 = vmatprep.subr.mxu0 0.0
    %407 = vmatpush2.msra.mxu0 0.0
    %408 = vmatprep.subr.mxu0 0.0
    %409 = vmatpush2.msra.mxu0 0.0
    %410 = vmatprep.subr.mxu0 0.0
    %411 = vmatpush2.msra.mxu0 0.0
    %412 = vmatprep.subr.mxu0 0.0
    %413 = vmatpush2.msra.mxu0 0.0
    %414 = vmatprep.subr.mxu0 0.0
    %415 = vmatpush2.msra.mxu0 0.0
    %416 = vmatprep.subr.mxu0 0.0
    %417 = vmatpush2.msra.mxu0 0.0
    %418 = vmatprep.subr.mxu0 0.0
    %419 = vmatpush2.msra.mxu0 0.0
    %420 = vmatprep.subr.mxu0 0.0
    %421 = vmatpush2.msra.mxu0 0.0
    %422 = vmatprep.subr.mxu0 0.0
    %423 = vmatpush2.msra.mxu0 0.0
    %424 = vmatprep.subr.mxu0 0.0
    %425 = vmatpush2.msra.mxu0 0.0
    %426 = vmatprep.subr.mxu0 0.0
    %427 = vmatpush2.msra.mxu0 0.0
    %428 = vmatprep.mubr.f32.mxu0 0.0
    %429 = vmatmul.mubr.f32.gmra.mxu0 %v335
    %v430 = vpop.f32.mrf.mxu0
    %v431 = vadd.f32 %v288, %v430
    %v432 = vpop.f32.mrf.mxu0
    %v433 = vadd.f32 %v290, %v432
    %434 = vmatprep.mubr.f32.mxu0 0.0
    %435 = vmatmul.mubr.f32.gmra.mxu0 %v338
    %v436 = vpop.f32.mrf.mxu0
    %v437 = vadd.f32 %v294, %v436
    %v438 = vpop.f32.mrf.mxu0
    %v439 = vadd.f32 %v296, %v438
    %440 = vmatprep.mubr.f32.mxu0 0.0
    %441 = vmatmul.mubr.f32.gmra.mxu0 %v341
    %v442 = vpop.f32.mrf.mxu0
    %v443 = vadd.f32 %v300, %v442
    %v444 = vpop.f32.mrf.mxu0
    %v445 = vadd.f32 %v302, %v444
    %446 = vmatprep.mubr.f32.mxu0 0.0
    %447 = vmatmul.mubr.f32.gmra.mxu0 %v344
    %v448 = vpop.f32.mrf.mxu0
    %v449 = vadd.f32 %v306, %v448
    %v450 = vpop.f32.mrf.mxu0
    %v451 = vadd.f32 %v308, %v450
    %452 = vmatprep.mubr.f32.mxu0 0.0
    %453 = vmatmul.mubr.f32.gmra.mxu0 %v347
    %v454 = vpop.f32.mrf.mxu0
    %v455 = vadd.f32 %v312, %v454
    %v456 = vpop.f32.mrf.mxu0
    %v457 = vadd.f32 %v314, %v456
    %458 = vmatprep.mubr.f32.mxu0 0.0
    %459 = vmatmul.mubr.f32.gmra.mxu0 %v350
    %v460 = vpop.f32.mrf.mxu0
    %v461 = vadd.f32 %v318, %v460
    %v462 = vpop.f32.mrf.mxu0
    %v463 = vadd.f32 %v320, %v462
    %464 = vmatprep.mubr.f32.mxu0 0.0
    %465 = vmatmul.mubr.f32.gmra.mxu0 %v353
    %v466 = vpop.f32.mrf.mxu0
    %v467 = vadd.f32 %v324, %v466
    %v468 = vpop.f32.mrf.mxu0
    %v469 = vadd.f32 %v326, %v468
    %470 = vmatprep.mubr.f32.mxu0 0.0
    %471 = vmatmul.mubr.f32.gmra.mxu0 %v356
    %v472 = vpop.f32.mrf.mxu0
    %v473 = vadd.f32 %v330, %v472
    %v474 = vpop.f32.mrf.mxu0
    %v475 = vadd.f32 %v332, %v474
    %476 = vdwg.mxu0
    %s477 = scalar_lea.vmem %s1, 128
    %v478 = vld [vmem:[%s477] sm:$0xff]
    %v479 = vld [vmem:[%s477 + $0x8] sm:$0xff]
    %v480 = vld [vmem:[%s477 + $0x10] sm:$0xff]
    %v481 = vld [vmem:[%s477 + $0x18] sm:$0xff]
    %v482 = vld [vmem:[%s477 + $0x20] sm:$0xff]
    %v483 = vld [vmem:[%s477 + $0x28] sm:$0xff]
    %v484 = vld [vmem:[%s477 + $0x30] sm:$0xff]
    %v485 = vld [vmem:[%s477 + $0x38] sm:$0xff]
    %v487 = vsel %vm191, %v478, 0
    %v490 = vsel %vm191, %v479, 0
    %v493 = vsel %vm191, %v480, 0
    %v496 = vsel %vm191, %v481, 0
    %v499 = vsel %vm191, %v482, 0
    %v502 = vsel %vm191, %v483, 0
    %v505 = vsel %vm191, %v484, 0
    %v508 = vsel %vm191, %v485, 0
    %v511 = vsel %vm216, %v172, 0
    %v514 = vsel %vm216, %v173, 0
    %516 = vmatprep.subr.mxu0 0.0
    %517 = vmatpush1.msra.mxu0 0.0
    %518 = vmatprep.subr.mxu0 0.0
    %519 = vmatpush1.msra.mxu0 0.0
    %520 = vmatprep.subr.mxu0 0.0
    %521 = vmatpush1.msra.mxu0 0.0
    %522 = vmatprep.subr.mxu0 0.0
    %523 = vmatpush1.msra.mxu0 0.0
    %524 = vmatprep.subr.mxu0 0.0
    %525 = vmatpush1.msra.mxu0 0.0
    %526 = vmatprep.subr.mxu0 0.0
    %527 = vmatpush1.msra.mxu0 0.0
    %528 = vmatprep.subr.mxu0 0.0
    %529 = vmatpush1.msra.mxu0 0.0
    %530 = vmatprep.subr.mxu0 0.0
    %531 = vmatpush1.msra.mxu0 0.0
    %532 = vmatprep.subr.mxu0 0.0
    %533 = vmatpush1.msra.mxu0 0.0
    %534 = vmatprep.subr.mxu0 0.0
    %535 = vmatpush1.msra.mxu0 0.0
    %536 = vmatprep.subr.mxu0 0.0
    %537 = vmatpush1.msra.mxu0 0.0
    %538 = vmatprep.subr.mxu0 0.0
    %539 = vmatpush1.msra.mxu0 0.0
    %540 = vmatprep.subr.mxu0 0.0
    %541 = vmatpush1.msra.mxu0 0.0
    %542 = vmatprep.subr.mxu0 0.0
    %543 = vmatpush1.msra.mxu0 0.0
    %544 = vmatprep.subr.mxu0 0.0
    %545 = vmatpush1.msra.mxu0 0.0
    %546 = vmatprep.subr.mxu0 %v514
    %547 = vmatpush1.msra.mxu0 %v511
    %548 = vmatprep.subr.mxu0 0.0
    %549 = vmatpush2.msra.mxu0 0.0
    %550 = vmatprep.subr.mxu0 0.0
    %551 = vmatpush2.msra.mxu0 0.0
    %552 = vmatprep.subr.mxu0 0.0
    %553 = vmatpush2.msra.mxu0 0.0
    %554 = vmatprep.subr.mxu0 0.0
    %555 = vmatpush2.msra.mxu0 0.0
    %556 = vmatprep.subr.mxu0 0.0
    %557 = vmatpush2.msra.mxu0 0.0
    %558 = vmatprep.subr.mxu0 0.0
    %559 = vmatpush2.msra.mxu0 0.0
    %560 = vmatprep.subr.mxu0 0.0
    %561 = vmatpush2.msra.mxu0 0.0
    %562 = vmatprep.subr.mxu0 0.0
    %563 = vmatpush2.msra.mxu0 0.0
    %564 = vmatprep.subr.mxu0 0.0
    %565 = vmatpush2.msra.mxu0 0.0
    %566 = vmatprep.subr.mxu0 0.0
    %567 = vmatpush2.msra.mxu0 0.0
    %568 = vmatprep.subr.mxu0 0.0
    %569 = vmatpush2.msra.mxu0 0.0
    %570 = vmatprep.subr.mxu0 0.0
    %571 = vmatpush2.msra.mxu0 0.0
    %572 = vmatprep.subr.mxu0 0.0
    %573 = vmatpush2.msra.mxu0 0.0
    %574 = vmatprep.subr.mxu0 0.0
    %575 = vmatpush2.msra.mxu0 0.0
    %576 = vmatprep.subr.mxu0 0.0
    %577 = vmatpush2.msra.mxu0 0.0
    %578 = vmatprep.subr.mxu0 0.0
    %579 = vmatpush2.msra.mxu0 0.0
    %580 = vmatprep.mubr.f32.mxu0 0.0
    %581 = vmatmul.mubr.f32.gmra.mxu0 %v487
    %v582 = vpop.f32.mrf.mxu0
    %v583 = vadd.f32 0.0, %v582
    %v584 = vpop.f32.mrf.mxu0
    %v585 = vadd.f32 0.0, %v584
    %586 = vmatprep.mubr.f32.mxu0 0.0
    %587 = vmatmul.mubr.f32.gmra.mxu0 %v490
    %v588 = vpop.f32.mrf.mxu0
    %v589 = vadd.f32 0.0, %v588
    %v590 = vpop.f32.mrf.mxu0
    %v591 = vadd.f32 0.0, %v590
    %592 = vmatprep.mubr.f32.mxu0 0.0
    %593 = vmatmul.mubr.f32.gmra.mxu0 %v493
    %v594 = vpop.f32.mrf.mxu0
    %v595 = vadd.f32 0.0, %v594
    %v596 = vpop.f32.mrf.mxu0
    %v597 = vadd.f32 0.0, %v596
    %598 = vmatprep.mubr.f32.mxu0 0.0
    %599 = vmatmul.mubr.f32.gmra.mxu0 %v496
    %v600 = vpop.f32.mrf.mxu0
    %v601 = vadd.f32 0.0, %v600
    %v602 = vpop.f32.mrf.mxu0
    %v603 = vadd.f32 0.0, %v602
    %604 = vmatprep.mubr.f32.mxu0 0.0
    %605 = vmatmul.mubr.f32.gmra.mxu0 %v499
    %v606 = vpop.f32.mrf.mxu0
    %v607 = vadd.f32 0.0, %v606
    %v608 = vpop.f32.mrf.mxu0
    %v609 = vadd.f32 0.0, %v608
    %610 = vmatprep.mubr.f32.mxu0 0.0
    %611 = vmatmul.mubr.f32.gmra.mxu0 %v502
    %v612 = vpop.f32.mrf.mxu0
    %v613 = vadd.f32 0.0, %v612
    %v614 = vpop.f32.mrf.mxu0
    %v615 = vadd.f32 0.0, %v614
    %616 = vmatprep.mubr.f32.mxu0 0.0
    %617 = vmatmul.mubr.f32.gmra.mxu0 %v505
    %v618 = vpop.f32.mrf.mxu0
    %v619 = vadd.f32 0.0, %v618
    %v620 = vpop.f32.mrf.mxu0
    %v621 = vadd.f32 0.0, %v620
    %622 = vmatprep.mubr.f32.mxu0 0.0
    %623 = vmatmul.mubr.f32.gmra.mxu0 %v508
    %v624 = vpop.f32.mrf.mxu0
    %v625 = vadd.f32 0.0, %v624
    %v626 = vpop.f32.mrf.mxu0
    %v627 = vadd.f32 0.0, %v626
    %628 = vdwg.mxu0
    %v629 = vadd.f32 %v431, %v583
    %v630 = vadd.f32 %v433, %v585
    %v631 = vadd.f32 %v437, %v589
    %v632 = vadd.f32 %v439, %v591
    %v633 = vadd.f32 %v443, %v595
    %v634 = vadd.f32 %v445, %v597
    %v635 = vadd.f32 %v449, %v601
    %v636 = vadd.f32 %v451, %v603
    %v637 = vadd.f32 %v455, %v607
    %v638 = vadd.f32 %v457, %v609
    %v639 = vadd.f32 %v461, %v613
    %v640 = vadd.f32 %v463, %v615
    %v641 = vadd.f32 %v467, %v619
    %v642 = vadd.f32 %v469, %v621
    %v643 = vadd.f32 %v473, %v625
    %v644 = vadd.f32 %v475, %v627
    %v645 = vld [vmem:[%s2] sm:$0xff]
    %v646 = vld [vmem:[%s2 + $0x8] sm:$0xff]
    %v647 = vld [vmem:[%s2 + $0x10] sm:$0xff]
    %v648 = vld [vmem:[%s2 + $0x18] sm:$0xff]
    %v649 = vld [vmem:[%s2 + $0x20] sm:$0xff]
    %v650 = vld [vmem:[%s2 + $0x28] sm:$0xff]
    %v651 = vld [vmem:[%s2 + $0x30] sm:$0xff]
    %v652 = vld [vmem:[%s2 + $0x38] sm:$0xff]
    %654 = vset.pattern.permute.xlu0 0
    %655 = vperm.xlu0 %654, %v645
    %v656 = vpop.permute.xlu0 %655
    %659 = vset.pattern.permute.xlu0 0
    %660 = vperm.xlu0 %659, %v646
    %v661 = vpop.permute.xlu0 %660
    %664 = vset.pattern.permute.xlu0 0
    %665 = vperm.xlu0 %664, %v647
    %v666 = vpop.permute.xlu0 %665
    %669 = vset.pattern.permute.xlu0 0
    %670 = vperm.xlu0 %669, %v648
    %v671 = vpop.permute.xlu0 %670
    %674 = vset.pattern.permute.xlu0 0
    %675 = vperm.xlu0 %674, %v649
    %v676 = vpop.permute.xlu0 %675
    %679 = vset.pattern.permute.xlu0 0
    %680 = vperm.xlu0 %679, %v650
    %v681 = vpop.permute.xlu0 %680
    %684 = vset.pattern.permute.xlu0 0
    %685 = vperm.xlu0 %684, %v651
    %v686 = vpop.permute.xlu0 %685
    %689 = vset.pattern.permute.xlu0 0
    %690 = vperm.xlu0 %689, %v652
    %v691 = vpop.permute.xlu0 %690
    %v693 = vmul.f32 %v629, %v656
    %v694 = vmul.f32 %v630, %v656
    %v695 = vmul.f32 %v631, %v661
    %v696 = vmul.f32 %v632, %v661
    %v697 = vmul.f32 %v633, %v666
    %v698 = vmul.f32 %v634, %v666
    %v699 = vmul.f32 %v635, %v671
    %v700 = vmul.f32 %v636, %v671
    %v701 = vmul.f32 %v637, %v676
    %v702 = vmul.f32 %v638, %v676
    %v703 = vmul.f32 %v639, %v681
    %v704 = vmul.f32 %v640, %v681
    %v705 = vmul.f32 %v641, %v686
    %v706 = vmul.f32 %v642, %v686
    %v707 = vmul.f32 %v643, %v691
    %v708 = vmul.f32 %v644, %v691
    %v709 = vld [vmem:[%s3] sm:$0xff]
    %v710 = vld [vmem:[%s3 + $0x8] sm:$0xff]
    %v711 = vld [vmem:[%s3 + $0x10] sm:$0xff]
    %v712 = vld [vmem:[%s3 + $0x18] sm:$0xff]
    %v713 = vld [vmem:[%s3 + $0x20] sm:$0xff]
    %v714 = vld [vmem:[%s3 + $0x28] sm:$0xff]
    %v715 = vld [vmem:[%s3 + $0x30] sm:$0xff]
    %v716 = vld [vmem:[%s3 + $0x38] sm:$0xff]
    %718 = vset.pattern.permute.xlu0 0
    %719 = vperm.xlu0 %718, %v709
    %v720 = vpop.permute.xlu0 %719
    %723 = vset.pattern.permute.xlu0 0
    %724 = vperm.xlu0 %723, %v710
    %v725 = vpop.permute.xlu0 %724
    %728 = vset.pattern.permute.xlu0 0
    %729 = vperm.xlu0 %728, %v711
    %v730 = vpop.permute.xlu0 %729
    %733 = vset.pattern.permute.xlu0 0
    %734 = vperm.xlu0 %733, %v712
    %v735 = vpop.permute.xlu0 %734
    %738 = vset.pattern.permute.xlu0 0
    %739 = vperm.xlu0 %738, %v713
    %v740 = vpop.permute.xlu0 %739
    %743 = vset.pattern.permute.xlu0 0
    %744 = vperm.xlu0 %743, %v714
    %v745 = vpop.permute.xlu0 %744
    %748 = vset.pattern.permute.xlu0 0
    %749 = vperm.xlu0 %748, %v715
    %v750 = vpop.permute.xlu0 %749
    %753 = vset.pattern.permute.xlu0 0
    %754 = vperm.xlu0 %753, %v716
    %v755 = vpop.permute.xlu0 %754
    %v757 = vadd.f32 %v693, %v720
    %v758 = vadd.f32 %v694, %v720
    %v759 = vadd.f32 %v695, %v725
    %v760 = vadd.f32 %v696, %v725
    %v761 = vadd.f32 %v697, %v730
    %v762 = vadd.f32 %v698, %v730
    %v763 = vadd.f32 %v699, %v735
    %v764 = vadd.f32 %v700, %v735
    %v765 = vadd.f32 %v701, %v740
    %v766 = vadd.f32 %v702, %v740
    %v767 = vadd.f32 %v703, %v745
    %v768 = vadd.f32 %v704, %v745
    %v769 = vadd.f32 %v705, %v750
    %v770 = vadd.f32 %v706, %v750
    %v771 = vadd.f32 %v707, %v755
    %v772 = vadd.f32 %v708, %v755
    %v773 = vmax.f32 %v757, 0.0
    %v774 = vmax.f32 %v758, 0.0
    %v775 = vmax.f32 %v759, 0.0
    %v776 = vmax.f32 %v760, 0.0
    %v777 = vmax.f32 %v761, 0.0
    %v778 = vmax.f32 %v762, 0.0
    %v779 = vmax.f32 %v763, 0.0
    %v780 = vmax.f32 %v764, 0.0
    %v781 = vmax.f32 %v765, 0.0
    %v782 = vmax.f32 %v766, 0.0
    %v783 = vmax.f32 %v767, 0.0
    %v784 = vmax.f32 %v768, 0.0
    %v785 = vmax.f32 %v769, 0.0
    %v786 = vmax.f32 %v770, 0.0
    %v787 = vmax.f32 %v771, 0.0
    %v788 = vmax.f32 %v772, 0.0
    %805 = vrot.lane.b32.xlu0 %v773, 1
    %v806 = vpop.permute.xlu0 %805
    %807 = vrot.lane.b32.xlu0 %v774, 1
    %v808 = vpop.permute.xlu0 %807
    %809 = vrot.lane.b32.xlu0 %v775, 1
    %v810 = vpop.permute.xlu0 %809
    %811 = vrot.lane.b32.xlu0 %v776, 1
    %v812 = vpop.permute.xlu0 %811
    %813 = vrot.lane.b32.xlu0 %v777, 1
    %v814 = vpop.permute.xlu0 %813
    %815 = vrot.lane.b32.xlu0 %v778, 1
    %v816 = vpop.permute.xlu0 %815
    %817 = vrot.lane.b32.xlu0 %v779, 1
    %v818 = vpop.permute.xlu0 %817
    %819 = vrot.lane.b32.xlu0 %v780, 1
    %v820 = vpop.permute.xlu0 %819
    %821 = vrot.lane.b32.xlu0 %v781, 1
    %v822 = vpop.permute.xlu0 %821
    %823 = vrot.lane.b32.xlu0 %v782, 1
    %v824 = vpop.permute.xlu0 %823
    %825 = vrot.lane.b32.xlu0 %v783, 1
    %v826 = vpop.permute.xlu0 %825
    %827 = vrot.lane.b32.xlu0 %v784, 1
    %v828 = vpop.permute.xlu0 %827
    %829 = vrot.lane.b32.xlu0 %v785, 1
    %v830 = vpop.permute.xlu0 %829
    %831 = vrot.lane.b32.xlu0 %v786, 1
    %v832 = vpop.permute.xlu0 %831
    %833 = vrot.lane.b32.xlu0 %v787, 1
    %v834 = vpop.permute.xlu0 %833
    %835 = vrot.lane.b32.xlu0 %v788, 1
    %v836 = vpop.permute.xlu0 %835
    %v837 = vsel %vm115, %v806, %v808
    %v838 = vsel %vm115, %v810, %v812
    %v839 = vsel %vm115, %v814, %v816
    %v840 = vsel %vm115, %v818, %v820
    %v841 = vsel %vm115, %v822, %v824
    %v842 = vsel %vm115, %v826, %v828
    %v843 = vsel %vm115, %v830, %v832
    %v844 = vsel %vm115, %v834, %v836
    %v861 = vsel %vm115, %v773, %v806
    %v862 = vsel %vm115, %v775, %v810
    %v863 = vsel %vm115, %v777, %v814
    %v864 = vsel %vm115, %v779, %v818
    %v865 = vsel %vm115, %v781, %v822
    %v866 = vsel %vm115, %v783, %v826
    %v867 = vsel %vm115, %v785, %v830
    %v868 = vsel %vm115, %v787, %v834
    %869 = vrot.lane.b32.xlu0 %v773, 127
    %v870 = vpop.permute.xlu0 %869
    %871 = vrot.lane.b32.xlu0 %v774, 127
    %v872 = vpop.permute.xlu0 %871
    %873 = vrot.lane.b32.xlu0 %v775, 127
    %v874 = vpop.permute.xlu0 %873
    %875 = vrot.lane.b32.xlu0 %v776, 127
    %v876 = vpop.permute.xlu0 %875
    %877 = vrot.lane.b32.xlu0 %v777, 127
    %v878 = vpop.permute.xlu0 %877
    %879 = vrot.lane.b32.xlu0 %v778, 127
    %v880 = vpop.permute.xlu0 %879
    %881 = vrot.lane.b32.xlu0 %v779, 127
    %v882 = vpop.permute.xlu0 %881
    %883 = vrot.lane.b32.xlu0 %v780, 127
    %v884 = vpop.permute.xlu0 %883
    %885 = vrot.lane.b32.xlu0 %v781, 127
    %v886 = vpop.permute.xlu0 %885
    %887 = vrot.lane.b32.xlu0 %v782, 127
    %v888 = vpop.permute.xlu0 %887
    %889 = vrot.lane.b32.xlu0 %v783, 127
    %v890 = vpop.permute.xlu0 %889
    %891 = vrot.lane.b32.xlu0 %v784, 127
    %v892 = vpop.permute.xlu0 %891
    %893 = vrot.lane.b32.xlu0 %v785, 127
    %v894 = vpop.permute.xlu0 %893
    %895 = vrot.lane.b32.xlu0 %v786, 127
    %v896 = vpop.permute.xlu0 %895
    %897 = vrot.lane.b32.xlu0 %v787, 127
    %v898 = vpop.permute.xlu0 %897
    %899 = vrot.lane.b32.xlu0 %v788, 127
    %v900 = vpop.permute.xlu0 %899
    %v901 = vsel %vm124, %v870, %v872
    %v902 = vsel %vm124, %v874, %v876
    %v903 = vsel %vm124, %v878, %v880
    %v904 = vsel %vm124, %v882, %v884
    %v905 = vsel %vm124, %v886, %v888
    %v906 = vsel %vm124, %v890, %v892
    %v907 = vsel %vm124, %v894, %v896
    %v908 = vsel %vm124, %v898, %v900
    %v925 = vsel %vm129, %v872, %v774
    %v926 = vsel %vm129, %v876, %v776
    %v927 = vsel %vm129, %v880, %v778
    %v928 = vsel %vm129, %v884, %v780
    %v929 = vsel %vm129, %v888, %v782
    %v930 = vsel %vm129, %v892, %v784
    %v931 = vsel %vm129, %v896, %v786
    %v932 = vsel %vm129, %v900, %v788
    %v933 = vsel %vm166, %v773, %v861
    %v934 = vsel %vm167, %v774, %v837
    %v935 = vsel %vm166, %v775, %v862
    %v936 = vsel %vm167, %v776, %v838
    %v937 = vsel %vm166, %v777, %v863
    %v938 = vsel %vm167, %v778, %v839
    %v939 = vsel %vm166, %v779, %v864
    %v940 = vsel %vm167, %v780, %v840
    %v941 = vsel %vm166, %v781, %v865
    %v942 = vsel %vm167, %v782, %v841
    %v943 = vsel %vm166, %v783, %v866
    %v944 = vsel %vm167, %v784, %v842
    %v945 = vsel %vm166, %v785, %v867
    %v946 = vsel %vm167, %v786, %v843
    %v947 = vsel %vm166, %v787, %v868
    %v948 = vsel %vm167, %v788, %v844
    %v949 = vsel %vm170, %v773, %v901
    %v950 = vsel %vm171, %v774, %v925
    %v951 = vsel %vm170, %v775, %v902
    %v952 = vsel %vm171, %v776, %v926
    %v953 = vsel %vm170, %v777, %v903
    %v954 = vsel %vm171, %v778, %v927
    %v955 = vsel %vm170, %v779, %v904
    %v956 = vsel %vm171, %v780, %v928
    %v957 = vsel %vm170, %v781, %v905
    %v958 = vsel %vm171, %v782, %v929
    %v959 = vsel %vm170, %v783, %v906
    %v960 = vsel %vm171, %v784, %v930
    %v961 = vsel %vm170, %v785, %v907
    %v962 = vsel %vm171, %v786, %v931
    %v963 = vsel %vm170, %v787, %v908
    %v964 = vsel %vm171, %v788, %v932
    %v965 = vld [vmem:[#allocation2] sm:$0xff]
    %v966 = vld [vmem:[#allocation2 + $0x8] sm:$0xff]
    %v967 = vld [vmem:[#allocation2 + $0x10] sm:$0xff]
    %v968 = vld [vmem:[#allocation2 + $0x18] sm:$0xff]
    %s969 = scalar_lea.vmem [#allocation2], 32
    %v970 = vld [vmem:[%s969] sm:$0xff]
    %v971 = vld [vmem:[%s969 + $0x8] sm:$0xff]
    %v972 = vld [vmem:[%s969 + $0x10] sm:$0xff]
    %v973 = vld [vmem:[%s969 + $0x18] sm:$0xff]
    %vm974 = vcmask 523264
    %v976 = vsel %vm974, %v970, 0
    %v979 = vsel %vm974, %v971, 0
    %v982 = vsel %vm974, %v972, 0
    %v985 = vsel %vm974, %v973, 0
    %987 = vmatprep.subr.mxu0 0.0
    %988 = vmatpush1.msra.mxu0 0.0
    %989 = vmatprep.subr.mxu0 0.0
    %990 = vmatpush1.msra.mxu0 0.0
    %991 = vmatprep.subr.mxu0 0.0
    %992 = vmatpush1.msra.mxu0 0.0
    %993 = vmatprep.subr.mxu0 0.0
    %994 = vmatpush1.msra.mxu0 0.0
    %995 = vmatprep.subr.mxu0 0.0
    %996 = vmatpush1.msra.mxu0 0.0
    %997 = vmatprep.subr.mxu0 0.0
    %998 = vmatpush1.msra.mxu0 0.0
    %999 = vmatprep.subr.mxu0 0.0
    %1000 = vmatpush1.msra.mxu0 0.0
    %1001 = vmatprep.subr.mxu0 0.0
    %1002 = vmatpush1.msra.mxu0 0.0
    %1003 = vmatprep.subr.mxu0 %v788
    %1004 = vmatpush1.msra.mxu0 %v787
    %1005 = vmatprep.subr.mxu0 %v786
    %1006 = vmatpush1.msra.mxu0 %v785
    %1007 = vmatprep.subr.mxu0 %v784
    %1008 = vmatpush1.msra.mxu0 %v783
    %1009 = vmatprep.subr.mxu0 %v782
    %1010 = vmatpush1.msra.mxu0 %v781
    %1011 = vmatprep.subr.mxu0 %v780
    %1012 = vmatpush1.msra.mxu0 %v779
    %1013 = vmatprep.subr.mxu0 %v778
    %1014 = vmatpush1.msra.mxu0 %v777
    %1015 = vmatprep.subr.mxu0 %v776
    %1016 = vmatpush1.msra.mxu0 %v775
    %1017 = vmatprep.subr.mxu0 %v774
    %1018 = vmatpush1.msra.mxu0 %v773
    %1019 = vmatprep.subr.mxu0 0.0
    %1020 = vmatpush2.msra.mxu0 0.0
    %1021 = vmatprep.subr.mxu0 0.0
    %1022 = vmatpush2.msra.mxu0 0.0
    %1023 = vmatprep.subr.mxu0 0.0
    %1024 = vmatpush2.msra.mxu0 0.0
    %1025 = vmatprep.subr.mxu0 0.0
    %1026 = vmatpush2.msra.mxu0 0.0
    %1027 = vmatprep.subr.mxu0 0.0
    %1028 = vmatpush2.msra.mxu0 0.0
    %1029 = vmatprep.subr.mxu0 0.0
    %1030 = vmatpush2.msra.mxu0 0.0
    %1031 = vmatprep.subr.mxu0 0.0
    %1032 = vmatpush2.msra.mxu0 0.0
    %1033 = vmatprep.subr.mxu0 0.0
    %1034 = vmatpush2.msra.mxu0 0.0
    %1035 = vmatprep.subr.mxu0 0.0
    %1036 = vmatpush2.msra.mxu0 0.0
    %1037 = vmatprep.subr.mxu0 0.0
    %1038 = vmatpush2.msra.mxu0 0.0
    %1039 = vmatprep.subr.mxu0 0.0
    %1040 = vmatpush2.msra.mxu0 0.0
    %1041 = vmatprep.subr.mxu0 0.0
    %1042 = vmatpush2.msra.mxu0 0.0
    %1043 = vmatprep.subr.mxu0 0.0
    %1044 = vmatpush2.msra.mxu0 0.0
    %1045 = vmatprep.subr.mxu0 0.0
    %1046 = vmatpush2.msra.mxu0 0.0
    %1047 = vmatprep.subr.mxu0 0.0
    %1048 = vmatpush2.msra.mxu0 0.0
    %1049 = vmatprep.subr.mxu0 0.0
    %1050 = vmatpush2.msra.mxu0 0.0
    %1051 = vmatprep.mubr.f32.mxu0 0.0
    %1052 = vmatmul.mubr.f32.gmra.mxu0 %v976
    %v1053 = vpop.f32.mrf.mxu0
    %v1054 = vadd.f32 0.0, %v1053
    %v1055 = vpop.f32.mrf.mxu0
    %v1056 = vadd.f32 0.0, %v1055
    %1057 = vmatprep.mubr.f32.mxu0 0.0
    %1058 = vmatmul.mubr.f32.gmra.mxu0 %v979
    %v1059 = vpop.f32.mrf.mxu0
    %v1060 = vadd.f32 0.0, %v1059
    %v1061 = vpop.f32.mrf.mxu0
    %v1062 = vadd.f32 0.0, %v1061
    %1063 = vmatprep.mubr.f32.mxu0 0.0
    %1064 = vmatmul.mubr.f32.gmra.mxu0 %v982
    %v1065 = vpop.f32.mrf.mxu0
    %v1066 = vadd.f32 0.0, %v1065
    %v1067 = vpop.f32.mrf.mxu0
    %v1068 = vadd.f32 0.0, %v1067
    %1069 = vmatprep.mubr.f32.mxu0 0.0
    %1070 = vmatmul.mubr.f32.gmra.mxu0 %v985
    %v1071 = vpop.f32.mrf.mxu0
    %v1072 = vadd.f32 0.0, %v1071
    %v1073 = vpop.f32.mrf.mxu0
    %v1074 = vadd.f32 0.0, %v1073
    %1075 = vdwg.mxu0
    %v1077 = vsel %vm974, %v965, 0
    %v1080 = vsel %vm974, %v966, 0
    %v1083 = vsel %vm974, %v967, 0
    %v1086 = vsel %vm974, %v968, 0
    %1088 = vmatprep.subr.mxu0 0.0
    %1089 = vmatpush1.msra.mxu0 0.0
    %1090 = vmatprep.subr.mxu0 0.0
    %1091 = vmatpush1.msra.mxu0 0.0
    %1092 = vmatprep.subr.mxu0 0.0
    %1093 = vmatpush1.msra.mxu0 0.0
    %1094 = vmatprep.subr.mxu0 0.0
    %1095 = vmatpush1.msra.mxu0 0.0
    %1096 = vmatprep.subr.mxu0 0.0
    %1097 = vmatpush1.msra.mxu0 0.0
    %1098 = vmatprep.subr.mxu0 0.0
    %1099 = vmatpush1.msra.mxu0 0.0
    %1100 = vmatprep.subr.mxu0 0.0
    %1101 = vmatpush1.msra.mxu0 0.0
    %1102 = vmatprep.subr.mxu0 0.0
    %1103 = vmatpush1.msra.mxu0 0.0
    %1104 = vmatprep.subr.mxu0 %v948
    %1105 = vmatpush1.msra.mxu0 %v947
    %1106 = vmatprep.subr.mxu0 %v946
    %1107 = vmatpush1.msra.mxu0 %v945
    %1108 = vmatprep.subr.mxu0 %v944
    %1109 = vmatpush1.msra.mxu0 %v943
    %1110 = vmatprep.subr.mxu0 %v942
    %1111 = vmatpush1.msra.mxu0 %v941
    %1112 = vmatprep.subr.mxu0 %v940
    %1113 = vmatpush1.msra.mxu0 %v939
    %1114 = vmatprep.subr.mxu0 %v938
    %1115 = vmatpush1.msra.mxu0 %v937
    %1116 = vmatprep.subr.mxu0 %v936
    %1117 = vmatpush1.msra.mxu0 %v935
    %1118 = vmatprep.subr.mxu0 %v934
    %1119 = vmatpush1.msra.mxu0 %v933
    %1120 = vmatprep.subr.mxu0 0.0
    %1121 = vmatpush2.msra.mxu0 0.0
    %1122 = vmatprep.subr.mxu0 0.0
    %1123 = vmatpush2.msra.mxu0 0.0
    %1124 = vmatprep.subr.mxu0 0.0
    %1125 = vmatpush2.msra.mxu0 0.0
    %1126 = vmatprep.subr.mxu0 0.0
    %1127 = vmatpush2.msra.mxu0 0.0
    %1128 = vmatprep.subr.mxu0 0.0
    %1129 = vmatpush2.msra.mxu0 0.0
    %1130 = vmatprep.subr.mxu0 0.0
    %1131 = vmatpush2.msra.mxu0 0.0
    %1132 = vmatprep.subr.mxu0 0.0
    %1133 = vmatpush2.msra.mxu0 0.0
    %1134 = vmatprep.subr.mxu0 0.0
    %1135 = vmatpush2.msra.mxu0 0.0
    %1136 = vmatprep.subr.mxu0 0.0
    %1137 = vmatpush2.msra.mxu0 0.0
    %1138 = vmatprep.subr.mxu0 0.0
    %1139 = vmatpush2.msra.mxu0 0.0
    %1140 = vmatprep.subr.mxu0 0.0
    %1141 = vmatpush2.msra.mxu0 0.0
    %1142 = vmatprep.subr.mxu0 0.0
    %1143 = vmatpush2.msra.mxu0 0.0
    %1144 = vmatprep.subr.mxu0 0.0
    %1145 = vmatpush2.msra.mxu0 0.0
    %1146 = vmatprep.subr.mxu0 0.0
    %1147 = vmatpush2.msra.mxu0 0.0
    %1148 = vmatprep.subr.mxu0 0.0
    %1149 = vmatpush2.msra.mxu0 0.0
    %1150 = vmatprep.subr.mxu0 0.0
    %1151 = vmatpush2.msra.mxu0 0.0
    %1152 = vmatprep.mubr.f32.mxu0 0.0
    %1153 = vmatmul.mubr.f32.gmra.mxu0 %v1077
    %v1154 = vpop.f32.mrf.mxu0
    %v1155 = vadd.f32 %v1054, %v1154
    %v1156 = vpop.f32.mrf.mxu0
    %v1157 = vadd.f32 %v1056, %v1156
    %1158 = vmatprep.mubr.f32.mxu0 0.0
    %1159 = vmatmul.mubr.f32.gmra.mxu0 %v1080
    %v1160 = vpop.f32.mrf.mxu0
    %v1161 = vadd.f32 %v1060, %v1160
    %v1162 = vpop.f32.mrf.mxu0
    %v1163 = vadd.f32 %v1062, %v1162
    %1164 = vmatprep.mubr.f32.mxu0 0.0
    %1165 = vmatmul.mubr.f32.gmra.mxu0 %v1083
    %v1166 = vpop.f32.mrf.mxu0
    %v1167 = vadd.f32 %v1066, %v1166
    %v1168 = vpop.f32.mrf.mxu0
    %v1169 = vadd.f32 %v1068, %v1168
    %1170 = vmatprep.mubr.f32.mxu0 0.0
    %1171 = vmatmul.mubr.f32.gmra.mxu0 %v1086
    %v1172 = vpop.f32.mrf.mxu0
    %v1173 = vadd.f32 %v1072, %v1172
    %v1174 = vpop.f32.mrf.mxu0
    %v1175 = vadd.f32 %v1074, %v1174
    %1176 = vdwg.mxu0
    %s1177 = scalar_lea.vmem [#allocation2], 64
    %v1178 = vld [vmem:[%s1177] sm:$0xff]
    %v1179 = vld [vmem:[%s1177 + $0x8] sm:$0xff]
    %v1180 = vld [vmem:[%s1177 + $0x10] sm:$0xff]
    %v1181 = vld [vmem:[%s1177 + $0x18] sm:$0xff]
    %v1183 = vsel %vm974, %v1178, 0
    %v1186 = vsel %vm974, %v1179, 0
    %v1189 = vsel %vm974, %v1180, 0
    %v1192 = vsel %vm974, %v1181, 0
    %1194 = vmatprep.subr.mxu0 0.0
    %1195 = vmatpush1.msra.mxu0 0.0
    %1196 = vmatprep.subr.mxu0 0.0
    %1197 = vmatpush1.msra.mxu0 0.0
    %1198 = vmatprep.subr.mxu0 0.0
    %1199 = vmatpush1.msra.mxu0 0.0
    %1200 = vmatprep.subr.mxu0 0.0
    %1201 = vmatpush1.msra.mxu0 0.0
    %1202 = vmatprep.subr.mxu0 0.0
    %1203 = vmatpush1.msra.mxu0 0.0
    %1204 = vmatprep.subr.mxu0 0.0
    %1205 = vmatpush1.msra.mxu0 0.0
    %1206 = vmatprep.subr.mxu0 0.0
    %1207 = vmatpush1.msra.mxu0 0.0
    %1208 = vmatprep.subr.mxu0 0.0
    %1209 = vmatpush1.msra.mxu0 0.0
    %1210 = vmatprep.subr.mxu0 %v964
    %1211 = vmatpush1.msra.mxu0 %v963
    %1212 = vmatprep.subr.mxu0 %v962
    %1213 = vmatpush1.msra.mxu0 %v961
    %1214 = vmatprep.subr.mxu0 %v960
    %1215 = vmatpush1.msra.mxu0 %v959
    %1216 = vmatprep.subr.mxu0 %v958
    %1217 = vmatpush1.msra.mxu0 %v957
    %1218 = vmatprep.subr.mxu0 %v956
    %1219 = vmatpush1.msra.mxu0 %v955
    %1220 = vmatprep.subr.mxu0 %v954
    %1221 = vmatpush1.msra.mxu0 %v953
    %1222 = vmatprep.subr.mxu0 %v952
    %1223 = vmatpush1.msra.mxu0 %v951
    %1224 = vmatprep.subr.mxu0 %v950
    %1225 = vmatpush1.msra.mxu0 %v949
    %1226 = vmatprep.subr.mxu0 0.0
    %1227 = vmatpush2.msra.mxu0 0.0
    %1228 = vmatprep.subr.mxu0 0.0
    %1229 = vmatpush2.msra.mxu0 0.0
    %1230 = vmatprep.subr.mxu0 0.0
    %1231 = vmatpush2.msra.mxu0 0.0
    %1232 = vmatprep.subr.mxu0 0.0
    %1233 = vmatpush2.msra.mxu0 0.0
    %1234 = vmatprep.subr.mxu0 0.0
    %1235 = vmatpush2.msra.mxu0 0.0
    %1236 = vmatprep.subr.mxu0 0.0
    %1237 = vmatpush2.msra.mxu0 0.0
    %1238 = vmatprep.subr.mxu0 0.0
    %1239 = vmatpush2.msra.mxu0 0.0
    %1240 = vmatprep.subr.mxu0 0.0
    %1241 = vmatpush2.msra.mxu0 0.0
    %1242 = vmatprep.subr.mxu0 0.0
    %1243 = vmatpush2.msra.mxu0 0.0
    %1244 = vmatprep.subr.mxu0 0.0
    %1245 = vmatpush2.msra.mxu0 0.0
    %1246 = vmatprep.subr.mxu0 0.0
    %1247 = vmatpush2.msra.mxu0 0.0
    %1248 = vmatprep.subr.mxu0 0.0
    %1249 = vmatpush2.msra.mxu0 0.0
    %1250 = vmatprep.subr.mxu0 0.0
    %1251 = vmatpush2.msra.mxu0 0.0
    %1252 = vmatprep.subr.mxu0 0.0
    %1253 = vmatpush2.msra.mxu0 0.0
    %1254 = vmatprep.subr.mxu0 0.0
    %1255 = vmatpush2.msra.mxu0 0.0
    %1256 = vmatprep.subr.mxu0 0.0
    %1257 = vmatpush2.msra.mxu0 0.0
    %1258 = vmatprep.mubr.f32.mxu0 0.0
    %1259 = vmatmul.mubr.f32.gmra.mxu0 %v1183
    %v1260 = vpop.f32.mrf.mxu0
    %v1261 = vadd.f32 0.0, %v1260
    %v1262 = vpop.f32.mrf.mxu0
    %v1263 = vadd.f32 0.0, %v1262
    %1264 = vmatprep.mubr.f32.mxu0 0.0
    %1265 = vmatmul.mubr.f32.gmra.mxu0 %v1186
    %v1266 = vpop.f32.mrf.mxu0
    %v1267 = vadd.f32 0.0, %v1266
    %v1268 = vpop.f32.mrf.mxu0
    %v1269 = vadd.f32 0.0, %v1268
    %1270 = vmatprep.mubr.f32.mxu0 0.0
    %1271 = vmatmul.mubr.f32.gmra.mxu0 %v1189
    %v1272 = vpop.f32.mrf.mxu0
    %v1273 = vadd.f32 0.0, %v1272
    %v1274 = vpop.f32.mrf.mxu0
    %v1275 = vadd.f32 0.0, %v1274
    %1276 = vmatprep.mubr.f32.mxu0 0.0
    %1277 = vmatmul.mubr.f32.gmra.mxu0 %v1192
    %v1278 = vpop.f32.mrf.mxu0
    %v1279 = vadd.f32 0.0, %v1278
    %v1280 = vpop.f32.mrf.mxu0
    %v1281 = vadd.f32 0.0, %v1280
    %1282 = vdwg.mxu0
    %v1283 = vadd.f32 %v1155, %v1261
    %v1284 = vadd.f32 %v1157, %v1263
    %v1285 = vadd.f32 %v1161, %v1267
    %v1286 = vadd.f32 %v1163, %v1269
    %v1287 = vadd.f32 %v1167, %v1273
    %v1288 = vadd.f32 %v1169, %v1275
    %v1289 = vadd.f32 %v1173, %v1279
    %v1290 = vadd.f32 %v1175, %v1281
    %v1291 = vld [vmem:[%s5] sm:$0xff]
    %v1292 = vld [vmem:[%s5 + $0x8] sm:$0xff]
    %v1293 = vld [vmem:[%s5 + $0x10] sm:$0xff]
    %v1294 = vld [vmem:[%s5 + $0x18] sm:$0xff]
    %1296 = vset.pattern.permute.xlu0 0
    %1297 = vperm.xlu0 %1296, %v1291
    %v1298 = vpop.permute.xlu0 %1297
    %1301 = vset.pattern.permute.xlu0 0
    %1302 = vperm.xlu0 %1301, %v1292
    %v1303 = vpop.permute.xlu0 %1302
    %1306 = vset.pattern.permute.xlu0 0
    %1307 = vperm.xlu0 %1306, %v1293
    %v1308 = vpop.permute.xlu0 %1307
    %1311 = vset.pattern.permute.xlu0 0
    %1312 = vperm.xlu0 %1311, %v1294
    %v1313 = vpop.permute.xlu0 %1312
    %v1315 = vmul.f32 %v1283, %v1298
    %v1316 = vmul.f32 %v1284, %v1298
    %v1317 = vmul.f32 %v1285, %v1303
    %v1318 = vmul.f32 %v1286, %v1303
    %v1319 = vmul.f32 %v1287, %v1308
    %v1320 = vmul.f32 %v1288, %v1308
    %v1321 = vmul.f32 %v1289, %v1313
    %v1322 = vmul.f32 %v1290, %v1313
    %v1323 = vld [vmem:[%s6] sm:$0xff]
    %v1324 = vld [vmem:[%s6 + $0x8] sm:$0xff]
    %v1325 = vld [vmem:[%s6 + $0x10] sm:$0xff]
    %v1326 = vld [vmem:[%s6 + $0x18] sm:$0xff]
    %1328 = vset.pattern.permute.xlu0 0
    %1329 = vperm.xlu0 %1328, %v1323
    %v1330 = vpop.permute.xlu0 %1329
    %1333 = vset.pattern.permute.xlu0 0
    %1334 = vperm.xlu0 %1333, %v1324
    %v1335 = vpop.permute.xlu0 %1334
    %1338 = vset.pattern.permute.xlu0 0
    %1339 = vperm.xlu0 %1338, %v1325
    %v1340 = vpop.permute.xlu0 %1339
    %1343 = vset.pattern.permute.xlu0 0
    %1344 = vperm.xlu0 %1343, %v1326
    %v1345 = vpop.permute.xlu0 %1344
    %v1347 = vadd.f32 %v1315, %v1330
    %v1348 = vadd.f32 %v1316, %v1330
    %v1349 = vadd.f32 %v1317, %v1335
    %v1350 = vadd.f32 %v1318, %v1335
    %v1351 = vadd.f32 %v1319, %v1340
    %v1352 = vadd.f32 %v1320, %v1340
    %v1353 = vadd.f32 %v1321, %v1345
    %v1354 = vadd.f32 %v1322, %v1345
    %v1355 = vmax.f32 %v1347, 0.0
    %v1356 = vmax.f32 %v1348, 0.0
    %v1357 = vmax.f32 %v1349, 0.0
    %v1358 = vmax.f32 %v1350, 0.0
    %v1359 = vmax.f32 %v1351, 0.0
    %v1360 = vmax.f32 %v1352, 0.0
    %v1361 = vmax.f32 %v1353, 0.0
    %v1362 = vmax.f32 %v1354, 0.0
    %1371 = vrot.lane.b32.xlu0 %v1355, 1
    %v1372 = vpop.permute.xlu0 %1371
    %1373 = vrot.lane.b32.xlu0 %v1356, 1
    %v1374 = vpop.permute.xlu0 %1373
    %1375 = vrot.lane.b32.xlu0 %v1357, 1
    %v1376 = vpop.permute.xlu0 %1375
    %1377 = vrot.lane.b32.xlu0 %v1358, 1
    %v1378 = vpop.permute.xlu0 %1377
    %1379 = vrot.lane.b32.xlu0 %v1359, 1
    %v1380 = vpop.permute.xlu0 %1379
    %1381 = vrot.lane.b32.xlu0 %v1360, 1
    %v1382 = vpop.permute.xlu0 %1381
    %1383 = vrot.lane.b32.xlu0 %v1361, 1
    %v1384 = vpop.permute.xlu0 %1383
    %1385 = vrot.lane.b32.xlu0 %v1362, 1
    %v1386 = vpop.permute.xlu0 %1385
    %v1387 = vsel %vm115, %v1372, %v1374
    %v1388 = vsel %vm115, %v1376, %v1378
    %v1389 = vsel %vm115, %v1380, %v1382
    %v1390 = vsel %vm115, %v1384, %v1386
    %v1399 = vsel %vm115, %v1355, %v1372
    %v1400 = vsel %vm115, %v1357, %v1376
    %v1401 = vsel %vm115, %v1359, %v1380
    %v1402 = vsel %vm115, %v1361, %v1384
    %1403 = vrot.lane.b32.xlu0 %v1355, 127
    %v1404 = vpop.permute.xlu0 %1403
    %1405 = vrot.lane.b32.xlu0 %v1356, 127
    %v1406 = vpop.permute.xlu0 %1405
    %1407 = vrot.lane.b32.xlu0 %v1357, 127
    %v1408 = vpop.permute.xlu0 %1407
    %1409 = vrot.lane.b32.xlu0 %v1358, 127
    %v1410 = vpop.permute.xlu0 %1409
    %1411 = vrot.lane.b32.xlu0 %v1359, 127
    %v1412 = vpop.permute.xlu0 %1411
    %1413 = vrot.lane.b32.xlu0 %v1360, 127
    %v1414 = vpop.permute.xlu0 %1413
    %1415 = vrot.lane.b32.xlu0 %v1361, 127
    %v1416 = vpop.permute.xlu0 %1415
    %1417 = vrot.lane.b32.xlu0 %v1362, 127
    %v1418 = vpop.permute.xlu0 %1417
    %v1419 = vsel %vm124, %v1404, %v1406
    %v1420 = vsel %vm124, %v1408, %v1410
    %v1421 = vsel %vm124, %v1412, %v1414
    %v1422 = vsel %vm124, %v1416, %v1418
    %v1431 = vsel %vm129, %v1406, %v1356
    %v1432 = vsel %vm129, %v1410, %v1358
    %v1433 = vsel %vm129, %v1414, %v1360
    %v1434 = vsel %vm129, %v1418, %v1362
    %v1435 = vsel %vm166, %v1355, %v1399
    %v1436 = vsel %vm167, %v1356, %v1387
    %v1437 = vsel %vm166, %v1357, %v1400
    %v1438 = vsel %vm167, %v1358, %v1388
    %v1439 = vsel %vm166, %v1359, %v1401
    %v1440 = vsel %vm167, %v1360, %v1389
    %v1441 = vsel %vm166, %v1361, %v1402
    %v1442 = vsel %vm167, %v1362, %v1390
    %v1443 = vsel %vm170, %v1355, %v1419
    %v1444 = vsel %vm171, %v1356, %v1431
    %v1445 = vsel %vm170, %v1357, %v1420
    %v1446 = vsel %vm171, %v1358, %v1432
    %v1447 = vsel %vm170, %v1359, %v1421
    %v1448 = vsel %vm171, %v1360, %v1433
    %v1449 = vsel %vm170, %v1361, %v1422
    %v1450 = vsel %vm171, %v1362, %v1434
    %v1451 = vld [vmem:[#allocation4] sm:$0xff]
    %v1452 = vld [vmem:[#allocation4 + $0x8] sm:$0xff]
    %s1453 = scalar_lea.vmem [#allocation4], 16
    %v1454 = vld [vmem:[%s1453] sm:$0xff]
    %v1455 = vld [vmem:[%s1453 + $0x8] sm:$0xff]
    %vm1456 = vcmask 261120
    %v1458 = vsel %vm1456, %v1454, 0
    %v1461 = vsel %vm1456, %v1455, 0
    %1463 = vmatprep.subr.mxu0 0.0
    %1464 = vmatpush1.msra.mxu0 0.0
    %1465 = vmatprep.subr.mxu0 0.0
    %1466 = vmatpush1.msra.mxu0 0.0
    %1467 = vmatprep.subr.mxu0 0.0
    %1468 = vmatpush1.msra.mxu0 0.0
    %1469 = vmatprep.subr.mxu0 0.0
    %1470 = vmatpush1.msra.mxu0 0.0
    %1471 = vmatprep.subr.mxu0 0.0
    %1472 = vmatpush1.msra.mxu0 0.0
    %1473 = vmatprep.subr.mxu0 0.0
    %1474 = vmatpush1.msra.mxu0 0.0
    %1475 = vmatprep.subr.mxu0 0.0
    %1476 = vmatpush1.msra.mxu0 0.0
    %1477 = vmatprep.subr.mxu0 0.0
    %1478 = vmatpush1.msra.mxu0 0.0
    %1479 = vmatprep.subr.mxu0 0.0
    %1480 = vmatpush1.msra.mxu0 0.0
    %1481 = vmatprep.subr.mxu0 0.0
    %1482 = vmatpush1.msra.mxu0 0.0
    %1483 = vmatprep.subr.mxu0 0.0
    %1484 = vmatpush1.msra.mxu0 0.0
    %1485 = vmatprep.subr.mxu0 0.0
    %1486 = vmatpush1.msra.mxu0 0.0
    %1487 = vmatprep.subr.mxu0 %v1362
    %1488 = vmatpush1.msra.mxu0 %v1361
    %1489 = vmatprep.subr.mxu0 %v1360
    %1490 = vmatpush1.msra.mxu0 %v1359
    %1491 = vmatprep.subr.mxu0 %v1358
    %1492 = vmatpush1.msra.mxu0 %v1357
    %1493 = vmatprep.subr.mxu0 %v1356
    %1494 = vmatpush1.msra.mxu0 %v1355
    %1495 = vmatprep.subr.mxu0 0.0
    %1496 = vmatpush2.msra.mxu0 0.0
    %1497 = vmatprep.subr.mxu0 0.0
    %1498 = vmatpush2.msra.mxu0 0.0
    %1499 = vmatprep.subr.mxu0 0.0
    %1500 = vmatpush2.msra.mxu0 0.0
    %1501 = vmatprep.subr.mxu0 0.0
    %1502 = vmatpush2.msra.mxu0 0.0
    %1503 = vmatprep.subr.mxu0 0.0
    %1504 = vmatpush2.msra.mxu0 0.0
    %1505 = vmatprep.subr.mxu0 0.0
    %1506 = vmatpush2.msra.mxu0 0.0
    %1507 = vmatprep.subr.mxu0 0.0
    %1508 = vmatpush2.msra.mxu0 0.0
    %1509 = vmatprep.subr.mxu0 0.0
    %1510 = vmatpush2.msra.mxu0 0.0
    %1511 = vmatprep.subr.mxu0 0.0
    %1512 = vmatpush2.msra.mxu0 0.0
    %1513 = vmatprep.subr.mxu0 0.0
    %1514 = vmatpush2.msra.mxu0 0.0
    %1515 = vmatprep.subr.mxu0 0.0
    %1516 = vmatpush2.msra.mxu0 0.0
    %1517 = vmatprep.subr.mxu0 0.0
    %1518 = vmatpush2.msra.mxu0 0.0
    %1519 = vmatprep.subr.mxu0 0.0
    %1520 = vmatpush2.msra.mxu0 0.0
    %1521 = vmatprep.subr.mxu0 0.0
    %1522 = vmatpush2.msra.mxu0 0.0
    %1523 = vmatprep.subr.mxu0 0.0
    %1524 = vmatpush2.msra.mxu0 0.0
    %1525 = vmatprep.subr.mxu0 0.0
    %1526 = vmatpush2.msra.mxu0 0.0
    %1527 = vmatprep.mubr.f32.mxu0 0.0
    %1528 = vmatmul.mubr.f32.gmra.mxu0 %v1458
    %v1529 = vpop.f32.mrf.mxu0
    %v1530 = vadd.f32 0.0, %v1529
    %v1531 = vpop.f32.mrf.mxu0
    %v1532 = vadd.f32 0.0, %v1531
    %1533 = vmatprep.mubr.f32.mxu0 0.0
    %1534 = vmatmul.mubr.f32.gmra.mxu0 %v1461
    %v1535 = vpop.f32.mrf.mxu0
    %v1536 = vadd.f32 0.0, %v1535
    %v1537 = vpop.f32.mrf.mxu0
    %v1538 = vadd.f32 0.0, %v1537
    %1539 = vdwg.mxu0
    %v1541 = vsel %vm1456, %v1451, 0
    %v1544 = vsel %vm1456, %v1452, 0
    %1546 = vmatprep.subr.mxu0 0.0
    %1547 = vmatpush1.msra.mxu0 0.0
    %1548 = vmatprep.subr.mxu0 0.0
    %1549 = vmatpush1.msra.mxu0 0.0
    %1550 = vmatprep.subr.mxu0 0.0
    %1551 = vmatpush1.msra.mxu0 0.0
    %1552 = vmatprep.subr.mxu0 0.0
    %1553 = vmatpush1.msra.mxu0 0.0
    %1554 = vmatprep.subr.mxu0 0.0
    %1555 = vmatpush1.msra.mxu0 0.0
    %1556 = vmatprep.subr.mxu0 0.0
    %1557 = vmatpush1.msra.mxu0 0.0
    %1558 = vmatprep.subr.mxu0 0.0
    %1559 = vmatpush1.msra.mxu0 0.0
    %1560 = vmatprep.subr.mxu0 0.0
    %1561 = vmatpush1.msra.mxu0 0.0
    %1562 = vmatprep.subr.mxu0 0.0
    %1563 = vmatpush1.msra.mxu0 0.0
    %1564 = vmatprep.subr.mxu0 0.0
    %1565 = vmatpush1.msra.mxu0 0.0
    %1566 = vmatprep.subr.mxu0 0.0
    %1567 = vmatpush1.msra.mxu0 0.0
    %1568 = vmatprep.subr.mxu0 0.0
    %1569 = vmatpush1.msra.mxu0 0.0
    %1570 = vmatprep.subr.mxu0 %v1442
    %1571 = vmatpush1.msra.mxu0 %v1441
    %1572 = vmatprep.subr.mxu0 %v1440
    %1573 = vmatpush1.msra.mxu0 %v1439
    %1574 = vmatprep.subr.mxu0 %v1438
    %1575 = vmatpush1.msra.mxu0 %v1437
    %1576 = vmatprep.subr.mxu0 %v1436
    %1577 = vmatpush1.msra.mxu0 %v1435
    %1578 = vmatprep.subr.mxu0 0.0
    %1579 = vmatpush2.msra.mxu0 0.0
    %1580 = vmatprep.subr.mxu0 0.0
    %1581 = vmatpush2.msra.mxu0 0.0
    %1582 = vmatprep.subr.mxu0 0.0
    %1583 = vmatpush2.msra.mxu0 0.0
    %1584 = vmatprep.subr.mxu0 0.0
    %1585 = vmatpush2.msra.mxu0 0.0
    %1586 = vmatprep.subr.mxu0 0.0
    %1587 = vmatpush2.msra.mxu0 0.0
    %1588 = vmatprep.subr.mxu0 0.0
    %1589 = vmatpush2.msra.mxu0 0.0
    %1590 = vmatprep.subr.mxu0 0.0
    %1591 = vmatpush2.msra.mxu0 0.0
    %1592 = vmatprep.subr.mxu0 0.0
    %1593 = vmatpush2.msra.mxu0 0.0
    %1594 = vmatprep.subr.mxu0 0.0
    %1595 = vmatpush2.msra.mxu0 0.0
    %1596 = vmatprep.subr.mxu0 0.0
    %1597 = vmatpush2.msra.mxu0 0.0
    %1598 = vmatprep.subr.mxu0 0.0
    %1599 = vmatpush2.msra.mxu0 0.0
    %1600 = vmatprep.subr.mxu0 0.0
    %1601 = vmatpush2.msra.mxu0 0.0
    %1602 = vmatprep.subr.mxu0 0.0
    %1603 = vmatpush2.msra.mxu0 0.0
    %1604 = vmatprep.subr.mxu0 0.0
    %1605 = vmatpush2.msra.mxu0 0.0
    %1606 = vmatprep.subr.mxu0 0.0
    %1607 = vmatpush2.msra.mxu0 0.0
    %1608 = vmatprep.subr.mxu0 0.0
    %1609 = vmatpush2.msra.mxu0 0.0
    %1610 = vmatprep.mubr.f32.mxu0 0.0
    %1611 = vmatmul.mubr.f32.gmra.mxu0 %v1541
    %v1612 = vpop.f32.mrf.mxu0
    %v1613 = vadd.f32 %v1530, %v1612
    %v1614 = vpop.f32.mrf.mxu0
    %v1615 = vadd.f32 %v1532, %v1614
    %1616 = vmatprep.mubr.f32.mxu0 0.0
    %1617 = vmatmul.mubr.f32.gmra.mxu0 %v1544
    %v1618 = vpop.f32.mrf.mxu0
    %v1619 = vadd.f32 %v1536, %v1618
    %v1620 = vpop.f32.mrf.mxu0
    %v1621 = vadd.f32 %v1538, %v1620
    %1622 = vdwg.mxu0
    %s1623 = scalar_lea.vmem [#allocation4], 32
    %v1624 = vld [vmem:[%s1623] sm:$0xff]
    %v1625 = vld [vmem:[%s1623 + $0x8] sm:$0xff]
    %v1627 = vsel %vm1456, %v1624, 0
    %v1630 = vsel %vm1456, %v1625, 0
    %1632 = vmatprep.subr.mxu0 0.0
    %1633 = vmatpush1.msra.mxu0 0.0
    %1634 = vmatprep.subr.mxu0 0.0
    %1635 = vmatpush1.msra.mxu0 0.0
    %1636 = vmatprep.subr.mxu0 0.0
    %1637 = vmatpush1.msra.mxu0 0.0
    %1638 = vmatprep.subr.mxu0 0.0
    %1639 = vmatpush1.msra.mxu0 0.0
    %1640 = vmatprep.subr.mxu0 0.0
    %1641 = vmatpush1.msra.mxu0 0.0
    %1642 = vmatprep.subr.mxu0 0.0
    %1643 = vmatpush1.msra.mxu0 0.0
    %1644 = vmatprep.subr.mxu0 0.0
    %1645 = vmatpush1.msra.mxu0 0.0
    %1646 = vmatprep.subr.mxu0 0.0
    %1647 = vmatpush1.msra.mxu0 0.0
    %1648 = vmatprep.subr.mxu0 0.0
    %1649 = vmatpush1.msra.mxu0 0.0
    %1650 = vmatprep.subr.mxu0 0.0
    %1651 = vmatpush1.msra.mxu0 0.0
    %1652 = vmatprep.subr.mxu0 0.0
    %1653 = vmatpush1.msra.mxu0 0.0
    %1654 = vmatprep.subr.mxu0 0.0
    %1655 = vmatpush1.msra.mxu0 0.0
    %1656 = vmatprep.subr.mxu0 %v1450
    %1657 = vmatpush1.msra.mxu0 %v1449
    %1658 = vmatprep.subr.mxu0 %v1448
    %1659 = vmatpush1.msra.mxu0 %v1447
    %1660 = vmatprep.subr.mxu0 %v1446
    %1661 = vmatpush1.msra.mxu0 %v1445
    %1662 = vmatprep.subr.mxu0 %v1444
    %1663 = vmatpush1.msra.mxu0 %v1443
    %1664 = vmatprep.subr.mxu0 0.0
    %1665 = vmatpush2.msra.mxu0 0.0
    %1666 = vmatprep.subr.mxu0 0.0
    %1667 = vmatpush2.msra.mxu0 0.0
    %1668 = vmatprep.subr.mxu0 0.0
    %1669 = vmatpush2.msra.mxu0 0.0
    %1670 = vmatprep.subr.mxu0 0.0
    %1671 = vmatpush2.msra.mxu0 0.0
    %1672 = vmatprep.subr.mxu0 0.0
    %1673 = vmatpush2.msra.mxu0 0.0
    %1674 = vmatprep.subr.mxu0 0.0
    %1675 = vmatpush2.msra.mxu0 0.0
    %1676 = vmatprep.subr.mxu0 0.0
    %1677 = vmatpush2.msra.mxu0 0.0
    %1678 = vmatprep.subr.mxu0 0.0
    %1679 = vmatpush2.msra.mxu0 0.0
    %1680 = vmatprep.subr.mxu0 0.0
    %1681 = vmatpush2.msra.mxu0 0.0
    %1682 = vmatprep.subr.mxu0 0.0
    %1683 = vmatpush2.msra.mxu0 0.0
    %1684 = vmatprep.subr.mxu0 0.0
    %1685 = vmatpush2.msra.mxu0 0.0
    %1686 = vmatprep.subr.mxu0 0.0
    %1687 = vmatpush2.msra.mxu0 0.0
    %1688 = vmatprep.subr.mxu0 0.0
    %1689 = vmatpush2.msra.mxu0 0.0
    %1690 = vmatprep.subr.mxu0 0.0
    %1691 = vmatpush2.msra.mxu0 0.0
    %1692 = vmatprep.subr.mxu0 0.0
    %1693 = vmatpush2.msra.mxu0 0.0
    %1694 = vmatprep.subr.mxu0 0.0
    %1695 = vmatpush2.msra.mxu0 0.0
    %1696 = vmatprep.mubr.f32.mxu0 0.0
    %1697 = vmatmul.mubr.f32.gmra.mxu0 %v1627
    %v1698 = vpop.f32.mrf.mxu0
    %v1699 = vadd.f32 0.0, %v1698
    %v1700 = vpop.f32.mrf.mxu0
    %v1701 = vadd.f32 0.0, %v1700
    %1702 = vmatprep.mubr.f32.mxu0 0.0
    %1703 = vmatmul.mubr.f32.gmra.mxu0 %v1630
    %v1704 = vpop.f32.mrf.mxu0
    %v1705 = vadd.f32 0.0, %v1704
    %v1706 = vpop.f32.mrf.mxu0
    %v1707 = vadd.f32 0.0, %v1706
    %1708 = vdwg.mxu0
    %v1709 = vadd.f32 %v1613, %v1699
    %v1710 = vadd.f32 %v1615, %v1701
    %v1711 = vadd.f32 %v1619, %v1705
    %v1712 = vadd.f32 %v1621, %v1707
    %v1713 = vld [vmem:[%s8] sm:$0xff]
    %v1714 = vld [vmem:[%s8 + $0x8] sm:$0xff]
    %1716 = vset.pattern.permute.xlu0 0
    %1717 = vperm.xlu0 %1716, %v1713
    %v1718 = vpop.permute.xlu0 %1717
    %1721 = vset.pattern.permute.xlu0 0
    %1722 = vperm.xlu0 %1721, %v1714
    %v1723 = vpop.permute.xlu0 %1722
    %v1725 = vmul.f32 %v1709, %v1718
    %v1726 = vmul.f32 %v1710, %v1718
    %v1727 = vmul.f32 %v1711, %v1723
    %v1728 = vmul.f32 %v1712, %v1723
    %v1729 = vld [vmem:[%s9] sm:$0xff]
    %v1730 = vld [vmem:[%s9 + $0x8] sm:$0xff]
    %1732 = vset.pattern.permute.xlu0 0
    %1733 = vperm.xlu0 %1732, %v1729
    %v1734 = vpop.permute.xlu0 %1733
    %1737 = vset.pattern.permute.xlu0 0
    %1738 = vperm.xlu0 %1737, %v1730
    %v1739 = vpop.permute.xlu0 %1738
    %v1741 = vadd.f32 %v1725, %v1734
    %v1742 = vadd.f32 %v1726, %v1734
    %v1743 = vadd.f32 %v1727, %v1739
    %v1744 = vadd.f32 %v1728, %v1739
    %v1745 = vmax.f32 %v1741, 0.0
    %v1746 = vmax.f32 %v1742, 0.0
    %v1747 = vmax.f32 %v1743, 0.0
    %v1748 = vmax.f32 %v1744, 0.0
    %1753 = vrot.lane.b32.xlu0 %v1745, 1
    %v1754 = vpop.permute.xlu0 %1753
    %1755 = vrot.lane.b32.xlu0 %v1746, 1
    %v1756 = vpop.permute.xlu0 %1755
    %1757 = vrot.lane.b32.xlu0 %v1747, 1
    %v1758 = vpop.permute.xlu0 %1757
    %1759 = vrot.lane.b32.xlu0 %v1748, 1
    %v1760 = vpop.permute.xlu0 %1759
    %v1761 = vsel %vm115, %v1754, %v1756
    %v1762 = vsel %vm115, %v1758, %v1760
    %v1767 = vsel %vm115, %v1745, %v1754
    %v1768 = vsel %vm115, %v1747, %v1758
    %1769 = vrot.lane.b32.xlu0 %v1745, 127
    %v1770 = vpop.permute.xlu0 %1769
    %1771 = vrot.lane.b32.xlu0 %v1746, 127
    %v1772 = vpop.permute.xlu0 %1771
    %1773 = vrot.lane.b32.xlu0 %v1747, 127
    %v1774 = vpop.permute.xlu0 %1773
    %1775 = vrot.lane.b32.xlu0 %v1748, 127
    %v1776 = vpop.permute.xlu0 %1775
    %v1777 = vsel %vm124, %v1770, %v1772
    %v1778 = vsel %vm124, %v1774, %v1776
    %v1783 = vsel %vm129, %v1772, %v1746
    %v1784 = vsel %vm129, %v1776, %v1748
    %v1785 = vsel %vm166, %v1745, %v1767
    %v1786 = vsel %vm167, %v1746, %v1761
    %v1787 = vsel %vm166, %v1747, %v1768
    %v1788 = vsel %vm167, %v1748, %v1762
    %v1789 = vsel %vm170, %v1745, %v1777
    %v1790 = vsel %vm171, %v1746, %v1783
    %v1791 = vsel %vm170, %v1747, %v1778
    %v1792 = vsel %vm171, %v1748, %v1784
    %v1793 = vld [vmem:[#allocation6] sm:$0xff]
    %s1794 = scalar_lea.vmem [#allocation6], 8
    %v1795 = vld [vmem:[%s1794] sm:$0xff]
    %vm1796 = vcmask 130048
    %v1798 = vsel %vm1796, %v1795, 0
    %1800 = vmatprep.subr.mxu0 0.0
    %1801 = vmatpush1.msra.mxu0 0.0
    %1802 = vmatprep.subr.mxu0 0.0
    %1803 = vmatpush1.msra.mxu0 0.0
    %1804 = vmatprep.subr.mxu0 0.0
    %1805 = vmatpush1.msra.mxu0 0.0
    %1806 = vmatprep.subr.mxu0 0.0
    %1807 = vmatpush1.msra.mxu0 0.0
    %1808 = vmatprep.subr.mxu0 0.0
    %1809 = vmatpush1.msra.mxu0 0.0
    %1810 = vmatprep.subr.mxu0 0.0
    %1811 = vmatpush1.msra.mxu0 0.0
    %1812 = vmatprep.subr.mxu0 0.0
    %1813 = vmatpush1.msra.mxu0 0.0
    %1814 = vmatprep.subr.mxu0 0.0
    %1815 = vmatpush1.msra.mxu0 0.0
    %1816 = vmatprep.subr.mxu0 0.0
    %1817 = vmatpush1.msra.mxu0 0.0
    %1818 = vmatprep.subr.mxu0 0.0
    %1819 = vmatpush1.msra.mxu0 0.0
    %1820 = vmatprep.subr.mxu0 0.0
    %1821 = vmatpush1.msra.mxu0 0.0
    %1822 = vmatprep.subr.mxu0 0.0
    %1823 = vmatpush1.msra.mxu0 0.0
    %1824 = vmatprep.subr.mxu0 0.0
    %1825 = vmatpush1.msra.mxu0 0.0
    %1826 = vmatprep.subr.mxu0 0.0
    %1827 = vmatpush1.msra.mxu0 0.0
    %1828 = vmatprep.subr.mxu0 %v1748
    %1829 = vmatpush1.msra.mxu0 %v1747
    %1830 = vmatprep.subr.mxu0 %v1746
    %1831 = vmatpush1.msra.mxu0 %v1745
    %1832 = vmatprep.subr.mxu0 0.0
    %1833 = vmatpush2.msra.mxu0 0.0
    %1834 = vmatprep.subr.mxu0 0.0
    %1835 = vmatpush2.msra.mxu0 0.0
    %1836 = vmatprep.subr.mxu0 0.0
    %1837 = vmatpush2.msra.mxu0 0.0
    %1838 = vmatprep.subr.mxu0 0.0
    %1839 = vmatpush2.msra.mxu0 0.0
    %1840 = vmatprep.subr.mxu0 0.0
    %1841 = vmatpush2.msra.mxu0 0.0
    %1842 = vmatprep.subr.mxu0 0.0
    %1843 = vmatpush2.msra.mxu0 0.0
    %1844 = vmatprep.subr.mxu0 0.0
    %1845 = vmatpush2.msra.mxu0 0.0
    %1846 = vmatprep.subr.mxu0 0.0
    %1847 = vmatpush2.msra.mxu0 0.0
    %1848 = vmatprep.subr.mxu0 0.0
    %1849 = vmatpush2.msra.mxu0 0.0
    %1850 = vmatprep.subr.mxu0 0.0
    %1851 = vmatpush2.msra.mxu0 0.0
    %1852 = vmatprep.subr.mxu0 0.0
    %1853 = vmatpush2.msra.mxu0 0.0
    %1854 = vmatprep.subr.mxu0 0.0
    %1855 = vmatpush2.msra.mxu0 0.0
    %1856 = vmatprep.subr.mxu0 0.0
    %1857 = vmatpush2.msra.mxu0 0.0
    %1858 = vmatprep.subr.mxu0 0.0
    %1859 = vmatpush2.msra.mxu0 0.0
    %1860 = vmatprep.subr.mxu0 0.0
    %1861 = vmatpush2.msra.mxu0 0.0
    %1862 = vmatprep.subr.mxu0 0.0
    %1863 = vmatpush2.msra.mxu0 0.0
    %1864 = vmatprep.mubr.f32.mxu0 0.0
    %1865 = vmatmul.mubr.f32.gmra.mxu0 %v1798
    %v1866 = vpop.f32.mrf.mxu0
    %v1867 = vadd.f32 0.0, %v1866
    %v1868 = vpop.f32.mrf.mxu0
    %v1869 = vadd.f32 0.0, %v1868
    %1870 = vdwg.mxu0
    %v1872 = vsel %vm1796, %v1793, 0
    %1874 = vmatprep.subr.mxu0 0.0
    %1875 = vmatpush1.msra.mxu0 0.0
    %1876 = vmatprep.subr.mxu0 0.0
    %1877 = vmatpush1.msra.mxu0 0.0
    %1878 = vmatprep.subr.mxu0 0.0
    %1879 = vmatpush1.msra.mxu0 0.0
    %1880 = vmatprep.subr.mxu0 0.0
    %1881 = vmatpush1.msra.mxu0 0.0
    %1882 = vmatprep.subr.mxu0 0.0
    %1883 = vmatpush1.msra.mxu0 0.0
    %1884 = vmatprep.subr.mxu0 0.0
    %1885 = vmatpush1.msra.mxu0 0.0
    %1886 = vmatprep.subr.mxu0 0.0
    %1887 = vmatpush1.msra.mxu0 0.0
    %1888 = vmatprep.subr.mxu0 0.0
    %1889 = vmatpush1.msra.mxu0 0.0
    %1890 = vmatprep.subr.mxu0 0.0
    %1891 = vmatpush1.msra.mxu0 0.0
    %1892 = vmatprep.subr.mxu0 0.0
    %1893 = vmatpush1.msra.mxu0 0.0
    %1894 = vmatprep.subr.mxu0 0.0
    %1895 = vmatpush1.msra.mxu0 0.0
    %1896 = vmatprep.subr.mxu0 0.0
    %1897 = vmatpush1.msra.mxu0 0.0
    %1898 = vmatprep.subr.mxu0 0.0
    %1899 = vmatpush1.msra.mxu0 0.0
    %1900 = vmatprep.subr.mxu0 0.0
    %1901 = vmatpush1.msra.mxu0 0.0
    %1902 = vmatprep.subr.mxu0 %v1788
    %1903 = vmatpush1.msra.mxu0 %v1787
    %1904 = vmatprep.subr.mxu0 %v1786
    %1905 = vmatpush1.msra.mxu0 %v1785
    %1906 = vmatprep.subr.mxu0 0.0
    %1907 = vmatpush2.msra.mxu0 0.0
    %1908 = vmatprep.subr.mxu0 0.0
    %1909 = vmatpush2.msra.mxu0 0.0
    %1910 = vmatprep.subr.mxu0 0.0
    %1911 = vmatpush2.msra.mxu0 0.0
    %1912 = vmatprep.subr.mxu0 0.0
    %1913 = vmatpush2.msra.mxu0 0.0
    %1914 = vmatprep.subr.mxu0 0.0
    %1915 = vmatpush2.msra.mxu0 0.0
    %1916 = vmatprep.subr.mxu0 0.0
    %1917 = vmatpush2.msra.mxu0 0.0
    %1918 = vmatprep.subr.mxu0 0.0
    %1919 = vmatpush2.msra.mxu0 0.0
    %1920 = vmatprep.subr.mxu0 0.0
    %1921 = vmatpush2.msra.mxu0 0.0
    %1922 = vmatprep.subr.mxu0 0.0
    %1923 = vmatpush2.msra.mxu0 0.0
    %1924 = vmatprep.subr.mxu0 0.0
    %1925 = vmatpush2.msra.mxu0 0.0
    %1926 = vmatprep.subr.mxu0 0.0
    %1927 = vmatpush2.msra.mxu0 0.0
    %1928 = vmatprep.subr.mxu0 0.0
    %1929 = vmatpush2.msra.mxu0 0.0
    %1930 = vmatprep.subr.mxu0 0.0
    %1931 = vmatpush2.msra.mxu0 0.0
    %1932 = vmatprep.subr.mxu0 0.0
    %1933 = vmatpush2.msra.mxu0 0.0
    %1934 = vmatprep.subr.mxu0 0.0
    %1935 = vmatpush2.msra.mxu0 0.0
    %1936 = vmatprep.subr.mxu0 0.0
    %1937 = vmatpush2.msra.mxu0 0.0
    %1938 = vmatprep.mubr.f32.mxu0 0.0
    %1939 = vmatmul.mubr.f32.gmra.mxu0 %v1872
    %v1940 = vpop.f32.mrf.mxu0
    %v1941 = vadd.f32 %v1867, %v1940
    %v1942 = vpop.f32.mrf.mxu0
    %v1943 = vadd.f32 %v1869, %v1942
    %1944 = vdwg.mxu0
    %s1945 = scalar_lea.vmem [#allocation6], 16
    %v1946 = vld [vmem:[%s1945] sm:$0xff]
    %v1948 = vsel %vm1796, %v1946, 0
    %1950 = vmatprep.subr.mxu0 0.0
    %1951 = vmatpush1.msra.mxu0 0.0
    %1952 = vmatprep.subr.mxu0 0.0
    %1953 = vmatpush1.msra.mxu0 0.0
    %1954 = vmatprep.subr.mxu0 0.0
    %1955 = vmatpush1.msra.mxu0 0.0
    %1956 = vmatprep.subr.mxu0 0.0
    %1957 = vmatpush1.msra.mxu0 0.0
    %1958 = vmatprep.subr.mxu0 0.0
    %1959 = vmatpush1.msra.mxu0 0.0
    %1960 = vmatprep.subr.mxu0 0.0
    %1961 = vmatpush1.msra.mxu0 0.0
    %1962 = vmatprep.subr.mxu0 0.0
    %1963 = vmatpush1.msra.mxu0 0.0
    %1964 = vmatprep.subr.mxu0 0.0
    %1965 = vmatpush1.msra.mxu0 0.0
    %1966 = vmatprep.subr.mxu0 0.0
    %1967 = vmatpush1.msra.mxu0 0.0
    %1968 = vmatprep.subr.mxu0 0.0
    %1969 = vmatpush1.msra.mxu0 0.0
    %1970 = vmatprep.subr.mxu0 0.0
    %1971 = vmatpush1.msra.mxu0 0.0
    %1972 = vmatprep.subr.mxu0 0.0
    %1973 = vmatpush1.msra.mxu0 0.0
    %1974 = vmatprep.subr.mxu0 0.0
    %1975 = vmatpush1.msra.mxu0 0.0
    %1976 = vmatprep.subr.mxu0 0.0
    %1977 = vmatpush1.msra.mxu0 0.0
    %1978 = vmatprep.subr.mxu0 %v1792
    %1979 = vmatpush1.msra.mxu0 %v1791
    %1980 = vmatprep.subr.mxu0 %v1790
    %1981 = vmatpush1.msra.mxu0 %v1789
    %1982 = vmatprep.subr.mxu0 0.0
    %1983 = vmatpush2.msra.mxu0 0.0
    %1984 = vmatprep.subr.mxu0 0.0
    %1985 = vmatpush2.msra.mxu0 0.0
    %1986 = vmatprep.subr.mxu0 0.0
    %1987 = vmatpush2.msra.mxu0 0.0
    %1988 = vmatprep.subr.mxu0 0.0
    %1989 = vmatpush2.msra.mxu0 0.0
    %1990 = vmatprep.subr.mxu0 0.0
    %1991 = vmatpush2.msra.mxu0 0.0
    %1992 = vmatprep.subr.mxu0 0.0
    %1993 = vmatpush2.msra.mxu0 0.0
    %1994 = vmatprep.subr.mxu0 0.0
    %1995 = vmatpush2.msra.mxu0 0.0
    %1996 = vmatprep.subr.mxu0 0.0
    %1997 = vmatpush2.msra.mxu0 0.0
    %1998 = vmatprep.subr.mxu0 0.0
    %1999 = vmatpush2.msra.mxu0 0.0
    %2000 = vmatprep.subr.mxu0 0.0
    %2001 = vmatpush2.msra.mxu0 0.0
    %2002 = vmatprep.subr.mxu0 0.0
    %2003 = vmatpush2.msra.mxu0 0.0
    %2004 = vmatprep.subr.mxu0 0.0
    %2005 = vmatpush2.msra.mxu0 0.0
    %2006 = vmatprep.subr.mxu0 0.0
    %2007 = vmatpush2.msra.mxu0 0.0
    %2008 = vmatprep.subr.mxu0 0.0
    %2009 = vmatpush2.msra.mxu0 0.0
    %2010 = vmatprep.subr.mxu0 0.0
    %2011 = vmatpush2.msra.mxu0 0.0
    %2012 = vmatprep.subr.mxu0 0.0
    %2013 = vmatpush2.msra.mxu0 0.0
    %2014 = vmatprep.mubr.f32.mxu0 0.0
    %2015 = vmatmul.mubr.f32.gmra.mxu0 %v1948
    %v2016 = vpop.f32.mrf.mxu0
    %v2017 = vadd.f32 0.0, %v2016
    %v2018 = vpop.f32.mrf.mxu0
    %v2019 = vadd.f32 0.0, %v2018
    %2020 = vdwg.mxu0
    %v2021 = vadd.f32 %v1941, %v2017
    %v2022 = vadd.f32 %v1943, %v2019
    %v2023 = vld [vmem:[%s11] sm:$0xff]
    %2025 = vset.pattern.permute.xlu0 0
    %2026 = vperm.xlu0 %2025, %v2023
    %v2027 = vpop.permute.xlu0 %2026
    %v2029 = vmul.f32 %v2021, %v2027
    %v2030 = vmul.f32 %v2022, %v2027
    %v2031 = vld [vmem:[%s12] sm:$0xff]
    %2033 = vset.pattern.permute.xlu0 0
    %2034 = vperm.xlu0 %2033, %v2031
    %v2035 = vpop.permute.xlu0 %2034
    %v2037 = vadd.f32 %v2029, %v2035
    %v2038 = vadd.f32 %v2030, %v2035
    %v2039 = vmax.f32 %v2037, 0.0
    %v2040 = vmax.f32 %v2038, 0.0
    %2043 = vrot.lane.b32.xlu0 %v2039, 1
    %v2044 = vpop.permute.xlu0 %2043
    %2045 = vrot.lane.b32.xlu0 %v2040, 1
    %v2046 = vpop.permute.xlu0 %2045
    %v2047 = vsel %vm115, %v2044, %v2046
    %v2050 = vsel %vm115, %v2039, %v2044
    %2051 = vrot.lane.b32.xlu0 %v2039, 127
    %v2052 = vpop.permute.xlu0 %2051
    %2053 = vrot.lane.b32.xlu0 %v2040, 127
    %v2054 = vpop.permute.xlu0 %2053
    %v2055 = vsel %vm124, %v2052, %v2054
    %v2058 = vsel %vm129, %v2054, %v2040
    %v2059 = vsel %vm166, %v2039, %v2050
    %v2060 = vsel %vm167, %v2040, %v2047
    %v2061 = vsel %vm170, %v2039, %v2055
    %v2062 = vsel %vm171, %v2040, %v2058
    %v2063 = vld [vmem:[#allocation7] sm:$0xf]
    %s2064 = scalar_lea.vmem [#allocation7], 4
    %v2065 = vld [vmem:[%s2064] sm:$0xf]
    %vm2066 = vcmask 64512
    %v2068 = vsel %vm2066, %v2065, 0
    %2070 = vmatprep.subr.mxu0 0.0
    %2071 = vmatpush1.msra.mxu0 0.0
    %2072 = vmatprep.subr.mxu0 0.0
    %2073 = vmatpush1.msra.mxu0 0.0
    %2074 = vmatprep.subr.mxu0 0.0
    %2075 = vmatpush1.msra.mxu0 0.0
    %2076 = vmatprep.subr.mxu0 0.0
    %2077 = vmatpush1.msra.mxu0 0.0
    %2078 = vmatprep.subr.mxu0 0.0
    %2079 = vmatpush1.msra.mxu0 0.0
    %2080 = vmatprep.subr.mxu0 0.0
    %2081 = vmatpush1.msra.mxu0 0.0
    %2082 = vmatprep.subr.mxu0 0.0
    %2083 = vmatpush1.msra.mxu0 0.0
    %2084 = vmatprep.subr.mxu0 0.0
    %2085 = vmatpush1.msra.mxu0 0.0
    %2086 = vmatprep.subr.mxu0 0.0
    %2087 = vmatpush1.msra.mxu0 0.0
    %2088 = vmatprep.subr.mxu0 0.0
    %2089 = vmatpush1.msra.mxu0 0.0
    %2090 = vmatprep.subr.mxu0 0.0
    %2091 = vmatpush1.msra.mxu0 0.0
    %2092 = vmatprep.subr.mxu0 0.0
    %2093 = vmatpush1.msra.mxu0 0.0
    %2094 = vmatprep.subr.mxu0 0.0
    %2095 = vmatpush1.msra.mxu0 0.0
    %2096 = vmatprep.subr.mxu0 0.0
    %2097 = vmatpush1.msra.mxu0 0.0
    %2098 = vmatprep.subr.mxu0 0.0
    %2099 = vmatpush1.msra.mxu0 0.0
    %2100 = vmatprep.subr.mxu0 %v2040
    %2101 = vmatpush1.msra.mxu0 %v2039
    %2102 = vmatprep.subr.mxu0 0.0
    %2103 = vmatpush2.msra.mxu0 0.0
    %2104 = vmatprep.subr.mxu0 0.0
    %2105 = vmatpush2.msra.mxu0 0.0
    %2106 = vmatprep.subr.mxu0 0.0
    %2107 = vmatpush2.msra.mxu0 0.0
    %2108 = vmatprep.subr.mxu0 0.0
    %2109 = vmatpush2.msra.mxu0 0.0
    %2110 = vmatprep.subr.mxu0 0.0
    %2111 = vmatpush2.msra.mxu0 0.0
    %2112 = vmatprep.subr.mxu0 0.0
    %2113 = vmatpush2.msra.mxu0 0.0
    %2114 = vmatprep.subr.mxu0 0.0
    %2115 = vmatpush2.msra.mxu0 0.0
    %2116 = vmatprep.subr.mxu0 0.0
    %2117 = vmatpush2.msra.mxu0 0.0
    %2118 = vmatprep.subr.mxu0 0.0
    %2119 = vmatpush2.msra.mxu0 0.0
    %2120 = vmatprep.subr.mxu0 0.0
    %2121 = vmatpush2.msra.mxu0 0.0
    %2122 = vmatprep.subr.mxu0 0.0
    %2123 = vmatpush2.msra.mxu0 0.0
    %2124 = vmatprep.subr.mxu0 0.0
    %2125 = vmatpush2.msra.mxu0 0.0
    %2126 = vmatprep.subr.mxu0 0.0
    %2127 = vmatpush2.msra.mxu0 0.0
    %2128 = vmatprep.subr.mxu0 0.0
    %2129 = vmatpush2.msra.mxu0 0.0
    %2130 = vmatprep.subr.mxu0 0.0
    %2131 = vmatpush2.msra.mxu0 0.0
    %2132 = vmatprep.subr.mxu0 0.0
    %2133 = vmatpush2.msra.mxu0 0.0
    %2134 = vmatprep.mubr.f32.mxu0 0.0
    %2135 = vmatmul.mubr.f32.gmra.mxu0 %v2068
    %v2136 = vpop.f32.mrf.mxu0
    %v2137 = vadd.f32 0.0, %v2136
    %v2138 = vpop.f32.mrf.mxu0
    %v2139 = vadd.f32 0.0, %v2138
    %2140 = vdwg.mxu0
    %v2142 = vsel %vm2066, %v2063, 0
    %2144 = vmatprep.subr.mxu0 0.0
    %2145 = vmatpush1.msra.mxu0 0.0
    %2146 = vmatprep.subr.mxu0 0.0
    %2147 = vmatpush1.msra.mxu0 0.0
    %2148 = vmatprep.subr.mxu0 0.0
    %2149 = vmatpush1.msra.mxu0 0.0
    %2150 = vmatprep.subr.mxu0 0.0
    %2151 = vmatpush1.msra.mxu0 0.0
    %2152 = vmatprep.subr.mxu0 0.0
    %2153 = vmatpush1.msra.mxu0 0.0
    %2154 = vmatprep.subr.mxu0 0.0
    %2155 = vmatpush1.msra.mxu0 0.0
    %2156 = vmatprep.subr.mxu0 0.0
    %2157 = vmatpush1.msra.mxu0 0.0
    %2158 = vmatprep.subr.mxu0 0.0
    %2159 = vmatpush1.msra.mxu0 0.0
    %2160 = vmatprep.subr.mxu0 0.0
    %2161 = vmatpush1.msra.mxu0 0.0
    %2162 = vmatprep.subr.mxu0 0.0
    %2163 = vmatpush1.msra.mxu0 0.0
    %2164 = vmatprep.subr.mxu0 0.0
    %2165 = vmatpush1.msra.mxu0 0.0
    %2166 = vmatprep.subr.mxu0 0.0
    %2167 = vmatpush1.msra.mxu0 0.0
    %2168 = vmatprep.subr.mxu0 0.0
    %2169 = vmatpush1.msra.mxu0 0.0
    %2170 = vmatprep.subr.mxu0 0.0
    %2171 = vmatpush1.msra.mxu0 0.0
    %2172 = vmatprep.subr.mxu0 0.0
    %2173 = vmatpush1.msra.mxu0 0.0
    %2174 = vmatprep.subr.mxu0 %v2060
    %2175 = vmatpush1.msra.mxu0 %v2059
    %2176 = vmatprep.subr.mxu0 0.0
    %2177 = vmatpush2.msra.mxu0 0.0
    %2178 = vmatprep.subr.mxu0 0.0
    %2179 = vmatpush2.msra.mxu0 0.0
    %2180 = vmatprep.subr.mxu0 0.0
    %2181 = vmatpush2.msra.mxu0 0.0
    %2182 = vmatprep.subr.mxu0 0.0
    %2183 = vmatpush2.msra.mxu0 0.0
    %2184 = vmatprep.subr.mxu0 0.0
    %2185 = vmatpush2.msra.mxu0 0.0
    %2186 = vmatprep.subr.mxu0 0.0
    %2187 = vmatpush2.msra.mxu0 0.0
    %2188 = vmatprep.subr.mxu0 0.0
    %2189 = vmatpush2.msra.mxu0 0.0
    %2190 = vmatprep.subr.mxu0 0.0
    %2191 = vmatpush2.msra.mxu0 0.0
    %2192 = vmatprep.subr.mxu0 0.0
    %2193 = vmatpush2.msra.mxu0 0.0
    %2194 = vmatprep.subr.mxu0 0.0
    %2195 = vmatpush2.msra.mxu0 0.0
    %2196 = vmatprep.subr.mxu0 0.0
    %2197 = vmatpush2.msra.mxu0 0.0
    %2198 = vmatprep.subr.mxu0 0.0
    %2199 = vmatpush2.msra.mxu0 0.0
    %2200 = vmatprep.subr.mxu0 0.0
    %2201 = vmatpush2.msra.mxu0 0.0
    %2202 = vmatprep.subr.mxu0 0.0
    %2203 = vmatpush2.msra.mxu0 0.0
    %2204 = vmatprep.subr.mxu0 0.0
    %2205 = vmatpush2.msra.mxu0 0.0
    %2206 = vmatprep.subr.mxu0 0.0
    %2207 = vmatpush2.msra.mxu0 0.0
    %2208 = vmatprep.mubr.f32.mxu0 0.0
    %2209 = vmatmul.mubr.f32.gmra.mxu0 %v2142
    %v2210 = vpop.f32.mrf.mxu0
    %v2211 = vadd.f32 %v2137, %v2210
    %v2212 = vpop.f32.mrf.mxu0
    %v2213 = vadd.f32 %v2139, %v2212
    %2214 = vdwg.mxu0
    %s2215 = scalar_lea.vmem [#allocation7], 8
    %v2216 = vld [vmem:[%s2215] sm:$0xf]
    %v2218 = vsel %vm2066, %v2216, 0
    %2220 = vmatprep.subr.mxu0 0.0
    %2221 = vmatpush1.msra.mxu0 0.0
    %2222 = vmatprep.subr.mxu0 0.0
    %2223 = vmatpush1.msra.mxu0 0.0
    %2224 = vmatprep.subr.mxu0 0.0
    %2225 = vmatpush1.msra.mxu0 0.0
    %2226 = vmatprep.subr.mxu0 0.0
    %2227 = vmatpush1.msra.mxu0 0.0
    %2228 = vmatprep.subr.mxu0 0.0
    %2229 = vmatpush1.msra.mxu0 0.0
    %2230 = vmatprep.subr.mxu0 0.0
    %2231 = vmatpush1.msra.mxu0 0.0
    %2232 = vmatprep.subr.mxu0 0.0
    %2233 = vmatpush1.msra.mxu0 0.0
    %2234 = vmatprep.subr.mxu0 0.0
    %2235 = vmatpush1.msra.mxu0 0.0
    %2236 = vmatprep.subr.mxu0 0.0
    %2237 = vmatpush1.msra.mxu0 0.0
    %2238 = vmatprep.subr.mxu0 0.0
    %2239 = vmatpush1.msra.mxu0 0.0
    %2240 = vmatprep.subr.mxu0 0.0
    %2241 = vmatpush1.msra.mxu0 0.0
    %2242 = vmatprep.subr.mxu0 0.0
    %2243 = vmatpush1.msra.mxu0 0.0
    %2244 = vmatprep.subr.mxu0 0.0
    %2245 = vmatpush1.msra.mxu0 0.0
    %2246 = vmatprep.subr.mxu0 0.0
    %2247 = vmatpush1.msra.mxu0 0.0
    %2248 = vmatprep.subr.mxu0 0.0
    %2249 = vmatpush1.msra.mxu0 0.0
    %2250 = vmatprep.subr.mxu0 %v2062
    %2251 = vmatpush1.msra.mxu0 %v2061
    %2252 = vmatprep.subr.mxu0 0.0
    %2253 = vmatpush2.msra.mxu0 0.0
    %2254 = vmatprep.subr.mxu0 0.0
    %2255 = vmatpush2.msra.mxu0 0.0
    %2256 = vmatprep.subr.mxu0 0.0
    %2257 = vmatpush2.msra.mxu0 0.0
    %2258 = vmatprep.subr.mxu0 0.0
    %2259 = vmatpush2.msra.mxu0 0.0
    %2260 = vmatprep.subr.mxu0 0.0
    %2261 = vmatpush2.msra.mxu0 0.0
    %2262 = vmatprep.subr.mxu0 0.0
    %2263 = vmatpush2.msra.mxu0 0.0
    %2264 = vmatprep.subr.mxu0 0.0
    %2265 = vmatpush2.msra.mxu0 0.0
    %2266 = vmatprep.subr.mxu0 0.0
    %2267 = vmatpush2.msra.mxu0 0.0
    %2268 = vmatprep.subr.mxu0 0.0
    %2269 = vmatpush2.msra.mxu0 0.0
    %2270 = vmatprep.subr.mxu0 0.0
    %2271 = vmatpush2.msra.mxu0 0.0
    %2272 = vmatprep.subr.mxu0 0.0
    %2273 = vmatpush2.msra.mxu0 0.0
    %2274 = vmatprep.subr.mxu0 0.0
    %2275 = vmatpush2.msra.mxu0 0.0
    %2276 = vmatprep.subr.mxu0 0.0
    %2277 = vmatpush2.msra.mxu0 0.0
    %2278 = vmatprep.subr.mxu0 0.0
    %2279 = vmatpush2.msra.mxu0 0.0
    %2280 = vmatprep.subr.mxu0 0.0
    %2281 = vmatpush2.msra.mxu0 0.0
    %2282 = vmatprep.subr.mxu0 0.0
    %2283 = vmatpush2.msra.mxu0 0.0
    %2284 = vmatprep.mubr.f32.mxu0 0.0
    %2285 = vmatmul.mubr.f32.gmra.mxu0 %v2218
    %v2286 = vpop.f32.mrf.mxu0
    %v2287 = vadd.f32 0.0, %v2286
    %v2288 = vpop.f32.mrf.mxu0
    %v2289 = vadd.f32 0.0, %v2288
    %2290 = vdwg.mxu0
    %v2291 = vadd.f32 %v2211, %v2287
    %v2292 = vadd.f32 %v2213, %v2289
    %v2293 = vld [vmem:[%s14] sm:$0xf]
    %2295 = vset.pattern.permute.xlu0 0
    %2296 = vperm.xlu0 %2295, %v2293
    %v2297 = vpop.permute.xlu0 %2296
    %v2299 = vmul.f32 %v2291, %v2297
    %v2300 = vmul.f32 %v2292, %v2297
    %v2301 = vld [vmem:[%s15] sm:$0xf]
    %2303 = vset.pattern.permute.xlu0 0
    %2304 = vperm.xlu0 %2303, %v2301
    %v2305 = vpop.permute.xlu0 %2304
    %v2307 = vadd.f32 %v2299, %v2305
    %v2308 = vadd.f32 %v2300, %v2305
    %v2309 = vmax.f32 %v2307, 0.0
    %v2310 = vmax.f32 %v2308, 0.0
    %v2313 = vcombine.low %v2309, %v2310
    %vm2315 = vcmask 261124
    %vm2316 = vmor %vm2315, %vm216
    %2317 = vst.msk [vmem:[%s16] sm:$0xff] %vm2316, %v2313
    // Predicated region
    $region82: #{n_vcnn_gru_forward.3} parent=1 // pred_check
      _
    $region83: #{n_vcnn_gru_forward.3} parent=1 // pred_check_branch
      %2319 = sbr.rel (0) target = $region85
    $region84: #{n_vcnn_gru_forward.3} parent=1 // pred_region
      _
    $region85: #{n_vcnn_gru_forward.3} parent=1 // pred_fallthru
      _
    // Predicated region
    $region86: #{n_vcnn_gru_forward.3} parent=1 // pred_check
      _
    $region87: #{n_vcnn_gru_forward.3} parent=1 // pred_check_branch
      %2321 = sbr.rel (0) target = $region89
    $region88: #{n_vcnn_gru_forward.3} parent=1 // pred_region
      _
    $region89: #{n_vcnn_gru_forward.3} parent=1 // pred_fallthru
      _
    %2322 = vsyncpa [#allocation3], 1
    %2323 = vsyncpa [#allocation5], 1
    %2324 = vsyncpa [#allocation8], 1

// kernel: n_vcnn_gru_forward.5
$region0: #{n_vcnn_gru_forward.5}
  #allocation0 [shape = 'u32[]', space=smem, size = 0x4, offset = 0x4, fixed_abs, tag = 'smem constant byte address 0x4 - core index']
  #allocation1 [shape = 'u32[144,128]{1,0:T(1,128)}', space=vmem, size = 0x12000, scoped, tag = 'internal scratch']
  %s0 = inlined_call_operand.vmem [shape: f32[1,1280], index: 0, kind: input, shape index: {}]
  %s1 = inlined_call_operand.hbm [shape: bf16[1280,512], index: 1, kind: input, shape index: {}]
  %s2 = inlined_call_operand.hbm [shape: f32[1,512], index: 2, kind: input, shape index: {}]
  %s3 = inlined_call_operand.hbm [shape: f32[1,512], index: 3, kind: output, shape index: {}]
  %s4 = sld [smem:[#allocation0]]
  $region30: #{n_vcnn_gru_forward.5} parent=0
    _
  %s6 = ssub.s32 1, %s4
  %s7 = scalar_select 0, %s6, %s4
  $region1: #{n_vcnn_gru_forward.5} parent=0
    #allocation2 [shape = 'u8[1310720]{0}', space=vmem, size = 0x140000, scoped, tag = 'input window, operand 1, single buffered']
    #allocation3 [shape = 's32[1]{0}', space=sflag, size = 0x4, scoped, tag = 'scoped memory for n_vcnn_gru_forward.5']
    #allocation4 [shape = 's32[1]{0}', space=sflag, size = 0x4, scoped, tag = 'scoped memory for n_vcnn_gru_forward.5']
    #allocation5 [shape = 'u8[2048]{0}', space=vmem, size = 0x800, scoped, tag = 'input window, operand 2, single buffered']
    #allocation6 [shape = 's32[1]{0}', space=sflag, size = 0x4, scoped, tag = 'scoped memory for n_vcnn_gru_forward.5']
    #allocation7 [shape = 'u8[2048]{0}', space=vmem, size = 0x800, scoped, tag = 'output window, operand 0, single buffered']
    %8 = vsyncpa [#allocation3], 0
    %9 = vsyncpa [#allocation6], 0
    %10 = vsyncpa [#allocation4], 0
    // Predicated region
    $region2: #{n_vcnn_gru_forward.5} parent=1 // pred_check
      _
    $region3: #{n_vcnn_gru_forward.5} parent=1 // pred_check_branch
      %12 = sbr.rel (0) target = $region5
    $region4: #{n_vcnn_gru_forward.5} parent=1 // pred_region
      _
    $region5: #{n_vcnn_gru_forward.5} parent=1 // pred_fallthru
      _
    // Predicated region
    $region6: #{n_vcnn_gru_forward.5} parent=1 // pred_check
      _
    $region7: #{n_vcnn_gru_forward.5} parent=1 // pred_check_branch
      %14 = sbr.rel (0) target = $region9
    $region8: #{n_vcnn_gru_forward.5} parent=1 // pred_region
      %s16 = ssub.s32 40960, 40960
      %17 = vsyncadd [#allocation3], %s16
      %s18 = sshll.u32 [#allocation2], 4
      %s19 = int_to_ptr.vmem [resolvable:$true] %s18
      %24 = dma.hbm_to_vmem [thread:$0]  %s1, 40960, %s19, [#allocation3], 256, 256, 16
    $region9: #{n_vcnn_gru_forward.5} parent=1 // pred_fallthru
      _
    // Predicated region
    $region10: #{n_vcnn_gru_forward.5} parent=1 // pred_check
      _
    $region11: #{n_vcnn_gru_forward.5} parent=1 // pred_check_branch
      %26 = sbr.rel (0) target = $region13
    $region12: #{n_vcnn_gru_forward.5} parent=1 // pred_region
      %s28 = ssub.s32 64, 64
      %29 = vsyncadd [#allocation6], %s28
      %s31 = sshll.u32 [#allocation5], 4
      %s32 = int_to_ptr.vmem [resolvable:$true] %s31
      %34 = dma.hbm_to_vmem [thread:$0]  %s2, 64, %s32, [#allocation6]
    $region13: #{n_vcnn_gru_forward.5} parent=1 // pred_fallthru
      _
    // Predicated region
    $region14: #{n_vcnn_gru_forward.5} parent=1 // pred_check
      _
    $region15: #{n_vcnn_gru_forward.5} parent=1 // pred_check_branch
      %36 = sbr.rel (0) target = $region17
    $region16: #{n_vcnn_gru_forward.5} parent=1 // pred_region
      %37 = dma.done [#allocation3], 40960
    $region17: #{n_vcnn_gru_forward.5} parent=1 // pred_fallthru
      _
    // Predicated region
    $region18: #{n_vcnn_gru_forward.5} parent=1 // pred_check
      _
    $region19: #{n_vcnn_gru_forward.5} parent=1 // pred_check_branch
      %39 = sbr.rel (0) target = $region21
    $region20: #{n_vcnn_gru_forward.5} parent=1 // pred_region
      %40 = dma.done [#allocation6], 64
    $region21: #{n_vcnn_gru_forward.5} parent=1 // pred_fallthru
      _
    %v41 = vld [vmem:[%s0] sm:$0xff]
    %v42 = vld [vmem:[%s0 + $0x8] sm:$0x3]
    %v45 = vlaneseq
    %v46 = vshrl.u32 %v45, 7
    %v47 = vsub.s32 0, %v46
    %v48 = vrot.slane %v41, %v47
    %v49 = vlaneseq
    %v50 = vshrl.u32 %v49, 7
    %v51 = vsub.s32 1, %v50
    %v52 = vrot.slane %v41, %v51
    %v53 = vlaneseq
    %v54 = vshrl.u32 %v53, 7
    %v55 = vsub.s32 2, %v54
    %v56 = vrot.slane %v41, %v55
    %v57 = vlaneseq
    %v58 = vshrl.u32 %v57, 7
    %v59 = vsub.s32 3, %v58
    %v60 = vrot.slane %v41, %v59
    %v61 = vlaneseq
    %v62 = vshrl.u32 %v61, 7
    %v63 = vsub.s32 4, %v62
    %v64 = vrot.slane %v41, %v63
    %v65 = vlaneseq
    %v66 = vshrl.u32 %v65, 7
    %v67 = vsub.s32 5, %v66
    %v68 = vrot.slane %v41, %v67
    %v69 = vlaneseq
    %v70 = vshrl.u32 %v69, 7
    %v71 = vsub.s32 6, %v70
    %v72 = vrot.slane %v41, %v71
    %v73 = vlaneseq
    %v74 = vshrl.u32 %v73, 7
    %v75 = vsub.s32 7, %v74
    %v76 = vrot.slane %v41, %v75
    %v77 = vlaneseq
    %v78 = vshrl.u32 %v77, 7
    %v79 = vsub.s32 0, %v78
    %v80 = vrot.slane %v42, %v79
    %v81 = vlaneseq
    %v82 = vshrl.u32 %v81, 7
    %v83 = vsub.s32 1, %v82
    %v84 = vrot.slane %v42, %v83
    %v95 = vpack.c.bf16 %v48, %v48
    %v96 = vpack.c.bf16 %v52, %v52
    %v97 = vpack.c.bf16 %v56, %v56
    %v98 = vpack.c.bf16 %v60, %v60
    %v99 = vpack.c.bf16 %v64, %v64
    %v100 = vpack.c.bf16 %v68, %v68
    %v101 = vpack.c.bf16 %v72, %v72
    %v102 = vpack.c.bf16 %v76, %v76
    %v103 = vpack.c.bf16 %v80, %v80
    %v104 = vpack.c.bf16 %v84, %v84
    %v105 = vld [vmem:[#allocation2] sm:$0xff]
    %v106 = vld [vmem:[#allocation2 + $0x8] sm:$0xff]
    %v107 = vld [vmem:[#allocation2 + $0x10] sm:$0xff]
    %v108 = vld [vmem:[#allocation2 + $0x18] sm:$0xff]
    %v109 = vld [vmem:[#allocation2 + $0x20] sm:$0xff]
    %v110 = vld [vmem:[#allocation2 + $0x28] sm:$0xff]
    %v111 = vld [vmem:[#allocation2 + $0x30] sm:$0xff]
    %v112 = vld [vmem:[#allocation2 + $0x38] sm:$0xff]
    %v113 = vld [vmem:[#allocation2 + $0x40] sm:$0xff]
    %v114 = vld [vmem:[#allocation2 + $0x48] sm:$0xff]
    %v115 = vld [vmem:[#allocation2 + $0x50] sm:$0xff]
    %v116 = vld [vmem:[#allocation2 + $0x58] sm:$0xff]
    %v117 = vld [vmem:[#allocation2 + $0x60] sm:$0xff]
    %v118 = vld [vmem:[#allocation2 + $0x68] sm:$0xff]
    %v119 = vld [vmem:[#allocation2 + $0x70] sm:$0xff]
    %v120 = vld [vmem:[#allocation2 + $0x78] sm:$0xff]
    %v121 = vld [vmem:[#allocation2 + $0x80] sm:$0xff]
    %v122 = vld [vmem:[#allocation2 + $0x88] sm:$0xff]
    %v123 = vld [vmem:[#allocation2 + $0x90] sm:$0xff]
    %v124 = vld [vmem:[#allocation2 + $0x98] sm:$0xff]
    %v125 = vld [vmem:[#allocation2 + $0xa0] sm:$0xff]
    %v126 = vld [vmem:[#allocation2 + $0xa8] sm:$0xff]
    %v127 = vld [vmem:[#allocation2 + $0xb0] sm:$0xff]
    %v128 = vld [vmem:[#allocation2 + $0xb8] sm:$0xff]
    %v129 = vld [vmem:[#allocation2 + $0xc0] sm:$0xff]
    %v130 = vld [vmem:[#allocation2 + $0xc8] sm:$0xff]
    %v131 = vld [vmem:[#allocation2 + $0xd0] sm:$0xff]
    %v132 = vld [vmem:[#allocation2 + $0xd8] sm:$0xff]
    %v133 = vld [vmem:[#allocation2 + $0xe0] sm:$0xff]
    %v134 = vld [vmem:[#allocation2 + $0xe8] sm:$0xff]
    %v135 = vld [vmem:[#allocation2 + $0xf0] sm:$0xff]
    %v136 = vld [vmem:[#allocation2 + $0xf8] sm:$0xff]
    %v137 = vld [vmem:[#allocation2 + $0x100] sm:$0xff]
    %v138 = vld [vmem:[#allocation2 + $0x108] sm:$0xff]
    %v139 = vld [vmem:[#allocation2 + $0x110] sm:$0xff]
    %v140 = vld [vmem:[#allocation2 + $0x118] sm:$0xff]
    %v141 = vld [vmem:[#allocation2 + $0x120] sm:$0xff]
    %v142 = vld [vmem:[#allocation2 + $0x128] sm:$0xff]
    %v143 = vld [vmem:[#allocation2 + $0x130] sm:$0xff]
    %v144 = vld [vmem:[#allocation2 + $0x138] sm:$0xff]
    %v145 = vld [vmem:[#allocation2 + $0x140] sm:$0xff]
    %v146 = vld [vmem:[#allocation2 + $0x148] sm:$0xff]
    %v147 = vld [vmem:[#allocation2 + $0x150] sm:$0xff]
    %v148 = vld [vmem:[#allocation2 + $0x158] sm:$0xff]
    %v149 = vld [vmem:[#allocation2 + $0x160] sm:$0xff]
    %v150 = vld [vmem:[#allocation2 + $0x168] sm:$0xff]
    %v151 = vld [vmem:[#allocation2 + $0x170] sm:$0xff]
    %v152 = vld [vmem:[#allocation2 + $0x178] sm:$0xff]
    %v153 = vld [vmem:[#allocation2 + $0x180] sm:$0xff]
    %v154 = vld [vmem:[#allocation2 + $0x188] sm:$0xff]
    %v155 = vld [vmem:[#allocation2 + $0x190] sm:$0xff]
    %v156 = vld [vmem:[#allocation2 + $0x198] sm:$0xff]
    %v157 = vld [vmem:[#allocation2 + $0x1a0] sm:$0xff]
    %v158 = vld [vmem:[#allocation2 + $0x1a8] sm:$0xff]
    %v159 = vld [vmem:[#allocation2 + $0x1b0] sm:$0xff]
    %v160 = vld [vmem:[#allocation2 + $0x1b8] sm:$0xff]
    %v161 = vld [vmem:[#allocation2 + $0x1c0] sm:$0xff]
    %v162 = vld [vmem:[#allocation2 + $0x1c8] sm:$0xff]
    %v163 = vld [vmem:[#allocation2 + $0x1d0] sm:$0xff]
    %v164 = vld [vmem:[#allocation2 + $0x1d8] sm:$0xff]
    %v165 = vld [vmem:[#allocation2 + $0x1e0] sm:$0xff]
    %v166 = vld [vmem:[#allocation2 + $0x1e8] sm:$0xff]
    %v167 = vld [vmem:[#allocation2 + $0x1f0] sm:$0xff]
    %v168 = vld [vmem:[#allocation2 + $0x1f8] sm:$0xff]
    %v169 = vld [vmem:[#allocation2 + $0x200] sm:$0xff]
    %v170 = vld [vmem:[#allocation2 + $0x208] sm:$0xff]
    %v171 = vld [vmem:[#allocation2 + $0x210] sm:$0xff]
    %v172 = vld [vmem:[#allocation2 + $0x218] sm:$0xff]
    %v173 = vld [vmem:[#allocation2 + $0x220] sm:$0xff]
    %v174 = vld [vmem:[#allocation2 + $0x228] sm:$0xff]
    %v175 = vld [vmem:[#allocation2 + $0x230] sm:$0xff]
    %v176 = vld [vmem:[#allocation2 + $0x238] sm:$0xff]
    %v177 = vld [vmem:[#allocation2 + $0x240] sm:$0xff]
    %v178 = vld [vmem:[#allocation2 + $0x248] sm:$0xff]
    %v179 = vld [vmem:[#allocation2 + $0x250] sm:$0xff]
    %v180 = vld [vmem:[#allocation2 + $0x258] sm:$0xff]
    %v181 = vld [vmem:[#allocation2 + $0x260] sm:$0xff]
    %v182 = vld [vmem:[#allocation2 + $0x268] sm:$0xff]
    %v183 = vld [vmem:[#allocation2 + $0x270] sm:$0xff]
    %v184 = vld [vmem:[#allocation2 + $0x278] sm:$0xff]
    %v185 = vld [vmem:[#allocation2 + $0x280] sm:$0xff]
    %v186 = vld [vmem:[#allocation2 + $0x288] sm:$0xff]
    %v187 = vld [vmem:[#allocation2 + $0x290] sm:$0xff]
    %v188 = vld [vmem:[#allocation2 + $0x298] sm:$0xff]
    %v189 = vld [vmem:[#allocation2 + $0x2a0] sm:$0xff]
    %v190 = vld [vmem:[#allocation2 + $0x2a8] sm:$0xff]
    %v191 = vld [vmem:[#allocation2 + $0x2b0] sm:$0xff]
    %v192 = vld [vmem:[#allocation2 + $0x2b8] sm:$0xff]
    %v193 = vld [vmem:[#allocation2 + $0x2c0] sm:$0xff]
    %v194 = vld [vmem:[#allocation2 + $0x2c8] sm:$0xff]
    %v195 = vld [vmem:[#allocation2 + $0x2d0] sm:$0xff]
    %v196 = vld [vmem:[#allocation2 + $0x2d8] sm:$0xff]
    %v197 = vld [vmem:[#allocation2 + $0x2e0] sm:$0xff]
    %v198 = vld [vmem:[#allocation2 + $0x2e8] sm:$0xff]
    %v199 = vld [vmem:[#allocation2 + $0x2f0] sm:$0xff]
    %v200 = vld [vmem:[#allocation2 + $0x2f8] sm:$0xff]
    %v201 = vld [vmem:[#allocation2 + $0x300] sm:$0xff]
    %v202 = vld [vmem:[#allocation2 + $0x308] sm:$0xff]
    %v203 = vld [vmem:[#allocation2 + $0x310] sm:$0xff]
    %v204 = vld [vmem:[#allocation2 + $0x318] sm:$0xff]
    %v205 = vld [vmem:[#allocation2 + $0x320] sm:$0xff]
    %v206 = vld [vmem:[#allocation2 + $0x328] sm:$0xff]
    %v207 = vld [vmem:[#allocation2 + $0x330] sm:$0xff]
    %v208 = vld [vmem:[#allocation2 + $0x338] sm:$0xff]
    %v209 = vld [vmem:[#allocation2 + $0x340] sm:$0xff]
    %v210 = vld [vmem:[#allocation2 + $0x348] sm:$0xff]
    %v211 = vld [vmem:[#allocation2 + $0x350] sm:$0xff]
    %v212 = vld [vmem:[#allocation2 + $0x358] sm:$0xff]
    %v213 = vld [vmem:[#allocation2 + $0x360] sm:$0xff]
    %v214 = vld [vmem:[#allocation2 + $0x368] sm:$0xff]
    %v215 = vld [vmem:[#allocation2 + $0x370] sm:$0xff]
    %v216 = vld [vmem:[#allocation2 + $0x378] sm:$0xff]
    %v217 = vld [vmem:[#allocation2 + $0x380] sm:$0xff]
    %v218 = vld [vmem:[#allocation2 + $0x388] sm:$0xff]
    %v219 = vld [vmem:[#allocation2 + $0x390] sm:$0xff]
    %v220 = vld [vmem:[#allocation2 + $0x398] sm:$0xff]
    %v221 = vld [vmem:[#allocation2 + $0x3a0] sm:$0xff]
    %v222 = vld [vmem:[#allocation2 + $0x3a8] sm:$0xff]
    %v223 = vld [vmem:[#allocation2 + $0x3b0] sm:$0xff]
    %v224 = vld [vmem:[#allocation2 + $0x3b8] sm:$0xff]
    %v225 = vld [vmem:[#allocation2 + $0x3c0] sm:$0xff]
    %v226 = vld [vmem:[#allocation2 + $0x3c8] sm:$0xff]
    %v227 = vld [vmem:[#allocation2 + $0x3d0] sm:$0xff]
    %v228 = vld [vmem:[#allocation2 + $0x3d8] sm:$0xff]
    %v229 = vld [vmem:[#allocation2 + $0x3e0] sm:$0xff]
    %v230 = vld [vmem:[#allocation2 + $0x3e8] sm:$0xff]
    %v231 = vld [vmem:[#allocation2 + $0x3f0] sm:$0xff]
    %v232 = vld [vmem:[#allocation2 + $0x3f8] sm:$0xff]
    %v233 = vld [vmem:[#allocation2 + $0x400] sm:$0xff]
    %v234 = vld [vmem:[#allocation2 + $0x408] sm:$0xff]
    %v235 = vld [vmem:[#allocation2 + $0x410] sm:$0xff]
    %v236 = vld [vmem:[#allocation2 + $0x418] sm:$0xff]
    %v237 = vld [vmem:[#allocation2 + $0x420] sm:$0xff]
    %v238 = vld [vmem:[#allocation2 + $0x428] sm:$0xff]
    %v239 = vld [vmem:[#allocation2 + $0x430] sm:$0xff]
    %v240 = vld [vmem:[#allocation2 + $0x438] sm:$0xff]
    %v241 = vld [vmem:[#allocation2 + $0x440] sm:$0xff]
    %v242 = vld [vmem:[#allocation2 + $0x448] sm:$0xff]
    %v243 = vld [vmem:[#allocation2 + $0x450] sm:$0xff]
    %v244 = vld [vmem:[#allocation2 + $0x458] sm:$0xff]
    %v245 = vld [vmem:[#allocation2 + $0x460] sm:$0xff]
    %v246 = vld [vmem:[#allocation2 + $0x468] sm:$0xff]
    %v247 = vld [vmem:[#allocation2 + $0x470] sm:$0xff]
    %v248 = vld [vmem:[#allocation2 + $0x478] sm:$0xff]
    %v249 = vld [vmem:[#allocation2 + $0x480] sm:$0xff]
    %v250 = vld [vmem:[#allocation2 + $0x488] sm:$0xff]
    %v251 = vld [vmem:[#allocation2 + $0x490] sm:$0xff]
    %v252 = vld [vmem:[#allocation2 + $0x498] sm:$0xff]
    %v253 = vld [vmem:[#allocation2 + $0x4a0] sm:$0xff]
    %v254 = vld [vmem:[#allocation2 + $0x4a8] sm:$0xff]
    %v255 = vld [vmem:[#allocation2 + $0x4b0] sm:$0xff]
    %v256 = vld [vmem:[#allocation2 + $0x4b8] sm:$0xff]
    %v257 = vld [vmem:[#allocation2 + $0x4c0] sm:$0xff]
    %v258 = vld [vmem:[#allocation2 + $0x4c8] sm:$0xff]
    %v259 = vld [vmem:[#allocation2 + $0x4d0] sm:$0xff]
    %v260 = vld [vmem:[#allocation2 + $0x4d8] sm:$0xff]
    %v261 = vld [vmem:[#allocation2 + $0x4e0] sm:$0xff]
    %v262 = vld [vmem:[#allocation2 + $0x4e8] sm:$0xff]
    %v263 = vld [vmem:[#allocation2 + $0x4f0] sm:$0xff]
    %v264 = vld [vmem:[#allocation2 + $0x4f8] sm:$0xff]
    %v265 = vld [vmem:[#allocation2 + $0x500] sm:$0xff]
    %v266 = vld [vmem:[#allocation2 + $0x508] sm:$0xff]
    %v267 = vld [vmem:[#allocation2 + $0x510] sm:$0xff]
    %v268 = vld [vmem:[#allocation2 + $0x518] sm:$0xff]
    %v269 = vld [vmem:[#allocation2 + $0x520] sm:$0xff]
    %v270 = vld [vmem:[#allocation2 + $0x528] sm:$0xff]
    %v271 = vld [vmem:[#allocation2 + $0x530] sm:$0xff]
    %v272 = vld [vmem:[#allocation2 + $0x538] sm:$0xff]
    %v273 = vld [vmem:[#allocation2 + $0x540] sm:$0xff]
    %v274 = vld [vmem:[#allocation2 + $0x548] sm:$0xff]
    %v275 = vld [vmem:[#allocation2 + $0x550] sm:$0xff]
    %v276 = vld [vmem:[#allocation2 + $0x558] sm:$0xff]
    %v277 = vld [vmem:[#allocation2 + $0x560] sm:$0xff]
    %v278 = vld [vmem:[#allocation2 + $0x568] sm:$0xff]
    %v279 = vld [vmem:[#allocation2 + $0x570] sm:$0xff]
    %v280 = vld [vmem:[#allocation2 + $0x578] sm:$0xff]
    %v281 = vld [vmem:[#allocation2 + $0x580] sm:$0xff]
    %v282 = vld [vmem:[#allocation2 + $0x588] sm:$0xff]
    %v283 = vld [vmem:[#allocation2 + $0x590] sm:$0xff]
    %v284 = vld [vmem:[#allocation2 + $0x598] sm:$0xff]
    %v285 = vld [vmem:[#allocation2 + $0x5a0] sm:$0xff]
    %v286 = vld [vmem:[#allocation2 + $0x5a8] sm:$0xff]
    %v287 = vld [vmem:[#allocation2 + $0x5b0] sm:$0xff]
    %v288 = vld [vmem:[#allocation2 + $0x5b8] sm:$0xff]
    %v289 = vld [vmem:[#allocation2 + $0x5c0] sm:$0xff]
    %v290 = vld [vmem:[#allocation2 + $0x5c8] sm:$0xff]
    %v291 = vld [vmem:[#allocation2 + $0x5d0] sm:$0xff]
    %v292 = vld [vmem:[#allocation2 + $0x5d8] sm:$0xff]
    %v293 = vld [vmem:[#allocation2 + $0x5e0] sm:$0xff]
    %v294 = vld [vmem:[#allocation2 + $0x5e8] sm:$0xff]
    %v295 = vld [vmem:[#allocation2 + $0x5f0] sm:$0xff]
    %v296 = vld [vmem:[#allocation2 + $0x5f8] sm:$0xff]
    %v297 = vld [vmem:[#allocation2 + $0x600] sm:$0xff]
    %v298 = vld [vmem:[#allocation2 + $0x608] sm:$0xff]
    %v299 = vld [vmem:[#allocation2 + $0x610] sm:$0xff]
    %v300 = vld [vmem:[#allocation2 + $0x618] sm:$0xff]
    %v301 = vld [vmem:[#allocation2 + $0x620] sm:$0xff]
    %v302 = vld [vmem:[#allocation2 + $0x628] sm:$0xff]
    %v303 = vld [vmem:[#allocation2 + $0x630] sm:$0xff]
    %v304 = vld [vmem:[#allocation2 + $0x638] sm:$0xff]
    %v305 = vld [vmem:[#allocation2 + $0x640] sm:$0xff]
    %v306 = vld [vmem:[#allocation2 + $0x648] sm:$0xff]
    %v307 = vld [vmem:[#allocation2 + $0x650] sm:$0xff]
    %v308 = vld [vmem:[#allocation2 + $0x658] sm:$0xff]
    %v309 = vld [vmem:[#allocation2 + $0x660] sm:$0xff]
    %v310 = vld [vmem:[#allocation2 + $0x668] sm:$0xff]
    %v311 = vld [vmem:[#allocation2 + $0x670] sm:$0xff]
    %v312 = vld [vmem:[#allocation2 + $0x678] sm:$0xff]
    %v313 = vld [vmem:[#allocation2 + $0x680] sm:$0xff]
    %v314 = vld [vmem:[#allocation2 + $0x688] sm:$0xff]
    %v315 = vld [vmem:[#allocation2 + $0x690] sm:$0xff]
    %v316 = vld [vmem:[#allocation2 + $0x698] sm:$0xff]
    %v317 = vld [vmem:[#allocation2 + $0x6a0] sm:$0xff]
    %v318 = vld [vmem:[#allocation2 + $0x6a8] sm:$0xff]
    %v319 = vld [vmem:[#allocation2 + $0x6b0] sm:$0xff]
    %v320 = vld [vmem:[#allocation2 + $0x6b8] sm:$0xff]
    %v321 = vld [vmem:[#allocation2 + $0x6c0] sm:$0xff]
    %v322 = vld [vmem:[#allocation2 + $0x6c8] sm:$0xff]
    %v323 = vld [vmem:[#allocation2 + $0x6d0] sm:$0xff]
    %v324 = vld [vmem:[#allocation2 + $0x6d8] sm:$0xff]
    %v325 = vld [vmem:[#allocation2 + $0x6e0] sm:$0xff]
    %v326 = vld [vmem:[#allocation2 + $0x6e8] sm:$0xff]
    %v327 = vld [vmem:[#allocation2 + $0x6f0] sm:$0xff]
    %v328 = vld [vmem:[#allocation2 + $0x6f8] sm:$0xff]
    %v329 = vld [vmem:[#allocation2 + $0x700] sm:$0xff]
    %v330 = vld [vmem:[#allocation2 + $0x708] sm:$0xff]
    %v331 = vld [vmem:[#allocation2 + $0x710] sm:$0xff]
    %v332 = vld [vmem:[#allocation2 + $0x718] sm:$0xff]
    %v333 = vld [vmem:[#allocation2 + $0x720] sm:$0xff]
    %v334 = vld [vmem:[#allocation2 + $0x728] sm:$0xff]
    %v335 = vld [vmem:[#allocation2 + $0x730] sm:$0xff]
    %v336 = vld [vmem:[#allocation2 + $0x738] sm:$0xff]
    %v337 = vld [vmem:[#allocation2 + $0x740] sm:$0xff]
    %v338 = vld [vmem:[#allocation2 + $0x748] sm:$0xff]
    %v339 = vld [vmem:[#allocation2 + $0x750] sm:$0xff]
    %v340 = vld [vmem:[#allocation2 + $0x758] sm:$0xff]
    %v341 = vld [vmem:[#allocation2 + $0x760] sm:$0xff]
    %v342 = vld [vmem:[#allocation2 + $0x768] sm:$0xff]
    %v343 = vld [vmem:[#allocation2 + $0x770] sm:$0xff]
    %v344 = vld [vmem:[#allocation2 + $0x778] sm:$0xff]
    %v345 = vld [vmem:[#allocation2 + $0x780] sm:$0xff]
    %v346 = vld [vmem:[#allocation2 + $0x788] sm:$0xff]
    %v347 = vld [vmem:[#allocation2 + $0x790] sm:$0xff]
    %v348 = vld [vmem:[#allocation2 + $0x798] sm:$0xff]
    %v349 = vld [vmem:[#allocation2 + $0x7a0] sm:$0xff]
    %v350 = vld [vmem:[#allocation2 + $0x7a8] sm:$0xff]
    %v351 = vld [vmem:[#allocation2 + $0x7b0] sm:$0xff]
    %v352 = vld [vmem:[#allocation2 + $0x7b8] sm:$0xff]
    %v353 = vld [vmem:[#allocation2 + $0x7c0] sm:$0xff]
    %v354 = vld [vmem:[#allocation2 + $0x7c8] sm:$0xff]
    %v355 = vld [vmem:[#allocation2 + $0x7d0] sm:$0xff]
    %v356 = vld [vmem:[#allocation2 + $0x7d8] sm:$0xff]
    %v357 = vld [vmem:[#allocation2 + $0x7e0] sm:$0xff]
    %v358 = vld [vmem:[#allocation2 + $0x7e8] sm:$0xff]
    %v359 = vld [vmem:[#allocation2 + $0x7f0] sm:$0xff]
    %v360 = vld [vmem:[#allocation2 + $0x7f8] sm:$0xff]
    %v361 = vld [vmem:[#allocation2 + $0x800] sm:$0xff]
    %v362 = vld [vmem:[#allocation2 + $0x808] sm:$0xff]
    %v363 = vld [vmem:[#allocation2 + $0x810] sm:$0xff]
    %v364 = vld [vmem:[#allocation2 + $0x818] sm:$0xff]
    %v365 = vld [vmem:[#allocation2 + $0x820] sm:$0xff]
    %v366 = vld [vmem:[#allocation2 + $0x828] sm:$0xff]
    %v367 = vld [vmem:[#allocation2 + $0x830] sm:$0xff]
    %v368 = vld [vmem:[#allocation2 + $0x838] sm:$0xff]
    %v369 = vld [vmem:[#allocation2 + $0x840] sm:$0xff]
    %v370 = vld [vmem:[#allocation2 + $0x848] sm:$0xff]
    %v371 = vld [vmem:[#allocation2 + $0x850] sm:$0xff]
    %v372 = vld [vmem:[#allocation2 + $0x858] sm:$0xff]
    %v373 = vld [vmem:[#allocation2 + $0x860] sm:$0xff]
    %v374 = vld [vmem:[#allocation2 + $0x868] sm:$0xff]
    %v375 = vld [vmem:[#allocation2 + $0x870] sm:$0xff]
    %v376 = vld [vmem:[#allocation2 + $0x878] sm:$0xff]
    %v377 = vld [vmem:[#allocation2 + $0x880] sm:$0xff]
    %v378 = vld [vmem:[#allocation2 + $0x888] sm:$0xff]
    %v379 = vld [vmem:[#allocation2 + $0x890] sm:$0xff]
    %v380 = vld [vmem:[#allocation2 + $0x898] sm:$0xff]
    %v381 = vld [vmem:[#allocation2 + $0x8a0] sm:$0xff]
    %v382 = vld [vmem:[#allocation2 + $0x8a8] sm:$0xff]
    %v383 = vld [vmem:[#allocation2 + $0x8b0] sm:$0xff]
    %v384 = vld [vmem:[#allocation2 + $0x8b8] sm:$0xff]
    %v385 = vld [vmem:[#allocation2 + $0x8c0] sm:$0xff]
    %v386 = vld [vmem:[#allocation2 + $0x8c8] sm:$0xff]
    %v387 = vld [vmem:[#allocation2 + $0x8d0] sm:$0xff]
    %v388 = vld [vmem:[#allocation2 + $0x8d8] sm:$0xff]
    %v389 = vld [vmem:[#allocation2 + $0x8e0] sm:$0xff]
    %v390 = vld [vmem:[#allocation2 + $0x8e8] sm:$0xff]
    %v391 = vld [vmem:[#allocation2 + $0x8f0] sm:$0xff]
    %v392 = vld [vmem:[#allocation2 + $0x8f8] sm:$0xff]
    %v393 = vld [vmem:[#allocation2 + $0x900] sm:$0xff]
    %v394 = vld [vmem:[#allocation2 + $0x908] sm:$0xff]
    %v395 = vld [vmem:[#allocation2 + $0x910] sm:$0xff]
    %v396 = vld [vmem:[#allocation2 + $0x918] sm:$0xff]
    %v397 = vld [vmem:[#allocation2 + $0x920] sm:$0xff]
    %v398 = vld [vmem:[#allocation2 + $0x928] sm:$0xff]
    %v399 = vld [vmem:[#allocation2 + $0x930] sm:$0xff]
    %v400 = vld [vmem:[#allocation2 + $0x938] sm:$0xff]
    %v401 = vld [vmem:[#allocation2 + $0x940] sm:$0xff]
    %v402 = vld [vmem:[#allocation2 + $0x948] sm:$0xff]
    %v403 = vld [vmem:[#allocation2 + $0x950] sm:$0xff]
    %v404 = vld [vmem:[#allocation2 + $0x958] sm:$0xff]
    %v405 = vld [vmem:[#allocation2 + $0x960] sm:$0xff]
    %v406 = vld [vmem:[#allocation2 + $0x968] sm:$0xff]
    %v407 = vld [vmem:[#allocation2 + $0x970] sm:$0xff]
    %v408 = vld [vmem:[#allocation2 + $0x978] sm:$0xff]
    %v409 = vld [vmem:[#allocation2 + $0x980] sm:$0xff]
    %v410 = vld [vmem:[#allocation2 + $0x988] sm:$0xff]
    %v411 = vld [vmem:[#allocation2 + $0x990] sm:$0xff]
    %v412 = vld [vmem:[#allocation2 + $0x998] sm:$0xff]
    %v413 = vld [vmem:[#allocation2 + $0x9a0] sm:$0xff]
    %v414 = vld [vmem:[#allocation2 + $0x9a8] sm:$0xff]
    %v415 = vld [vmem:[#allocation2 + $0x9b0] sm:$0xff]
    %v416 = vld [vmem:[#allocation2 + $0x9b8] sm:$0xff]
    %v417 = vld [vmem:[#allocation2 + $0x9c0] sm:$0xff]
    %v418 = vld [vmem:[#allocation2 + $0x9c8] sm:$0xff]
    %v419 = vld [vmem:[#allocation2 + $0x9d0] sm:$0xff]
    %v420 = vld [vmem:[#allocation2 + $0x9d8] sm:$0xff]
    %v421 = vld [vmem:[#allocation2 + $0x9e0] sm:$0xff]
    %v422 = vld [vmem:[#allocation2 + $0x9e8] sm:$0xff]
    %v423 = vld [vmem:[#allocation2 + $0x9f0] sm:$0xff]
    %v424 = vld [vmem:[#allocation2 + $0x9f8] sm:$0xff]
    %v425 = vld [vmem:[#allocation5] sm:$0xf]
    %v746 = vunpack.c.l.b16 %v105
    %v747 = vunpack.c.h.b16 %v105
    %v748 = vunpack.c.l.b16 %v106
    %v749 = vunpack.c.h.b16 %v106
    %v750 = vunpack.c.l.b16 %v107
    %v751 = vunpack.c.h.b16 %v107
    %v752 = vunpack.c.l.b16 %v108
    %v753 = vunpack.c.h.b16 %v108
    %v754 = vunpack.c.l.b16 %v109
    %v755 = vunpack.c.h.b16 %v109
    %v756 = vunpack.c.l.b16 %v110
    %v757 = vunpack.c.h.b16 %v110
    %v758 = vunpack.c.l.b16 %v111
    %v759 = vunpack.c.h.b16 %v111
    %v760 = vunpack.c.l.b16 %v112
    %v761 = vunpack.c.h.b16 %v112
    %v762 = vunpack.c.l.b16 %v113
    %v763 = vunpack.c.h.b16 %v113
    %v764 = vunpack.c.l.b16 %v114
    %v765 = vunpack.c.h.b16 %v114
    %v766 = vunpack.c.l.b16 %v115
    %v767 = vunpack.c.h.b16 %v115
    %v768 = vunpack.c.l.b16 %v116
    %v769 = vunpack.c.h.b16 %v116
    %v770 = vunpack.c.l.b16 %v117
    %v771 = vunpack.c.h.b16 %v117
    %v772 = vunpack.c.l.b16 %v118
    %v773 = vunpack.c.h.b16 %v118
    %v774 = vunpack.c.l.b16 %v119
    %v775 = vunpack.c.h.b16 %v119
    %v776 = vunpack.c.l.b16 %v120
    %v777 = vunpack.c.h.b16 %v120
    %v778 = vunpack.c.l.b16 %v121
    %v779 = vunpack.c.h.b16 %v121
    %v780 = vunpack.c.l.b16 %v122
    %v781 = vunpack.c.h.b16 %v122
    %v782 = vunpack.c.l.b16 %v123
    %v783 = vunpack.c.h.b16 %v123
    %v784 = vunpack.c.l.b16 %v124
    %v785 = vunpack.c.h.b16 %v124
    %v786 = vunpack.c.l.b16 %v125
    %v787 = vunpack.c.h.b16 %v125
    %v788 = vunpack.c.l.b16 %v126
    %v789 = vunpack.c.h.b16 %v126
    %v790 = vunpack.c.l.b16 %v127
    %v791 = vunpack.c.h.b16 %v127
    %v792 = vunpack.c.l.b16 %v128
    %v793 = vunpack.c.h.b16 %v128
    %v794 = vunpack.c.l.b16 %v129
    %v795 = vunpack.c.h.b16 %v129
    %v796 = vunpack.c.l.b16 %v130
    %v797 = vunpack.c.h.b16 %v130
    %v798 = vunpack.c.l.b16 %v131
    %v799 = vunpack.c.h.b16 %v131
    %v800 = vunpack.c.l.b16 %v132
    %v801 = vunpack.c.h.b16 %v132
    %v802 = vunpack.c.l.b16 %v133
    %v803 = vunpack.c.h.b16 %v133
    %v804 = vunpack.c.l.b16 %v134
    %v805 = vunpack.c.h.b16 %v134
    %v806 = vunpack.c.l.b16 %v135
    %v807 = vunpack.c.h.b16 %v135
    %v808 = vunpack.c.l.b16 %v136
    %v809 = vunpack.c.h.b16 %v136
    %v810 = vunpack.c.l.b16 %v137
    %v811 = vunpack.c.h.b16 %v137
    %v812 = vunpack.c.l.b16 %v138
    %v813 = vunpack.c.h.b16 %v138
    %v814 = vunpack.c.l.b16 %v139
    %v815 = vunpack.c.h.b16 %v139
    %v816 = vunpack.c.l.b16 %v140
    %v817 = vunpack.c.h.b16 %v140
    %v818 = vunpack.c.l.b16 %v141
    %v819 = vunpack.c.h.b16 %v141
    %v820 = vunpack.c.l.b16 %v142
    %v821 = vunpack.c.h.b16 %v142
    %v822 = vunpack.c.l.b16 %v143
    %v823 = vunpack.c.h.b16 %v143
    %v824 = vunpack.c.l.b16 %v144
    %v825 = vunpack.c.h.b16 %v144
    %v826 = vunpack.c.l.b16 %v145
    %v827 = vunpack.c.h.b16 %v145
    %v828 = vunpack.c.l.b16 %v146
    %v829 = vunpack.c.h.b16 %v146
    %v830 = vunpack.c.l.b16 %v147
    %v831 = vunpack.c.h.b16 %v147
    %v832 = vunpack.c.l.b16 %v148
    %v833 = vunpack.c.h.b16 %v148
    %v834 = vunpack.c.l.b16 %v149
    %v835 = vunpack.c.h.b16 %v149
    %v836 = vunpack.c.l.b16 %v150
    %v837 = vunpack.c.h.b16 %v150
    %v838 = vunpack.c.l.b16 %v151
    %v839 = vunpack.c.h.b16 %v151
    %v840 = vunpack.c.l.b16 %v152
    %v841 = vunpack.c.h.b16 %v152
    %v842 = vunpack.c.l.b16 %v153
    %v843 = vunpack.c.h.b16 %v153
    %v844 = vunpack.c.l.b16 %v154
    %v845 = vunpack.c.h.b16 %v154
    %v846 = vunpack.c.l.b16 %v155
    %v847 = vunpack.c.h.b16 %v155
    %v848 = vunpack.c.l.b16 %v156
    %v849 = vunpack.c.h.b16 %v156
    %v850 = vunpack.c.l.b16 %v157
    %v851 = vunpack.c.h.b16 %v157
    %v852 = vunpack.c.l.b16 %v158
    %v853 = vunpack.c.h.b16 %v158
    %v854 = vunpack.c.l.b16 %v159
    %v855 = vunpack.c.h.b16 %v159
    %v856 = vunpack.c.l.b16 %v160
    %v857 = vunpack.c.h.b16 %v160
    %v858 = vunpack.c.l.b16 %v161
    %v859 = vunpack.c.h.b16 %v161
    %v860 = vunpack.c.l.b16 %v162
    %v861 = vunpack.c.h.b16 %v162
    %v862 = vunpack.c.l.b16 %v163
    %v863 = vunpack.c.h.b16 %v163
    %v864 = vunpack.c.l.b16 %v164
    %v865 = vunpack.c.h.b16 %v164
    %v866 = vunpack.c.l.b16 %v165
    %v867 = vunpack.c.h.b16 %v165
    %v868 = vunpack.c.l.b16 %v166
    %v869 = vunpack.c.h.b16 %v166
    %v870 = vunpack.c.l.b16 %v167
    %v871 = vunpack.c.h.b16 %v167
    %v872 = vunpack.c.l.b16 %v168
    %v873 = vunpack.c.h.b16 %v168
    %v874 = vunpack.c.l.b16 %v169
    %v875 = vunpack.c.h.b16 %v169
    %v876 = vunpack.c.l.b16 %v170
    %v877 = vunpack.c.h.b16 %v170
    %v878 = vunpack.c.l.b16 %v171
    %v879 = vunpack.c.h.b16 %v171
    %v880 = vunpack.c.l.b16 %v172
    %v881 = vunpack.c.h.b16 %v172
    %v882 = vunpack.c.l.b16 %v173
    %v883 = vunpack.c.h.b16 %v173
    %v884 = vunpack.c.l.b16 %v174
    %v885 = vunpack.c.h.b16 %v174
    %v886 = vunpack.c.l.b16 %v175
    %v887 = vunpack.c.h.b16 %v175
    %v888 = vunpack.c.l.b16 %v176
    %v889 = vunpack.c.h.b16 %v176
    %v890 = vunpack.c.l.b16 %v177
    %v891 = vunpack.c.h.b16 %v177
    %v892 = vunpack.c.l.b16 %v178
    %v893 = vunpack.c.h.b16 %v178
    %v894 = vunpack.c.l.b16 %v179
    %v895 = vunpack.c.h.b16 %v179
    %v896 = vunpack.c.l.b16 %v180
    %v897 = vunpack.c.h.b16 %v180
    %v898 = vunpack.c.l.b16 %v181
    %v899 = vunpack.c.h.b16 %v181
    %v900 = vunpack.c.l.b16 %v182
    %v901 = vunpack.c.h.b16 %v182
    %v902 = vunpack.c.l.b16 %v183
    %v903 = vunpack.c.h.b16 %v183
    %v904 = vunpack.c.l.b16 %v184
    %v905 = vunpack.c.h.b16 %v184
    %v906 = vunpack.c.l.b16 %v185
    %v907 = vunpack.c.h.b16 %v185
    %v908 = vunpack.c.l.b16 %v186
    %v909 = vunpack.c.h.b16 %v186
    %v910 = vunpack.c.l.b16 %v187
    %v911 = vunpack.c.h.b16 %v187
    %v912 = vunpack.c.l.b16 %v188
    %v913 = vunpack.c.h.b16 %v188
    %v914 = vunpack.c.l.b16 %v189
    %v915 = vunpack.c.h.b16 %v189
    %v916 = vunpack.c.l.b16 %v190
    %v917 = vunpack.c.h.b16 %v190
    %v918 = vunpack.c.l.b16 %v191
    %v919 = vunpack.c.h.b16 %v191
    %v920 = vunpack.c.l.b16 %v192
    %v921 = vunpack.c.h.b16 %v192
    %v922 = vunpack.c.l.b16 %v193
    %v923 = vunpack.c.h.b16 %v193
    %v924 = vunpack.c.l.b16 %v194
    %v925 = vunpack.c.h.b16 %v194
    %v926 = vunpack.c.l.b16 %v195
    %v927 = vunpack.c.h.b16 %v195
    %v928 = vunpack.c.l.b16 %v196
    %v929 = vunpack.c.h.b16 %v196
    %v930 = vunpack.c.l.b16 %v197
    %v931 = vunpack.c.h.b16 %v197
    %v932 = vunpack.c.l.b16 %v198
    %v933 = vunpack.c.h.b16 %v198
    %v934 = vunpack.c.l.b16 %v199
    %v935 = vunpack.c.h.b16 %v199
    %v936 = vunpack.c.l.b16 %v200
    %v937 = vunpack.c.h.b16 %v200
    %v938 = vunpack.c.l.b16 %v201
    %v939 = vunpack.c.h.b16 %v201
    %v940 = vunpack.c.l.b16 %v202
    %v941 = vunpack.c.h.b16 %v202
    %v942 = vunpack.c.l.b16 %v203
    %v943 = vunpack.c.h.b16 %v203
    %v944 = vunpack.c.l.b16 %v204
    %v945 = vunpack.c.h.b16 %v204
    %v946 = vunpack.c.l.b16 %v205
    %v947 = vunpack.c.h.b16 %v205
    %v948 = vunpack.c.l.b16 %v206
    %v949 = vunpack.c.h.b16 %v206
    %v950 = vunpack.c.l.b16 %v207
    %v951 = vunpack.c.h.b16 %v207
    %v952 = vunpack.c.l.b16 %v208
    %v953 = vunpack.c.h.b16 %v208
    %v954 = vunpack.c.l.b16 %v209
    %v955 = vunpack.c.h.b16 %v209
    %v956 = vunpack.c.l.b16 %v210
    %v957 = vunpack.c.h.b16 %v210
    %v958 = vunpack.c.l.b16 %v211
    %v959 = vunpack.c.h.b16 %v211
    %v960 = vunpack.c.l.b16 %v212
    %v961 = vunpack.c.h.b16 %v212
    %v962 = vunpack.c.l.b16 %v213
    %v963 = vunpack.c.h.b16 %v213
    %v964 = vunpack.c.l.b16 %v214
    %v965 = vunpack.c.h.b16 %v214
    %v966 = vunpack.c.l.b16 %v215
    %v967 = vunpack.c.h.b16 %v215
    %v968 = vunpack.c.l.b16 %v216
    %v969 = vunpack.c.h.b16 %v216
    %v970 = vunpack.c.l.b16 %v217
    %v971 = vunpack.c.h.b16 %v217
    %v972 = vunpack.c.l.b16 %v218
    %v973 = vunpack.c.h.b16 %v218
    %v974 = vunpack.c.l.b16 %v219
    %v975 = vunpack.c.h.b16 %v219
    %v976 = vunpack.c.l.b16 %v220
    %v977 = vunpack.c.h.b16 %v220
    %v978 = vunpack.c.l.b16 %v221
    %v979 = vunpack.c.h.b16 %v221
    %v980 = vunpack.c.l.b16 %v222
    %v981 = vunpack.c.h.b16 %v222
    %v982 = vunpack.c.l.b16 %v223
    %v983 = vunpack.c.h.b16 %v223
    %v984 = vunpack.c.l.b16 %v224
    %v985 = vunpack.c.h.b16 %v224
    %v986 = vunpack.c.l.b16 %v225
    %v987 = vunpack.c.h.b16 %v225
    %v988 = vunpack.c.l.b16 %v226
    %v989 = vunpack.c.h.b16 %v226
    %v990 = vunpack.c.l.b16 %v227
    %v991 = vunpack.c.h.b16 %v227
    %v992 = vunpack.c.l.b16 %v228
    %v993 = vunpack.c.h.b16 %v228
    %v994 = vunpack.c.l.b16 %v229
    %v995 = vunpack.c.h.b16 %v229
    %v996 = vunpack.c.l.b16 %v230
    %v997 = vunpack.c.h.b16 %v230
    %v998 = vunpack.c.l.b16 %v231
    %v999 = vunpack.c.h.b16 %v231
    %v1000 = vunpack.c.l.b16 %v232
    %v1001 = vunpack.c.h.b16 %v232
    %v1002 = vunpack.c.l.b16 %v233
    %v1003 = vunpack.c.h.b16 %v233
    %v1004 = vunpack.c.l.b16 %v234
    %v1005 = vunpack.c.h.b16 %v234
    %v1006 = vunpack.c.l.b16 %v235
    %v1007 = vunpack.c.h.b16 %v235
    %v1008 = vunpack.c.l.b16 %v236
    %v1009 = vunpack.c.h.b16 %v236
    %v1010 = vunpack.c.l.b16 %v237
    %v1011 = vunpack.c.h.b16 %v237
    %v1012 = vunpack.c.l.b16 %v238
    %v1013 = vunpack.c.h.b16 %v238
    %v1014 = vunpack.c.l.b16 %v239
    %v1015 = vunpack.c.h.b16 %v239
    %v1016 = vunpack.c.l.b16 %v240
    %v1017 = vunpack.c.h.b16 %v240
    %v1018 = vunpack.c.l.b16 %v241
    %v1019 = vunpack.c.h.b16 %v241
    %v1020 = vunpack.c.l.b16 %v242
    %v1021 = vunpack.c.h.b16 %v242
    %v1022 = vunpack.c.l.b16 %v243
    %v1023 = vunpack.c.h.b16 %v243
    %v1024 = vunpack.c.l.b16 %v244
    %v1025 = vunpack.c.h.b16 %v244
    %v1026 = vunpack.c.l.b16 %v245
    %v1027 = vunpack.c.h.b16 %v245
    %v1028 = vunpack.c.l.b16 %v246
    %v1029 = vunpack.c.h.b16 %v246
    %v1030 = vunpack.c.l.b16 %v247
    %v1031 = vunpack.c.h.b16 %v247
    %v1032 = vunpack.c.l.b16 %v248
    %v1033 = vunpack.c.h.b16 %v248
    %v1034 = vunpack.c.l.b16 %v249
    %v1035 = vunpack.c.h.b16 %v249
    %v1036 = vunpack.c.l.b16 %v250
    %v1037 = vunpack.c.h.b16 %v250
    %v1038 = vunpack.c.l.b16 %v251
    %v1039 = vunpack.c.h.b16 %v251
    %v1040 = vunpack.c.l.b16 %v252
    %v1041 = vunpack.c.h.b16 %v252
    %v1042 = vunpack.c.l.b16 %v253
    %v1043 = vunpack.c.h.b16 %v253
    %v1044 = vunpack.c.l.b16 %v254
    %v1045 = vunpack.c.h.b16 %v254
    %v1046 = vunpack.c.l.b16 %v255
    %v1047 = vunpack.c.h.b16 %v255
    %v1048 = vunpack.c.l.b16 %v256
    %v1049 = vunpack.c.h.b16 %v256
    %v1050 = vunpack.c.l.b16 %v257
    %v1051 = vunpack.c.h.b16 %v257
    %v1052 = vunpack.c.l.b16 %v258
    %v1053 = vunpack.c.h.b16 %v258
    %v1054 = vunpack.c.l.b16 %v259
    %v1055 = vunpack.c.h.b16 %v259
    %v1056 = vunpack.c.l.b16 %v260
    %v1057 = vunpack.c.h.b16 %v260
    %v1058 = vunpack.c.l.b16 %v261
    %v1059 = vunpack.c.h.b16 %v261
    %v1060 = vunpack.c.l.b16 %v262
    %v1061 = vunpack.c.h.b16 %v262
    %v1062 = vunpack.c.l.b16 %v263
    %v1063 = vunpack.c.h.b16 %v263
    %v1064 = vunpack.c.l.b16 %v264
    %v1065 = vunpack.c.h.b16 %v264
    %v1066 = vunpack.c.l.b16 %v265
    %v1067 = vunpack.c.h.b16 %v265
    %v1068 = vunpack.c.l.b16 %v266
    %v1069 = vunpack.c.h.b16 %v266
    %v1070 = vunpack.c.l.b16 %v267
    %v1071 = vunpack.c.h.b16 %v267
    %v1072 = vunpack.c.l.b16 %v268
    %v1073 = vunpack.c.h.b16 %v268
    %v1074 = vunpack.c.l.b16 %v269
    %v1075 = vunpack.c.h.b16 %v269
    %v1076 = vunpack.c.l.b16 %v270
    %v1077 = vunpack.c.h.b16 %v270
    %v1078 = vunpack.c.l.b16 %v271
    %v1079 = vunpack.c.h.b16 %v271
    %v1080 = vunpack.c.l.b16 %v272
    %v1081 = vunpack.c.h.b16 %v272
    %v1082 = vunpack.c.l.b16 %v273
    %v1083 = vunpack.c.h.b16 %v273
    %v1084 = vunpack.c.l.b16 %v274
    %v1085 = vunpack.c.h.b16 %v274
    %v1086 = vunpack.c.l.b16 %v275
    %v1087 = vunpack.c.h.b16 %v275
    %v1088 = vunpack.c.l.b16 %v276
    %v1089 = vunpack.c.h.b16 %v276
    %v1090 = vunpack.c.l.b16 %v277
    %v1091 = vunpack.c.h.b16 %v277
    %v1092 = vunpack.c.l.b16 %v278
    %v1093 = vunpack.c.h.b16 %v278
    %v1094 = vunpack.c.l.b16 %v279
    %v1095 = vunpack.c.h.b16 %v279
    %v1096 = vunpack.c.l.b16 %v280
    %v1097 = vunpack.c.h.b16 %v280
    %v1098 = vunpack.c.l.b16 %v281
    %v1099 = vunpack.c.h.b16 %v281
    %v1100 = vunpack.c.l.b16 %v282
    %v1101 = vunpack.c.h.b16 %v282
    %v1102 = vunpack.c.l.b16 %v283
    %v1103 = vunpack.c.h.b16 %v283
    %v1104 = vunpack.c.l.b16 %v284
    %v1105 = vunpack.c.h.b16 %v284
    %v1106 = vunpack.c.l.b16 %v285
    %v1107 = vunpack.c.h.b16 %v285
    %v1108 = vunpack.c.l.b16 %v286
    %v1109 = vunpack.c.h.b16 %v286
    %v1110 = vunpack.c.l.b16 %v287
    %v1111 = vunpack.c.h.b16 %v287
    %v1112 = vunpack.c.l.b16 %v288
    %v1113 = vunpack.c.h.b16 %v288
    %v1114 = vunpack.c.l.b16 %v289
    %v1115 = vunpack.c.h.b16 %v289
    %v1116 = vunpack.c.l.b16 %v290
    %v1117 = vunpack.c.h.b16 %v290
    %v1118 = vunpack.c.l.b16 %v291
    %v1119 = vunpack.c.h.b16 %v291
    %v1120 = vunpack.c.l.b16 %v292
    %v1121 = vunpack.c.h.b16 %v292
    %v1122 = vunpack.c.l.b16 %v293
    %v1123 = vunpack.c.h.b16 %v293
    %v1124 = vunpack.c.l.b16 %v294
    %v1125 = vunpack.c.h.b16 %v294
    %v1126 = vunpack.c.l.b16 %v295
    %v1127 = vunpack.c.h.b16 %v295
    %v1128 = vunpack.c.l.b16 %v296
    %v1129 = vunpack.c.h.b16 %v296
    %v1130 = vunpack.c.l.b16 %v297
    %v1131 = vunpack.c.h.b16 %v297
    %v1132 = vunpack.c.l.b16 %v298
    %v1133 = vunpack.c.h.b16 %v298
    %v1134 = vunpack.c.l.b16 %v299
    %v1135 = vunpack.c.h.b16 %v299
    %v1136 = vunpack.c.l.b16 %v300
    %v1137 = vunpack.c.h.b16 %v300
    %v1138 = vunpack.c.l.b16 %v301
    %v1139 = vunpack.c.h.b16 %v301
    %v1140 = vunpack.c.l.b16 %v302
    %v1141 = vunpack.c.h.b16 %v302
    %v1142 = vunpack.c.l.b16 %v303
    %v1143 = vunpack.c.h.b16 %v303
    %v1144 = vunpack.c.l.b16 %v304
    %v1145 = vunpack.c.h.b16 %v304
    %v1146 = vunpack.c.l.b16 %v305
    %v1147 = vunpack.c.h.b16 %v305
    %v1148 = vunpack.c.l.b16 %v306
    %v1149 = vunpack.c.h.b16 %v306
    %v1150 = vunpack.c.l.b16 %v307
    %v1151 = vunpack.c.h.b16 %v307
    %v1152 = vunpack.c.l.b16 %v308
    %v1153 = vunpack.c.h.b16 %v308
    %v1154 = vunpack.c.l.b16 %v309
    %v1155 = vunpack.c.h.b16 %v309
    %v1156 = vunpack.c.l.b16 %v310
    %v1157 = vunpack.c.h.b16 %v310
    %v1158 = vunpack.c.l.b16 %v311
    %v1159 = vunpack.c.h.b16 %v311
    %v1160 = vunpack.c.l.b16 %v312
    %v1161 = vunpack.c.h.b16 %v312
    %v1162 = vunpack.c.l.b16 %v313
    %v1163 = vunpack.c.h.b16 %v313
    %v1164 = vunpack.c.l.b16 %v314
    %v1165 = vunpack.c.h.b16 %v314
    %v1166 = vunpack.c.l.b16 %v315
    %v1167 = vunpack.c.h.b16 %v315
    %v1168 = vunpack.c.l.b16 %v316
    %v1169 = vunpack.c.h.b16 %v316
    %v1170 = vunpack.c.l.b16 %v317
    %v1171 = vunpack.c.h.b16 %v317
    %v1172 = vunpack.c.l.b16 %v318
    %v1173 = vunpack.c.h.b16 %v318
    %v1174 = vunpack.c.l.b16 %v319
    %v1175 = vunpack.c.h.b16 %v319
    %v1176 = vunpack.c.l.b16 %v320
    %v1177 = vunpack.c.h.b16 %v320
    %v1178 = vunpack.c.l.b16 %v321
    %v1179 = vunpack.c.h.b16 %v321
    %v1180 = vunpack.c.l.b16 %v322
    %v1181 = vunpack.c.h.b16 %v322
    %v1182 = vunpack.c.l.b16 %v323
    %v1183 = vunpack.c.h.b16 %v323
    %v1184 = vunpack.c.l.b16 %v324
    %v1185 = vunpack.c.h.b16 %v324
    %v1186 = vunpack.c.l.b16 %v325
    %v1187 = vunpack.c.h.b16 %v325
    %v1188 = vunpack.c.l.b16 %v326
    %v1189 = vunpack.c.h.b16 %v326
    %v1190 = vunpack.c.l.b16 %v327
    %v1191 = vunpack.c.h.b16 %v327
    %v1192 = vunpack.c.l.b16 %v328
    %v1193 = vunpack.c.h.b16 %v328
    %v1194 = vunpack.c.l.b16 %v329
    %v1195 = vunpack.c.h.b16 %v329
    %v1196 = vunpack.c.l.b16 %v330
    %v1197 = vunpack.c.h.b16 %v330
    %v1198 = vunpack.c.l.b16 %v331
    %v1199 = vunpack.c.h.b16 %v331
    %v1200 = vunpack.c.l.b16 %v332
    %v1201 = vunpack.c.h.b16 %v332
    %v1202 = vunpack.c.l.b16 %v333
    %v1203 = vunpack.c.h.b16 %v333
    %v1204 = vunpack.c.l.b16 %v334
    %v1205 = vunpack.c.h.b16 %v334
    %v1206 = vunpack.c.l.b16 %v335
    %v1207 = vunpack.c.h.b16 %v335
    %v1208 = vunpack.c.l.b16 %v336
    %v1209 = vunpack.c.h.b16 %v336
    %v1210 = vunpack.c.l.b16 %v337
    %v1211 = vunpack.c.h.b16 %v337
    %v1212 = vunpack.c.l.b16 %v338
    %v1213 = vunpack.c.h.b16 %v338
    %v1214 = vunpack.c.l.b16 %v339
    %v1215 = vunpack.c.h.b16 %v339
    %v1216 = vunpack.c.l.b16 %v340
    %v1217 = vunpack.c.h.b16 %v340
    %v1218 = vunpack.c.l.b16 %v341
    %v1219 = vunpack.c.h.b16 %v341
    %v1220 = vunpack.c.l.b16 %v342
    %v1221 = vunpack.c.h.b16 %v342
    %v1222 = vunpack.c.l.b16 %v343
    %v1223 = vunpack.c.h.b16 %v343
    %v1224 = vunpack.c.l.b16 %v344
    %v1225 = vunpack.c.h.b16 %v344
    %v1226 = vunpack.c.l.b16 %v345
    %v1227 = vunpack.c.h.b16 %v345
    %v1228 = vunpack.c.l.b16 %v346
    %v1229 = vunpack.c.h.b16 %v346
    %v1230 = vunpack.c.l.b16 %v347
    %v1231 = vunpack.c.h.b16 %v347
    %v1232 = vunpack.c.l.b16 %v348
    %v1233 = vunpack.c.h.b16 %v348
    %v1234 = vunpack.c.l.b16 %v349
    %v1235 = vunpack.c.h.b16 %v349
    %v1236 = vunpack.c.l.b16 %v350
    %v1237 = vunpack.c.h.b16 %v350
    %v1238 = vunpack.c.l.b16 %v351
    %v1239 = vunpack.c.h.b16 %v351
    %v1240 = vunpack.c.l.b16 %v352
    %v1241 = vunpack.c.h.b16 %v352
    %v1242 = vunpack.c.l.b16 %v353
    %v1243 = vunpack.c.h.b16 %v353
    %v1244 = vunpack.c.l.b16 %v354
    %v1245 = vunpack.c.h.b16 %v354
    %v1246 = vunpack.c.l.b16 %v355
    %v1247 = vunpack.c.h.b16 %v355
    %v1248 = vunpack.c.l.b16 %v356
    %v1249 = vunpack.c.h.b16 %v356
    %v1250 = vunpack.c.l.b16 %v357
    %v1251 = vunpack.c.h.b16 %v357
    %v1252 = vunpack.c.l.b16 %v358
    %v1253 = vunpack.c.h.b16 %v358
    %v1254 = vunpack.c.l.b16 %v359
    %v1255 = vunpack.c.h.b16 %v359
    %v1256 = vunpack.c.l.b16 %v360
    %v1257 = vunpack.c.h.b16 %v360
    %v1258 = vunpack.c.l.b16 %v361
    %v1259 = vunpack.c.h.b16 %v361
    %v1260 = vunpack.c.l.b16 %v362
    %v1261 = vunpack.c.h.b16 %v362
    %v1262 = vunpack.c.l.b16 %v363
    %v1263 = vunpack.c.h.b16 %v363
    %v1264 = vunpack.c.l.b16 %v364
    %v1265 = vunpack.c.h.b16 %v364
    %v1266 = vunpack.c.l.b16 %v365
    %v1267 = vunpack.c.h.b16 %v365
    %v1268 = vunpack.c.l.b16 %v366
    %v1269 = vunpack.c.h.b16 %v366
    %v1270 = vunpack.c.l.b16 %v367
    %v1271 = vunpack.c.h.b16 %v367
    %v1272 = vunpack.c.l.b16 %v368
    %v1273 = vunpack.c.h.b16 %v368
    %v1274 = vunpack.c.l.b16 %v369
    %v1275 = vunpack.c.h.b16 %v369
    %v1276 = vunpack.c.l.b16 %v370
    %v1277 = vunpack.c.h.b16 %v370
    %v1278 = vunpack.c.l.b16 %v371
    %v1279 = vunpack.c.h.b16 %v371
    %v1280 = vunpack.c.l.b16 %v372
    %v1281 = vunpack.c.h.b16 %v372
    %v1282 = vunpack.c.l.b16 %v373
    %v1283 = vunpack.c.h.b16 %v373
    %v1284 = vunpack.c.l.b16 %v374
    %v1285 = vunpack.c.h.b16 %v374
    %v1286 = vunpack.c.l.b16 %v375
    %v1287 = vunpack.c.h.b16 %v375
    %v1288 = vunpack.c.l.b16 %v376
    %v1289 = vunpack.c.h.b16 %v376
    %v1290 = vunpack.c.l.b16 %v377
    %v1291 = vunpack.c.h.b16 %v377
    %v1292 = vunpack.c.l.b16 %v378
    %v1293 = vunpack.c.h.b16 %v378
    %v1294 = vunpack.c.l.b16 %v379
    %v1295 = vunpack.c.h.b16 %v379
    %v1296 = vunpack.c.l.b16 %v380
    %v1297 = vunpack.c.h.b16 %v380
    %v1298 = vunpack.c.l.b16 %v381
    %v1299 = vunpack.c.h.b16 %v381
    %v1300 = vunpack.c.l.b16 %v382
    %v1301 = vunpack.c.h.b16 %v382
    %v1302 = vunpack.c.l.b16 %v383
    %v1303 = vunpack.c.h.b16 %v383
    %v1304 = vunpack.c.l.b16 %v384
    %v1305 = vunpack.c.h.b16 %v384
    %v1306 = vunpack.c.l.b16 %v385
    %v1307 = vunpack.c.h.b16 %v385
    %v1308 = vunpack.c.l.b16 %v386
    %v1309 = vunpack.c.h.b16 %v386
    %v1310 = vunpack.c.l.b16 %v387
    %v1311 = vunpack.c.h.b16 %v387
    %v1312 = vunpack.c.l.b16 %v388
    %v1313 = vunpack.c.h.b16 %v388
    %v1314 = vunpack.c.l.b16 %v389
    %v1315 = vunpack.c.h.b16 %v389
    %v1316 = vunpack.c.l.b16 %v390
    %v1317 = vunpack.c.h.b16 %v390
    %v1318 = vunpack.c.l.b16 %v391
    %v1319 = vunpack.c.h.b16 %v391
    %v1320 = vunpack.c.l.b16 %v392
    %v1321 = vunpack.c.h.b16 %v392
    %v1322 = vunpack.c.l.b16 %v393
    %v1323 = vunpack.c.h.b16 %v393
    %v1324 = vunpack.c.l.b16 %v394
    %v1325 = vunpack.c.h.b16 %v394
    %v1326 = vunpack.c.l.b16 %v395
    %v1327 = vunpack.c.h.b16 %v395
    %v1328 = vunpack.c.l.b16 %v396
    %v1329 = vunpack.c.h.b16 %v396
    %v1330 = vunpack.c.l.b16 %v397
    %v1331 = vunpack.c.h.b16 %v397
    %v1332 = vunpack.c.l.b16 %v398
    %v1333 = vunpack.c.h.b16 %v398
    %v1334 = vunpack.c.l.b16 %v399
    %v1335 = vunpack.c.h.b16 %v399
    %v1336 = vunpack.c.l.b16 %v400
    %v1337 = vunpack.c.h.b16 %v400
    %v1338 = vunpack.c.l.b16 %v401
    %v1339 = vunpack.c.h.b16 %v401
    %v1340 = vunpack.c.l.b16 %v402
    %v1341 = vunpack.c.h.b16 %v402
    %v1342 = vunpack.c.l.b16 %v403
    %v1343 = vunpack.c.h.b16 %v403
    %v1344 = vunpack.c.l.b16 %v404
    %v1345 = vunpack.c.h.b16 %v404
    %v1346 = vunpack.c.l.b16 %v405
    %v1347 = vunpack.c.h.b16 %v405
    %v1348 = vunpack.c.l.b16 %v406
    %v1349 = vunpack.c.h.b16 %v406
    %v1350 = vunpack.c.l.b16 %v407
    %v1351 = vunpack.c.h.b16 %v407
    %v1352 = vunpack.c.l.b16 %v408
    %v1353 = vunpack.c.h.b16 %v408
    %v1354 = vunpack.c.l.b16 %v409
    %v1355 = vunpack.c.h.b16 %v409
    %v1356 = vunpack.c.l.b16 %v410
    %v1357 = vunpack.c.h.b16 %v410
    %v1358 = vunpack.c.l.b16 %v411
    %v1359 = vunpack.c.h.b16 %v411
    %v1360 = vunpack.c.l.b16 %v412
    %v1361 = vunpack.c.h.b16 %v412
    %v1362 = vunpack.c.l.b16 %v413
    %v1363 = vunpack.c.h.b16 %v413
    %v1364 = vunpack.c.l.b16 %v414
    %v1365 = vunpack.c.h.b16 %v414
    %v1366 = vunpack.c.l.b16 %v415
    %v1367 = vunpack.c.h.b16 %v415
    %v1368 = vunpack.c.l.b16 %v416
    %v1369 = vunpack.c.h.b16 %v416
    %v1370 = vunpack.c.l.b16 %v417
    %v1371 = vunpack.c.h.b16 %v417
    %v1372 = vunpack.c.l.b16 %v418
    %v1373 = vunpack.c.h.b16 %v418
    %v1374 = vunpack.c.l.b16 %v419
    %v1375 = vunpack.c.h.b16 %v419
    %v1376 = vunpack.c.l.b16 %v420
    %v1377 = vunpack.c.h.b16 %v420
    %v1378 = vunpack.c.l.b16 %v421
    %v1379 = vunpack.c.h.b16 %v421
    %v1380 = vunpack.c.l.b16 %v422
    %v1381 = vunpack.c.h.b16 %v422
    %v1382 = vunpack.c.l.b16 %v423
    %v1383 = vunpack.c.h.b16 %v423
    %v1384 = vunpack.c.l.b16 %v424
    %v1385 = vunpack.c.h.b16 %v424
    %v1386 = vpack.c.b16 %v750, %v746
    %v1387 = vpack.c.b16 %v751, %v747
    %v1388 = vpack.c.b16 %v752, %v748
    %v1389 = vpack.c.b16 %v753, %v749
    %v1390 = vpack.c.b16 %v758, %v754
    %v1391 = vpack.c.b16 %v759, %v755
    %v1392 = vpack.c.b16 %v760, %v756
    %v1393 = vpack.c.b16 %v761, %v757
    %v1394 = vpack.c.b16 %v766, %v762
    %v1395 = vpack.c.b16 %v767, %v763
    %v1396 = vpack.c.b16 %v768, %v764
    %v1397 = vpack.c.b16 %v769, %v765
    %v1398 = vpack.c.b16 %v774, %v770
    %v1399 = vpack.c.b16 %v775, %v771
    %v1400 = vpack.c.b16 %v776, %v772
    %v1401 = vpack.c.b16 %v777, %v773
    %v1402 = vpack.c.b16 %v782, %v778
    %v1403 = vpack.c.b16 %v783, %v779
    %v1404 = vpack.c.b16 %v784, %v780
    %v1405 = vpack.c.b16 %v785, %v781
    %v1406 = vpack.c.b16 %v790, %v786
    %v1407 = vpack.c.b16 %v791, %v787
    %v1408 = vpack.c.b16 %v792, %v788
    %v1409 = vpack.c.b16 %v793, %v789
    %v1410 = vpack.c.b16 %v798, %v794
    %v1411 = vpack.c.b16 %v799, %v795
    %v1412 = vpack.c.b16 %v800, %v796
    %v1413 = vpack.c.b16 %v801, %v797
    %v1414 = vpack.c.b16 %v806, %v802
    %v1415 = vpack.c.b16 %v807, %v803
    %v1416 = vpack.c.b16 %v808, %v804
    %v1417 = vpack.c.b16 %v809, %v805
    %v1418 = vpack.c.b16 %v814, %v810
    %v1419 = vpack.c.b16 %v815, %v811
    %v1420 = vpack.c.b16 %v816, %v812
    %v1421 = vpack.c.b16 %v817, %v813
    %v1422 = vpack.c.b16 %v822, %v818
    %v1423 = vpack.c.b16 %v823, %v819
    %v1424 = vpack.c.b16 %v824, %v820
    %v1425 = vpack.c.b16 %v825, %v821
    %v1426 = vpack.c.b16 %v830, %v826
    %v1427 = vpack.c.b16 %v831, %v827
    %v1428 = vpack.c.b16 %v832, %v828
    %v1429 = vpack.c.b16 %v833, %v829
    %v1430 = vpack.c.b16 %v838, %v834
    %v1431 = vpack.c.b16 %v839, %v835
    %v1432 = vpack.c.b16 %v840, %v836
    %v1433 = vpack.c.b16 %v841, %v837
    %v1434 = vpack.c.b16 %v846, %v842
    %v1435 = vpack.c.b16 %v847, %v843
    %v1436 = vpack.c.b16 %v848, %v844
    %v1437 = vpack.c.b16 %v849, %v845
    %v1438 = vpack.c.b16 %v854, %v850
    %v1439 = vpack.c.b16 %v855, %v851
    %v1440 = vpack.c.b16 %v856, %v852
    %v1441 = vpack.c.b16 %v857, %v853
    %v1442 = vpack.c.b16 %v862, %v858
    %v1443 = vpack.c.b16 %v863, %v859
    %v1444 = vpack.c.b16 %v864, %v860
    %v1445 = vpack.c.b16 %v865, %v861
    %v1446 = vpack.c.b16 %v870, %v866
    %v1447 = vpack.c.b16 %v871, %v867
    %v1448 = vpack.c.b16 %v872, %v868
    %v1449 = vpack.c.b16 %v873, %v869
    %v1450 = vpack.c.b16 %v878, %v874
    %v1451 = vpack.c.b16 %v879, %v875
    %v1452 = vpack.c.b16 %v880, %v876
    %v1453 = vpack.c.b16 %v881, %v877
    %v1454 = vpack.c.b16 %v886, %v882
    %v1455 = vpack.c.b16 %v887, %v883
    %v1456 = vpack.c.b16 %v888, %v884
    %v1457 = vpack.c.b16 %v889, %v885
    %v1458 = vpack.c.b16 %v894, %v890
    %v1459 = vpack.c.b16 %v895, %v891
    %v1460 = vpack.c.b16 %v896, %v892
    %v1461 = vpack.c.b16 %v897, %v893
    %v1462 = vpack.c.b16 %v902, %v898
    %v1463 = vpack.c.b16 %v903, %v899
    %v1464 = vpack.c.b16 %v904, %v900
    %v1465 = vpack.c.b16 %v905, %v901
    %v1466 = vpack.c.b16 %v910, %v906
    %v1467 = vpack.c.b16 %v911, %v907
    %v1468 = vpack.c.b16 %v912, %v908
    %v1469 = vpack.c.b16 %v913, %v909
    %v1470 = vpack.c.b16 %v918, %v914
    %v1471 = vpack.c.b16 %v919, %v915
    %v1472 = vpack.c.b16 %v920, %v916
    %v1473 = vpack.c.b16 %v921, %v917
    %v1474 = vpack.c.b16 %v926, %v922
    %v1475 = vpack.c.b16 %v927, %v923
    %v1476 = vpack.c.b16 %v928, %v924
    %v1477 = vpack.c.b16 %v929, %v925
    %v1478 = vpack.c.b16 %v934, %v930
    %v1479 = vpack.c.b16 %v935, %v931
    %v1480 = vpack.c.b16 %v936, %v932
    %v1481 = vpack.c.b16 %v937, %v933
    %v1482 = vpack.c.b16 %v942, %v938
    %v1483 = vpack.c.b16 %v943, %v939
    %v1484 = vpack.c.b16 %v944, %v940
    %v1485 = vpack.c.b16 %v945, %v941
    %v1486 = vpack.c.b16 %v950, %v946
    %v1487 = vpack.c.b16 %v951, %v947
    %v1488 = vpack.c.b16 %v952, %v948
    %v1489 = vpack.c.b16 %v953, %v949
    %v1490 = vpack.c.b16 %v958, %v954
    %v1491 = vpack.c.b16 %v959, %v955
    %v1492 = vpack.c.b16 %v960, %v956
    %v1493 = vpack.c.b16 %v961, %v957
    %v1494 = vpack.c.b16 %v966, %v962
    %v1495 = vpack.c.b16 %v967, %v963
    %v1496 = vpack.c.b16 %v968, %v964
    %v1497 = vpack.c.b16 %v969, %v965
    %v1498 = vpack.c.b16 %v974, %v970
    %v1499 = vpack.c.b16 %v975, %v971
    %v1500 = vpack.c.b16 %v976, %v972
    %v1501 = vpack.c.b16 %v977, %v973
    %v1502 = vpack.c.b16 %v982, %v978
    %v1503 = vpack.c.b16 %v983, %v979
    %v1504 = vpack.c.b16 %v984, %v980
    %v1505 = vpack.c.b16 %v985, %v981
    %v1506 = vpack.c.b16 %v990, %v986
    %v1507 = vpack.c.b16 %v991, %v987
    %v1508 = vpack.c.b16 %v992, %v988
    %v1509 = vpack.c.b16 %v993, %v989
    %v1510 = vpack.c.b16 %v998, %v994
    %v1511 = vpack.c.b16 %v999, %v995
    %v1512 = vpack.c.b16 %v1000, %v996
    %v1513 = vpack.c.b16 %v1001, %v997
    %v1514 = vpack.c.b16 %v1006, %v1002
    %v1515 = vpack.c.b16 %v1007, %v1003
    %v1516 = vpack.c.b16 %v1008, %v1004
    %v1517 = vpack.c.b16 %v1009, %v1005
    %v1518 = vpack.c.b16 %v1014, %v1010
    %v1519 = vpack.c.b16 %v1015, %v1011
    %v1520 = vpack.c.b16 %v1016, %v1012
    %v1521 = vpack.c.b16 %v1017, %v1013
    %v1522 = vpack.c.b16 %v1022, %v1018
    %v1523 = vpack.c.b16 %v1023, %v1019
    %v1524 = vpack.c.b16 %v1024, %v1020
    %v1525 = vpack.c.b16 %v1025, %v1021
    %v1526 = vpack.c.b16 %v1030, %v1026
    %v1527 = vpack.c.b16 %v1031, %v1027
    %v1528 = vpack.c.b16 %v1032, %v1028
    %v1529 = vpack.c.b16 %v1033, %v1029
    %v1530 = vpack.c.b16 %v1038, %v1034
    %v1531 = vpack.c.b16 %v1039, %v1035
    %v1532 = vpack.c.b16 %v1040, %v1036
    %v1533 = vpack.c.b16 %v1041, %v1037
    %v1534 = vpack.c.b16 %v1046, %v1042
    %v1535 = vpack.c.b16 %v1047, %v1043
    %v1536 = vpack.c.b16 %v1048, %v1044
    %v1537 = vpack.c.b16 %v1049, %v1045
    %v1538 = vpack.c.b16 %v1054, %v1050
    %v1539 = vpack.c.b16 %v1055, %v1051
    %v1540 = vpack.c.b16 %v1056, %v1052
    %v1541 = vpack.c.b16 %v1057, %v1053
    %v1542 = vpack.c.b16 %v1062, %v1058
    %v1543 = vpack.c.b16 %v1063, %v1059
    %v1544 = vpack.c.b16 %v1064, %v1060
    %v1545 = vpack.c.b16 %v1065, %v1061
    %v1546 = vpack.c.b16 %v1070, %v1066
    %v1547 = vpack.c.b16 %v1071, %v1067
    %v1548 = vpack.c.b16 %v1072, %v1068
    %v1549 = vpack.c.b16 %v1073, %v1069
    %v1550 = vpack.c.b16 %v1078, %v1074
    %v1551 = vpack.c.b16 %v1079, %v1075
    %v1552 = vpack.c.b16 %v1080, %v1076
    %v1553 = vpack.c.b16 %v1081, %v1077
    %v1554 = vpack.c.b16 %v1086, %v1082
    %v1555 = vpack.c.b16 %v1087, %v1083
    %v1556 = vpack.c.b16 %v1088, %v1084
    %v1557 = vpack.c.b16 %v1089, %v1085
    %v1558 = vpack.c.b16 %v1094, %v1090
    %v1559 = vpack.c.b16 %v1095, %v1091
    %v1560 = vpack.c.b16 %v1096, %v1092
    %v1561 = vpack.c.b16 %v1097, %v1093
    %v1562 = vpack.c.b16 %v1102, %v1098
    %v1563 = vpack.c.b16 %v1103, %v1099
    %v1564 = vpack.c.b16 %v1104, %v1100
    %v1565 = vpack.c.b16 %v1105, %v1101
    %v1566 = vpack.c.b16 %v1110, %v1106
    %v1567 = vpack.c.b16 %v1111, %v1107
    %v1568 = vpack.c.b16 %v1112, %v1108
    %v1569 = vpack.c.b16 %v1113, %v1109
    %v1570 = vpack.c.b16 %v1118, %v1114
    %v1571 = vpack.c.b16 %v1119, %v1115
    %v1572 = vpack.c.b16 %v1120, %v1116
    %v1573 = vpack.c.b16 %v1121, %v1117
    %v1574 = vpack.c.b16 %v1126, %v1122
    %v1575 = vpack.c.b16 %v1127, %v1123
    %v1576 = vpack.c.b16 %v1128, %v1124
    %v1577 = vpack.c.b16 %v1129, %v1125
    %v1578 = vpack.c.b16 %v1134, %v1130
    %v1579 = vpack.c.b16 %v1135, %v1131
    %v1580 = vpack.c.b16 %v1136, %v1132
    %v1581 = vpack.c.b16 %v1137, %v1133
    %v1582 = vpack.c.b16 %v1142, %v1138
    %v1583 = vpack.c.b16 %v1143, %v1139
    %v1584 = vpack.c.b16 %v1144, %v1140
    %v1585 = vpack.c.b16 %v1145, %v1141
    %v1586 = vpack.c.b16 %v1150, %v1146
    %v1587 = vpack.c.b16 %v1151, %v1147
    %v1588 = vpack.c.b16 %v1152, %v1148
    %v1589 = vpack.c.b16 %v1153, %v1149
    %v1590 = vpack.c.b16 %v1158, %v1154
    %v1591 = vpack.c.b16 %v1159, %v1155
    %v1592 = vpack.c.b16 %v1160, %v1156
    %v1593 = vpack.c.b16 %v1161, %v1157
    %v1594 = vpack.c.b16 %v1166, %v1162
    %v1595 = vpack.c.b16 %v1167, %v1163
    %v1596 = vpack.c.b16 %v1168, %v1164
    %v1597 = vpack.c.b16 %v1169, %v1165
    %v1598 = vpack.c.b16 %v1174, %v1170
    %v1599 = vpack.c.b16 %v1175, %v1171
    %v1600 = vpack.c.b16 %v1176, %v1172
    %v1601 = vpack.c.b16 %v1177, %v1173
    %v1602 = vpack.c.b16 %v1182, %v1178
    %v1603 = vpack.c.b16 %v1183, %v1179
    %v1604 = vpack.c.b16 %v1184, %v1180
    %v1605 = vpack.c.b16 %v1185, %v1181
    %v1606 = vpack.c.b16 %v1190, %v1186
    %v1607 = vpack.c.b16 %v1191, %v1187
    %v1608 = vpack.c.b16 %v1192, %v1188
    %v1609 = vpack.c.b16 %v1193, %v1189
    %v1610 = vpack.c.b16 %v1198, %v1194
    %v1611 = vpack.c.b16 %v1199, %v1195
    %v1612 = vpack.c.b16 %v1200, %v1196
    %v1613 = vpack.c.b16 %v1201, %v1197
    %v1614 = vpack.c.b16 %v1206, %v1202
    %v1615 = vpack.c.b16 %v1207, %v1203
    %v1616 = vpack.c.b16 %v1208, %v1204
    %v1617 = vpack.c.b16 %v1209, %v1205
    %v1618 = vpack.c.b16 %v1214, %v1210
    %v1619 = vpack.c.b16 %v1215, %v1211
    %v1620 = vpack.c.b16 %v1216, %v1212
    %v1621 = vpack.c.b16 %v1217, %v1213
    %v1622 = vpack.c.b16 %v1222, %v1218
    %v1623 = vpack.c.b16 %v1223, %v1219
    %v1624 = vpack.c.b16 %v1224, %v1220
    %v1625 = vpack.c.b16 %v1225, %v1221
    %v1626 = vpack.c.b16 %v1230, %v1226
    %v1627 = vpack.c.b16 %v1231, %v1227
    %v1628 = vpack.c.b16 %v1232, %v1228
    %v1629 = vpack.c.b16 %v1233, %v1229
    %v1630 = vpack.c.b16 %v1238, %v1234
    %v1631 = vpack.c.b16 %v1239, %v1235
    %v1632 = vpack.c.b16 %v1240, %v1236
    %v1633 = vpack.c.b16 %v1241, %v1237
    %v1634 = vpack.c.b16 %v1246, %v1242
    %v1635 = vpack.c.b16 %v1247, %v1243
    %v1636 = vpack.c.b16 %v1248, %v1244
    %v1637 = vpack.c.b16 %v1249, %v1245
    %v1638 = vpack.c.b16 %v1254, %v1250
    %v1639 = vpack.c.b16 %v1255, %v1251
    %v1640 = vpack.c.b16 %v1256, %v1252
    %v1641 = vpack.c.b16 %v1257, %v1253
    %v1642 = vpack.c.b16 %v1262, %v1258
    %v1643 = vpack.c.b16 %v1263, %v1259
    %v1644 = vpack.c.b16 %v1264, %v1260
    %v1645 = vpack.c.b16 %v1265, %v1261
    %v1646 = vpack.c.b16 %v1270, %v1266
    %v1647 = vpack.c.b16 %v1271, %v1267
    %v1648 = vpack.c.b16 %v1272, %v1268
    %v1649 = vpack.c.b16 %v1273, %v1269
    %v1650 = vpack.c.b16 %v1278, %v1274
    %v1651 = vpack.c.b16 %v1279, %v1275
    %v1652 = vpack.c.b16 %v1280, %v1276
    %v1653 = vpack.c.b16 %v1281, %v1277
    %v1654 = vpack.c.b16 %v1286, %v1282
    %v1655 = vpack.c.b16 %v1287, %v1283
    %v1656 = vpack.c.b16 %v1288, %v1284
    %v1657 = vpack.c.b16 %v1289, %v1285
    %v1658 = vpack.c.b16 %v1294, %v1290
    %v1659 = vpack.c.b16 %v1295, %v1291
    %v1660 = vpack.c.b16 %v1296, %v1292
    %v1661 = vpack.c.b16 %v1297, %v1293
    %v1662 = vpack.c.b16 %v1302, %v1298
    %v1663 = vpack.c.b16 %v1303, %v1299
    %v1664 = vpack.c.b16 %v1304, %v1300
    %v1665 = vpack.c.b16 %v1305, %v1301
    %v1666 = vpack.c.b16 %v1310, %v1306
    %v1667 = vpack.c.b16 %v1311, %v1307
    %v1668 = vpack.c.b16 %v1312, %v1308
    %v1669 = vpack.c.b16 %v1313, %v1309
    %v1670 = vpack.c.b16 %v1318, %v1314
    %v1671 = vpack.c.b16 %v1319, %v1315
    %v1672 = vpack.c.b16 %v1320, %v1316
    %v1673 = vpack.c.b16 %v1321, %v1317
    %v1674 = vpack.c.b16 %v1326, %v1322
    %v1675 = vpack.c.b16 %v1327, %v1323
    %v1676 = vpack.c.b16 %v1328, %v1324
    %v1677 = vpack.c.b16 %v1329, %v1325
    %v1678 = vpack.c.b16 %v1334, %v1330
    %v1679 = vpack.c.b16 %v1335, %v1331
    %v1680 = vpack.c.b16 %v1336, %v1332
    %v1681 = vpack.c.b16 %v1337, %v1333
    %v1682 = vpack.c.b16 %v1342, %v1338
    %v1683 = vpack.c.b16 %v1343, %v1339
    %v1684 = vpack.c.b16 %v1344, %v1340
    %v1685 = vpack.c.b16 %v1345, %v1341
    %v1686 = vpack.c.b16 %v1350, %v1346
    %v1687 = vpack.c.b16 %v1351, %v1347
    %v1688 = vpack.c.b16 %v1352, %v1348
    %v1689 = vpack.c.b16 %v1353, %v1349
    %v1690 = vpack.c.b16 %v1358, %v1354
    %v1691 = vpack.c.b16 %v1359, %v1355
    %v1692 = vpack.c.b16 %v1360, %v1356
    %v1693 = vpack.c.b16 %v1361, %v1357
    %v1694 = vpack.c.b16 %v1366, %v1362
    %v1695 = vpack.c.b16 %v1367, %v1363
    %v1696 = vpack.c.b16 %v1368, %v1364
    %v1697 = vpack.c.b16 %v1369, %v1365
    %v1698 = vpack.c.b16 %v1374, %v1370
    %v1699 = vpack.c.b16 %v1375, %v1371
    %v1700 = vpack.c.b16 %v1376, %v1372
    %v1701 = vpack.c.b16 %v1377, %v1373
    %v1702 = vpack.c.b16 %v1382, %v1378
    %v1703 = vpack.c.b16 %v1383, %v1379
    %v1704 = vpack.c.b16 %v1384, %v1380
    %v1705 = vpack.c.b16 %v1385, %v1381
    %v2027 = vlaneseq
    %v2028 = vshrl.u32 %v2027, 7
    %v2029 = vsub.s32 0, %v2028
    %v2030 = vrot.slane %v425, %v2029
    %v2031 = vlaneseq
    %v2032 = vshrl.u32 %v2031, 7
    %v2033 = vsub.s32 1, %v2032
    %v2034 = vrot.slane %v425, %v2033
    %v2035 = vlaneseq
    %v2036 = vshrl.u32 %v2035, 7
    %v2037 = vsub.s32 2, %v2036
    %v2038 = vrot.slane %v425, %v2037
    %v2039 = vlaneseq
    %v2040 = vshrl.u32 %v2039, 7
    %v2041 = vsub.s32 3, %v2040
    %v2042 = vrot.slane %v425, %v2041
    %2047 = vmatprep.subr.bf16.mxu0 %v1415
    %2048 = vmatpush1.bf16.msra.mxu0 %v1414
    %2049 = vmatprep.subr.bf16.mxu0 %v1411
    %2050 = vmatpush1.bf16.msra.mxu0 %v1410
    %2051 = vmatprep.subr.bf16.mxu0 %v1407
    %2052 = vmatpush1.bf16.msra.mxu0 %v1406
    %2053 = vmatprep.subr.bf16.mxu0 %v1403
    %2054 = vmatpush1.bf16.msra.mxu0 %v1402
    %2055 = vmatprep.subr.bf16.mxu0 %v1399
    %2056 = vmatpush1.bf16.msra.mxu0 %v1398
    %2057 = vmatprep.subr.bf16.mxu0 %v1395
    %2058 = vmatpush1.bf16.msra.mxu0 %v1394
    %2059 = vmatprep.subr.bf16.mxu0 %v1391
    %2060 = vmatpush1.bf16.msra.mxu0 %v1390
    %2061 = vmatprep.subr.bf16.mxu0 %v1387
    %2062 = vmatpush1.bf16.msra.mxu0 %v1386
    %2063 = vmatprep.subr.bf16.mxu0 %v1447
    %2064 = vmatpush2.bf16.msra.mxu0 %v1446
    %2065 = vmatprep.subr.bf16.mxu0 %v1443
    %2066 = vmatpush2.bf16.msra.mxu0 %v1442
    %2067 = vmatprep.subr.bf16.mxu0 %v1439
    %2068 = vmatpush2.bf16.msra.mxu0 %v1438
    %2069 = vmatprep.subr.bf16.mxu0 %v1435
    %2070 = vmatpush2.bf16.msra.mxu0 %v1434
    %2071 = vmatprep.subr.bf16.mxu0 %v1431
    %2072 = vmatpush2.bf16.msra.mxu0 %v1430
    %2073 = vmatprep.subr.bf16.mxu0 %v1427
    %2074 = vmatpush2.bf16.msra.mxu0 %v1426
    %2075 = vmatprep.subr.bf16.mxu0 %v1423
    %2076 = vmatpush2.bf16.msra.mxu0 %v1422
    %2077 = vmatprep.subr.bf16.mxu0 %v1419
    %2078 = vmatpush2.bf16.msra.mxu0 %v1418
    %2079 = vmatprep.mubr.bf16.mxu0 %v96
    %2080 = vmatmul.mubr.bf16.gmra.mxu0 %v95
    %v2081 = vpop.f32.mrf.mxu0
    %v2082 = vadd.f32 %v2030, %v2081
    %v2083 = vpop.f32.mrf.mxu0
    %v2084 = vadd.f32 %v2034, %v2083
    %v2085 = vpop.f32.mrf.mxu0
    %v2086 = vpop.f32.mrf.mxu0
    %2087 = vdwg.mxu0
    %2088 = vmatprep.subr.bf16.mxu0 %v1479
    %2089 = vmatpush1.bf16.msra.mxu0 %v1478
    %2090 = vmatprep.subr.bf16.mxu0 %v1475
    %2091 = vmatpush1.bf16.msra.mxu0 %v1474
    %2092 = vmatprep.subr.bf16.mxu0 %v1471
    %2093 = vmatpush1.bf16.msra.mxu0 %v1470
    %2094 = vmatprep.subr.bf16.mxu0 %v1467
    %2095 = vmatpush1.bf16.msra.mxu0 %v1466
    %2096 = vmatprep.subr.bf16.mxu0 %v1463
    %2097 = vmatpush1.bf16.msra.mxu0 %v1462
    %2098 = vmatprep.subr.bf16.mxu0 %v1459
    %2099 = vmatpush1.bf16.msra.mxu0 %v1458
    %2100 = vmatprep.subr.bf16.mxu0 %v1455
    %2101 = vmatpush1.bf16.msra.mxu0 %v1454
    %2102 = vmatprep.subr.bf16.mxu0 %v1451
    %2103 = vmatpush1.bf16.msra.mxu0 %v1450
    %2104 = vmatprep.subr.bf16.mxu0 %v1511
    %2105 = vmatpush2.bf16.msra.mxu0 %v1510
    %2106 = vmatprep.subr.bf16.mxu0 %v1507
    %2107 = vmatpush2.bf16.msra.mxu0 %v1506
    %2108 = vmatprep.subr.bf16.mxu0 %v1503
    %2109 = vmatpush2.bf16.msra.mxu0 %v1502
    %2110 = vmatprep.subr.bf16.mxu0 %v1499
    %2111 = vmatpush2.bf16.msra.mxu0 %v1498
    %2112 = vmatprep.subr.bf16.mxu0 %v1495
    %2113 = vmatpush2.bf16.msra.mxu0 %v1494
    %2114 = vmatprep.subr.bf16.mxu0 %v1491
    %2115 = vmatpush2.bf16.msra.mxu0 %v1490
    %2116 = vmatprep.subr.bf16.mxu0 %v1487
    %2117 = vmatpush2.bf16.msra.mxu0 %v1486
    %2118 = vmatprep.subr.bf16.mxu0 %v1483
    %2119 = vmatpush2.bf16.msra.mxu0 %v1482
    %2120 = vmatprep.mubr.bf16.mxu0 %v98
    %2121 = vmatmul.mubr.bf16.gmra.mxu0 %v97
    %v2122 = vpop.f32.mrf.mxu0
    %v2123 = vadd.f32 %v2082, %v2122
    %v2124 = vpop.f32.mrf.mxu0
    %v2125 = vadd.f32 %v2084, %v2124
    %v2126 = vpop.f32.mrf.mxu0
    %v2127 = vpop.f32.mrf.mxu0
    %2128 = vdwg.mxu0
    %2129 = vmatprep.subr.bf16.mxu0 %v1543
    %2130 = vmatpush1.bf16.msra.mxu0 %v1542
    %2131 = vmatprep.subr.bf16.mxu0 %v1539
    %2132 = vmatpush1.bf16.msra.mxu0 %v1538
    %2133 = vmatprep.subr.bf16.mxu0 %v1535
    %2134 = vmatpush1.bf16.msra.mxu0 %v1534
    %2135 = vmatprep.subr.bf16.mxu0 %v1531
    %2136 = vmatpush1.bf16.msra.mxu0 %v1530
    %2137 = vmatprep.subr.bf16.mxu0 %v1527
    %2138 = vmatpush1.bf16.msra.mxu0 %v1526
    %2139 = vmatprep.subr.bf16.mxu0 %v1523
    %2140 = vmatpush1.bf16.msra.mxu0 %v1522
    %2141 = vmatprep.subr.bf16.mxu0 %v1519
    %2142 = vmatpush1.bf16.msra.mxu0 %v1518
    %2143 = vmatprep.subr.bf16.mxu0 %v1515
    %2144 = vmatpush1.bf16.msra.mxu0 %v1514
    %2145 = vmatprep.subr.bf16.mxu0 %v1575
    %2146 = vmatpush2.bf16.msra.mxu0 %v1574
    %2147 = vmatprep.subr.bf16.mxu0 %v1571
    %2148 = vmatpush2.bf16.msra.mxu0 %v1570
    %2149 = vmatprep.subr.bf16.mxu0 %v1567
    %2150 = vmatpush2.bf16.msra.mxu0 %v1566
    %2151 = vmatprep.subr.bf16.mxu0 %v1563
    %2152 = vmatpush2.bf16.msra.mxu0 %v1562
    %2153 = vmatprep.subr.bf16.mxu0 %v1559
    %2154 = vmatpush2.bf16.msra.mxu0 %v1558
    %2155 = vmatprep.subr.bf16.mxu0 %v1555
    %2156 = vmatpush2.bf16.msra.mxu0 %v1554
    %2157 = vmatprep.subr.bf16.mxu0 %v1551
    %2158 = vmatpush2.bf16.msra.mxu0 %v1550
    %2159 = vmatprep.subr.bf16.mxu0 %v1547
    %2160 = vmatpush2.bf16.msra.mxu0 %v1546
    %2161 = vmatprep.mubr.bf16.mxu0 %v100
    %2162 = vmatmul.mubr.bf16.gmra.mxu0 %v99
    %v2163 = vpop.f32.mrf.mxu0
    %v2164 = vadd.f32 %v2123, %v2163
    %v2165 = vpop.f32.mrf.mxu0
    %v2166 = vadd.f32 %v2125, %v2165
    %v2167 = vpop.f32.mrf.mxu0
    %v2168 = vpop.f32.mrf.mxu0
    %2169 = vdwg.mxu0
    %2170 = vmatprep.subr.bf16.mxu0 %v1607
    %2171 = vmatpush1.bf16.msra.mxu0 %v1606
    %2172 = vmatprep.subr.bf16.mxu0 %v1603
    %2173 = vmatpush1.bf16.msra.mxu0 %v1602
    %2174 = vmatprep.subr.bf16.mxu0 %v1599
    %2175 = vmatpush1.bf16.msra.mxu0 %v1598
    %2176 = vmatprep.subr.bf16.mxu0 %v1595
    %2177 = vmatpush1.bf16.msra.mxu0 %v1594
    %2178 = vmatprep.subr.bf16.mxu0 %v1591
    %2179 = vmatpush1.bf16.msra.mxu0 %v1590
    %2180 = vmatprep.subr.bf16.mxu0 %v1587
    %2181 = vmatpush1.bf16.msra.mxu0 %v1586
    %2182 = vmatprep.subr.bf16.mxu0 %v1583
    %2183 = vmatpush1.bf16.msra.mxu0 %v1582
    %2184 = vmatprep.subr.bf16.mxu0 %v1579
    %2185 = vmatpush1.bf16.msra.mxu0 %v1578
    %2186 = vmatprep.subr.bf16.mxu0 %v1639
    %2187 = vmatpush2.bf16.msra.mxu0 %v1638
    %2188 = vmatprep.subr.bf16.mxu0 %v1635
    %2189 = vmatpush2.bf16.msra.mxu0 %v1634
    %2190 = vmatprep.subr.bf16.mxu0 %v1631
    %2191 = vmatpush2.bf16.msra.mxu0 %v1630
    %2192 = vmatprep.subr.bf16.mxu0 %v1627
    %2193 = vmatpush2.bf16.msra.mxu0 %v1626
    %2194 = vmatprep.subr.bf16.mxu0 %v1623
    %2195 = vmatpush2.bf16.msra.mxu0 %v1622
    %2196 = vmatprep.subr.bf16.mxu0 %v1619
    %2197 = vmatpush2.bf16.msra.mxu0 %v1618
    %2198 = vmatprep.subr.bf16.mxu0 %v1615
    %2199 = vmatpush2.bf16.msra.mxu0 %v1614
    %2200 = vmatprep.subr.bf16.mxu0 %v1611
    %2201 = vmatpush2.bf16.msra.mxu0 %v1610
    %2202 = vmatprep.mubr.bf16.mxu0 %v102
    %2203 = vmatmul.mubr.bf16.gmra.mxu0 %v101
    %v2204 = vpop.f32.mrf.mxu0
    %v2205 = vadd.f32 %v2164, %v2204
    %v2206 = vpop.f32.mrf.mxu0
    %v2207 = vadd.f32 %v2166, %v2206
    %v2208 = vpop.f32.mrf.mxu0
    %v2209 = vpop.f32.mrf.mxu0
    %2210 = vdwg.mxu0
    %2211 = vmatprep.subr.bf16.mxu0 %v1671
    %2212 = vmatpush1.bf16.msra.mxu0 %v1670
    %2213 = vmatprep.subr.bf16.mxu0 %v1667
    %2214 = vmatpush1.bf16.msra.mxu0 %v1666
    %2215 = vmatprep.subr.bf16.mxu0 %v1663
    %2216 = vmatpush1.bf16.msra.mxu0 %v1662
    %2217 = vmatprep.subr.bf16.mxu0 %v1659
    %2218 = vmatpush1.bf16.msra.mxu0 %v1658
    %2219 = vmatprep.subr.bf16.mxu0 %v1655
    %2220 = vmatpush1.bf16.msra.mxu0 %v1654
    %2221 = vmatprep.subr.bf16.mxu0 %v1651
    %2222 = vmatpush1.bf16.msra.mxu0 %v1650
    %2223 = vmatprep.subr.bf16.mxu0 %v1647
    %2224 = vmatpush1.bf16.msra.mxu0 %v1646
    %2225 = vmatprep.subr.bf16.mxu0 %v1643
    %2226 = vmatpush1.bf16.msra.mxu0 %v1642
    %2227 = vmatprep.subr.bf16.mxu0 %v1703
    %2228 = vmatpush2.bf16.msra.mxu0 %v1702
    %2229 = vmatprep.subr.bf16.mxu0 %v1699
    %2230 = vmatpush2.bf16.msra.mxu0 %v1698
    %2231 = vmatprep.subr.bf16.mxu0 %v1695
    %2232 = vmatpush2.bf16.msra.mxu0 %v1694
    %2233 = vmatprep.subr.bf16.mxu0 %v1691
    %2234 = vmatpush2.bf16.msra.mxu0 %v1690
    %2235 = vmatprep.subr.bf16.mxu0 %v1687
    %2236 = vmatpush2.bf16.msra.mxu0 %v1686
    %2237 = vmatprep.subr.bf16.mxu0 %v1683
    %2238 = vmatpush2.bf16.msra.mxu0 %v1682
    %2239 = vmatprep.subr.bf16.mxu0 %v1679
    %2240 = vmatpush2.bf16.msra.mxu0 %v1678
    %2241 = vmatprep.subr.bf16.mxu0 %v1675
    %2242 = vmatpush2.bf16.msra.mxu0 %v1674
    %2243 = vmatprep.mubr.bf16.mxu0 %v104
    %2244 = vmatmul.mubr.bf16.gmra.mxu0 %v103
    %v2245 = vpop.f32.mrf.mxu0
    %v2246 = vadd.f32 %v2205, %v2245
    %v2247 = vpop.f32.mrf.mxu0
    %v2248 = vadd.f32 %v2207, %v2247
    %v2249 = vpop.f32.mrf.mxu0
    %v2250 = vpop.f32.mrf.mxu0
    %2251 = vdwg.mxu0
    %2252 = vmatprep.subr.bf16.mxu0 %v1417
    %2253 = vmatpush1.bf16.msra.mxu0 %v1416
    %2254 = vmatprep.subr.bf16.mxu0 %v1413
    %2255 = vmatpush1.bf16.msra.mxu0 %v1412
    %2256 = vmatprep.subr.bf16.mxu0 %v1409
    %2257 = vmatpush1.bf16.msra.mxu0 %v1408
    %2258 = vmatprep.subr.bf16.mxu0 %v1405
    %2259 = vmatpush1.bf16.msra.mxu0 %v1404
    %2260 = vmatprep.subr.bf16.mxu0 %v1401
    %2261 = vmatpush1.bf16.msra.mxu0 %v1400
    %2262 = vmatprep.subr.bf16.mxu0 %v1397
    %2263 = vmatpush1.bf16.msra.mxu0 %v1396
    %2264 = vmatprep.subr.bf16.mxu0 %v1393
    %2265 = vmatpush1.bf16.msra.mxu0 %v1392
    %2266 = vmatprep.subr.bf16.mxu0 %v1389
    %2267 = vmatpush1.bf16.msra.mxu0 %v1388
    %2268 = vmatprep.subr.bf16.mxu0 %v1449
    %2269 = vmatpush2.bf16.msra.mxu0 %v1448
    %2270 = vmatprep.subr.bf16.mxu0 %v1445
    %2271 = vmatpush2.bf16.msra.mxu0 %v1444
    %2272 = vmatprep.subr.bf16.mxu0 %v1441
    %2273 = vmatpush2.bf16.msra.mxu0 %v1440
    %2274 = vmatprep.subr.bf16.mxu0 %v1437
    %2275 = vmatpush2.bf16.msra.mxu0 %v1436
    %2276 = vmatprep.subr.bf16.mxu0 %v1433
    %2277 = vmatpush2.bf16.msra.mxu0 %v1432
    %2278 = vmatprep.subr.bf16.mxu0 %v1429
    %2279 = vmatpush2.bf16.msra.mxu0 %v1428
    %2280 = vmatprep.subr.bf16.mxu0 %v1425
    %2281 = vmatpush2.bf16.msra.mxu0 %v1424
    %2282 = vmatprep.subr.bf16.mxu0 %v1421
    %2283 = vmatpush2.bf16.msra.mxu0 %v1420
    %2284 = vmatprep.mubr.bf16.mxu0 %v96
    %2285 = vmatmul.mubr.bf16.gmra.mxu0 %v95
    %v2286 = vpop.f32.mrf.mxu0
    %v2287 = vadd.f32 %v2038, %v2286
    %v2288 = vpop.f32.mrf.mxu0
    %v2289 = vadd.f32 %v2042, %v2288
    %v2290 = vpop.f32.mrf.mxu0
    %v2291 = vpop.f32.mrf.mxu0
    %2292 = vdwg.mxu0
    %2293 = vmatprep.subr.bf16.mxu0 %v1481
    %2294 = vmatpush1.bf16.msra.mxu0 %v1480
    %2295 = vmatprep.subr.bf16.mxu0 %v1477
    %2296 = vmatpush1.bf16.msra.mxu0 %v1476
    %2297 = vmatprep.subr.bf16.mxu0 %v1473
    %2298 = vmatpush1.bf16.msra.mxu0 %v1472
    %2299 = vmatprep.subr.bf16.mxu0 %v1469
    %2300 = vmatpush1.bf16.msra.mxu0 %v1468
    %2301 = vmatprep.subr.bf16.mxu0 %v1465
    %2302 = vmatpush1.bf16.msra.mxu0 %v1464
    %2303 = vmatprep.subr.bf16.mxu0 %v1461
    %2304 = vmatpush1.bf16.msra.mxu0 %v1460
    %2305 = vmatprep.subr.bf16.mxu0 %v1457
    %2306 = vmatpush1.bf16.msra.mxu0 %v1456
    %2307 = vmatprep.subr.bf16.mxu0 %v1453
    %2308 = vmatpush1.bf16.msra.mxu0 %v1452
    %2309 = vmatprep.subr.bf16.mxu0 %v1513
    %2310 = vmatpush2.bf16.msra.mxu0 %v1512
    %2311 = vmatprep.subr.bf16.mxu0 %v1509
    %2312 = vmatpush2.bf16.msra.mxu0 %v1508
    %2313 = vmatprep.subr.bf16.mxu0 %v1505
    %2314 = vmatpush2.bf16.msra.mxu0 %v1504
    %2315 = vmatprep.subr.bf16.mxu0 %v1501
    %2316 = vmatpush2.bf16.msra.mxu0 %v1500
    %2317 = vmatprep.subr.bf16.mxu0 %v1497
    %2318 = vmatpush2.bf16.msra.mxu0 %v1496
    %2319 = vmatprep.subr.bf16.mxu0 %v1493
    %2320 = vmatpush2.bf16.msra.mxu0 %v1492
    %2321 = vmatprep.subr.bf16.mxu0 %v1489
    %2322 = vmatpush2.bf16.msra.mxu0 %v1488
    %2323 = vmatprep.subr.bf16.mxu0 %v1485
    %2324 = vmatpush2.bf16.msra.mxu0 %v1484
    %2325 = vmatprep.mubr.bf16.mxu0 %v98
    %2326 = vmatmul.mubr.bf16.gmra.mxu0 %v97
    %v2327 = vpop.f32.mrf.mxu0
    %v2328 = vadd.f32 %v2287, %v2327
    %v2329 = vpop.f32.mrf.mxu0
    %v2330 = vadd.f32 %v2289, %v2329
    %v2331 = vpop.f32.mrf.mxu0
    %v2332 = vpop.f32.mrf.mxu0
    %2333 = vdwg.mxu0
    %2334 = vmatprep.subr.bf16.mxu0 %v1545
    %2335 = vmatpush1.bf16.msra.mxu0 %v1544
    %2336 = vmatprep.subr.bf16.mxu0 %v1541
    %2337 = vmatpush1.bf16.msra.mxu0 %v1540
    %2338 = vmatprep.subr.bf16.mxu0 %v1537
    %2339 = vmatpush1.bf16.msra.mxu0 %v1536
    %2340 = vmatprep.subr.bf16.mxu0 %v1533
    %2341 = vmatpush1.bf16.msra.mxu0 %v1532
    %2342 = vmatprep.subr.bf16.mxu0 %v1529
    %2343 = vmatpush1.bf16.msra.mxu0 %v1528
    %2344 = vmatprep.subr.bf16.mxu0 %v1525
    %2345 = vmatpush1.bf16.msra.mxu0 %v1524
    %2346 = vmatprep.subr.bf16.mxu0 %v1521
    %2347 = vmatpush1.bf16.msra.mxu0 %v1520
    %2348 = vmatprep.subr.bf16.mxu0 %v1517
    %2349 = vmatpush1.bf16.msra.mxu0 %v1516
    %2350 = vmatprep.subr.bf16.mxu0 %v1577
    %2351 = vmatpush2.bf16.msra.mxu0 %v1576
    %2352 = vmatprep.subr.bf16.mxu0 %v1573
    %2353 = vmatpush2.bf16.msra.mxu0 %v1572
    %2354 = vmatprep.subr.bf16.mxu0 %v1569
    %2355 = vmatpush2.bf16.msra.mxu0 %v1568
    %2356 = vmatprep.subr.bf16.mxu0 %v1565
    %2357 = vmatpush2.bf16.msra.mxu0 %v1564
    %2358 = vmatprep.subr.bf16.mxu0 %v1561
    %2359 = vmatpush2.bf16.msra.mxu0 %v1560
    %2360 = vmatprep.subr.bf16.mxu0 %v1557
    %2361 = vmatpush2.bf16.msra.mxu0 %v1556
    %2362 = vmatprep.subr.bf16.mxu0 %v1553
    %2363 = vmatpush2.bf16.msra.mxu0 %v1552
    %2364 = vmatprep.subr.bf16.mxu0 %v1549
    %2365 = vmatpush2.bf16.msra.mxu0 %v1548
    %2366 = vmatprep.mubr.bf16.mxu0 %v100
    %2367 = vmatmul.mubr.bf16.gmra.mxu0 %v99
    %v2368 = vpop.f32.mrf.mxu0
    %v2369 = vadd.f32 %v2328, %v2368
    %v2370 = vpop.f32.mrf.mxu0
    %v2371 = vadd.f32 %v2330, %v2370
    %v2372 = vpop.f32.mrf.mxu0
    %v2373 = vpop.f32.mrf.mxu0
    %2374 = vdwg.mxu0
    %2375 = vmatprep.subr.bf16.mxu0 %v1609
    %2376 = vmatpush1.bf16.msra.mxu0 %v1608
    %2377 = vmatprep.subr.bf16.mxu0 %v1605
    %2378 = vmatpush1.bf16.msra.mxu0 %v1604
    %2379 = vmatprep.subr.bf16.mxu0 %v1601
    %2380 = vmatpush1.bf16.msra.mxu0 %v1600
    %2381 = vmatprep.subr.bf16.mxu0 %v1597
    %2382 = vmatpush1.bf16.msra.mxu0 %v1596
    %2383 = vmatprep.subr.bf16.mxu0 %v1593
    %2384 = vmatpush1.bf16.msra.mxu0 %v1592
    %2385 = vmatprep.subr.bf16.mxu0 %v1589
    %2386 = vmatpush1.bf16.msra.mxu0 %v1588
    %2387 = vmatprep.subr.bf16.mxu0 %v1585
    %2388 = vmatpush1.bf16.msra.mxu0 %v1584
    %2389 = vmatprep.subr.bf16.mxu0 %v1581
    %2390 = vmatpush1.bf16.msra.mxu0 %v1580
    %2391 = vmatprep.subr.bf16.mxu0 %v1641
    %2392 = vmatpush2.bf16.msra.mxu0 %v1640
    %2393 = vmatprep.subr.bf16.mxu0 %v1637
    %2394 = vmatpush2.bf16.msra.mxu0 %v1636
    %2395 = vmatprep.subr.bf16.mxu0 %v1633
    %2396 = vmatpush2.bf16.msra.mxu0 %v1632
    %2397 = vmatprep.subr.bf16.mxu0 %v1629
    %2398 = vmatpush2.bf16.msra.mxu0 %v1628
    %2399 = vmatprep.subr.bf16.mxu0 %v1625
    %2400 = vmatpush2.bf16.msra.mxu0 %v1624
    %2401 = vmatprep.subr.bf16.mxu0 %v1621
    %2402 = vmatpush2.bf16.msra.mxu0 %v1620
    %2403 = vmatprep.subr.bf16.mxu0 %v1617
    %2404 = vmatpush2.bf16.msra.mxu0 %v1616
    %2405 = vmatprep.subr.bf16.mxu0 %v1613
    %2406 = vmatpush2.bf16.msra.mxu0 %v1612
    %2407 = vmatprep.mubr.bf16.mxu0 %v102
    %2408 = vmatmul.mubr.bf16.gmra.mxu0 %v101
    %v2409 = vpop.f32.mrf.mxu0
    %v2410 = vadd.f32 %v2369, %v2409
    %v2411 = vpop.f32.mrf.mxu0
    %v2412 = vadd.f32 %v2371, %v2411
    %v2413 = vpop.f32.mrf.mxu0
    %v2414 = vpop.f32.mrf.mxu0
    %2415 = vdwg.mxu0
    %2416 = vmatprep.subr.bf16.mxu0 %v1673
    %2417 = vmatpush1.bf16.msra.mxu0 %v1672
    %2418 = vmatprep.subr.bf16.mxu0 %v1669
    %2419 = vmatpush1.bf16.msra.mxu0 %v1668
    %2420 = vmatprep.subr.bf16.mxu0 %v1665
    %2421 = vmatpush1.bf16.msra.mxu0 %v1664
    %2422 = vmatprep.subr.bf16.mxu0 %v1661
    %2423 = vmatpush1.bf16.msra.mxu0 %v1660
    %2424 = vmatprep.subr.bf16.mxu0 %v1657
    %2425 = vmatpush1.bf16.msra.mxu0 %v1656
    %2426 = vmatprep.subr.bf16.mxu0 %v1653
    %2427 = vmatpush1.bf16.msra.mxu0 %v1652
    %2428 = vmatprep.subr.bf16.mxu0 %v1649
    %2429 = vmatpush1.bf16.msra.mxu0 %v1648
    %2430 = vmatprep.subr.bf16.mxu0 %v1645
    %2431 = vmatpush1.bf16.msra.mxu0 %v1644
    %2432 = vmatprep.subr.bf16.mxu0 %v1705
    %2433 = vmatpush2.bf16.msra.mxu0 %v1704
    %2434 = vmatprep.subr.bf16.mxu0 %v1701
    %2435 = vmatpush2.bf16.msra.mxu0 %v1700
    %2436 = vmatprep.subr.bf16.mxu0 %v1697
    %2437 = vmatpush2.bf16.msra.mxu0 %v1696
    %2438 = vmatprep.subr.bf16.mxu0 %v1693
    %2439 = vmatpush2.bf16.msra.mxu0 %v1692
    %2440 = vmatprep.subr.bf16.mxu0 %v1689
    %2441 = vmatpush2.bf16.msra.mxu0 %v1688
    %2442 = vmatprep.subr.bf16.mxu0 %v1685
    %2443 = vmatpush2.bf16.msra.mxu0 %v1684
    %2444 = vmatprep.subr.bf16.mxu0 %v1681
    %2445 = vmatpush2.bf16.msra.mxu0 %v1680
    %2446 = vmatprep.subr.bf16.mxu0 %v1677
    %2447 = vmatpush2.bf16.msra.mxu0 %v1676
    %2448 = vmatprep.mubr.bf16.mxu0 %v104
    %2449 = vmatmul.mubr.bf16.gmra.mxu0 %v103
    %v2450 = vpop.f32.mrf.mxu0
    %v2451 = vadd.f32 %v2410, %v2450
    %v2452 = vpop.f32.mrf.mxu0
    %v2453 = vadd.f32 %v2412, %v2452
    %v2454 = vpop.f32.mrf.mxu0
    %v2455 = vpop.f32.mrf.mxu0
    %2456 = vdwg.mxu0
    %v2461 = vcombine.low %v2246, %v2248
    %v2462 = vcombine.low %v2451, %v2453
    %v2464 = vunpack.c.l.s4 1966171168
    %v2465 = vunpack.c.0.s8 %v2464
    %v2466 = vlaneseq
    %v2467 = vshrl.u32 %v2466, 7
    %v2468 = vsub.s32 %v2465, %v2467
    %v2469 = vrot.slane %v2461, %v2468
    %v2471 = vunpack.c.l.s4 1966171168
    %v2472 = vunpack.c.0.s8 %v2471
    %v2473 = vlaneseq
    %v2474 = vshrl.u32 %v2473, 7
    %v2475 = vsub.s32 %v2472, %v2474
    %v2476 = vrot.slane %v2462, %v2475
    %v2477 = vcombine.low %v2469, %v2476
    %v2479 = vunpack.c.l.s4 1966171168
    %v2480 = vunpack.c.0.s8 %v2479
    %v2481 = vlaneseq
    %v2482 = vshrl.u32 %v2481, 7
    %v2483 = vsub.s32 %v2480, %v2482
    %v2484 = vrot.slane %v2477, %v2483
    %v2486 = vlaneseq
    %vm2487 = vcmp.ge.s32.totalorder %v2486, 0
    %vm2488 = vcmp.lt.s32.totalorder %v2486, 512
    %vm2489 = vmand %vm2487, %vm2488
    %2490 = vst.msk [vmem:[#allocation7] sm:$0xf] %vm2489, %v2484
    // Predicated region
    $region22: #{n_vcnn_gru_forward.5} parent=1 // pred_check
      _
    $region23: #{n_vcnn_gru_forward.5} parent=1 // pred_check_branch
      %2492 = sbr.rel (0) target = $region25
    $region24: #{n_vcnn_gru_forward.5} parent=1 // pred_region
      %s2494 = ssub.s32 64, 64
      %2495 = vsyncadd [#allocation4], %s2494
      %s2497 = sshll.u32 [#allocation7], 4
      %s2498 = int_to_ptr.vmem [resolvable:$true] %s2497
      %2500 = dma.vmem_to_hbm [thread:$0]  %s2498, 64, %s3, [#allocation4]
    $region25: #{n_vcnn_gru_forward.5} parent=1 // pred_fallthru
      _
    // Predicated region
    $region26: #{n_vcnn_gru_forward.5} parent=1 // pred_check
      _
    $region27: #{n_vcnn_gru_forward.5} parent=1 // pred_check_branch
      %2502 = sbr.rel (0) target = $region29
    $region28: #{n_vcnn_gru_forward.5} parent=1 // pred_region
      %2503 = dma.done [#allocation4], 64
    $region29: #{n_vcnn_gru_forward.5} parent=1 // pred_fallthru
      _
    %2504 = vsyncpa [#allocation3], 1
    %2505 = vsyncpa [#allocation6], 1
    %2506 = vsyncpa [#allocation4], 1

</llo_original>
